<compile_context>
chip_gen: v7x
topology: tpu7x:2x2x1
jax: 0.10.0
libtpu: 0.0.40
codegen_flags: <defaults>
</compile_context>

<pallas_src>
import functools

import jax
import jax.numpy as jnp
from jax import lax
from jax.experimental import pallas as pl
from jax.experimental.pallas import tpu as pltpu

BN_EPS = 1e-5


def _round_up(x, m):
    return (x + m - 1) // m * m


def _next_pow2(x):
    return 1 << (max(int(x), 1) - 1).bit_length()


def _vmem_limit_bytes():
    # Generation-aware scoped-VMEM budget: half of physical, capped at 64 MiB
    # (v5e/v6e: 128 MiB physical -> 64 MiB scoped; v7x: 64 MiB physical -> 32 MiB).
    try:
        cap = int(pltpu.get_tpu_info().vmem_capacity_bytes)
    except Exception:
        cap = 64 * 1024 * 1024
    return min(max(cap // 2, 32 * 1024 * 1024), 64 * 1024 * 1024)


_VMEM_LIMIT_BYTES = _vmem_limit_bytes()


def _choose_tm(m_frame, halo_pad, cin, cinp, cp, budget_bytes):
    """Largest row tile (a multiple of halo_pad) whose buffers fit the VMEM budget."""
    cap = _round_up(max(m_frame, halo_pad), halo_pad)   # no point tiling past the data
    tm = max(2048, halo_pad)
    while tm > halo_pad:
        need = (2 * tm * cp * 4              # double-buffered f32 output tile (pass 2)
                + 2 * tm * cinp * 2          # double-buffered bf16 input tile
                + 2 * halo_pad * cinp * 2    # double-buffered bf16 halo tile
                + (tm + halo_pad) * cin * 4  # f32 staging scratch
                + tm * 9 * cin * 2           # bf16 im2col slab scratch
                + 4 * 9 * cin * cp * 2       # weight block (+ margin)
                + (2 << 20))                 # stats / scale / shift / misc headroom
        if need <= budget_bytes:
            break
        tm //= 2
    return max(halo_pad, min(tm, cap))


# --------------------------------------------------------------------------- #
# Shared helper: stage TM rows + small halo (f32, aligned copies), then scatter
# the 9 shifted taps into a (TM, 9*C_in) bf16 im2col slab for ONE K-folded dot.
# --------------------------------------------------------------------------- #
def _build_im2col_slab(cur_ref, halo_ref, stage_ref, slab_ref, *, cin, tm, wp):
    stage_ref[0:tm, :] = cur_ref[:, 0:cin].astype(jnp.float32)
    stage_ref[tm:, :] = halo_ref[:, 0:cin].astype(jnp.float32)
    for kh in range(3):
        for kw in range(3):
            s = kh * wp + kw                     # static flat-row shift of this tap
            t = kh * 3 + kw
            slab_ref[:, t * cin:(t + 1) * cin] = (
                stage_ref[s:s + tm, :].astype(jnp.bfloat16))


# --------------------------------------------------------------------------- #
# Pass 1: conv (one K-folded MXU dot per tile) + masked per-channel sum / sumsq
# accumulated into a resident (8, CP) block.  Grid axis is "arbitrary".
# --------------------------------------------------------------------------- #
def _conv_stats_kernel(cin, tm, wp, cur_ref, halo_ref, w_ref, stats_ref,
                       stage_ref, slab_ref):
    _build_im2col_slab(cur_ref, halo_ref, stage_ref, slab_ref, cin=cin, tm=tm, wp=wp)
    y = jnp.dot(slab_ref[...], w_ref[...], preferred_element_type=jnp.float32)

    # Row-validity mask rides along as the last input column (1.0 = real output row);
    # junk padded-frame rows and the zero tail are excluded from the statistics.
    mask = cur_ref[:, cin:cin + 1].astype(jnp.float32)
    ym = y * mask

    @pl.when(pl.program_id(0) == 0)
    def _():
        stats_ref[...] = jnp.zeros_like(stats_ref)

    stats_ref[0:1, :] += jnp.sum(ym, axis=0, keepdims=True)
    stats_ref[1:2, :] += jnp.sum(ym * y, axis=0, keepdims=True)


# --------------------------------------------------------------------------- #
# Pass 2: recompute the conv and apply the folded BN affine; one lane-dense store
# per tile.  No cross-step state -> grid axis is "parallel" (2 TCs on v7x).
# --------------------------------------------------------------------------- #
def _conv_bn_apply_kernel(cin, tm, wp, cur_ref, halo_ref, w_ref, scale_ref, shift_ref,
                          out_ref, stage_ref, slab_ref):
    _build_im2col_slab(cur_ref, halo_ref, stage_ref, slab_ref, cin=cin, tm=tm, wp=wp)
    y = jnp.dot(slab_ref[...], w_ref[...], preferred_element_type=jnp.float32)
    out_ref[...] = y * scale_ref[...] + shift_ref[...]


# --------------------------------------------------------------------------- #
# Wrapper: conv2DBatchNorm forward (NCHW in, NCHW out).
# --------------------------------------------------------------------------- #
@jax.jit
def conv2d_batchnorm_3x3(x_nchw, w_oihw, gamma, beta):
    n, cin, h, w = x_nchw.shape
    cout = w_oihw.shape[0]
    cinp = cin + 1                               # +1: row-validity mask column
    cp = _round_up(cout, 128)                    # lane-dense / MXU-wide output channels
    hp, wp = h + 2, w + 2                        # spatially padded (pad=1) frame dims
    m_frame = n * hp * wp                        # rows of the flat padded frame
    max_shift = 2 * wp + 2                       # largest tap offset in flat rows
    halo_pad = max(_next_pow2(max_shift), 8)     # halo rows (power of 2, divides tm)
    tm = _choose_tm(m_frame, halo_pad, cin, cinp, cp, int(_VMEM_LIMIT_BYTES * 0.7))
    nb = (m_frame + tm - 1) // tm
    m_pad = nb * tm
    m_in = (nb + 1) * tm                         # zero tail so the last halo block exists

    # NCHW -> NHWC once; pad spatially; flatten rows; append the 0/1 stats mask; bf16.
    x_nhwc = jnp.transpose(x_nchw, (0, 2, 3, 1))
    xp = jnp.pad(x_nhwc, ((0, 0), (1, 1), (1, 1), (0, 0)))
    xf = xp.reshape(m_frame, cin)
    r = jnp.arange(m_frame, dtype=jnp.int32)
    valid = (r % wp < w) & ((r // wp) % hp < h)
    xfm = jnp.concatenate([xf, valid.astype(xf.dtype).reshape(m_frame, 1)], axis=1)
    xfm = jnp.pad(xfm.astype(jnp.bfloat16), ((0, m_in - m_frame), (0, 0)))

    # torch OIHW -> (9*C_in, CP) K-folded weight slab (zero-padded output lanes), bf16.
    # Conv bias is dropped: a per-channel constant before training-mode BN cancels.
    wk = jnp.transpose(w_oihw, (2, 3, 1, 0)).reshape(9 * cin, cout)
    wk = jnp.pad(wk, ((0, 0), (0, cp - cout))).astype(jnp.bfloat16)

    ratio = tm // halo_pad
    cur_spec = pl.BlockSpec((tm, cinp), lambda i: (i, 0))
    halo_spec = pl.BlockSpec((halo_pad, cinp), lambda i: ((i + 1) * ratio, 0))
    w_spec = pl.BlockSpec((9 * cin, cp), lambda i: (0, 0))
    scratch = [pltpu.VMEM((tm + halo_pad, cin), jnp.float32),    # staged rows (f32)
               pltpu.VMEM((tm, 9 * cin), jnp.bfloat16)]          # im2col slab (bf16)

    # ---- Pass 1: stats only (no pre-BN intermediate written to HBM). ----------------
    stats = pl.pallas_call(
        functools.partial(_conv_stats_kernel, cin, tm, wp),
        out_shape=jax.ShapeDtypeStruct((8, cp), jnp.float32),
        grid=(nb,),
        in_specs=[cur_spec, halo_spec, w_spec],
        out_specs=pl.BlockSpec((8, cp), lambda i: (0, 0)),       # resident accumulator
        scratch_shapes=scratch,
        compiler_params=pltpu.CompilerParams(
            dimension_semantics=("arbitrary",),                  # sequential: stats acc
            vmem_limit_bytes=_VMEM_LIMIT_BYTES),
    )(xfm, xfm, wk)

    # Fold training-mode BatchNorm (biased variance) into a per-channel affine.
    count = float(n * h * w)
    mean = stats[0] / count
    var = jnp.maximum(stats[1] / count - mean * mean, 0.0)
    gamma_p = jnp.pad(gamma.astype(jnp.float32), (0, cp - cout))
    beta_p = jnp.pad(beta.astype(jnp.float32), (0, cp - cout))
    scale = gamma_p * lax.rsqrt(var + BN_EPS)
    shift = beta_p - mean * scale

    # ---- Pass 2: recompute conv, apply folded BN, write the output once. ------------
    y_norm = pl.pallas_call(
        functools.partial(_conv_bn_apply_kernel, cin, tm, wp),
        out_shape=jax.ShapeDtypeStruct((m_pad, cp), jnp.float32),
        grid=(nb,),
        in_specs=[cur_spec, halo_spec, w_spec,
                  pl.BlockSpec((1, cp), lambda i: (0, 0)),
                  pl.BlockSpec((1, cp), lambda i: (0, 0))],
        out_specs=pl.BlockSpec((tm, cp), lambda i: (i, 0)),
        scratch_shapes=scratch,
        compiler_params=pltpu.CompilerParams(
            dimension_semantics=("parallel",),                   # both TCs on v7x
            vmem_limit_bytes=_VMEM_LIMIT_BYTES),
    )(xfm, xfm, wk, scale.reshape(1, cp), shift.reshape(1, cp))

    # Drop junk frame rows / padded channels; NHWC -> NCHW once at the API boundary.
    y = y_norm[:m_frame].reshape(n, hp, wp, cp)[:, :h, :w, :cout]
    return jnp.transpose(y, (0, 3, 1, 2))


if __name__ == "__main__":
    key = jax.random.PRNGKey(0)
    kx, kw, kb, kg, kbe = jax.random.split(key, 5)

    N, C_in, H, W = 2, 4, 16, 16
    C_out = 8

    x = jax.random.normal(kx, (N, C_in, H, W), jnp.float32)
    wt = jax.random.normal(kw, (C_out, C_in, 3, 3), jnp.float32) * jnp.sqrt(2.0 / (9 * C_in))
    bias = 0.1 * jax.random.normal(kb, (C_out,), jnp.float32)   # reference-only: BN cancels it
    gamma = 1.0 + 0.1 * jax.random.normal(kg, (C_out,), jnp.float32)
    beta = 0.1 * jax.random.normal(kbe, (C_out,), jnp.float32)

    out = conv2d_batchnorm_3x3(x, wt, gamma, beta)
    out = jax.block_until_ready(out)

    # Pure-JAX f32 reference (conv WITH bias + training-mode BatchNorm2d).
    def reference(x, w, b, g, be):
        y = lax.conv_general_dilated(x, w, (1, 1), ((1, 1), (1, 1)),
                                     dimension_numbers=("NCHW", "OIHW", "NCHW"),
                                     precision=lax.Precision.HIGHEST)
        y = y + b.reshape(1, -1, 1, 1)
        mean = jnp.mean(y, axis=(0, 2, 3), keepdims=True)
        var = jnp.mean((y - mean) ** 2, axis=(0, 2, 3), keepdims=True)
        return ((y - mean) * lax.rsqrt(var + BN_EPS) * g.reshape(1, -1, 1, 1)
                + be.reshape(1, -1, 1, 1))

    ref = reference(x, wt, bias, gamma, beta)
    assert out.shape == (N, C_out, H, W)
    assert out.dtype == jnp.float32
    max_err = float(jnp.max(jnp.abs(out - ref)))
    assert max_err < 0.1, f"max abs error vs reference: {max_err}"
    print("KERNEL_OK")
</pallas_src>

<mosaic_0001>
module attributes {stable_mosaic.version = 11 : i64} {
  func.func @_conv_stats_kernel(%arg0: i32, %arg1: memref<704x5xbf16, #tpu.memory_space<vmem>>, %arg2: memref<64x5xbf16, #tpu.memory_space<vmem>>, %arg3: memref<36x128xbf16, #tpu.memory_space<vmem>>, %arg4: memref<8x128xf32, #tpu.memory_space<vmem>>, %arg5: memref<768x4xf32, #tpu.memory_space<vmem>>, %arg6: memref<704x36xbf16, #tpu.memory_space<vmem>>) attributes {dimension_semantics = [#tpu.dimension_semantics<arbitrary>], iteration_bounds = array<i64: 1>, scalar_prefetch = 0 : i64, scratch_operands = 2 : i64, tpu.core_type = #tpu.core_type<tc>, window_params = [{transform_indices = @transform_0, window_bounds = array<i64: 704, 5>}, {transform_indices = @transform_1, window_bounds = array<i64: 64, 5>}, {pipeline_mode = #tpu.pipeline_mode<synchronous>, transform_indices = @transform_2, window_bounds = array<i64: 36, 128>}, {pipeline_mode = #tpu.pipeline_mode<synchronous>, transform_indices = @transform_3, window_bounds = array<i64: 8, 128>}]} {
    %c0 = arith.constant 0 : index
    %c0_0 = arith.constant 0 : index
    %0 = vector.load %arg1[%c0, %c0_0] : memref<704x5xbf16, #tpu.memory_space<vmem>>, vector<704x4xbf16>
    %1 = arith.extf %0 : vector<704x4xbf16> to vector<704x4xf32>
    %c0_1 = arith.constant 0 : index
    %c0_2 = arith.constant 0 : index
    %2 = vector.load %arg5[%c0_1, %c0_2] : memref<768x4xf32, #tpu.memory_space<vmem>>, vector<704x4xf32>
    tpu.vector_store %arg5[%c0_1, %c0_2], %1 {strides = array<i32>} : memref<768x4xf32, #tpu.memory_space<vmem>>, vector<704x4xf32>,
    %c0_3 = arith.constant 0 : index
    %c0_4 = arith.constant 0 : index
    %3 = vector.load %arg2[%c0_3, %c0_4] : memref<64x5xbf16, #tpu.memory_space<vmem>>, vector<64x4xbf16>
    %4 = arith.extf %3 : vector<64x4xbf16> to vector<64x4xf32>
    %c704 = arith.constant 704 : index
    %c0_5 = arith.constant 0 : index
    %5 = vector.load %arg5[%c704, %c0_5] : memref<768x4xf32, #tpu.memory_space<vmem>>, vector<64x4xf32>
    tpu.vector_store %arg5[%c704, %c0_5], %4 {strides = array<i32>} : memref<768x4xf32, #tpu.memory_space<vmem>>, vector<64x4xf32>,
    %c0_6 = arith.constant 0 : index
    %c0_7 = arith.constant 0 : index
    %6 = vector.load %arg5[%c0_6, %c0_7] : memref<768x4xf32, #tpu.memory_space<vmem>>, vector<704x4xf32>
    %7 = arith.truncf %6 : vector<704x4xf32> to vector<704x4xbf16>
    %c0_8 = arith.constant 0 : index
    %c0_9 = arith.constant 0 : index
    %8 = vector.load %arg6[%c0_8, %c0_9] : memref<704x36xbf16, #tpu.memory_space<vmem>>, vector<704x4xbf16>
    tpu.vector_store %arg6[%c0_8, %c0_9], %7 {strides = array<i32>} : memref<704x36xbf16, #tpu.memory_space<vmem>>, vector<704x4xbf16>,
    %c1 = arith.constant 1 : index
    %c0_10 = arith.constant 0 : index
    %9 = vector.load %arg5[%c1, %c0_10] : memref<768x4xf32, #tpu.memory_space<vmem>>, vector<704x4xf32>
    %10 = arith.truncf %9 : vector<704x4xf32> to vector<704x4xbf16>
    %c0_11 = arith.constant 0 : index
    %c4 = arith.constant 4 : index
    %11 = vector.load %arg6[%c0_11, %c4] : memref<704x36xbf16, #tpu.memory_space<vmem>>, vector<704x4xbf16>
    tpu.vector_store %arg6[%c0_11, %c4], %10 {strides = array<i32>} : memref<704x36xbf16, #tpu.memory_space<vmem>>, vector<704x4xbf16>,
    %c2 = arith.constant 2 : index
    %c0_12 = arith.constant 0 : index
    %12 = vector.load %arg5[%c2, %c0_12] : memref<768x4xf32, #tpu.memory_space<vmem>>, vector<704x4xf32>
    %13 = arith.truncf %12 : vector<704x4xf32> to vector<704x4xbf16>
    %c0_13 = arith.constant 0 : index
    %c8 = arith.constant 8 : index
    %14 = vector.load %arg6[%c0_13, %c8] : memref<704x36xbf16, #tpu.memory_space<vmem>>, vector<704x4xbf16>
    tpu.vector_store %arg6[%c0_13, %c8], %13 {strides = array<i32>} : memref<704x36xbf16, #tpu.memory_space<vmem>>, vector<704x4xbf16>,
    %c18 = arith.constant 18 : index
    %c0_14 = arith.constant 0 : index
    %15 = vector.load %arg5[%c18, %c0_14] : memref<768x4xf32, #tpu.memory_space<vmem>>, vector<704x4xf32>
    %16 = arith.truncf %15 : vector<704x4xf32> to vector<704x4xbf16>
    %c0_15 = arith.constant 0 : index
    %c12 = arith.constant 12 : index
    %17 = vector.load %arg6[%c0_15, %c12] : memref<704x36xbf16, #tpu.memory_space<vmem>>, vector<704x4xbf16>
    tpu.vector_store %arg6[%c0_15, %c12], %16 {strides = array<i32>} : memref<704x36xbf16, #tpu.memory_space<vmem>>, vector<704x4xbf16>,
    %c19 = arith.constant 19 : index
    %c0_16 = arith.constant 0 : index
    %18 = vector.load %arg5[%c19, %c0_16] : memref<768x4xf32, #tpu.memory_space<vmem>>, vector<704x4xf32>
    %19 = arith.truncf %18 : vector<704x4xf32> to vector<704x4xbf16>
    %c0_17 = arith.constant 0 : index
    %c16 = arith.constant 16 : index
    %20 = vector.load %arg6[%c0_17, %c16] : memref<704x36xbf16, #tpu.memory_space<vmem>>, vector<704x4xbf16>
    tpu.vector_store %arg6[%c0_17, %c16], %19 {strides = array<i32>} : memref<704x36xbf16, #tpu.memory_space<vmem>>, vector<704x4xbf16>,
    %c20 = arith.constant 20 : index
    %c0_18 = arith.constant 0 : index
    %21 = vector.load %arg5[%c20, %c0_18] : memref<768x4xf32, #tpu.memory_space<vmem>>, vector<704x4xf32>
    %22 = arith.truncf %21 : vector<704x4xf32> to vector<704x4xbf16>
    %c0_19 = arith.constant 0 : index
    %c20_20 = arith.constant 20 : index
    %23 = vector.load %arg6[%c0_19, %c20_20] : memref<704x36xbf16, #tpu.memory_space<vmem>>, vector<704x4xbf16>
    tpu.vector_store %arg6[%c0_19, %c20_20], %22 {strides = array<i32>} : memref<704x36xbf16, #tpu.memory_space<vmem>>, vector<704x4xbf16>,
    %c36 = arith.constant 36 : index
    %c0_21 = arith.constant 0 : index
    %24 = vector.load %arg5[%c36, %c0_21] : memref<768x4xf32, #tpu.memory_space<vmem>>, vector<704x4xf32>
    %25 = arith.truncf %24 : vector<704x4xf32> to vector<704x4xbf16>
    %c0_22 = arith.constant 0 : index
    %c24 = arith.constant 24 : index
    %26 = vector.load %arg6[%c0_22, %c24] : memref<704x36xbf16, #tpu.memory_space<vmem>>, vector<704x4xbf16>
    tpu.vector_store %arg6[%c0_22, %c24], %25 {strides = array<i32>} : memref<704x36xbf16, #tpu.memory_space<vmem>>, vector<704x4xbf16>,
    %c37 = arith.constant 37 : index
    %c0_23 = arith.constant 0 : index
    %27 = vector.load %arg5[%c37, %c0_23] : memref<768x4xf32, #tpu.memory_space<vmem>>, vector<704x4xf32>
    %28 = arith.truncf %27 : vector<704x4xf32> to vector<704x4xbf16>
    %c0_24 = arith.constant 0 : index
    %c28 = arith.constant 28 : index
    %29 = vector.load %arg6[%c0_24, %c28] : memref<704x36xbf16, #tpu.memory_space<vmem>>, vector<704x4xbf16>
    tpu.vector_store %arg6[%c0_24, %c28], %28 {strides = array<i32>} : memref<704x36xbf16, #tpu.memory_space<vmem>>, vector<704x4xbf16>,
    %c38 = arith.constant 38 : index
    %c0_25 = arith.constant 0 : index
    %30 = vector.load %arg5[%c38, %c0_25] : memref<768x4xf32, #tpu.memory_space<vmem>>, vector<704x4xf32>
    %31 = arith.truncf %30 : vector<704x4xf32> to vector<704x4xbf16>
    %c0_26 = arith.constant 0 : index
    %c32 = arith.constant 32 : index
    %32 = vector.load %arg6[%c0_26, %c32] : memref<704x36xbf16, #tpu.memory_space<vmem>>, vector<704x4xbf16>
    tpu.vector_store %arg6[%c0_26, %c32], %31 {strides = array<i32>} : memref<704x36xbf16, #tpu.memory_space<vmem>>, vector<704x4xbf16>,
    %c0_27 = arith.constant 0 : index
    %c0_28 = arith.constant 0 : index
    %33 = vector.load %arg6[%c0_27, %c0_28] : memref<704x36xbf16, #tpu.memory_space<vmem>>, vector<704x36xbf16>
    %c0_29 = arith.constant 0 : index
    %c0_30 = arith.constant 0 : index
    %34 = vector.load %arg3[%c0_29, %c0_30] : memref<36x128xbf16, #tpu.memory_space<vmem>>, vector<36x128xbf16>
    %cst = arith.constant dense<0.000000e+00> : vector<704x128xf32>
    %35 = tpu.matmul %33, %34, %cst {dimension_numbers = #tpu.dot_dimension_numbers<[1], [0], [0], [1], [0, 0, 1, 1], [], []>} : vector<704x36xbf16>, vector<36x128xbf16>, vector<704x128xf32> -> vector<704x128xf32>
    %c0_31 = arith.constant 0 : index
    %c4_32 = arith.constant 4 : index
    %36 = vector.load %arg1[%c0_31, %c4_32] : memref<704x5xbf16, #tpu.memory_space<vmem>>, vector<704x1xbf16>
    %37 = arith.extf %36 : vector<704x1xbf16> to vector<704x1xf32>
    %38 = vector.broadcast %37 : vector<704x1xf32> to vector<704x128xf32>
    %39 = arith.mulf %35, %38 : vector<704x128xf32>
    %c0_i32 = arith.constant 0 : i32
    %40 = arith.cmpi eq, %arg0, %c0_i32 : i32
    %41 = arith.extui %40 : i1 to i32
    %c0_i32_33 = arith.constant 0 : i32
    %42 = arith.cmpi ne, %41, %c0_i32_33 : i32
    scf.if %42 {
      %cst_44 = arith.constant 0.000000e+00 : f32
      %54 = vector.broadcast %cst_44 : f32 to vector<8x128xf32>
      %c0_45 = arith.constant 0 : index
      %c0_46 = arith.constant 0 : index
      %55 = vector.load %arg4[%c0_45, %c0_46] : memref<8x128xf32, #tpu.memory_space<vmem>>, vector<8x128xf32>
      tpu.vector_store %arg4[%c0_45, %c0_46], %54 {strides = array<i32>} : memref<8x128xf32, #tpu.memory_space<vmem>>, vector<8x128xf32>,
    } else {
    }
    %c0_34 = arith.constant 0 : index
    %c0_35 = arith.constant 0 : index
    %43 = vector.load %arg4[%c0_34, %c0_35] : memref<8x128xf32, #tpu.memory_space<vmem>>, vector<1x128xf32>
    %cst_36 = arith.constant dense<0.000000e+00> : vector<128xf32>
    %44 = vector.multi_reduction <add>, %39, %cst_36 [0] : vector<704x128xf32> to vector<128xf32>
    %45 = vector.shape_cast %44 : vector<128xf32> to vector<1x128xf32>
    %46 = arith.addf %43, %45 : vector<1x128xf32>
    %c0_37 = arith.constant 0 : index
    %c0_38 = arith.constant 0 : index
    %47 = vector.load %arg4[%c0_37, %c0_38] : memref<8x128xf32, #tpu.memory_space<vmem>>, vector<1x128xf32>
    tpu.vector_store %arg4[%c0_37, %c0_38], %46 {strides = array<i32>} : memref<8x128xf32, #tpu.memory_space<vmem>>, vector<1x128xf32>,
    %c1_39 = arith.constant 1 : index
    %c0_40 = arith.constant 0 : index
    %48 = vector.load %arg4[%c1_39, %c0_40] : memref<8x128xf32, #tpu.memory_space<vmem>>, vector<1x128xf32>
    %49 = arith.mulf %39, %35 : vector<704x128xf32>
    %cst_41 = arith.constant dense<0.000000e+00> : vector<128xf32>
    %50 = vector.multi_reduction <add>, %49, %cst_41 [0] : vector<704x128xf32> to vector<128xf32>
    %51 = vector.shape_cast %50 : vector<128xf32> to vector<1x128xf32>
    %52 = arith.addf %48, %51 : vector<1x128xf32>
    %c1_42 = arith.constant 1 : index
    %c0_43 = arith.constant 0 : index
    %53 = vector.load %arg4[%c1_42, %c0_43] : memref<8x128xf32, #tpu.memory_space<vmem>>, vector<1x128xf32>
    tpu.vector_store %arg4[%c1_42, %c0_43], %52 {strides = array<i32>} : memref<8x128xf32, #tpu.memory_space<vmem>>, vector<1x128xf32>,
    return
  }
  func.func @transform_0(%arg0: i32) -> (i32, i32) {
    %c0_i32 = arith.constant 0 : i32
    %c0_i32_0 = arith.constant 0 : i32
    return %arg0, %c0_i32 : i32, i32
  }
  func.func @transform_1(%arg0: i32) -> (i32, i32) {
    %c1_i32 = arith.constant 1 : i32
    %0 = arith.addi %arg0, %c1_i32 : i32
    %c11_i32 = arith.constant 11 : i32
    %1 = arith.muli %0, %c11_i32 : i32
    %c0_i32 = arith.constant 0 : i32
    %c0_i32_0 = arith.constant 0 : i32
    return %1, %c0_i32 : i32, i32
  }
  func.func @transform_2(%arg0: i32) -> (i32, i32) {
    %c0_i32 = arith.constant 0 : i32
    %c0_i32_0 = arith.constant 0 : i32
    %c0_i32_1 = arith.constant 0 : i32
    return %c0_i32, %c0_i32_0 : i32, i32
  }
  func.func @transform_3(%arg0: i32) -> (i32, i32) {
    %c0_i32 = arith.constant 0 : i32
    %c0_i32_0 = arith.constant 0 : i32
    %c0_i32_1 = arith.constant 0 : i32
    return %c0_i32, %c0_i32_0 : i32, i32
  }
}

module attributes {stable_mosaic.version = 11 : i64} {
  func.func @_conv_bn_apply_kernel(%arg0: i32, %arg1: memref<704x5xbf16, #tpu.memory_space<vmem>>, %arg2: memref<64x5xbf16, #tpu.memory_space<vmem>>, %arg3: memref<36x128xbf16, #tpu.memory_space<vmem>>, %arg4: memref<1x128xf32, #tpu.memory_space<vmem>>, %arg5: memref<1x128xf32, #tpu.memory_space<vmem>>, %arg6: memref<704x128xf32, #tpu.memory_space<vmem>>, %arg7: memref<768x4xf32, #tpu.memory_space<vmem>>, %arg8: memref<704x36xbf16, #tpu.memory_space<vmem>>) attributes {dimension_semantics = [#tpu.dimension_semantics<parallel>], iteration_bounds = array<i64: 1>, scalar_prefetch = 0 : i64, scratch_operands = 2 : i64, tpu.core_type = #tpu.core_type<tc>, window_params = [{transform_indices = @transform_0, window_bounds = array<i64: 704, 5>}, {transform_indices = @transform_1, window_bounds = array<i64: 64, 5>}, {pipeline_mode = #tpu.pipeline_mode<synchronous>, transform_indices = @transform_2, window_bounds = array<i64: 36, 128>}, {pipeline_mode = #tpu.pipeline_mode<synchronous>, transform_indices = @transform_3, window_bounds = array<i64: 1, 128>}, {pipeline_mode = #tpu.pipeline_mode<synchronous>, transform_indices = @transform_4, window_bounds = array<i64: 1, 128>}, {transform_indices = @transform_5, window_bounds = array<i64: 704, 128>}]} {
    %c0 = arith.constant 0 : index
    %c0_0 = arith.constant 0 : index
    %0 = vector.load %arg1[%c0, %c0_0] : memref<704x5xbf16, #tpu.memory_space<vmem>>, vector<704x4xbf16>
    %1 = arith.extf %0 : vector<704x4xbf16> to vector<704x4xf32>
    %c0_1 = arith.constant 0 : index
    %c0_2 = arith.constant 0 : index
    %2 = vector.load %arg7[%c0_1, %c0_2] : memref<768x4xf32, #tpu.memory_space<vmem>>, vector<704x4xf32>
    tpu.vector_store %arg7[%c0_1, %c0_2], %1 {strides = array<i32>} : memref<768x4xf32, #tpu.memory_space<vmem>>, vector<704x4xf32>,
    %c0_3 = arith.constant 0 : index
    %c0_4 = arith.constant 0 : index
    %3 = vector.load %arg2[%c0_3, %c0_4] : memref<64x5xbf16, #tpu.memory_space<vmem>>, vector<64x4xbf16>
    %4 = arith.extf %3 : vector<64x4xbf16> to vector<64x4xf32>
    %c704 = arith.constant 704 : index
    %c0_5 = arith.constant 0 : index
    %5 = vector.load %arg7[%c704, %c0_5] : memref<768x4xf32, #tpu.memory_space<vmem>>, vector<64x4xf32>
    tpu.vector_store %arg7[%c704, %c0_5], %4 {strides = array<i32>} : memref<768x4xf32, #tpu.memory_space<vmem>>, vector<64x4xf32>,
    %c0_6 = arith.constant 0 : index
    %c0_7 = arith.constant 0 : index
    %6 = vector.load %arg7[%c0_6, %c0_7] : memref<768x4xf32, #tpu.memory_space<vmem>>, vector<704x4xf32>
    %7 = arith.truncf %6 : vector<704x4xf32> to vector<704x4xbf16>
    %c0_8 = arith.constant 0 : index
    %c0_9 = arith.constant 0 : index
    %8 = vector.load %arg8[%c0_8, %c0_9] : memref<704x36xbf16, #tpu.memory_space<vmem>>, vector<704x4xbf16>
    tpu.vector_store %arg8[%c0_8, %c0_9], %7 {strides = array<i32>} : memref<704x36xbf16, #tpu.memory_space<vmem>>, vector<704x4xbf16>,
    %c1 = arith.constant 1 : index
    %c0_10 = arith.constant 0 : index
    %9 = vector.load %arg7[%c1, %c0_10] : memref<768x4xf32, #tpu.memory_space<vmem>>, vector<704x4xf32>
    %10 = arith.truncf %9 : vector<704x4xf32> to vector<704x4xbf16>
    %c0_11 = arith.constant 0 : index
    %c4 = arith.constant 4 : index
    %11 = vector.load %arg8[%c0_11, %c4] : memref<704x36xbf16, #tpu.memory_space<vmem>>, vector<704x4xbf16>
    tpu.vector_store %arg8[%c0_11, %c4], %10 {strides = array<i32>} : memref<704x36xbf16, #tpu.memory_space<vmem>>, vector<704x4xbf16>,
    %c2 = arith.constant 2 : index
    %c0_12 = arith.constant 0 : index
    %12 = vector.load %arg7[%c2, %c0_12] : memref<768x4xf32, #tpu.memory_space<vmem>>, vector<704x4xf32>
    %13 = arith.truncf %12 : vector<704x4xf32> to vector<704x4xbf16>
    %c0_13 = arith.constant 0 : index
    %c8 = arith.constant 8 : index
    %14 = vector.load %arg8[%c0_13, %c8] : memref<704x36xbf16, #tpu.memory_space<vmem>>, vector<704x4xbf16>
    tpu.vector_store %arg8[%c0_13, %c8], %13 {strides = array<i32>} : memref<704x36xbf16, #tpu.memory_space<vmem>>, vector<704x4xbf16>,
    %c18 = arith.constant 18 : index
    %c0_14 = arith.constant 0 : index
    %15 = vector.load %arg7[%c18, %c0_14] : memref<768x4xf32, #tpu.memory_space<vmem>>, vector<704x4xf32>
    %16 = arith.truncf %15 : vector<704x4xf32> to vector<704x4xbf16>
    %c0_15 = arith.constant 0 : index
    %c12 = arith.constant 12 : index
    %17 = vector.load %arg8[%c0_15, %c12] : memref<704x36xbf16, #tpu.memory_space<vmem>>, vector<704x4xbf16>
    tpu.vector_store %arg8[%c0_15, %c12], %16 {strides = array<i32>} : memref<704x36xbf16, #tpu.memory_space<vmem>>, vector<704x4xbf16>,
    %c19 = arith.constant 19 : index
    %c0_16 = arith.constant 0 : index
    %18 = vector.load %arg7[%c19, %c0_16] : memref<768x4xf32, #tpu.memory_space<vmem>>, vector<704x4xf32>
    %19 = arith.truncf %18 : vector<704x4xf32> to vector<704x4xbf16>
    %c0_17 = arith.constant 0 : index
    %c16 = arith.constant 16 : index
    %20 = vector.load %arg8[%c0_17, %c16] : memref<704x36xbf16, #tpu.memory_space<vmem>>, vector<704x4xbf16>
    tpu.vector_store %arg8[%c0_17, %c16], %19 {strides = array<i32>} : memref<704x36xbf16, #tpu.memory_space<vmem>>, vector<704x4xbf16>,
    %c20 = arith.constant 20 : index
    %c0_18 = arith.constant 0 : index
    %21 = vector.load %arg7[%c20, %c0_18] : memref<768x4xf32, #tpu.memory_space<vmem>>, vector<704x4xf32>
    %22 = arith.truncf %21 : vector<704x4xf32> to vector<704x4xbf16>
    %c0_19 = arith.constant 0 : index
    %c20_20 = arith.constant 20 : index
    %23 = vector.load %arg8[%c0_19, %c20_20] : memref<704x36xbf16, #tpu.memory_space<vmem>>, vector<704x4xbf16>
    tpu.vector_store %arg8[%c0_19, %c20_20], %22 {strides = array<i32>} : memref<704x36xbf16, #tpu.memory_space<vmem>>, vector<704x4xbf16>,
    %c36 = arith.constant 36 : index
    %c0_21 = arith.constant 0 : index
    %24 = vector.load %arg7[%c36, %c0_21] : memref<768x4xf32, #tpu.memory_space<vmem>>, vector<704x4xf32>
    %25 = arith.truncf %24 : vector<704x4xf32> to vector<704x4xbf16>
    %c0_22 = arith.constant 0 : index
    %c24 = arith.constant 24 : index
    %26 = vector.load %arg8[%c0_22, %c24] : memref<704x36xbf16, #tpu.memory_space<vmem>>, vector<704x4xbf16>
    tpu.vector_store %arg8[%c0_22, %c24], %25 {strides = array<i32>} : memref<704x36xbf16, #tpu.memory_space<vmem>>, vector<704x4xbf16>,
    %c37 = arith.constant 37 : index
    %c0_23 = arith.constant 0 : index
    %27 = vector.load %arg7[%c37, %c0_23] : memref<768x4xf32, #tpu.memory_space<vmem>>, vector<704x4xf32>
    %28 = arith.truncf %27 : vector<704x4xf32> to vector<704x4xbf16>
    %c0_24 = arith.constant 0 : index
    %c28 = arith.constant 28 : index
    %29 = vector.load %arg8[%c0_24, %c28] : memref<704x36xbf16, #tpu.memory_space<vmem>>, vector<704x4xbf16>
    tpu.vector_store %arg8[%c0_24, %c28], %28 {strides = array<i32>} : memref<704x36xbf16, #tpu.memory_space<vmem>>, vector<704x4xbf16>,
    %c38 = arith.constant 38 : index
    %c0_25 = arith.constant 0 : index
    %30 = vector.load %arg7[%c38, %c0_25] : memref<768x4xf32, #tpu.memory_space<vmem>>, vector<704x4xf32>
    %31 = arith.truncf %30 : vector<704x4xf32> to vector<704x4xbf16>
    %c0_26 = arith.constant 0 : index
    %c32 = arith.constant 32 : index
    %32 = vector.load %arg8[%c0_26, %c32] : memref<704x36xbf16, #tpu.memory_space<vmem>>, vector<704x4xbf16>
    tpu.vector_store %arg8[%c0_26, %c32], %31 {strides = array<i32>} : memref<704x36xbf16, #tpu.memory_space<vmem>>, vector<704x4xbf16>,
    %c0_27 = arith.constant 0 : index
    %c0_28 = arith.constant 0 : index
    %33 = vector.load %arg8[%c0_27, %c0_28] : memref<704x36xbf16, #tpu.memory_space<vmem>>, vector<704x36xbf16>
    %c0_29 = arith.constant 0 : index
    %c0_30 = arith.constant 0 : index
    %34 = vector.load %arg3[%c0_29, %c0_30] : memref<36x128xbf16, #tpu.memory_space<vmem>>, vector<36x128xbf16>
    %cst = arith.constant dense<0.000000e+00> : vector<704x128xf32>
    %35 = tpu.matmul %33, %34, %cst {dimension_numbers = #tpu.dot_dimension_numbers<[1], [0], [0], [1], [0, 0, 1, 1], [], []>} : vector<704x36xbf16>, vector<36x128xbf16>, vector<704x128xf32> -> vector<704x128xf32>
    %c0_31 = arith.constant 0 : index
    %c0_32 = arith.constant 0 : index
    %36 = vector.load %arg4[%c0_31, %c0_32] : memref<1x128xf32, #tpu.memory_space<vmem>>, vector<1x128xf32>
    %37 = vector.broadcast %36 : vector<1x128xf32> to vector<704x128xf32>
    %38 = arith.mulf %35, %37 : vector<704x128xf32>
    %c0_33 = arith.constant 0 : index
    %c0_34 = arith.constant 0 : index
    %39 = vector.load %arg5[%c0_33, %c0_34] : memref<1x128xf32, #tpu.memory_space<vmem>>, vector<1x128xf32>
    %40 = vector.broadcast %39 : vector<1x128xf32> to vector<704x128xf32>
    %41 = arith.addf %38, %40 : vector<704x128xf32>
    %c0_35 = arith.constant 0 : index
    %c0_36 = arith.constant 0 : index
    %42 = vector.load %arg6[%c0_35, %c0_36] : memref<704x128xf32, #tpu.memory_space<vmem>>, vector<704x128xf32>
    tpu.vector_store %arg6[%c0_35, %c0_36], %41 {strides = array<i32>} : memref<704x128xf32, #tpu.memory_space<vmem>>, vector<704x128xf32>,
    return
  }
  func.func @transform_0(%arg0: i32) -> (i32, i32) {
    %c0_i32 = arith.constant 0 : i32
    %c0_i32_0 = arith.constant 0 : i32
    return %arg0, %c0_i32 : i32, i32
  }
  func.func @transform_1(%arg0: i32) -> (i32, i32) {
    %c1_i32 = arith.constant 1 : i32
    %0 = arith.addi %arg0, %c1_i32 : i32
    %c11_i32 = arith.constant 11 : i32
    %1 = arith.muli %0, %c11_i32 : i32
    %c0_i32 = arith.constant 0 : i32
    %c0_i32_0 = arith.constant 0 : i32
    return %1, %c0_i32 : i32, i32
  }
  func.func @transform_2(%arg0: i32) -> (i32, i32) {
    %c0_i32 = arith.constant 0 : i32
    %c0_i32_0 = arith.constant 0 : i32
    %c0_i32_1 = arith.constant 0 : i32
    return %c0_i32, %c0_i32_0 : i32, i32
  }
  func.func @transform_3(%arg0: i32) -> (i32, i32) {
    %c0_i32 = arith.constant 0 : i32
    %c0_i32_0 = arith.constant 0 : i32
    %c0_i32_1 = arith.constant 0 : i32
    return %c0_i32, %c0_i32_0 : i32, i32
  }
  func.func @transform_4(%arg0: i32) -> (i32, i32) {
    %c0_i32 = arith.constant 0 : i32
    %c0_i32_0 = arith.constant 0 : i32
    %c0_i32_1 = arith.constant 0 : i32
    return %c0_i32, %c0_i32_0 : i32, i32
  }
  func.func @transform_5(%arg0: i32) -> (i32, i32) {
    %c0_i32 = arith.constant 0 : i32
    %c0_i32_0 = arith.constant 0 : i32
    return %arg0, %c0_i32 : i32, i32
  }
}

</mosaic_0001>

<llo_original>
// kernel: conv2d_batchnorm_3x3.3
$region0: #{conv2d_batchnorm_3x3.3}
  #allocation0 [shape = 'u32[]', space=smem, size = 0x4, offset = 0x4, fixed_abs, tag = 'smem constant byte address 0x4 - core index']
  #allocation1 [shape = 'u32[144,128]{1,0:T(1,128)}', space=vmem, size = 0x12000, scoped, tag = 'internal scratch']
  #allocation2 [shape = 'f32[768,4]{1,0:T(8,128)}', space=vmem, size = 0x60000, scoped, tag = 'scratch operand']
  #allocation3 [shape = 'bf16[704,36]{1,0:T(16,128)(2,1)}', space=vmem, size = 0x2c000, scoped, tag = 'scratch operand']
  %s0 = inlined_call_operand.vmem [shape: bf16[1408,5], index: 0, kind: input, shape index: {}, may-alias: {0,1}]
  %s1 = inlined_call_operand.vmem [shape: bf16[1408,5], index: 1, kind: input, shape index: {}, may-alias: {0,1}]
  %s2 = inlined_call_operand.vmem [shape: bf16[36,128], index: 2, kind: input, shape index: {}]
  %s3 = inlined_call_operand.vmem [shape: f32[1,128], index: 3, kind: input, shape index: {}]
  %s4 = inlined_call_operand.vmem [shape: f32[1,128], index: 4, kind: input, shape index: {}]
  %s5 = inlined_call_operand.vmem [shape: f32[704,128], index: 5, kind: output, shape index: {}]
  %s6 = sld [smem:[#allocation0]]
  $region30: #{conv2d_batchnorm_3x3.3} parent=0
    _
  %s8 = ssub.s32 1, %s6
  %s9 = scalar_select 0, %s8, %s6
  // Predicated region
  $region2: #{conv2d_batchnorm_3x3.3} parent=0 // pred_check
    _
  $region3: #{conv2d_batchnorm_3x3.3} parent=0 // pred_check_branch
    %11 = sbr.rel (0) target = $region5
  $region4: #{conv2d_batchnorm_3x3.3} parent=0 // pred_region
    _
  $region5: #{conv2d_batchnorm_3x3.3} parent=0 // pred_fallthru
    _
  // Predicated region
  $region6: #{conv2d_batchnorm_3x3.3} parent=0 // pred_check
    _
  $region7: #{conv2d_batchnorm_3x3.3} parent=0 // pred_check_branch
    %13 = sbr.rel (0) target = $region9
  $region8: #{conv2d_batchnorm_3x3.3} parent=0 // pred_region
    %s14 = sadd.s32 0, 1
    %s15 = smul.u32 %s14, 11
    %s16 = smul.u32 8, %s15
    %p17 = scmp.lt.s32.totalorder %s16, 175
    %s18 = scalar_select %p17, %s16, 175
    %s19 = smul.addr %s18, 4
    %s20 = scalar_lea.vmem %s1, %s19
    %s21 = sadd.s32 0, 1
    %s22 = smul.u32 %s21, 11
    %s23 = smul.u32 8, %s22
  $region9: #{conv2d_batchnorm_3x3.3} parent=0 // pred_fallthru
    _
  // Predicated region
  $region10: #{conv2d_batchnorm_3x3.3} parent=0 // pred_check
    _
  $region11: #{conv2d_batchnorm_3x3.3} parent=0 // pred_check_branch
    %25 = sbr.rel (0) target = $region13
  $region12: #{conv2d_batchnorm_3x3.3} parent=0 // pred_region
    _
  $region13: #{conv2d_batchnorm_3x3.3} parent=0 // pred_fallthru
    _
  // Predicated region
  $region14: #{conv2d_batchnorm_3x3.3} parent=0 // pred_check
    _
  $region15: #{conv2d_batchnorm_3x3.3} parent=0 // pred_check_branch
    %27 = sbr.rel (0) target = $region17
  $region16: #{conv2d_batchnorm_3x3.3} parent=0 // pred_region
    _
  $region17: #{conv2d_batchnorm_3x3.3} parent=0 // pred_fallthru
    _
  // Predicated region
  $region18: #{conv2d_batchnorm_3x3.3} parent=0 // pred_check
    _
  $region19: #{conv2d_batchnorm_3x3.3} parent=0 // pred_check_branch
    %29 = sbr.rel (0) target = $region21
  $region20: #{conv2d_batchnorm_3x3.3} parent=0 // pred_region
    _
  $region21: #{conv2d_batchnorm_3x3.3} parent=0 // pred_fallthru
    _
  %s30 = sadd.s32 0, 1
  %s31 = smul.u32 %s30, 11
  %s32 = smul.u32 8, %s31
  %p33 = scmp.lt.s32.totalorder %s32, 175
  %s34 = scalar_select %p33, %s32, 175
  %s35 = smul.addr %s34, 4
  %s36 = scalar_lea.vmem %s1, %s35
  %s37 = sadd.s32 0, 1
  %s38 = smul.u32 %s37, 11
  %s39 = smul.u32 8, %s38
  %p40 = scmp.lt.s32.totalorder %s39, 175
  %s41 = scalar_select %p40, %s39, 175
  %s42 = smul.addr %s41, 4
  %s43 = scalar_lea.vmem %s1, %s42
  %s44 = sadd.s32 0, 1
  %s45 = smul.u32 %s44, 11
  %s46 = smul.u32 8, %s45
  %v48 = vld [vmem:[%s0] sm:$0xf]
  %v49 = vld [vmem:[%s0 + $0x4] sm:$0xf]
  %v50 = vld [vmem:[%s0 + $0x8] sm:$0xf]
  %v51 = vld [vmem:[%s0 + $0xc] sm:$0xf]
  %v52 = vld [vmem:[%s0 + $0x10] sm:$0xf]
  %v53 = vld [vmem:[%s0 + $0x14] sm:$0xf]
  %v54 = vld [vmem:[%s0 + $0x18] sm:$0xf]
  %v55 = vld [vmem:[%s0 + $0x1c] sm:$0xf]
  %v56 = vld [vmem:[%s0 + $0x20] sm:$0xf]
  %v57 = vld [vmem:[%s0 + $0x24] sm:$0xf]
  %v58 = vld [vmem:[%s0 + $0x28] sm:$0xf]
  %v59 = vld [vmem:[%s0 + $0x2c] sm:$0xf]
  %v60 = vld [vmem:[%s0 + $0x30] sm:$0xf]
  %v61 = vld [vmem:[%s0 + $0x34] sm:$0xf]
  %v62 = vld [vmem:[%s0 + $0x38] sm:$0xf]
  %v63 = vld [vmem:[%s0 + $0x3c] sm:$0xf]
  %v64 = vld [vmem:[%s0 + $0x40] sm:$0xf]
  %v65 = vld [vmem:[%s0 + $0x44] sm:$0xf]
  %v66 = vld [vmem:[%s0 + $0x48] sm:$0xf]
  %v67 = vld [vmem:[%s0 + $0x4c] sm:$0xf]
  %v68 = vld [vmem:[%s0 + $0x50] sm:$0xf]
  %v69 = vld [vmem:[%s0 + $0x54] sm:$0xf]
  %v70 = vld [vmem:[%s0 + $0x58] sm:$0xf]
  %v71 = vld [vmem:[%s0 + $0x5c] sm:$0xf]
  %v72 = vld [vmem:[%s0 + $0x60] sm:$0xf]
  %v73 = vld [vmem:[%s0 + $0x64] sm:$0xf]
  %v74 = vld [vmem:[%s0 + $0x68] sm:$0xf]
  %v75 = vld [vmem:[%s0 + $0x6c] sm:$0xf]
  %v76 = vld [vmem:[%s0 + $0x70] sm:$0xf]
  %v77 = vld [vmem:[%s0 + $0x74] sm:$0xf]
  %v78 = vld [vmem:[%s0 + $0x78] sm:$0xf]
  %v79 = vld [vmem:[%s0 + $0x7c] sm:$0xf]
  %v80 = vld [vmem:[%s0 + $0x80] sm:$0xf]
  %v81 = vld [vmem:[%s0 + $0x84] sm:$0xf]
  %v82 = vld [vmem:[%s0 + $0x88] sm:$0xf]
  %v83 = vld [vmem:[%s0 + $0x8c] sm:$0xf]
  %v84 = vld [vmem:[%s0 + $0x90] sm:$0xf]
  %v85 = vld [vmem:[%s0 + $0x94] sm:$0xf]
  %v86 = vld [vmem:[%s0 + $0x98] sm:$0xf]
  %v87 = vld [vmem:[%s0 + $0x9c] sm:$0xf]
  %v88 = vld [vmem:[%s0 + $0xa0] sm:$0xf]
  %v89 = vld [vmem:[%s0 + $0xa4] sm:$0xf]
  %v90 = vld [vmem:[%s0 + $0xa8] sm:$0xf]
  %v91 = vld [vmem:[%s0 + $0xac] sm:$0xf]
  %v92 = vld [vmem:[%s0 + $0xb0] sm:$0xf]
  %v93 = vld [vmem:[%s0 + $0xb4] sm:$0xf]
  %v94 = vld [vmem:[%s0 + $0xb8] sm:$0xf]
  %v95 = vld [vmem:[%s0 + $0xbc] sm:$0xf]
  %v96 = vld [vmem:[%s0 + $0xc0] sm:$0xf]
  %v97 = vld [vmem:[%s0 + $0xc4] sm:$0xf]
  %v98 = vld [vmem:[%s0 + $0xc8] sm:$0xf]
  %v99 = vld [vmem:[%s0 + $0xcc] sm:$0xf]
  %v100 = vld [vmem:[%s0 + $0xd0] sm:$0xf]
  %v101 = vld [vmem:[%s0 + $0xd4] sm:$0xf]
  %v102 = vld [vmem:[%s0 + $0xd8] sm:$0xf]
  %v103 = vld [vmem:[%s0 + $0xdc] sm:$0xf]
  %v104 = vld [vmem:[%s0 + $0xe0] sm:$0xf]
  %v105 = vld [vmem:[%s0 + $0xe4] sm:$0xf]
  %v106 = vld [vmem:[%s0 + $0xe8] sm:$0xf]
  %v107 = vld [vmem:[%s0 + $0xec] sm:$0xf]
  %v108 = vld [vmem:[%s0 + $0xf0] sm:$0xf]
  %v109 = vld [vmem:[%s0 + $0xf4] sm:$0xf]
  %v110 = vld [vmem:[%s0 + $0xf8] sm:$0xf]
  %v111 = vld [vmem:[%s0 + $0xfc] sm:$0xf]
  %v112 = vld [vmem:[%s0 + $0x100] sm:$0xf]
  %v113 = vld [vmem:[%s0 + $0x104] sm:$0xf]
  %v114 = vld [vmem:[%s0 + $0x108] sm:$0xf]
  %v115 = vld [vmem:[%s0 + $0x10c] sm:$0xf]
  %v116 = vld [vmem:[%s0 + $0x110] sm:$0xf]
  %v117 = vld [vmem:[%s0 + $0x114] sm:$0xf]
  %v118 = vld [vmem:[%s0 + $0x118] sm:$0xf]
  %v119 = vld [vmem:[%s0 + $0x11c] sm:$0xf]
  %v120 = vld [vmem:[%s0 + $0x120] sm:$0xf]
  %v121 = vld [vmem:[%s0 + $0x124] sm:$0xf]
  %v122 = vld [vmem:[%s0 + $0x128] sm:$0xf]
  %v123 = vld [vmem:[%s0 + $0x12c] sm:$0xf]
  %v124 = vld [vmem:[%s0 + $0x130] sm:$0xf]
  %v125 = vld [vmem:[%s0 + $0x134] sm:$0xf]
  %v126 = vld [vmem:[%s0 + $0x138] sm:$0xf]
  %v127 = vld [vmem:[%s0 + $0x13c] sm:$0xf]
  %v128 = vld [vmem:[%s0 + $0x140] sm:$0xf]
  %v129 = vld [vmem:[%s0 + $0x144] sm:$0xf]
  %v130 = vld [vmem:[%s0 + $0x148] sm:$0xf]
  %v131 = vld [vmem:[%s0 + $0x14c] sm:$0xf]
  %v132 = vld [vmem:[%s0 + $0x150] sm:$0xf]
  %v133 = vld [vmem:[%s0 + $0x154] sm:$0xf]
  %v134 = vld [vmem:[%s0 + $0x158] sm:$0xf]
  %v135 = vld [vmem:[%s0 + $0x15c] sm:$0xf]
  %v136 = vunpack.c.l.bf16 %v48
  %v137 = vunpack.c.l.bf16 %v49
  %v138 = vunpack.c.l.bf16 %v50
  %v139 = vunpack.c.l.bf16 %v51
  %v140 = vunpack.c.l.bf16 %v52
  %v141 = vunpack.c.l.bf16 %v53
  %v142 = vunpack.c.l.bf16 %v54
  %v143 = vunpack.c.l.bf16 %v55
  %v144 = vunpack.c.l.bf16 %v56
  %v145 = vunpack.c.l.bf16 %v57
  %v146 = vunpack.c.l.bf16 %v58
  %v147 = vunpack.c.l.bf16 %v59
  %v148 = vunpack.c.l.bf16 %v60
  %v149 = vunpack.c.l.bf16 %v61
  %v150 = vunpack.c.l.bf16 %v62
  %v151 = vunpack.c.l.bf16 %v63
  %v152 = vunpack.c.l.bf16 %v64
  %v153 = vunpack.c.l.bf16 %v65
  %v154 = vunpack.c.l.bf16 %v66
  %v155 = vunpack.c.l.bf16 %v67
  %v156 = vunpack.c.l.bf16 %v68
  %v157 = vunpack.c.l.bf16 %v69
  %v158 = vunpack.c.l.bf16 %v70
  %v159 = vunpack.c.l.bf16 %v71
  %v160 = vunpack.c.l.bf16 %v72
  %v161 = vunpack.c.l.bf16 %v73
  %v162 = vunpack.c.l.bf16 %v74
  %v163 = vunpack.c.l.bf16 %v75
  %v164 = vunpack.c.l.bf16 %v76
  %v165 = vunpack.c.l.bf16 %v77
  %v166 = vunpack.c.l.bf16 %v78
  %v167 = vunpack.c.l.bf16 %v79
  %v168 = vunpack.c.l.bf16 %v80
  %v169 = vunpack.c.l.bf16 %v81
  %v170 = vunpack.c.l.bf16 %v82
  %v171 = vunpack.c.l.bf16 %v83
  %v172 = vunpack.c.l.bf16 %v84
  %v173 = vunpack.c.l.bf16 %v85
  %v174 = vunpack.c.l.bf16 %v86
  %v175 = vunpack.c.l.bf16 %v87
  %v176 = vunpack.c.l.bf16 %v88
  %v177 = vunpack.c.l.bf16 %v89
  %v178 = vunpack.c.l.bf16 %v90
  %v179 = vunpack.c.l.bf16 %v91
  %v180 = vunpack.c.l.bf16 %v92
  %v181 = vunpack.c.l.bf16 %v93
  %v182 = vunpack.c.l.bf16 %v94
  %v183 = vunpack.c.l.bf16 %v95
  %v184 = vunpack.c.l.bf16 %v96
  %v185 = vunpack.c.l.bf16 %v97
  %v186 = vunpack.c.l.bf16 %v98
  %v187 = vunpack.c.l.bf16 %v99
  %v188 = vunpack.c.l.bf16 %v100
  %v189 = vunpack.c.l.bf16 %v101
  %v190 = vunpack.c.l.bf16 %v102
  %v191 = vunpack.c.l.bf16 %v103
  %v192 = vunpack.c.l.bf16 %v104
  %v193 = vunpack.c.l.bf16 %v105
  %v194 = vunpack.c.l.bf16 %v106
  %v195 = vunpack.c.l.bf16 %v107
  %v196 = vunpack.c.l.bf16 %v108
  %v197 = vunpack.c.l.bf16 %v109
  %v198 = vunpack.c.l.bf16 %v110
  %v199 = vunpack.c.l.bf16 %v111
  %v200 = vunpack.c.l.bf16 %v112
  %v201 = vunpack.c.l.bf16 %v113
  %v202 = vunpack.c.l.bf16 %v114
  %v203 = vunpack.c.l.bf16 %v115
  %v204 = vunpack.c.l.bf16 %v116
  %v205 = vunpack.c.l.bf16 %v117
  %v206 = vunpack.c.l.bf16 %v118
  %v207 = vunpack.c.l.bf16 %v119
  %v208 = vunpack.c.l.bf16 %v120
  %v209 = vunpack.c.l.bf16 %v121
  %v210 = vunpack.c.l.bf16 %v122
  %v211 = vunpack.c.l.bf16 %v123
  %v212 = vunpack.c.l.bf16 %v124
  %v213 = vunpack.c.l.bf16 %v125
  %v214 = vunpack.c.l.bf16 %v126
  %v215 = vunpack.c.l.bf16 %v127
  %v216 = vunpack.c.l.bf16 %v128
  %v217 = vunpack.c.l.bf16 %v129
  %v218 = vunpack.c.l.bf16 %v130
  %v219 = vunpack.c.l.bf16 %v131
  %v220 = vunpack.c.l.bf16 %v132
  %v221 = vunpack.c.l.bf16 %v133
  %v222 = vunpack.c.l.bf16 %v134
  %v223 = vunpack.c.l.bf16 %v135
  %vm224 = vcmask 31744
  %225 = vst.msk [vmem:[#allocation2] sm:$0xff] %vm224, %v136
  %226 = vst.msk [vmem:[#allocation2 + $0x8] sm:$0xff] %vm224, %v137
  %227 = vst.msk [vmem:[#allocation2 + $0x10] sm:$0xff] %vm224, %v138
  %228 = vst.msk [vmem:[#allocation2 + $0x18] sm:$0xff] %vm224, %v139
  %229 = vst.msk [vmem:[#allocation2 + $0x20] sm:$0xff] %vm224, %v140
  %230 = vst.msk [vmem:[#allocation2 + $0x28] sm:$0xff] %vm224, %v141
  %231 = vst.msk [vmem:[#allocation2 + $0x30] sm:$0xff] %vm224, %v142
  %232 = vst.msk [vmem:[#allocation2 + $0x38] sm:$0xff] %vm224, %v143
  %233 = vst.msk [vmem:[#allocation2 + $0x40] sm:$0xff] %vm224, %v144
  %234 = vst.msk [vmem:[#allocation2 + $0x48] sm:$0xff] %vm224, %v145
  %235 = vst.msk [vmem:[#allocation2 + $0x50] sm:$0xff] %vm224, %v146
  %236 = vst.msk [vmem:[#allocation2 + $0x58] sm:$0xff] %vm224, %v147
  %237 = vst.msk [vmem:[#allocation2 + $0x60] sm:$0xff] %vm224, %v148
  %238 = vst.msk [vmem:[#allocation2 + $0x68] sm:$0xff] %vm224, %v149
  %239 = vst.msk [vmem:[#allocation2 + $0x70] sm:$0xff] %vm224, %v150
  %240 = vst.msk [vmem:[#allocation2 + $0x78] sm:$0xff] %vm224, %v151
  %241 = vst.msk [vmem:[#allocation2 + $0x80] sm:$0xff] %vm224, %v152
  %242 = vst.msk [vmem:[#allocation2 + $0x88] sm:$0xff] %vm224, %v153
  %243 = vst.msk [vmem:[#allocation2 + $0x90] sm:$0xff] %vm224, %v154
  %244 = vst.msk [vmem:[#allocation2 + $0x98] sm:$0xff] %vm224, %v155
  %245 = vst.msk [vmem:[#allocation2 + $0xa0] sm:$0xff] %vm224, %v156
  %246 = vst.msk [vmem:[#allocation2 + $0xa8] sm:$0xff] %vm224, %v157
  %247 = vst.msk [vmem:[#allocation2 + $0xb0] sm:$0xff] %vm224, %v158
  %248 = vst.msk [vmem:[#allocation2 + $0xb8] sm:$0xff] %vm224, %v159
  %249 = vst.msk [vmem:[#allocation2 + $0xc0] sm:$0xff] %vm224, %v160
  %250 = vst.msk [vmem:[#allocation2 + $0xc8] sm:$0xff] %vm224, %v161
  %251 = vst.msk [vmem:[#allocation2 + $0xd0] sm:$0xff] %vm224, %v162
  %252 = vst.msk [vmem:[#allocation2 + $0xd8] sm:$0xff] %vm224, %v163
  %253 = vst.msk [vmem:[#allocation2 + $0xe0] sm:$0xff] %vm224, %v164
  %254 = vst.msk [vmem:[#allocation2 + $0xe8] sm:$0xff] %vm224, %v165
  %255 = vst.msk [vmem:[#allocation2 + $0xf0] sm:$0xff] %vm224, %v166
  %256 = vst.msk [vmem:[#allocation2 + $0xf8] sm:$0xff] %vm224, %v167
  %257 = vst.msk [vmem:[#allocation2 + $0x100] sm:$0xff] %vm224, %v168
  %258 = vst.msk [vmem:[#allocation2 + $0x108] sm:$0xff] %vm224, %v169
  %259 = vst.msk [vmem:[#allocation2 + $0x110] sm:$0xff] %vm224, %v170
  %260 = vst.msk [vmem:[#allocation2 + $0x118] sm:$0xff] %vm224, %v171
  %261 = vst.msk [vmem:[#allocation2 + $0x120] sm:$0xff] %vm224, %v172
  %262 = vst.msk [vmem:[#allocation2 + $0x128] sm:$0xff] %vm224, %v173
  %263 = vst.msk [vmem:[#allocation2 + $0x130] sm:$0xff] %vm224, %v174
  %264 = vst.msk [vmem:[#allocation2 + $0x138] sm:$0xff] %vm224, %v175
  %265 = vst.msk [vmem:[#allocation2 + $0x140] sm:$0xff] %vm224, %v176
  %266 = vst.msk [vmem:[#allocation2 + $0x148] sm:$0xff] %vm224, %v177
  %267 = vst.msk [vmem:[#allocation2 + $0x150] sm:$0xff] %vm224, %v178
  %268 = vst.msk [vmem:[#allocation2 + $0x158] sm:$0xff] %vm224, %v179
  %269 = vst.msk [vmem:[#allocation2 + $0x160] sm:$0xff] %vm224, %v180
  %270 = vst.msk [vmem:[#allocation2 + $0x168] sm:$0xff] %vm224, %v181
  %271 = vst.msk [vmem:[#allocation2 + $0x170] sm:$0xff] %vm224, %v182
  %272 = vst.msk [vmem:[#allocation2 + $0x178] sm:$0xff] %vm224, %v183
  %273 = vst.msk [vmem:[#allocation2 + $0x180] sm:$0xff] %vm224, %v184
  %274 = vst.msk [vmem:[#allocation2 + $0x188] sm:$0xff] %vm224, %v185
  %275 = vst.msk [vmem:[#allocation2 + $0x190] sm:$0xff] %vm224, %v186
  %276 = vst.msk [vmem:[#allocation2 + $0x198] sm:$0xff] %vm224, %v187
  %277 = vst.msk [vmem:[#allocation2 + $0x1a0] sm:$0xff] %vm224, %v188
  %278 = vst.msk [vmem:[#allocation2 + $0x1a8] sm:$0xff] %vm224, %v189
  %279 = vst.msk [vmem:[#allocation2 + $0x1b0] sm:$0xff] %vm224, %v190
  %280 = vst.msk [vmem:[#allocation2 + $0x1b8] sm:$0xff] %vm224, %v191
  %281 = vst.msk [vmem:[#allocation2 + $0x1c0] sm:$0xff] %vm224, %v192
  %282 = vst.msk [vmem:[#allocation2 + $0x1c8] sm:$0xff] %vm224, %v193
  %283 = vst.msk [vmem:[#allocation2 + $0x1d0] sm:$0xff] %vm224, %v194
  %284 = vst.msk [vmem:[#allocation2 + $0x1d8] sm:$0xff] %vm224, %v195
  %285 = vst.msk [vmem:[#allocation2 + $0x1e0] sm:$0xff] %vm224, %v196
  %286 = vst.msk [vmem:[#allocation2 + $0x1e8] sm:$0xff] %vm224, %v197
  %287 = vst.msk [vmem:[#allocation2 + $0x1f0] sm:$0xff] %vm224, %v198
  %288 = vst.msk [vmem:[#allocation2 + $0x1f8] sm:$0xff] %vm224, %v199
  %289 = vst.msk [vmem:[#allocation2 + $0x200] sm:$0xff] %vm224, %v200
  %290 = vst.msk [vmem:[#allocation2 + $0x208] sm:$0xff] %vm224, %v201
  %291 = vst.msk [vmem:[#allocation2 + $0x210] sm:$0xff] %vm224, %v202
  %292 = vst.msk [vmem:[#allocation2 + $0x218] sm:$0xff] %vm224, %v203
  %293 = vst.msk [vmem:[#allocation2 + $0x220] sm:$0xff] %vm224, %v204
  %294 = vst.msk [vmem:[#allocation2 + $0x228] sm:$0xff] %vm224, %v205
  %295 = vst.msk [vmem:[#allocation2 + $0x230] sm:$0xff] %vm224, %v206
  %296 = vst.msk [vmem:[#allocation2 + $0x238] sm:$0xff] %vm224, %v207
  %297 = vst.msk [vmem:[#allocation2 + $0x240] sm:$0xff] %vm224, %v208
  %298 = vst.msk [vmem:[#allocation2 + $0x248] sm:$0xff] %vm224, %v209
  %299 = vst.msk [vmem:[#allocation2 + $0x250] sm:$0xff] %vm224, %v210
  %300 = vst.msk [vmem:[#allocation2 + $0x258] sm:$0xff] %vm224, %v211
  %301 = vst.msk [vmem:[#allocation2 + $0x260] sm:$0xff] %vm224, %v212
  %302 = vst.msk [vmem:[#allocation2 + $0x268] sm:$0xff] %vm224, %v213
  %303 = vst.msk [vmem:[#allocation2 + $0x270] sm:$0xff] %vm224, %v214
  %304 = vst.msk [vmem:[#allocation2 + $0x278] sm:$0xff] %vm224, %v215
  %305 = vst.msk [vmem:[#allocation2 + $0x280] sm:$0xff] %vm224, %v216
  %306 = vst.msk [vmem:[#allocation2 + $0x288] sm:$0xff] %vm224, %v217
  %307 = vst.msk [vmem:[#allocation2 + $0x290] sm:$0xff] %vm224, %v218
  %308 = vst.msk [vmem:[#allocation2 + $0x298] sm:$0xff] %vm224, %v219
  %309 = vst.msk [vmem:[#allocation2 + $0x2a0] sm:$0xff] %vm224, %v220
  %310 = vst.msk [vmem:[#allocation2 + $0x2a8] sm:$0xff] %vm224, %v221
  %311 = vst.msk [vmem:[#allocation2 + $0x2b0] sm:$0xff] %vm224, %v222
  %312 = vst.msk [vmem:[#allocation2 + $0x2b8] sm:$0xff] %vm224, %v223
  %v313 = vld [vmem:[%s43] sm:$0xf]
  %v314 = vld [vmem:[%s43 + $0x4] sm:$0xf]
  %v315 = vld [vmem:[%s43 + $0x8] sm:$0xf]
  %v316 = vld [vmem:[%s43 + $0xc] sm:$0xf]
  %v317 = vld [vmem:[%s43 + $0x10] sm:$0xf]
  %v318 = vld [vmem:[%s43 + $0x14] sm:$0xf]
  %v319 = vld [vmem:[%s43 + $0x18] sm:$0xf]
  %v320 = vld [vmem:[%s43 + $0x1c] sm:$0xf]
  %v321 = vunpack.c.l.bf16 %v313
  %v322 = vunpack.c.l.bf16 %v314
  %v323 = vunpack.c.l.bf16 %v315
  %v324 = vunpack.c.l.bf16 %v316
  %v325 = vunpack.c.l.bf16 %v317
  %v326 = vunpack.c.l.bf16 %v318
  %v327 = vunpack.c.l.bf16 %v319
  %v328 = vunpack.c.l.bf16 %v320
  %329 = vst.msk [vmem:[#allocation2 + $0x2c0] sm:$0xff] %vm224, %v321
  %330 = vst.msk [vmem:[#allocation2 + $0x2c8] sm:$0xff] %vm224, %v322
  %331 = vst.msk [vmem:[#allocation2 + $0x2d0] sm:$0xff] %vm224, %v323
  %332 = vst.msk [vmem:[#allocation2 + $0x2d8] sm:$0xff] %vm224, %v324
  %333 = vst.msk [vmem:[#allocation2 + $0x2e0] sm:$0xff] %vm224, %v325
  %334 = vst.msk [vmem:[#allocation2 + $0x2e8] sm:$0xff] %vm224, %v326
  %335 = vst.msk [vmem:[#allocation2 + $0x2f0] sm:$0xff] %vm224, %v327
  %336 = vst.msk [vmem:[#allocation2 + $0x2f8] sm:$0xff] %vm224, %v328
  %v337 = vld [vmem:[#allocation2] sm:$0xff]
  %v338 = vld [vmem:[#allocation2 + $0x8] sm:$0xff]
  %v339 = vld [vmem:[#allocation2 + $0x10] sm:$0xff]
  %v340 = vld [vmem:[#allocation2 + $0x18] sm:$0xff]
  %v341 = vld [vmem:[#allocation2 + $0x20] sm:$0xff]
  %v342 = vld [vmem:[#allocation2 + $0x28] sm:$0xff]
  %v343 = vld [vmem:[#allocation2 + $0x30] sm:$0xff]
  %v344 = vld [vmem:[#allocation2 + $0x38] sm:$0xff]
  %v345 = vld [vmem:[#allocation2 + $0x40] sm:$0xff]
  %v346 = vld [vmem:[#allocation2 + $0x48] sm:$0xff]
  %v347 = vld [vmem:[#allocation2 + $0x50] sm:$0xff]
  %v348 = vld [vmem:[#allocation2 + $0x58] sm:$0xff]
  %v349 = vld [vmem:[#allocation2 + $0x60] sm:$0xff]
  %v350 = vld [vmem:[#allocation2 + $0x68] sm:$0xff]
  %v351 = vld [vmem:[#allocation2 + $0x70] sm:$0xff]
  %v352 = vld [vmem:[#allocation2 + $0x78] sm:$0xff]
  %v353 = vld [vmem:[#allocation2 + $0x80] sm:$0xff]
  %v354 = vld [vmem:[#allocation2 + $0x88] sm:$0xff]
  %v355 = vld [vmem:[#allocation2 + $0x90] sm:$0xff]
  %v356 = vld [vmem:[#allocation2 + $0x98] sm:$0xff]
  %v357 = vld [vmem:[#allocation2 + $0xa0] sm:$0xff]
  %v358 = vld [vmem:[#allocation2 + $0xa8] sm:$0xff]
  %v359 = vld [vmem:[#allocation2 + $0xb0] sm:$0xff]
  %v360 = vld [vmem:[#allocation2 + $0xb8] sm:$0xff]
  %v361 = vld [vmem:[#allocation2 + $0xc0] sm:$0xff]
  %v362 = vld [vmem:[#allocation2 + $0xc8] sm:$0xff]
  %v363 = vld [vmem:[#allocation2 + $0xd0] sm:$0xff]
  %v364 = vld [vmem:[#allocation2 + $0xd8] sm:$0xff]
  %v365 = vld [vmem:[#allocation2 + $0xe0] sm:$0xff]
  %v366 = vld [vmem:[#allocation2 + $0xe8] sm:$0xff]
  %v367 = vld [vmem:[#allocation2 + $0xf0] sm:$0xff]
  %v368 = vld [vmem:[#allocation2 + $0xf8] sm:$0xff]
  %v369 = vld [vmem:[#allocation2 + $0x100] sm:$0xff]
  %v370 = vld [vmem:[#allocation2 + $0x108] sm:$0xff]
  %v371 = vld [vmem:[#allocation2 + $0x110] sm:$0xff]
  %v372 = vld [vmem:[#allocation2 + $0x118] sm:$0xff]
  %v373 = vld [vmem:[#allocation2 + $0x120] sm:$0xff]
  %v374 = vld [vmem:[#allocation2 + $0x128] sm:$0xff]
  %v375 = vld [vmem:[#allocation2 + $0x130] sm:$0xff]
  %v376 = vld [vmem:[#allocation2 + $0x138] sm:$0xff]
  %v377 = vld [vmem:[#allocation2 + $0x140] sm:$0xff]
  %v378 = vld [vmem:[#allocation2 + $0x148] sm:$0xff]
  %v379 = vld [vmem:[#allocation2 + $0x150] sm:$0xff]
  %v380 = vld [vmem:[#allocation2 + $0x158] sm:$0xff]
  %v381 = vld [vmem:[#allocation2 + $0x160] sm:$0xff]
  %v382 = vld [vmem:[#allocation2 + $0x168] sm:$0xff]
  %v383 = vld [vmem:[#allocation2 + $0x170] sm:$0xff]
  %v384 = vld [vmem:[#allocation2 + $0x178] sm:$0xff]
  %v385 = vld [vmem:[#allocation2 + $0x180] sm:$0xff]
  %v386 = vld [vmem:[#allocation2 + $0x188] sm:$0xff]
  %v387 = vld [vmem:[#allocation2 + $0x190] sm:$0xff]
  %v388 = vld [vmem:[#allocation2 + $0x198] sm:$0xff]
  %v389 = vld [vmem:[#allocation2 + $0x1a0] sm:$0xff]
  %v390 = vld [vmem:[#allocation2 + $0x1a8] sm:$0xff]
  %v391 = vld [vmem:[#allocation2 + $0x1b0] sm:$0xff]
  %v392 = vld [vmem:[#allocation2 + $0x1b8] sm:$0xff]
  %v393 = vld [vmem:[#allocation2 + $0x1c0] sm:$0xff]
  %v394 = vld [vmem:[#allocation2 + $0x1c8] sm:$0xff]
  %v395 = vld [vmem:[#allocation2 + $0x1d0] sm:$0xff]
  %v396 = vld [vmem:[#allocation2 + $0x1d8] sm:$0xff]
  %v397 = vld [vmem:[#allocation2 + $0x1e0] sm:$0xff]
  %v398 = vld [vmem:[#allocation2 + $0x1e8] sm:$0xff]
  %v399 = vld [vmem:[#allocation2 + $0x1f0] sm:$0xff]
  %v400 = vld [vmem:[#allocation2 + $0x1f8] sm:$0xff]
  %v401 = vld [vmem:[#allocation2 + $0x200] sm:$0xff]
  %v402 = vld [vmem:[#allocation2 + $0x208] sm:$0xff]
  %v403 = vld [vmem:[#allocation2 + $0x210] sm:$0xff]
  %v404 = vld [vmem:[#allocation2 + $0x218] sm:$0xff]
  %v405 = vld [vmem:[#allocation2 + $0x220] sm:$0xff]
  %v406 = vld [vmem:[#allocation2 + $0x228] sm:$0xff]
  %v407 = vld [vmem:[#allocation2 + $0x230] sm:$0xff]
  %v408 = vld [vmem:[#allocation2 + $0x238] sm:$0xff]
  %v409 = vld [vmem:[#allocation2 + $0x240] sm:$0xff]
  %v410 = vld [vmem:[#allocation2 + $0x248] sm:$0xff]
  %v411 = vld [vmem:[#allocation2 + $0x250] sm:$0xff]
  %v412 = vld [vmem:[#allocation2 + $0x258] sm:$0xff]
  %v413 = vld [vmem:[#allocation2 + $0x260] sm:$0xff]
  %v414 = vld [vmem:[#allocation2 + $0x268] sm:$0xff]
  %v415 = vld [vmem:[#allocation2 + $0x270] sm:$0xff]
  %v416 = vld [vmem:[#allocation2 + $0x278] sm:$0xff]
  %v417 = vld [vmem:[#allocation2 + $0x280] sm:$0xff]
  %v418 = vld [vmem:[#allocation2 + $0x288] sm:$0xff]
  %v419 = vld [vmem:[#allocation2 + $0x290] sm:$0xff]
  %v420 = vld [vmem:[#allocation2 + $0x298] sm:$0xff]
  %v421 = vld [vmem:[#allocation2 + $0x2a0] sm:$0xff]
  %v422 = vld [vmem:[#allocation2 + $0x2a8] sm:$0xff]
  %v423 = vld [vmem:[#allocation2 + $0x2b0] sm:$0xff]
  %v424 = vld [vmem:[#allocation2 + $0x2b8] sm:$0xff]
  %v425 = vpack.c.bf16 %v338, %v337
  %v426 = vpack.c.bf16 %v340, %v339
  %v427 = vpack.c.bf16 %v342, %v341
  %v428 = vpack.c.bf16 %v344, %v343
  %v429 = vpack.c.bf16 %v346, %v345
  %v430 = vpack.c.bf16 %v348, %v347
  %v431 = vpack.c.bf16 %v350, %v349
  %v432 = vpack.c.bf16 %v352, %v351
  %v433 = vpack.c.bf16 %v354, %v353
  %v434 = vpack.c.bf16 %v356, %v355
  %v435 = vpack.c.bf16 %v358, %v357
  %v436 = vpack.c.bf16 %v360, %v359
  %v437 = vpack.c.bf16 %v362, %v361
  %v438 = vpack.c.bf16 %v364, %v363
  %v439 = vpack.c.bf16 %v366, %v365
  %v440 = vpack.c.bf16 %v368, %v367
  %v441 = vpack.c.bf16 %v370, %v369
  %v442 = vpack.c.bf16 %v372, %v371
  %v443 = vpack.c.bf16 %v374, %v373
  %v444 = vpack.c.bf16 %v376, %v375
  %v445 = vpack.c.bf16 %v378, %v377
  %v446 = vpack.c.bf16 %v380, %v379
  %v447 = vpack.c.bf16 %v382, %v381
  %v448 = vpack.c.bf16 %v384, %v383
  %v449 = vpack.c.bf16 %v386, %v385
  %v450 = vpack.c.bf16 %v388, %v387
  %v451 = vpack.c.bf16 %v390, %v389
  %v452 = vpack.c.bf16 %v392, %v391
  %v453 = vpack.c.bf16 %v394, %v393
  %v454 = vpack.c.bf16 %v396, %v395
  %v455 = vpack.c.bf16 %v398, %v397
  %v456 = vpack.c.bf16 %v400, %v399
  %v457 = vpack.c.bf16 %v402, %v401
  %v458 = vpack.c.bf16 %v404, %v403
  %v459 = vpack.c.bf16 %v406, %v405
  %v460 = vpack.c.bf16 %v408, %v407
  %v461 = vpack.c.bf16 %v410, %v409
  %v462 = vpack.c.bf16 %v412, %v411
  %v463 = vpack.c.bf16 %v414, %v413
  %v464 = vpack.c.bf16 %v416, %v415
  %v465 = vpack.c.bf16 %v418, %v417
  %v466 = vpack.c.bf16 %v420, %v419
  %v467 = vpack.c.bf16 %v422, %v421
  %v468 = vpack.c.bf16 %v424, %v423
  %469 = vst.msk [vmem:[#allocation3] sm:$0xff] %vm224, %v425
  %470 = vst.msk [vmem:[#allocation3 + $0x8] sm:$0xff] %vm224, %v426
  %471 = vst.msk [vmem:[#allocation3 + $0x10] sm:$0xff] %vm224, %v427
  %472 = vst.msk [vmem:[#allocation3 + $0x18] sm:$0xff] %vm224, %v428
  %473 = vst.msk [vmem:[#allocation3 + $0x20] sm:$0xff] %vm224, %v429
  %474 = vst.msk [vmem:[#allocation3 + $0x28] sm:$0xff] %vm224, %v430
  %475 = vst.msk [vmem:[#allocation3 + $0x30] sm:$0xff] %vm224, %v431
  %476 = vst.msk [vmem:[#allocation3 + $0x38] sm:$0xff] %vm224, %v432
  %477 = vst.msk [vmem:[#allocation3 + $0x40] sm:$0xff] %vm224, %v433
  %478 = vst.msk [vmem:[#allocation3 + $0x48] sm:$0xff] %vm224, %v434
  %479 = vst.msk [vmem:[#allocation3 + $0x50] sm:$0xff] %vm224, %v435
  %480 = vst.msk [vmem:[#allocation3 + $0x58] sm:$0xff] %vm224, %v436
  %481 = vst.msk [vmem:[#allocation3 + $0x60] sm:$0xff] %vm224, %v437
  %482 = vst.msk [vmem:[#allocation3 + $0x68] sm:$0xff] %vm224, %v438
  %483 = vst.msk [vmem:[#allocation3 + $0x70] sm:$0xff] %vm224, %v439
  %484 = vst.msk [vmem:[#allocation3 + $0x78] sm:$0xff] %vm224, %v440
  %485 = vst.msk [vmem:[#allocation3 + $0x80] sm:$0xff] %vm224, %v441
  %486 = vst.msk [vmem:[#allocation3 + $0x88] sm:$0xff] %vm224, %v442
  %487 = vst.msk [vmem:[#allocation3 + $0x90] sm:$0xff] %vm224, %v443
  %488 = vst.msk [vmem:[#allocation3 + $0x98] sm:$0xff] %vm224, %v444
  %489 = vst.msk [vmem:[#allocation3 + $0xa0] sm:$0xff] %vm224, %v445
  %490 = vst.msk [vmem:[#allocation3 + $0xa8] sm:$0xff] %vm224, %v446
  %491 = vst.msk [vmem:[#allocation3 + $0xb0] sm:$0xff] %vm224, %v447
  %492 = vst.msk [vmem:[#allocation3 + $0xb8] sm:$0xff] %vm224, %v448
  %493 = vst.msk [vmem:[#allocation3 + $0xc0] sm:$0xff] %vm224, %v449
  %494 = vst.msk [vmem:[#allocation3 + $0xc8] sm:$0xff] %vm224, %v450
  %495 = vst.msk [vmem:[#allocation3 + $0xd0] sm:$0xff] %vm224, %v451
  %496 = vst.msk [vmem:[#allocation3 + $0xd8] sm:$0xff] %vm224, %v452
  %497 = vst.msk [vmem:[#allocation3 + $0xe0] sm:$0xff] %vm224, %v453
  %498 = vst.msk [vmem:[#allocation3 + $0xe8] sm:$0xff] %vm224, %v454
  %499 = vst.msk [vmem:[#allocation3 + $0xf0] sm:$0xff] %vm224, %v455
  %500 = vst.msk [vmem:[#allocation3 + $0xf8] sm:$0xff] %vm224, %v456
  %501 = vst.msk [vmem:[#allocation3 + $0x100] sm:$0xff] %vm224, %v457
  %502 = vst.msk [vmem:[#allocation3 + $0x108] sm:$0xff] %vm224, %v458
  %503 = vst.msk [vmem:[#allocation3 + $0x110] sm:$0xff] %vm224, %v459
  %504 = vst.msk [vmem:[#allocation3 + $0x118] sm:$0xff] %vm224, %v460
  %505 = vst.msk [vmem:[#allocation3 + $0x120] sm:$0xff] %vm224, %v461
  %506 = vst.msk [vmem:[#allocation3 + $0x128] sm:$0xff] %vm224, %v462
  %507 = vst.msk [vmem:[#allocation3 + $0x130] sm:$0xff] %vm224, %v463
  %508 = vst.msk [vmem:[#allocation3 + $0x138] sm:$0xff] %vm224, %v464
  %509 = vst.msk [vmem:[#allocation3 + $0x140] sm:$0xff] %vm224, %v465
  %510 = vst.msk [vmem:[#allocation3 + $0x148] sm:$0xff] %vm224, %v466
  %511 = vst.msk [vmem:[#allocation3 + $0x150] sm:$0xff] %vm224, %v467
  %512 = vst.msk [vmem:[#allocation3 + $0x158] sm:$0xff] %vm224, %v468
  %v513 = vld [vmem:[#allocation2 + $0x1] sm:$0xff]
  %v514 = vld [vmem:[#allocation2 + $0x9] sm:$0xff]
  %v515 = vld [vmem:[#allocation2 + $0x11] sm:$0xff]
  %v516 = vld [vmem:[#allocation2 + $0x19] sm:$0xff]
  %v517 = vld [vmem:[#allocation2 + $0x21] sm:$0xff]
  %v518 = vld [vmem:[#allocation2 + $0x29] sm:$0xff]
  %v519 = vld [vmem:[#allocation2 + $0x31] sm:$0xff]
  %v520 = vld [vmem:[#allocation2 + $0x39] sm:$0xff]
  %v521 = vld [vmem:[#allocation2 + $0x41] sm:$0xff]
  %v522 = vld [vmem:[#allocation2 + $0x49] sm:$0xff]
  %v523 = vld [vmem:[#allocation2 + $0x51] sm:$0xff]
  %v524 = vld [vmem:[#allocation2 + $0x59] sm:$0xff]
  %v525 = vld [vmem:[#allocation2 + $0x61] sm:$0xff]
  %v526 = vld [vmem:[#allocation2 + $0x69] sm:$0xff]
  %v527 = vld [vmem:[#allocation2 + $0x71] sm:$0xff]
  %v528 = vld [vmem:[#allocation2 + $0x79] sm:$0xff]
  %v529 = vld [vmem:[#allocation2 + $0x81] sm:$0xff]
  %v530 = vld [vmem:[#allocation2 + $0x89] sm:$0xff]
  %v531 = vld [vmem:[#allocation2 + $0x91] sm:$0xff]
  %v532 = vld [vmem:[#allocation2 + $0x99] sm:$0xff]
  %v533 = vld [vmem:[#allocation2 + $0xa1] sm:$0xff]
  %v534 = vld [vmem:[#allocation2 + $0xa9] sm:$0xff]
  %v535 = vld [vmem:[#allocation2 + $0xb1] sm:$0xff]
  %v536 = vld [vmem:[#allocation2 + $0xb9] sm:$0xff]
  %v537 = vld [vmem:[#allocation2 + $0xc1] sm:$0xff]
  %v538 = vld [vmem:[#allocation2 + $0xc9] sm:$0xff]
  %v539 = vld [vmem:[#allocation2 + $0xd1] sm:$0xff]
  %v540 = vld [vmem:[#allocation2 + $0xd9] sm:$0xff]
  %v541 = vld [vmem:[#allocation2 + $0xe1] sm:$0xff]
  %v542 = vld [vmem:[#allocation2 + $0xe9] sm:$0xff]
  %v543 = vld [vmem:[#allocation2 + $0xf1] sm:$0xff]
  %v544 = vld [vmem:[#allocation2 + $0xf9] sm:$0xff]
  %v545 = vld [vmem:[#allocation2 + $0x101] sm:$0xff]
  %v546 = vld [vmem:[#allocation2 + $0x109] sm:$0xff]
  %v547 = vld [vmem:[#allocation2 + $0x111] sm:$0xff]
  %v548 = vld [vmem:[#allocation2 + $0x119] sm:$0xff]
  %v549 = vld [vmem:[#allocation2 + $0x121] sm:$0xff]
  %v550 = vld [vmem:[#allocation2 + $0x129] sm:$0xff]
  %v551 = vld [vmem:[#allocation2 + $0x131] sm:$0xff]
  %v552 = vld [vmem:[#allocation2 + $0x139] sm:$0xff]
  %v553 = vld [vmem:[#allocation2 + $0x141] sm:$0xff]
  %v554 = vld [vmem:[#allocation2 + $0x149] sm:$0xff]
  %v555 = vld [vmem:[#allocation2 + $0x151] sm:$0xff]
  %v556 = vld [vmem:[#allocation2 + $0x159] sm:$0xff]
  %v557 = vld [vmem:[#allocation2 + $0x161] sm:$0xff]
  %v558 = vld [vmem:[#allocation2 + $0x169] sm:$0xff]
  %v559 = vld [vmem:[#allocation2 + $0x171] sm:$0xff]
  %v560 = vld [vmem:[#allocation2 + $0x179] sm:$0xff]
  %v561 = vld [vmem:[#allocation2 + $0x181] sm:$0xff]
  %v562 = vld [vmem:[#allocation2 + $0x189] sm:$0xff]
  %v563 = vld [vmem:[#allocation2 + $0x191] sm:$0xff]
  %v564 = vld [vmem:[#allocation2 + $0x199] sm:$0xff]
  %v565 = vld [vmem:[#allocation2 + $0x1a1] sm:$0xff]
  %v566 = vld [vmem:[#allocation2 + $0x1a9] sm:$0xff]
  %v567 = vld [vmem:[#allocation2 + $0x1b1] sm:$0xff]
  %v568 = vld [vmem:[#allocation2 + $0x1b9] sm:$0xff]
  %v569 = vld [vmem:[#allocation2 + $0x1c1] sm:$0xff]
  %v570 = vld [vmem:[#allocation2 + $0x1c9] sm:$0xff]
  %v571 = vld [vmem:[#allocation2 + $0x1d1] sm:$0xff]
  %v572 = vld [vmem:[#allocation2 + $0x1d9] sm:$0xff]
  %v573 = vld [vmem:[#allocation2 + $0x1e1] sm:$0xff]
  %v574 = vld [vmem:[#allocation2 + $0x1e9] sm:$0xff]
  %v575 = vld [vmem:[#allocation2 + $0x1f1] sm:$0xff]
  %v576 = vld [vmem:[#allocation2 + $0x1f9] sm:$0xff]
  %v577 = vld [vmem:[#allocation2 + $0x201] sm:$0xff]
  %v578 = vld [vmem:[#allocation2 + $0x209] sm:$0xff]
  %v579 = vld [vmem:[#allocation2 + $0x211] sm:$0xff]
  %v580 = vld [vmem:[#allocation2 + $0x219] sm:$0xff]
  %v581 = vld [vmem:[#allocation2 + $0x221] sm:$0xff]
  %v582 = vld [vmem:[#allocation2 + $0x229] sm:$0xff]
  %v583 = vld [vmem:[#allocation2 + $0x231] sm:$0xff]
  %v584 = vld [vmem:[#allocation2 + $0x239] sm:$0xff]
  %v585 = vld [vmem:[#allocation2 + $0x241] sm:$0xff]
  %v586 = vld [vmem:[#allocation2 + $0x249] sm:$0xff]
  %v587 = vld [vmem:[#allocation2 + $0x251] sm:$0xff]
  %v588 = vld [vmem:[#allocation2 + $0x259] sm:$0xff]
  %v589 = vld [vmem:[#allocation2 + $0x261] sm:$0xff]
  %v590 = vld [vmem:[#allocation2 + $0x269] sm:$0xff]
  %v591 = vld [vmem:[#allocation2 + $0x271] sm:$0xff]
  %v592 = vld [vmem:[#allocation2 + $0x279] sm:$0xff]
  %v593 = vld [vmem:[#allocation2 + $0x281] sm:$0xff]
  %v594 = vld [vmem:[#allocation2 + $0x289] sm:$0xff]
  %v595 = vld [vmem:[#allocation2 + $0x291] sm:$0xff]
  %v596 = vld [vmem:[#allocation2 + $0x299] sm:$0xff]
  %v597 = vld [vmem:[#allocation2 + $0x2a1] sm:$0xff]
  %v598 = vld [vmem:[#allocation2 + $0x2a9] sm:$0xff]
  %v599 = vld [vmem:[#allocation2 + $0x2b1] sm:$0xff]
  %v600 = vld [vmem:[#allocation2 + $0x2b9] sm:$0xff]
  %v601 = vpack.c.bf16 %v514, %v513
  %v602 = vpack.c.bf16 %v516, %v515
  %v603 = vpack.c.bf16 %v518, %v517
  %v604 = vpack.c.bf16 %v520, %v519
  %v605 = vpack.c.bf16 %v522, %v521
  %v606 = vpack.c.bf16 %v524, %v523
  %v607 = vpack.c.bf16 %v526, %v525
  %v608 = vpack.c.bf16 %v528, %v527
  %v609 = vpack.c.bf16 %v530, %v529
  %v610 = vpack.c.bf16 %v532, %v531
  %v611 = vpack.c.bf16 %v534, %v533
  %v612 = vpack.c.bf16 %v536, %v535
  %v613 = vpack.c.bf16 %v538, %v537
  %v614 = vpack.c.bf16 %v540, %v539
  %v615 = vpack.c.bf16 %v542, %v541
  %v616 = vpack.c.bf16 %v544, %v543
  %v617 = vpack.c.bf16 %v546, %v545
  %v618 = vpack.c.bf16 %v548, %v547
  %v619 = vpack.c.bf16 %v550, %v549
  %v620 = vpack.c.bf16 %v552, %v551
  %v621 = vpack.c.bf16 %v554, %v553
  %v622 = vpack.c.bf16 %v556, %v555
  %v623 = vpack.c.bf16 %v558, %v557
  %v624 = vpack.c.bf16 %v560, %v559
  %v625 = vpack.c.bf16 %v562, %v561
  %v626 = vpack.c.bf16 %v564, %v563
  %v627 = vpack.c.bf16 %v566, %v565
  %v628 = vpack.c.bf16 %v568, %v567
  %v629 = vpack.c.bf16 %v570, %v569
  %v630 = vpack.c.bf16 %v572, %v571
  %v631 = vpack.c.bf16 %v574, %v573
  %v632 = vpack.c.bf16 %v576, %v575
  %v633 = vpack.c.bf16 %v578, %v577
  %v634 = vpack.c.bf16 %v580, %v579
  %v635 = vpack.c.bf16 %v582, %v581
  %v636 = vpack.c.bf16 %v584, %v583
  %v637 = vpack.c.bf16 %v586, %v585
  %v638 = vpack.c.bf16 %v588, %v587
  %v639 = vpack.c.bf16 %v590, %v589
  %v640 = vpack.c.bf16 %v592, %v591
  %v641 = vpack.c.bf16 %v594, %v593
  %v642 = vpack.c.bf16 %v596, %v595
  %v643 = vpack.c.bf16 %v598, %v597
  %v644 = vpack.c.bf16 %v600, %v599
  %689 = vrot.lane.b32.xlu0 %v601, 4
  %v690 = vpop.permute.xlu0 %689
  %691 = vrot.lane.b32.xlu0 %v602, 4
  %v692 = vpop.permute.xlu0 %691
  %693 = vrot.lane.b32.xlu0 %v603, 4
  %v694 = vpop.permute.xlu0 %693
  %695 = vrot.lane.b32.xlu0 %v604, 4
  %v696 = vpop.permute.xlu0 %695
  %697 = vrot.lane.b32.xlu0 %v605, 4
  %v698 = vpop.permute.xlu0 %697
  %699 = vrot.lane.b32.xlu0 %v606, 4
  %v700 = vpop.permute.xlu0 %699
  %701 = vrot.lane.b32.xlu0 %v607, 4
  %v702 = vpop.permute.xlu0 %701
  %703 = vrot.lane.b32.xlu0 %v608, 4
  %v704 = vpop.permute.xlu0 %703
  %705 = vrot.lane.b32.xlu0 %v609, 4
  %v706 = vpop.permute.xlu0 %705
  %707 = vrot.lane.b32.xlu0 %v610, 4
  %v708 = vpop.permute.xlu0 %707
  %709 = vrot.lane.b32.xlu0 %v611, 4
  %v710 = vpop.permute.xlu0 %709
  %711 = vrot.lane.b32.xlu0 %v612, 4
  %v712 = vpop.permute.xlu0 %711
  %713 = vrot.lane.b32.xlu0 %v613, 4
  %v714 = vpop.permute.xlu0 %713
  %715 = vrot.lane.b32.xlu0 %v614, 4
  %v716 = vpop.permute.xlu0 %715
  %717 = vrot.lane.b32.xlu0 %v615, 4
  %v718 = vpop.permute.xlu0 %717
  %719 = vrot.lane.b32.xlu0 %v616, 4
  %v720 = vpop.permute.xlu0 %719
  %721 = vrot.lane.b32.xlu0 %v617, 4
  %v722 = vpop.permute.xlu0 %721
  %723 = vrot.lane.b32.xlu0 %v618, 4
  %v724 = vpop.permute.xlu0 %723
  %725 = vrot.lane.b32.xlu0 %v619, 4
  %v726 = vpop.permute.xlu0 %725
  %727 = vrot.lane.b32.xlu0 %v620, 4
  %v728 = vpop.permute.xlu0 %727
  %729 = vrot.lane.b32.xlu0 %v621, 4
  %v730 = vpop.permute.xlu0 %729
  %731 = vrot.lane.b32.xlu0 %v622, 4
  %v732 = vpop.permute.xlu0 %731
  %733 = vrot.lane.b32.xlu0 %v623, 4
  %v734 = vpop.permute.xlu0 %733
  %735 = vrot.lane.b32.xlu0 %v624, 4
  %v736 = vpop.permute.xlu0 %735
  %737 = vrot.lane.b32.xlu0 %v625, 4
  %v738 = vpop.permute.xlu0 %737
  %739 = vrot.lane.b32.xlu0 %v626, 4
  %v740 = vpop.permute.xlu0 %739
  %741 = vrot.lane.b32.xlu0 %v627, 4
  %v742 = vpop.permute.xlu0 %741
  %743 = vrot.lane.b32.xlu0 %v628, 4
  %v744 = vpop.permute.xlu0 %743
  %745 = vrot.lane.b32.xlu0 %v629, 4
  %v746 = vpop.permute.xlu0 %745
  %747 = vrot.lane.b32.xlu0 %v630, 4
  %v748 = vpop.permute.xlu0 %747
  %749 = vrot.lane.b32.xlu0 %v631, 4
  %v750 = vpop.permute.xlu0 %749
  %751 = vrot.lane.b32.xlu0 %v632, 4
  %v752 = vpop.permute.xlu0 %751
  %753 = vrot.lane.b32.xlu0 %v633, 4
  %v754 = vpop.permute.xlu0 %753
  %755 = vrot.lane.b32.xlu0 %v634, 4
  %v756 = vpop.permute.xlu0 %755
  %757 = vrot.lane.b32.xlu0 %v635, 4
  %v758 = vpop.permute.xlu0 %757
  %759 = vrot.lane.b32.xlu0 %v636, 4
  %v760 = vpop.permute.xlu0 %759
  %761 = vrot.lane.b32.xlu0 %v637, 4
  %v762 = vpop.permute.xlu0 %761
  %763 = vrot.lane.b32.xlu0 %v638, 4
  %v764 = vpop.permute.xlu0 %763
  %765 = vrot.lane.b32.xlu0 %v639, 4
  %v766 = vpop.permute.xlu0 %765
  %767 = vrot.lane.b32.xlu0 %v640, 4
  %v768 = vpop.permute.xlu0 %767
  %769 = vrot.lane.b32.xlu0 %v641, 4
  %v770 = vpop.permute.xlu0 %769
  %771 = vrot.lane.b32.xlu0 %v642, 4
  %v772 = vpop.permute.xlu0 %771
  %773 = vrot.lane.b32.xlu0 %v643, 4
  %v774 = vpop.permute.xlu0 %773
  %775 = vrot.lane.b32.xlu0 %v644, 4
  %v776 = vpop.permute.xlu0 %775
  %vm821 = vcmask 64544
  %822 = vst.msk [vmem:[#allocation3] sm:$0xff] %vm821, %v690
  %823 = vst.msk [vmem:[#allocation3 + $0x8] sm:$0xff] %vm821, %v692
  %824 = vst.msk [vmem:[#allocation3 + $0x10] sm:$0xff] %vm821, %v694
  %825 = vst.msk [vmem:[#allocation3 + $0x18] sm:$0xff] %vm821, %v696
  %826 = vst.msk [vmem:[#allocation3 + $0x20] sm:$0xff] %vm821, %v698
  %827 = vst.msk [vmem:[#allocation3 + $0x28] sm:$0xff] %vm821, %v700
  %828 = vst.msk [vmem:[#allocation3 + $0x30] sm:$0xff] %vm821, %v702
  %829 = vst.msk [vmem:[#allocation3 + $0x38] sm:$0xff] %vm821, %v704
  %830 = vst.msk [vmem:[#allocation3 + $0x40] sm:$0xff] %vm821, %v706
  %831 = vst.msk [vmem:[#allocation3 + $0x48] sm:$0xff] %vm821, %v708
  %832 = vst.msk [vmem:[#allocation3 + $0x50] sm:$0xff] %vm821, %v710
  %833 = vst.msk [vmem:[#allocation3 + $0x58] sm:$0xff] %vm821, %v712
  %834 = vst.msk [vmem:[#allocation3 + $0x60] sm:$0xff] %vm821, %v714
  %835 = vst.msk [vmem:[#allocation3 + $0x68] sm:$0xff] %vm821, %v716
  %836 = vst.msk [vmem:[#allocation3 + $0x70] sm:$0xff] %vm821, %v718
  %837 = vst.msk [vmem:[#allocation3 + $0x78] sm:$0xff] %vm821, %v720
  %838 = vst.msk [vmem:[#allocation3 + $0x80] sm:$0xff] %vm821, %v722
  %839 = vst.msk [vmem:[#allocation3 + $0x88] sm:$0xff] %vm821, %v724
  %840 = vst.msk [vmem:[#allocation3 + $0x90] sm:$0xff] %vm821, %v726
  %841 = vst.msk [vmem:[#allocation3 + $0x98] sm:$0xff] %vm821, %v728
  %842 = vst.msk [vmem:[#allocation3 + $0xa0] sm:$0xff] %vm821, %v730
  %843 = vst.msk [vmem:[#allocation3 + $0xa8] sm:$0xff] %vm821, %v732
  %844 = vst.msk [vmem:[#allocation3 + $0xb0] sm:$0xff] %vm821, %v734
  %845 = vst.msk [vmem:[#allocation3 + $0xb8] sm:$0xff] %vm821, %v736
  %846 = vst.msk [vmem:[#allocation3 + $0xc0] sm:$0xff] %vm821, %v738
  %847 = vst.msk [vmem:[#allocation3 + $0xc8] sm:$0xff] %vm821, %v740
  %848 = vst.msk [vmem:[#allocation3 + $0xd0] sm:$0xff] %vm821, %v742
  %849 = vst.msk [vmem:[#allocation3 + $0xd8] sm:$0xff] %vm821, %v744
  %850 = vst.msk [vmem:[#allocation3 + $0xe0] sm:$0xff] %vm821, %v746
  %851 = vst.msk [vmem:[#allocation3 + $0xe8] sm:$0xff] %vm821, %v748
  %852 = vst.msk [vmem:[#allocation3 + $0xf0] sm:$0xff] %vm821, %v750
  %853 = vst.msk [vmem:[#allocation3 + $0xf8] sm:$0xff] %vm821, %v752
  %854 = vst.msk [vmem:[#allocation3 + $0x100] sm:$0xff] %vm821, %v754
  %855 = vst.msk [vmem:[#allocation3 + $0x108] sm:$0xff] %vm821, %v756
  %856 = vst.msk [vmem:[#allocation3 + $0x110] sm:$0xff] %vm821, %v758
  %857 = vst.msk [vmem:[#allocation3 + $0x118] sm:$0xff] %vm821, %v760
  %858 = vst.msk [vmem:[#allocation3 + $0x120] sm:$0xff] %vm821, %v762
  %859 = vst.msk [vmem:[#allocation3 + $0x128] sm:$0xff] %vm821, %v764
  %860 = vst.msk [vmem:[#allocation3 + $0x130] sm:$0xff] %vm821, %v766
  %861 = vst.msk [vmem:[#allocation3 + $0x138] sm:$0xff] %vm821, %v768
  %862 = vst.msk [vmem:[#allocation3 + $0x140] sm:$0xff] %vm821, %v770
  %863 = vst.msk [vmem:[#allocation3 + $0x148] sm:$0xff] %vm821, %v772
  %864 = vst.msk [vmem:[#allocation3 + $0x150] sm:$0xff] %vm821, %v774
  %865 = vst.msk [vmem:[#allocation3 + $0x158] sm:$0xff] %vm821, %v776
  %v866 = vld [vmem:[#allocation2 + $0x2] sm:$0xff]
  %v867 = vld [vmem:[#allocation2 + $0xa] sm:$0xff]
  %v868 = vld [vmem:[#allocation2 + $0x12] sm:$0xff]
  %v869 = vld [vmem:[#allocation2 + $0x1a] sm:$0xff]
  %v870 = vld [vmem:[#allocation2 + $0x22] sm:$0xff]
  %v871 = vld [vmem:[#allocation2 + $0x2a] sm:$0xff]
  %v872 = vld [vmem:[#allocation2 + $0x32] sm:$0xff]
  %v873 = vld [vmem:[#allocation2 + $0x3a] sm:$0xff]
  %v874 = vld [vmem:[#allocation2 + $0x42] sm:$0xff]
  %v875 = vld [vmem:[#allocation2 + $0x4a] sm:$0xff]
  %v876 = vld [vmem:[#allocation2 + $0x52] sm:$0xff]
  %v877 = vld [vmem:[#allocation2 + $0x5a] sm:$0xff]
  %v878 = vld [vmem:[#allocation2 + $0x62] sm:$0xff]
  %v879 = vld [vmem:[#allocation2 + $0x6a] sm:$0xff]
  %v880 = vld [vmem:[#allocation2 + $0x72] sm:$0xff]
  %v881 = vld [vmem:[#allocation2 + $0x7a] sm:$0xff]
  %v882 = vld [vmem:[#allocation2 + $0x82] sm:$0xff]
  %v883 = vld [vmem:[#allocation2 + $0x8a] sm:$0xff]
  %v884 = vld [vmem:[#allocation2 + $0x92] sm:$0xff]
  %v885 = vld [vmem:[#allocation2 + $0x9a] sm:$0xff]
  %v886 = vld [vmem:[#allocation2 + $0xa2] sm:$0xff]
  %v887 = vld [vmem:[#allocation2 + $0xaa] sm:$0xff]
  %v888 = vld [vmem:[#allocation2 + $0xb2] sm:$0xff]
  %v889 = vld [vmem:[#allocation2 + $0xba] sm:$0xff]
  %v890 = vld [vmem:[#allocation2 + $0xc2] sm:$0xff]
  %v891 = vld [vmem:[#allocation2 + $0xca] sm:$0xff]
  %v892 = vld [vmem:[#allocation2 + $0xd2] sm:$0xff]
  %v893 = vld [vmem:[#allocation2 + $0xda] sm:$0xff]
  %v894 = vld [vmem:[#allocation2 + $0xe2] sm:$0xff]
  %v895 = vld [vmem:[#allocation2 + $0xea] sm:$0xff]
  %v896 = vld [vmem:[#allocation2 + $0xf2] sm:$0xff]
  %v897 = vld [vmem:[#allocation2 + $0xfa] sm:$0xff]
  %v898 = vld [vmem:[#allocation2 + $0x102] sm:$0xff]
  %v899 = vld [vmem:[#allocation2 + $0x10a] sm:$0xff]
  %v900 = vld [vmem:[#allocation2 + $0x112] sm:$0xff]
  %v901 = vld [vmem:[#allocation2 + $0x11a] sm:$0xff]
  %v902 = vld [vmem:[#allocation2 + $0x122] sm:$0xff]
  %v903 = vld [vmem:[#allocation2 + $0x12a] sm:$0xff]
  %v904 = vld [vmem:[#allocation2 + $0x132] sm:$0xff]
  %v905 = vld [vmem:[#allocation2 + $0x13a] sm:$0xff]
  %v906 = vld [vmem:[#allocation2 + $0x142] sm:$0xff]
  %v907 = vld [vmem:[#allocation2 + $0x14a] sm:$0xff]
  %v908 = vld [vmem:[#allocation2 + $0x152] sm:$0xff]
  %v909 = vld [vmem:[#allocation2 + $0x15a] sm:$0xff]
  %v910 = vld [vmem:[#allocation2 + $0x162] sm:$0xff]
  %v911 = vld [vmem:[#allocation2 + $0x16a] sm:$0xff]
  %v912 = vld [vmem:[#allocation2 + $0x172] sm:$0xff]
  %v913 = vld [vmem:[#allocation2 + $0x17a] sm:$0xff]
  %v914 = vld [vmem:[#allocation2 + $0x182] sm:$0xff]
  %v915 = vld [vmem:[#allocation2 + $0x18a] sm:$0xff]
  %v916 = vld [vmem:[#allocation2 + $0x192] sm:$0xff]
  %v917 = vld [vmem:[#allocation2 + $0x19a] sm:$0xff]
  %v918 = vld [vmem:[#allocation2 + $0x1a2] sm:$0xff]
  %v919 = vld [vmem:[#allocation2 + $0x1aa] sm:$0xff]
  %v920 = vld [vmem:[#allocation2 + $0x1b2] sm:$0xff]
  %v921 = vld [vmem:[#allocation2 + $0x1ba] sm:$0xff]
  %v922 = vld [vmem:[#allocation2 + $0x1c2] sm:$0xff]
  %v923 = vld [vmem:[#allocation2 + $0x1ca] sm:$0xff]
  %v924 = vld [vmem:[#allocation2 + $0x1d2] sm:$0xff]
  %v925 = vld [vmem:[#allocation2 + $0x1da] sm:$0xff]
  %v926 = vld [vmem:[#allocation2 + $0x1e2] sm:$0xff]
  %v927 = vld [vmem:[#allocation2 + $0x1ea] sm:$0xff]
  %v928 = vld [vmem:[#allocation2 + $0x1f2] sm:$0xff]
  %v929 = vld [vmem:[#allocation2 + $0x1fa] sm:$0xff]
  %v930 = vld [vmem:[#allocation2 + $0x202] sm:$0xff]
  %v931 = vld [vmem:[#allocation2 + $0x20a] sm:$0xff]
  %v932 = vld [vmem:[#allocation2 + $0x212] sm:$0xff]
  %v933 = vld [vmem:[#allocation2 + $0x21a] sm:$0xff]
  %v934 = vld [vmem:[#allocation2 + $0x222] sm:$0xff]
  %v935 = vld [vmem:[#allocation2 + $0x22a] sm:$0xff]
  %v936 = vld [vmem:[#allocation2 + $0x232] sm:$0xff]
  %v937 = vld [vmem:[#allocation2 + $0x23a] sm:$0xff]
  %v938 = vld [vmem:[#allocation2 + $0x242] sm:$0xff]
  %v939 = vld [vmem:[#allocation2 + $0x24a] sm:$0xff]
  %v940 = vld [vmem:[#allocation2 + $0x252] sm:$0xff]
  %v941 = vld [vmem:[#allocation2 + $0x25a] sm:$0xff]
  %v942 = vld [vmem:[#allocation2 + $0x262] sm:$0xff]
  %v943 = vld [vmem:[#allocation2 + $0x26a] sm:$0xff]
  %v944 = vld [vmem:[#allocation2 + $0x272] sm:$0xff]
  %v945 = vld [vmem:[#allocation2 + $0x27a] sm:$0xff]
  %v946 = vld [vmem:[#allocation2 + $0x282] sm:$0xff]
  %v947 = vld [vmem:[#allocation2 + $0x28a] sm:$0xff]
  %v948 = vld [vmem:[#allocation2 + $0x292] sm:$0xff]
  %v949 = vld [vmem:[#allocation2 + $0x29a] sm:$0xff]
  %v950 = vld [vmem:[#allocation2 + $0x2a2] sm:$0xff]
  %v951 = vld [vmem:[#allocation2 + $0x2aa] sm:$0xff]
  %v952 = vld [vmem:[#allocation2 + $0x2b2] sm:$0xff]
  %v953 = vld [vmem:[#allocation2 + $0x2ba] sm:$0xff]
  %v954 = vpack.c.bf16 %v867, %v866
  %v955 = vpack.c.bf16 %v869, %v868
  %v956 = vpack.c.bf16 %v871, %v870
  %v957 = vpack.c.bf16 %v873, %v872
  %v958 = vpack.c.bf16 %v875, %v874
  %v959 = vpack.c.bf16 %v877, %v876
  %v960 = vpack.c.bf16 %v879, %v878
  %v961 = vpack.c.bf16 %v881, %v880
  %v962 = vpack.c.bf16 %v883, %v882
  %v963 = vpack.c.bf16 %v885, %v884
  %v964 = vpack.c.bf16 %v887, %v886
  %v965 = vpack.c.bf16 %v889, %v888
  %v966 = vpack.c.bf16 %v891, %v890
  %v967 = vpack.c.bf16 %v893, %v892
  %v968 = vpack.c.bf16 %v895, %v894
  %v969 = vpack.c.bf16 %v897, %v896
  %v970 = vpack.c.bf16 %v899, %v898
  %v971 = vpack.c.bf16 %v901, %v900
  %v972 = vpack.c.bf16 %v903, %v902
  %v973 = vpack.c.bf16 %v905, %v904
  %v974 = vpack.c.bf16 %v907, %v906
  %v975 = vpack.c.bf16 %v909, %v908
  %v976 = vpack.c.bf16 %v911, %v910
  %v977 = vpack.c.bf16 %v913, %v912
  %v978 = vpack.c.bf16 %v915, %v914
  %v979 = vpack.c.bf16 %v917, %v916
  %v980 = vpack.c.bf16 %v919, %v918
  %v981 = vpack.c.bf16 %v921, %v920
  %v982 = vpack.c.bf16 %v923, %v922
  %v983 = vpack.c.bf16 %v925, %v924
  %v984 = vpack.c.bf16 %v927, %v926
  %v985 = vpack.c.bf16 %v929, %v928
  %v986 = vpack.c.bf16 %v931, %v930
  %v987 = vpack.c.bf16 %v933, %v932
  %v988 = vpack.c.bf16 %v935, %v934
  %v989 = vpack.c.bf16 %v937, %v936
  %v990 = vpack.c.bf16 %v939, %v938
  %v991 = vpack.c.bf16 %v941, %v940
  %v992 = vpack.c.bf16 %v943, %v942
  %v993 = vpack.c.bf16 %v945, %v944
  %v994 = vpack.c.bf16 %v947, %v946
  %v995 = vpack.c.bf16 %v949, %v948
  %v996 = vpack.c.bf16 %v951, %v950
  %v997 = vpack.c.bf16 %v953, %v952
  %1042 = vrot.lane.b32.xlu0 %v954, 8
  %v1043 = vpop.permute.xlu0 %1042
  %1044 = vrot.lane.b32.xlu0 %v955, 8
  %v1045 = vpop.permute.xlu0 %1044
  %1046 = vrot.lane.b32.xlu0 %v956, 8
  %v1047 = vpop.permute.xlu0 %1046
  %1048 = vrot.lane.b32.xlu0 %v957, 8
  %v1049 = vpop.permute.xlu0 %1048
  %1050 = vrot.lane.b32.xlu0 %v958, 8
  %v1051 = vpop.permute.xlu0 %1050
  %1052 = vrot.lane.b32.xlu0 %v959, 8
  %v1053 = vpop.permute.xlu0 %1052
  %1054 = vrot.lane.b32.xlu0 %v960, 8
  %v1055 = vpop.permute.xlu0 %1054
  %1056 = vrot.lane.b32.xlu0 %v961, 8
  %v1057 = vpop.permute.xlu0 %1056
  %1058 = vrot.lane.b32.xlu0 %v962, 8
  %v1059 = vpop.permute.xlu0 %1058
  %1060 = vrot.lane.b32.xlu0 %v963, 8
  %v1061 = vpop.permute.xlu0 %1060
  %1062 = vrot.lane.b32.xlu0 %v964, 8
  %v1063 = vpop.permute.xlu0 %1062
  %1064 = vrot.lane.b32.xlu0 %v965, 8
  %v1065 = vpop.permute.xlu0 %1064
  %1066 = vrot.lane.b32.xlu0 %v966, 8
  %v1067 = vpop.permute.xlu0 %1066
  %1068 = vrot.lane.b32.xlu0 %v967, 8
  %v1069 = vpop.permute.xlu0 %1068
  %1070 = vrot.lane.b32.xlu0 %v968, 8
  %v1071 = vpop.permute.xlu0 %1070
  %1072 = vrot.lane.b32.xlu0 %v969, 8
  %v1073 = vpop.permute.xlu0 %1072
  %1074 = vrot.lane.b32.xlu0 %v970, 8
  %v1075 = vpop.permute.xlu0 %1074
  %1076 = vrot.lane.b32.xlu0 %v971, 8
  %v1077 = vpop.permute.xlu0 %1076
  %1078 = vrot.lane.b32.xlu0 %v972, 8
  %v1079 = vpop.permute.xlu0 %1078
  %1080 = vrot.lane.b32.xlu0 %v973, 8
  %v1081 = vpop.permute.xlu0 %1080
  %1082 = vrot.lane.b32.xlu0 %v974, 8
  %v1083 = vpop.permute.xlu0 %1082
  %1084 = vrot.lane.b32.xlu0 %v975, 8
  %v1085 = vpop.permute.xlu0 %1084
  %1086 = vrot.lane.b32.xlu0 %v976, 8
  %v1087 = vpop.permute.xlu0 %1086
  %1088 = vrot.lane.b32.xlu0 %v977, 8
  %v1089 = vpop.permute.xlu0 %1088
  %1090 = vrot.lane.b32.xlu0 %v978, 8
  %v1091 = vpop.permute.xlu0 %1090
  %1092 = vrot.lane.b32.xlu0 %v979, 8
  %v1093 = vpop.permute.xlu0 %1092
  %1094 = vrot.lane.b32.xlu0 %v980, 8
  %v1095 = vpop.permute.xlu0 %1094
  %1096 = vrot.lane.b32.xlu0 %v981, 8
  %v1097 = vpop.permute.xlu0 %1096
  %1098 = vrot.lane.b32.xlu0 %v982, 8
  %v1099 = vpop.permute.xlu0 %1098
  %1100 = vrot.lane.b32.xlu0 %v983, 8
  %v1101 = vpop.permute.xlu0 %1100
  %1102 = vrot.lane.b32.xlu0 %v984, 8
  %v1103 = vpop.permute.xlu0 %1102
  %1104 = vrot.lane.b32.xlu0 %v985, 8
  %v1105 = vpop.permute.xlu0 %1104
  %1106 = vrot.lane.b32.xlu0 %v986, 8
  %v1107 = vpop.permute.xlu0 %1106
  %1108 = vrot.lane.b32.xlu0 %v987, 8
  %v1109 = vpop.permute.xlu0 %1108
  %1110 = vrot.lane.b32.xlu0 %v988, 8
  %v1111 = vpop.permute.xlu0 %1110
  %1112 = vrot.lane.b32.xlu0 %v989, 8
  %v1113 = vpop.permute.xlu0 %1112
  %1114 = vrot.lane.b32.xlu0 %v990, 8
  %v1115 = vpop.permute.xlu0 %1114
  %1116 = vrot.lane.b32.xlu0 %v991, 8
  %v1117 = vpop.permute.xlu0 %1116
  %1118 = vrot.lane.b32.xlu0 %v992, 8
  %v1119 = vpop.permute.xlu0 %1118
  %1120 = vrot.lane.b32.xlu0 %v993, 8
  %v1121 = vpop.permute.xlu0 %1120
  %1122 = vrot.lane.b32.xlu0 %v994, 8
  %v1123 = vpop.permute.xlu0 %1122
  %1124 = vrot.lane.b32.xlu0 %v995, 8
  %v1125 = vpop.permute.xlu0 %1124
  %1126 = vrot.lane.b32.xlu0 %v996, 8
  %v1127 = vpop.permute.xlu0 %1126
  %1128 = vrot.lane.b32.xlu0 %v997, 8
  %v1129 = vpop.permute.xlu0 %1128
  %vm1174 = vcmask 97344
  %1175 = vst.msk [vmem:[#allocation3] sm:$0xff] %vm1174, %v1043
  %1176 = vst.msk [vmem:[#allocation3 + $0x8] sm:$0xff] %vm1174, %v1045
  %1177 = vst.msk [vmem:[#allocation3 + $0x10] sm:$0xff] %vm1174, %v1047
  %1178 = vst.msk [vmem:[#allocation3 + $0x18] sm:$0xff] %vm1174, %v1049
  %1179 = vst.msk [vmem:[#allocation3 + $0x20] sm:$0xff] %vm1174, %v1051
  %1180 = vst.msk [vmem:[#allocation3 + $0x28] sm:$0xff] %vm1174, %v1053
  %1181 = vst.msk [vmem:[#allocation3 + $0x30] sm:$0xff] %vm1174, %v1055
  %1182 = vst.msk [vmem:[#allocation3 + $0x38] sm:$0xff] %vm1174, %v1057
  %1183 = vst.msk [vmem:[#allocation3 + $0x40] sm:$0xff] %vm1174, %v1059
  %1184 = vst.msk [vmem:[#allocation3 + $0x48] sm:$0xff] %vm1174, %v1061
  %1185 = vst.msk [vmem:[#allocation3 + $0x50] sm:$0xff] %vm1174, %v1063
  %1186 = vst.msk [vmem:[#allocation3 + $0x58] sm:$0xff] %vm1174, %v1065
  %1187 = vst.msk [vmem:[#allocation3 + $0x60] sm:$0xff] %vm1174, %v1067
  %1188 = vst.msk [vmem:[#allocation3 + $0x68] sm:$0xff] %vm1174, %v1069
  %1189 = vst.msk [vmem:[#allocation3 + $0x70] sm:$0xff] %vm1174, %v1071
  %1190 = vst.msk [vmem:[#allocation3 + $0x78] sm:$0xff] %vm1174, %v1073
  %1191 = vst.msk [vmem:[#allocation3 + $0x80] sm:$0xff] %vm1174, %v1075
  %1192 = vst.msk [vmem:[#allocation3 + $0x88] sm:$0xff] %vm1174, %v1077
  %1193 = vst.msk [vmem:[#allocation3 + $0x90] sm:$0xff] %vm1174, %v1079
  %1194 = vst.msk [vmem:[#allocation3 + $0x98] sm:$0xff] %vm1174, %v1081
  %1195 = vst.msk [vmem:[#allocation3 + $0xa0] sm:$0xff] %vm1174, %v1083
  %1196 = vst.msk [vmem:[#allocation3 + $0xa8] sm:$0xff] %vm1174, %v1085
  %1197 = vst.msk [vmem:[#allocation3 + $0xb0] sm:$0xff] %vm1174, %v1087
  %1198 = vst.msk [vmem:[#allocation3 + $0xb8] sm:$0xff] %vm1174, %v1089
  %1199 = vst.msk [vmem:[#allocation3 + $0xc0] sm:$0xff] %vm1174, %v1091
  %1200 = vst.msk [vmem:[#allocation3 + $0xc8] sm:$0xff] %vm1174, %v1093
  %1201 = vst.msk [vmem:[#allocation3 + $0xd0] sm:$0xff] %vm1174, %v1095
  %1202 = vst.msk [vmem:[#allocation3 + $0xd8] sm:$0xff] %vm1174, %v1097
  %1203 = vst.msk [vmem:[#allocation3 + $0xe0] sm:$0xff] %vm1174, %v1099
  %1204 = vst.msk [vmem:[#allocation3 + $0xe8] sm:$0xff] %vm1174, %v1101
  %1205 = vst.msk [vmem:[#allocation3 + $0xf0] sm:$0xff] %vm1174, %v1103
  %1206 = vst.msk [vmem:[#allocation3 + $0xf8] sm:$0xff] %vm1174, %v1105
  %1207 = vst.msk [vmem:[#allocation3 + $0x100] sm:$0xff] %vm1174, %v1107
  %1208 = vst.msk [vmem:[#allocation3 + $0x108] sm:$0xff] %vm1174, %v1109
  %1209 = vst.msk [vmem:[#allocation3 + $0x110] sm:$0xff] %vm1174, %v1111
  %1210 = vst.msk [vmem:[#allocation3 + $0x118] sm:$0xff] %vm1174, %v1113
  %1211 = vst.msk [vmem:[#allocation3 + $0x120] sm:$0xff] %vm1174, %v1115
  %1212 = vst.msk [vmem:[#allocation3 + $0x128] sm:$0xff] %vm1174, %v1117
  %1213 = vst.msk [vmem:[#allocation3 + $0x130] sm:$0xff] %vm1174, %v1119
  %1214 = vst.msk [vmem:[#allocation3 + $0x138] sm:$0xff] %vm1174, %v1121
  %1215 = vst.msk [vmem:[#allocation3 + $0x140] sm:$0xff] %vm1174, %v1123
  %1216 = vst.msk [vmem:[#allocation3 + $0x148] sm:$0xff] %vm1174, %v1125
  %1217 = vst.msk [vmem:[#allocation3 + $0x150] sm:$0xff] %vm1174, %v1127
  %1218 = vst.msk [vmem:[#allocation3 + $0x158] sm:$0xff] %vm1174, %v1129
  %v1219 = vld [vmem:[#allocation2 + $0x12] sm:$0xff]
  %v1220 = vld [vmem:[#allocation2 + $0x1a] sm:$0xff]
  %v1221 = vld [vmem:[#allocation2 + $0x22] sm:$0xff]
  %v1222 = vld [vmem:[#allocation2 + $0x2a] sm:$0xff]
  %v1223 = vld [vmem:[#allocation2 + $0x32] sm:$0xff]
  %v1224 = vld [vmem:[#allocation2 + $0x3a] sm:$0xff]
  %v1225 = vld [vmem:[#allocation2 + $0x42] sm:$0xff]
  %v1226 = vld [vmem:[#allocation2 + $0x4a] sm:$0xff]
  %v1227 = vld [vmem:[#allocation2 + $0x52] sm:$0xff]
  %v1228 = vld [vmem:[#allocation2 + $0x5a] sm:$0xff]
  %v1229 = vld [vmem:[#allocation2 + $0x62] sm:$0xff]
  %v1230 = vld [vmem:[#allocation2 + $0x6a] sm:$0xff]
  %v1231 = vld [vmem:[#allocation2 + $0x72] sm:$0xff]
  %v1232 = vld [vmem:[#allocation2 + $0x7a] sm:$0xff]
  %v1233 = vld [vmem:[#allocation2 + $0x82] sm:$0xff]
  %v1234 = vld [vmem:[#allocation2 + $0x8a] sm:$0xff]
  %v1235 = vld [vmem:[#allocation2 + $0x92] sm:$0xff]
  %v1236 = vld [vmem:[#allocation2 + $0x9a] sm:$0xff]
  %v1237 = vld [vmem:[#allocation2 + $0xa2] sm:$0xff]
  %v1238 = vld [vmem:[#allocation2 + $0xaa] sm:$0xff]
  %v1239 = vld [vmem:[#allocation2 + $0xb2] sm:$0xff]
  %v1240 = vld [vmem:[#allocation2 + $0xba] sm:$0xff]
  %v1241 = vld [vmem:[#allocation2 + $0xc2] sm:$0xff]
  %v1242 = vld [vmem:[#allocation2 + $0xca] sm:$0xff]
  %v1243 = vld [vmem:[#allocation2 + $0xd2] sm:$0xff]
  %v1244 = vld [vmem:[#allocation2 + $0xda] sm:$0xff]
  %v1245 = vld [vmem:[#allocation2 + $0xe2] sm:$0xff]
  %v1246 = vld [vmem:[#allocation2 + $0xea] sm:$0xff]
  %v1247 = vld [vmem:[#allocation2 + $0xf2] sm:$0xff]
  %v1248 = vld [vmem:[#allocation2 + $0xfa] sm:$0xff]
  %v1249 = vld [vmem:[#allocation2 + $0x102] sm:$0xff]
  %v1250 = vld [vmem:[#allocation2 + $0x10a] sm:$0xff]
  %v1251 = vld [vmem:[#allocation2 + $0x112] sm:$0xff]
  %v1252 = vld [vmem:[#allocation2 + $0x11a] sm:$0xff]
  %v1253 = vld [vmem:[#allocation2 + $0x122] sm:$0xff]
  %v1254 = vld [vmem:[#allocation2 + $0x12a] sm:$0xff]
  %v1255 = vld [vmem:[#allocation2 + $0x132] sm:$0xff]
  %v1256 = vld [vmem:[#allocation2 + $0x13a] sm:$0xff]
  %v1257 = vld [vmem:[#allocation2 + $0x142] sm:$0xff]
  %v1258 = vld [vmem:[#allocation2 + $0x14a] sm:$0xff]
  %v1259 = vld [vmem:[#allocation2 + $0x152] sm:$0xff]
  %v1260 = vld [vmem:[#allocation2 + $0x15a] sm:$0xff]
  %v1261 = vld [vmem:[#allocation2 + $0x162] sm:$0xff]
  %v1262 = vld [vmem:[#allocation2 + $0x16a] sm:$0xff]
  %v1263 = vld [vmem:[#allocation2 + $0x172] sm:$0xff]
  %v1264 = vld [vmem:[#allocation2 + $0x17a] sm:$0xff]
  %v1265 = vld [vmem:[#allocation2 + $0x182] sm:$0xff]
  %v1266 = vld [vmem:[#allocation2 + $0x18a] sm:$0xff]
  %v1267 = vld [vmem:[#allocation2 + $0x192] sm:$0xff]
  %v1268 = vld [vmem:[#allocation2 + $0x19a] sm:$0xff]
  %v1269 = vld [vmem:[#allocation2 + $0x1a2] sm:$0xff]
  %v1270 = vld [vmem:[#allocation2 + $0x1aa] sm:$0xff]
  %v1271 = vld [vmem:[#allocation2 + $0x1b2] sm:$0xff]
  %v1272 = vld [vmem:[#allocation2 + $0x1ba] sm:$0xff]
  %v1273 = vld [vmem:[#allocation2 + $0x1c2] sm:$0xff]
  %v1274 = vld [vmem:[#allocation2 + $0x1ca] sm:$0xff]
  %v1275 = vld [vmem:[#allocation2 + $0x1d2] sm:$0xff]
  %v1276 = vld [vmem:[#allocation2 + $0x1da] sm:$0xff]
  %v1277 = vld [vmem:[#allocation2 + $0x1e2] sm:$0xff]
  %v1278 = vld [vmem:[#allocation2 + $0x1ea] sm:$0xff]
  %v1279 = vld [vmem:[#allocation2 + $0x1f2] sm:$0xff]
  %v1280 = vld [vmem:[#allocation2 + $0x1fa] sm:$0xff]
  %v1281 = vld [vmem:[#allocation2 + $0x202] sm:$0xff]
  %v1282 = vld [vmem:[#allocation2 + $0x20a] sm:$0xff]
  %v1283 = vld [vmem:[#allocation2 + $0x212] sm:$0xff]
  %v1284 = vld [vmem:[#allocation2 + $0x21a] sm:$0xff]
  %v1285 = vld [vmem:[#allocation2 + $0x222] sm:$0xff]
  %v1286 = vld [vmem:[#allocation2 + $0x22a] sm:$0xff]
  %v1287 = vld [vmem:[#allocation2 + $0x232] sm:$0xff]
  %v1288 = vld [vmem:[#allocation2 + $0x23a] sm:$0xff]
  %v1289 = vld [vmem:[#allocation2 + $0x242] sm:$0xff]
  %v1290 = vld [vmem:[#allocation2 + $0x24a] sm:$0xff]
  %v1291 = vld [vmem:[#allocation2 + $0x252] sm:$0xff]
  %v1292 = vld [vmem:[#allocation2 + $0x25a] sm:$0xff]
  %v1293 = vld [vmem:[#allocation2 + $0x262] sm:$0xff]
  %v1294 = vld [vmem:[#allocation2 + $0x26a] sm:$0xff]
  %v1295 = vld [vmem:[#allocation2 + $0x272] sm:$0xff]
  %v1296 = vld [vmem:[#allocation2 + $0x27a] sm:$0xff]
  %v1297 = vld [vmem:[#allocation2 + $0x282] sm:$0xff]
  %v1298 = vld [vmem:[#allocation2 + $0x28a] sm:$0xff]
  %v1299 = vld [vmem:[#allocation2 + $0x292] sm:$0xff]
  %v1300 = vld [vmem:[#allocation2 + $0x29a] sm:$0xff]
  %v1301 = vld [vmem:[#allocation2 + $0x2a2] sm:$0xff]
  %v1302 = vld [vmem:[#allocation2 + $0x2aa] sm:$0xff]
  %v1303 = vld [vmem:[#allocation2 + $0x2b2] sm:$0xff]
  %v1304 = vld [vmem:[#allocation2 + $0x2ba] sm:$0xff]
  %v1305 = vld [vmem:[#allocation2 + $0x2c2] sm:$0xff]
  %v1306 = vld [vmem:[#allocation2 + $0x2ca] sm:$0xff]
  %v1307 = vpack.c.bf16 %v1220, %v1219
  %v1308 = vpack.c.bf16 %v1222, %v1221
  %v1309 = vpack.c.bf16 %v1224, %v1223
  %v1310 = vpack.c.bf16 %v1226, %v1225
  %v1311 = vpack.c.bf16 %v1228, %v1227
  %v1312 = vpack.c.bf16 %v1230, %v1229
  %v1313 = vpack.c.bf16 %v1232, %v1231
  %v1314 = vpack.c.bf16 %v1234, %v1233
  %v1315 = vpack.c.bf16 %v1236, %v1235
  %v1316 = vpack.c.bf16 %v1238, %v1237
  %v1317 = vpack.c.bf16 %v1240, %v1239
  %v1318 = vpack.c.bf16 %v1242, %v1241
  %v1319 = vpack.c.bf16 %v1244, %v1243
  %v1320 = vpack.c.bf16 %v1246, %v1245
  %v1321 = vpack.c.bf16 %v1248, %v1247
  %v1322 = vpack.c.bf16 %v1250, %v1249
  %v1323 = vpack.c.bf16 %v1252, %v1251
  %v1324 = vpack.c.bf16 %v1254, %v1253
  %v1325 = vpack.c.bf16 %v1256, %v1255
  %v1326 = vpack.c.bf16 %v1258, %v1257
  %v1327 = vpack.c.bf16 %v1260, %v1259
  %v1328 = vpack.c.bf16 %v1262, %v1261
  %v1329 = vpack.c.bf16 %v1264, %v1263
  %v1330 = vpack.c.bf16 %v1266, %v1265
  %v1331 = vpack.c.bf16 %v1268, %v1267
  %v1332 = vpack.c.bf16 %v1270, %v1269
  %v1333 = vpack.c.bf16 %v1272, %v1271
  %v1334 = vpack.c.bf16 %v1274, %v1273
  %v1335 = vpack.c.bf16 %v1276, %v1275
  %v1336 = vpack.c.bf16 %v1278, %v1277
  %v1337 = vpack.c.bf16 %v1280, %v1279
  %v1338 = vpack.c.bf16 %v1282, %v1281
  %v1339 = vpack.c.bf16 %v1284, %v1283
  %v1340 = vpack.c.bf16 %v1286, %v1285
  %v1341 = vpack.c.bf16 %v1288, %v1287
  %v1342 = vpack.c.bf16 %v1290, %v1289
  %v1343 = vpack.c.bf16 %v1292, %v1291
  %v1344 = vpack.c.bf16 %v1294, %v1293
  %v1345 = vpack.c.bf16 %v1296, %v1295
  %v1346 = vpack.c.bf16 %v1298, %v1297
  %v1347 = vpack.c.bf16 %v1300, %v1299
  %v1348 = vpack.c.bf16 %v1302, %v1301
  %v1349 = vpack.c.bf16 %v1304, %v1303
  %v1350 = vpack.c.bf16 %v1306, %v1305
  %1395 = vrot.lane.b32.xlu0 %v1307, 12
  %v1396 = vpop.permute.xlu0 %1395
  %1397 = vrot.lane.b32.xlu0 %v1308, 12
  %v1398 = vpop.permute.xlu0 %1397
  %1399 = vrot.lane.b32.xlu0 %v1309, 12
  %v1400 = vpop.permute.xlu0 %1399
  %1401 = vrot.lane.b32.xlu0 %v1310, 12
  %v1402 = vpop.permute.xlu0 %1401
  %1403 = vrot.lane.b32.xlu0 %v1311, 12
  %v1404 = vpop.permute.xlu0 %1403
  %1405 = vrot.lane.b32.xlu0 %v1312, 12
  %v1406 = vpop.permute.xlu0 %1405
  %1407 = vrot.lane.b32.xlu0 %v1313, 12
  %v1408 = vpop.permute.xlu0 %1407
  %1409 = vrot.lane.b32.xlu0 %v1314, 12
  %v1410 = vpop.permute.xlu0 %1409
  %1411 = vrot.lane.b32.xlu0 %v1315, 12
  %v1412 = vpop.permute.xlu0 %1411
  %1413 = vrot.lane.b32.xlu0 %v1316, 12
  %v1414 = vpop.permute.xlu0 %1413
  %1415 = vrot.lane.b32.xlu0 %v1317, 12
  %v1416 = vpop.permute.xlu0 %1415
  %1417 = vrot.lane.b32.xlu0 %v1318, 12
  %v1418 = vpop.permute.xlu0 %1417
  %1419 = vrot.lane.b32.xlu0 %v1319, 12
  %v1420 = vpop.permute.xlu0 %1419
  %1421 = vrot.lane.b32.xlu0 %v1320, 12
  %v1422 = vpop.permute.xlu0 %1421
  %1423 = vrot.lane.b32.xlu0 %v1321, 12
  %v1424 = vpop.permute.xlu0 %1423
  %1425 = vrot.lane.b32.xlu0 %v1322, 12
  %v1426 = vpop.permute.xlu0 %1425
  %1427 = vrot.lane.b32.xlu0 %v1323, 12
  %v1428 = vpop.permute.xlu0 %1427
  %1429 = vrot.lane.b32.xlu0 %v1324, 12
  %v1430 = vpop.permute.xlu0 %1429
  %1431 = vrot.lane.b32.xlu0 %v1325, 12
  %v1432 = vpop.permute.xlu0 %1431
  %1433 = vrot.lane.b32.xlu0 %v1326, 12
  %v1434 = vpop.permute.xlu0 %1433
  %1435 = vrot.lane.b32.xlu0 %v1327, 12
  %v1436 = vpop.permute.xlu0 %1435
  %1437 = vrot.lane.b32.xlu0 %v1328, 12
  %v1438 = vpop.permute.xlu0 %1437
  %1439 = vrot.lane.b32.xlu0 %v1329, 12
  %v1440 = vpop.permute.xlu0 %1439
  %1441 = vrot.lane.b32.xlu0 %v1330, 12
  %v1442 = vpop.permute.xlu0 %1441
  %1443 = vrot.lane.b32.xlu0 %v1331, 12
  %v1444 = vpop.permute.xlu0 %1443
  %1445 = vrot.lane.b32.xlu0 %v1332, 12
  %v1446 = vpop.permute.xlu0 %1445
  %1447 = vrot.lane.b32.xlu0 %v1333, 12
  %v1448 = vpop.permute.xlu0 %1447
  %1449 = vrot.lane.b32.xlu0 %v1334, 12
  %v1450 = vpop.permute.xlu0 %1449
  %1451 = vrot.lane.b32.xlu0 %v1335, 12
  %v1452 = vpop.permute.xlu0 %1451
  %1453 = vrot.lane.b32.xlu0 %v1336, 12
  %v1454 = vpop.permute.xlu0 %1453
  %1455 = vrot.lane.b32.xlu0 %v1337, 12
  %v1456 = vpop.permute.xlu0 %1455
  %1457 = vrot.lane.b32.xlu0 %v1338, 12
  %v1458 = vpop.permute.xlu0 %1457
  %1459 = vrot.lane.b32.xlu0 %v1339, 12
  %v1460 = vpop.permute.xlu0 %1459
  %1461 = vrot.lane.b32.xlu0 %v1340, 12
  %v1462 = vpop.permute.xlu0 %1461
  %1463 = vrot.lane.b32.xlu0 %v1341, 12
  %v1464 = vpop.permute.xlu0 %1463
  %1465 = vrot.lane.b32.xlu0 %v1342, 12
  %v1466 = vpop.permute.xlu0 %1465
  %1467 = vrot.lane.b32.xlu0 %v1343, 12
  %v1468 = vpop.permute.xlu0 %1467
  %1469 = vrot.lane.b32.xlu0 %v1344, 12
  %v1470 = vpop.permute.xlu0 %1469
  %1471 = vrot.lane.b32.xlu0 %v1345, 12
  %v1472 = vpop.permute.xlu0 %1471
  %1473 = vrot.lane.b32.xlu0 %v1346, 12
  %v1474 = vpop.permute.xlu0 %1473
  %1475 = vrot.lane.b32.xlu0 %v1347, 12
  %v1476 = vpop.permute.xlu0 %1475
  %1477 = vrot.lane.b32.xlu0 %v1348, 12
  %v1478 = vpop.permute.xlu0 %1477
  %1479 = vrot.lane.b32.xlu0 %v1349, 12
  %v1480 = vpop.permute.xlu0 %1479
  %1481 = vrot.lane.b32.xlu0 %v1350, 12
  %v1482 = vpop.permute.xlu0 %1481
  %vm1527 = vcmask 130144
  %1528 = vst.msk [vmem:[#allocation3] sm:$0xff] %vm1527, %v1396
  %1529 = vst.msk [vmem:[#allocation3 + $0x8] sm:$0xff] %vm1527, %v1398
  %1530 = vst.msk [vmem:[#allocation3 + $0x10] sm:$0xff] %vm1527, %v1400
  %1531 = vst.msk [vmem:[#allocation3 + $0x18] sm:$0xff] %vm1527, %v1402
  %1532 = vst.msk [vmem:[#allocation3 + $0x20] sm:$0xff] %vm1527, %v1404
  %1533 = vst.msk [vmem:[#allocation3 + $0x28] sm:$0xff] %vm1527, %v1406
  %1534 = vst.msk [vmem:[#allocation3 + $0x30] sm:$0xff] %vm1527, %v1408
  %1535 = vst.msk [vmem:[#allocation3 + $0x38] sm:$0xff] %vm1527, %v1410
  %1536 = vst.msk [vmem:[#allocation3 + $0x40] sm:$0xff] %vm1527, %v1412
  %1537 = vst.msk [vmem:[#allocation3 + $0x48] sm:$0xff] %vm1527, %v1414
  %1538 = vst.msk [vmem:[#allocation3 + $0x50] sm:$0xff] %vm1527, %v1416
  %1539 = vst.msk [vmem:[#allocation3 + $0x58] sm:$0xff] %vm1527, %v1418
  %1540 = vst.msk [vmem:[#allocation3 + $0x60] sm:$0xff] %vm1527, %v1420
  %1541 = vst.msk [vmem:[#allocation3 + $0x68] sm:$0xff] %vm1527, %v1422
  %1542 = vst.msk [vmem:[#allocation3 + $0x70] sm:$0xff] %vm1527, %v1424
  %1543 = vst.msk [vmem:[#allocation3 + $0x78] sm:$0xff] %vm1527, %v1426
  %1544 = vst.msk [vmem:[#allocation3 + $0x80] sm:$0xff] %vm1527, %v1428
  %1545 = vst.msk [vmem:[#allocation3 + $0x88] sm:$0xff] %vm1527, %v1430
  %1546 = vst.msk [vmem:[#allocation3 + $0x90] sm:$0xff] %vm1527, %v1432
  %1547 = vst.msk [vmem:[#allocation3 + $0x98] sm:$0xff] %vm1527, %v1434
  %1548 = vst.msk [vmem:[#allocation3 + $0xa0] sm:$0xff] %vm1527, %v1436
  %1549 = vst.msk [vmem:[#allocation3 + $0xa8] sm:$0xff] %vm1527, %v1438
  %1550 = vst.msk [vmem:[#allocation3 + $0xb0] sm:$0xff] %vm1527, %v1440
  %1551 = vst.msk [vmem:[#allocation3 + $0xb8] sm:$0xff] %vm1527, %v1442
  %1552 = vst.msk [vmem:[#allocation3 + $0xc0] sm:$0xff] %vm1527, %v1444
  %1553 = vst.msk [vmem:[#allocation3 + $0xc8] sm:$0xff] %vm1527, %v1446
  %1554 = vst.msk [vmem:[#allocation3 + $0xd0] sm:$0xff] %vm1527, %v1448
  %1555 = vst.msk [vmem:[#allocation3 + $0xd8] sm:$0xff] %vm1527, %v1450
  %1556 = vst.msk [vmem:[#allocation3 + $0xe0] sm:$0xff] %vm1527, %v1452
  %1557 = vst.msk [vmem:[#allocation3 + $0xe8] sm:$0xff] %vm1527, %v1454
  %1558 = vst.msk [vmem:[#allocation3 + $0xf0] sm:$0xff] %vm1527, %v1456
  %1559 = vst.msk [vmem:[#allocation3 + $0xf8] sm:$0xff] %vm1527, %v1458
  %1560 = vst.msk [vmem:[#allocation3 + $0x100] sm:$0xff] %vm1527, %v1460
  %1561 = vst.msk [vmem:[#allocation3 + $0x108] sm:$0xff] %vm1527, %v1462
  %1562 = vst.msk [vmem:[#allocation3 + $0x110] sm:$0xff] %vm1527, %v1464
  %1563 = vst.msk [vmem:[#allocation3 + $0x118] sm:$0xff] %vm1527, %v1466
  %1564 = vst.msk [vmem:[#allocation3 + $0x120] sm:$0xff] %vm1527, %v1468
  %1565 = vst.msk [vmem:[#allocation3 + $0x128] sm:$0xff] %vm1527, %v1470
  %1566 = vst.msk [vmem:[#allocation3 + $0x130] sm:$0xff] %vm1527, %v1472
  %1567 = vst.msk [vmem:[#allocation3 + $0x138] sm:$0xff] %vm1527, %v1474
  %1568 = vst.msk [vmem:[#allocation3 + $0x140] sm:$0xff] %vm1527, %v1476
  %1569 = vst.msk [vmem:[#allocation3 + $0x148] sm:$0xff] %vm1527, %v1478
  %1570 = vst.msk [vmem:[#allocation3 + $0x150] sm:$0xff] %vm1527, %v1480
  %1571 = vst.msk [vmem:[#allocation3 + $0x158] sm:$0xff] %vm1527, %v1482
  %v1572 = vld [vmem:[#allocation2 + $0x13] sm:$0xff]
  %v1573 = vld [vmem:[#allocation2 + $0x1b] sm:$0xff]
  %v1574 = vld [vmem:[#allocation2 + $0x23] sm:$0xff]
  %v1575 = vld [vmem:[#allocation2 + $0x2b] sm:$0xff]
  %v1576 = vld [vmem:[#allocation2 + $0x33] sm:$0xff]
  %v1577 = vld [vmem:[#allocation2 + $0x3b] sm:$0xff]
  %v1578 = vld [vmem:[#allocation2 + $0x43] sm:$0xff]
  %v1579 = vld [vmem:[#allocation2 + $0x4b] sm:$0xff]
  %v1580 = vld [vmem:[#allocation2 + $0x53] sm:$0xff]
  %v1581 = vld [vmem:[#allocation2 + $0x5b] sm:$0xff]
  %v1582 = vld [vmem:[#allocation2 + $0x63] sm:$0xff]
  %v1583 = vld [vmem:[#allocation2 + $0x6b] sm:$0xff]
  %v1584 = vld [vmem:[#allocation2 + $0x73] sm:$0xff]
  %v1585 = vld [vmem:[#allocation2 + $0x7b] sm:$0xff]
  %v1586 = vld [vmem:[#allocation2 + $0x83] sm:$0xff]
  %v1587 = vld [vmem:[#allocation2 + $0x8b] sm:$0xff]
  %v1588 = vld [vmem:[#allocation2 + $0x93] sm:$0xff]
  %v1589 = vld [vmem:[#allocation2 + $0x9b] sm:$0xff]
  %v1590 = vld [vmem:[#allocation2 + $0xa3] sm:$0xff]
  %v1591 = vld [vmem:[#allocation2 + $0xab] sm:$0xff]
  %v1592 = vld [vmem:[#allocation2 + $0xb3] sm:$0xff]
  %v1593 = vld [vmem:[#allocation2 + $0xbb] sm:$0xff]
  %v1594 = vld [vmem:[#allocation2 + $0xc3] sm:$0xff]
  %v1595 = vld [vmem:[#allocation2 + $0xcb] sm:$0xff]
  %v1596 = vld [vmem:[#allocation2 + $0xd3] sm:$0xff]
  %v1597 = vld [vmem:[#allocation2 + $0xdb] sm:$0xff]
  %v1598 = vld [vmem:[#allocation2 + $0xe3] sm:$0xff]
  %v1599 = vld [vmem:[#allocation2 + $0xeb] sm:$0xff]
  %v1600 = vld [vmem:[#allocation2 + $0xf3] sm:$0xff]
  %v1601 = vld [vmem:[#allocation2 + $0xfb] sm:$0xff]
  %v1602 = vld [vmem:[#allocation2 + $0x103] sm:$0xff]
  %v1603 = vld [vmem:[#allocation2 + $0x10b] sm:$0xff]
  %v1604 = vld [vmem:[#allocation2 + $0x113] sm:$0xff]
  %v1605 = vld [vmem:[#allocation2 + $0x11b] sm:$0xff]
  %v1606 = vld [vmem:[#allocation2 + $0x123] sm:$0xff]
  %v1607 = vld [vmem:[#allocation2 + $0x12b] sm:$0xff]
  %v1608 = vld [vmem:[#allocation2 + $0x133] sm:$0xff]
  %v1609 = vld [vmem:[#allocation2 + $0x13b] sm:$0xff]
  %v1610 = vld [vmem:[#allocation2 + $0x143] sm:$0xff]
  %v1611 = vld [vmem:[#allocation2 + $0x14b] sm:$0xff]
  %v1612 = vld [vmem:[#allocation2 + $0x153] sm:$0xff]
  %v1613 = vld [vmem:[#allocation2 + $0x15b] sm:$0xff]
  %v1614 = vld [vmem:[#allocation2 + $0x163] sm:$0xff]
  %v1615 = vld [vmem:[#allocation2 + $0x16b] sm:$0xff]
  %v1616 = vld [vmem:[#allocation2 + $0x173] sm:$0xff]
  %v1617 = vld [vmem:[#allocation2 + $0x17b] sm:$0xff]
  %v1618 = vld [vmem:[#allocation2 + $0x183] sm:$0xff]
  %v1619 = vld [vmem:[#allocation2 + $0x18b] sm:$0xff]
  %v1620 = vld [vmem:[#allocation2 + $0x193] sm:$0xff]
  %v1621 = vld [vmem:[#allocation2 + $0x19b] sm:$0xff]
  %v1622 = vld [vmem:[#allocation2 + $0x1a3] sm:$0xff]
  %v1623 = vld [vmem:[#allocation2 + $0x1ab] sm:$0xff]
  %v1624 = vld [vmem:[#allocation2 + $0x1b3] sm:$0xff]
  %v1625 = vld [vmem:[#allocation2 + $0x1bb] sm:$0xff]
  %v1626 = vld [vmem:[#allocation2 + $0x1c3] sm:$0xff]
  %v1627 = vld [vmem:[#allocation2 + $0x1cb] sm:$0xff]
  %v1628 = vld [vmem:[#allocation2 + $0x1d3] sm:$0xff]
  %v1629 = vld [vmem:[#allocation2 + $0x1db] sm:$0xff]
  %v1630 = vld [vmem:[#allocation2 + $0x1e3] sm:$0xff]
  %v1631 = vld [vmem:[#allocation2 + $0x1eb] sm:$0xff]
  %v1632 = vld [vmem:[#allocation2 + $0x1f3] sm:$0xff]
  %v1633 = vld [vmem:[#allocation2 + $0x1fb] sm:$0xff]
  %v1634 = vld [vmem:[#allocation2 + $0x203] sm:$0xff]
  %v1635 = vld [vmem:[#allocation2 + $0x20b] sm:$0xff]
  %v1636 = vld [vmem:[#allocation2 + $0x213] sm:$0xff]
  %v1637 = vld [vmem:[#allocation2 + $0x21b] sm:$0xff]
  %v1638 = vld [vmem:[#allocation2 + $0x223] sm:$0xff]
  %v1639 = vld [vmem:[#allocation2 + $0x22b] sm:$0xff]
  %v1640 = vld [vmem:[#allocation2 + $0x233] sm:$0xff]
  %v1641 = vld [vmem:[#allocation2 + $0x23b] sm:$0xff]
  %v1642 = vld [vmem:[#allocation2 + $0x243] sm:$0xff]
  %v1643 = vld [vmem:[#allocation2 + $0x24b] sm:$0xff]
  %v1644 = vld [vmem:[#allocation2 + $0x253] sm:$0xff]
  %v1645 = vld [vmem:[#allocation2 + $0x25b] sm:$0xff]
  %v1646 = vld [vmem:[#allocation2 + $0x263] sm:$0xff]
  %v1647 = vld [vmem:[#allocation2 + $0x26b] sm:$0xff]
  %v1648 = vld [vmem:[#allocation2 + $0x273] sm:$0xff]
  %v1649 = vld [vmem:[#allocation2 + $0x27b] sm:$0xff]
  %v1650 = vld [vmem:[#allocation2 + $0x283] sm:$0xff]
  %v1651 = vld [vmem:[#allocation2 + $0x28b] sm:$0xff]
  %v1652 = vld [vmem:[#allocation2 + $0x293] sm:$0xff]
  %v1653 = vld [vmem:[#allocation2 + $0x29b] sm:$0xff]
  %v1654 = vld [vmem:[#allocation2 + $0x2a3] sm:$0xff]
  %v1655 = vld [vmem:[#allocation2 + $0x2ab] sm:$0xff]
  %v1656 = vld [vmem:[#allocation2 + $0x2b3] sm:$0xff]
  %v1657 = vld [vmem:[#allocation2 + $0x2bb] sm:$0xff]
  %v1658 = vld [vmem:[#allocation2 + $0x2c3] sm:$0xff]
  %v1659 = vld [vmem:[#allocation2 + $0x2cb] sm:$0xff]
  %v1660 = vpack.c.bf16 %v1573, %v1572
  %v1661 = vpack.c.bf16 %v1575, %v1574
  %v1662 = vpack.c.bf16 %v1577, %v1576
  %v1663 = vpack.c.bf16 %v1579, %v1578
  %v1664 = vpack.c.bf16 %v1581, %v1580
  %v1665 = vpack.c.bf16 %v1583, %v1582
  %v1666 = vpack.c.bf16 %v1585, %v1584
  %v1667 = vpack.c.bf16 %v1587, %v1586
  %v1668 = vpack.c.bf16 %v1589, %v1588
  %v1669 = vpack.c.bf16 %v1591, %v1590
  %v1670 = vpack.c.bf16 %v1593, %v1592
  %v1671 = vpack.c.bf16 %v1595, %v1594
  %v1672 = vpack.c.bf16 %v1597, %v1596
  %v1673 = vpack.c.bf16 %v1599, %v1598
  %v1674 = vpack.c.bf16 %v1601, %v1600
  %v1675 = vpack.c.bf16 %v1603, %v1602
  %v1676 = vpack.c.bf16 %v1605, %v1604
  %v1677 = vpack.c.bf16 %v1607, %v1606
  %v1678 = vpack.c.bf16 %v1609, %v1608
  %v1679 = vpack.c.bf16 %v1611, %v1610
  %v1680 = vpack.c.bf16 %v1613, %v1612
  %v1681 = vpack.c.bf16 %v1615, %v1614
  %v1682 = vpack.c.bf16 %v1617, %v1616
  %v1683 = vpack.c.bf16 %v1619, %v1618
  %v1684 = vpack.c.bf16 %v1621, %v1620
  %v1685 = vpack.c.bf16 %v1623, %v1622
  %v1686 = vpack.c.bf16 %v1625, %v1624
  %v1687 = vpack.c.bf16 %v1627, %v1626
  %v1688 = vpack.c.bf16 %v1629, %v1628
  %v1689 = vpack.c.bf16 %v1631, %v1630
  %v1690 = vpack.c.bf16 %v1633, %v1632
  %v1691 = vpack.c.bf16 %v1635, %v1634
  %v1692 = vpack.c.bf16 %v1637, %v1636
  %v1693 = vpack.c.bf16 %v1639, %v1638
  %v1694 = vpack.c.bf16 %v1641, %v1640
  %v1695 = vpack.c.bf16 %v1643, %v1642
  %v1696 = vpack.c.bf16 %v1645, %v1644
  %v1697 = vpack.c.bf16 %v1647, %v1646
  %v1698 = vpack.c.bf16 %v1649, %v1648
  %v1699 = vpack.c.bf16 %v1651, %v1650
  %v1700 = vpack.c.bf16 %v1653, %v1652
  %v1701 = vpack.c.bf16 %v1655, %v1654
  %v1702 = vpack.c.bf16 %v1657, %v1656
  %v1703 = vpack.c.bf16 %v1659, %v1658
  %1748 = vrot.lane.b32.xlu0 %v1660, 16
  %v1749 = vpop.permute.xlu0 %1748
  %1750 = vrot.lane.b32.xlu0 %v1661, 16
  %v1751 = vpop.permute.xlu0 %1750
  %1752 = vrot.lane.b32.xlu0 %v1662, 16
  %v1753 = vpop.permute.xlu0 %1752
  %1754 = vrot.lane.b32.xlu0 %v1663, 16
  %v1755 = vpop.permute.xlu0 %1754
  %1756 = vrot.lane.b32.xlu0 %v1664, 16
  %v1757 = vpop.permute.xlu0 %1756
  %1758 = vrot.lane.b32.xlu0 %v1665, 16
  %v1759 = vpop.permute.xlu0 %1758
  %1760 = vrot.lane.b32.xlu0 %v1666, 16
  %v1761 = vpop.permute.xlu0 %1760
  %1762 = vrot.lane.b32.xlu0 %v1667, 16
  %v1763 = vpop.permute.xlu0 %1762
  %1764 = vrot.lane.b32.xlu0 %v1668, 16
  %v1765 = vpop.permute.xlu0 %1764
  %1766 = vrot.lane.b32.xlu0 %v1669, 16
  %v1767 = vpop.permute.xlu0 %1766
  %1768 = vrot.lane.b32.xlu0 %v1670, 16
  %v1769 = vpop.permute.xlu0 %1768
  %1770 = vrot.lane.b32.xlu0 %v1671, 16
  %v1771 = vpop.permute.xlu0 %1770
  %1772 = vrot.lane.b32.xlu0 %v1672, 16
  %v1773 = vpop.permute.xlu0 %1772
  %1774 = vrot.lane.b32.xlu0 %v1673, 16
  %v1775 = vpop.permute.xlu0 %1774
  %1776 = vrot.lane.b32.xlu0 %v1674, 16
  %v1777 = vpop.permute.xlu0 %1776
  %1778 = vrot.lane.b32.xlu0 %v1675, 16
  %v1779 = vpop.permute.xlu0 %1778
  %1780 = vrot.lane.b32.xlu0 %v1676, 16
  %v1781 = vpop.permute.xlu0 %1780
  %1782 = vrot.lane.b32.xlu0 %v1677, 16
  %v1783 = vpop.permute.xlu0 %1782
  %1784 = vrot.lane.b32.xlu0 %v1678, 16
  %v1785 = vpop.permute.xlu0 %1784
  %1786 = vrot.lane.b32.xlu0 %v1679, 16
  %v1787 = vpop.permute.xlu0 %1786
  %1788 = vrot.lane.b32.xlu0 %v1680, 16
  %v1789 = vpop.permute.xlu0 %1788
  %1790 = vrot.lane.b32.xlu0 %v1681, 16
  %v1791 = vpop.permute.xlu0 %1790
  %1792 = vrot.lane.b32.xlu0 %v1682, 16
  %v1793 = vpop.permute.xlu0 %1792
  %1794 = vrot.lane.b32.xlu0 %v1683, 16
  %v1795 = vpop.permute.xlu0 %1794
  %1796 = vrot.lane.b32.xlu0 %v1684, 16
  %v1797 = vpop.permute.xlu0 %1796
  %1798 = vrot.lane.b32.xlu0 %v1685, 16
  %v1799 = vpop.permute.xlu0 %1798
  %1800 = vrot.lane.b32.xlu0 %v1686, 16
  %v1801 = vpop.permute.xlu0 %1800
  %1802 = vrot.lane.b32.xlu0 %v1687, 16
  %v1803 = vpop.permute.xlu0 %1802
  %1804 = vrot.lane.b32.xlu0 %v1688, 16
  %v1805 = vpop.permute.xlu0 %1804
  %1806 = vrot.lane.b32.xlu0 %v1689, 16
  %v1807 = vpop.permute.xlu0 %1806
  %1808 = vrot.lane.b32.xlu0 %v1690, 16
  %v1809 = vpop.permute.xlu0 %1808
  %1810 = vrot.lane.b32.xlu0 %v1691, 16
  %v1811 = vpop.permute.xlu0 %1810
  %1812 = vrot.lane.b32.xlu0 %v1692, 16
  %v1813 = vpop.permute.xlu0 %1812
  %1814 = vrot.lane.b32.xlu0 %v1693, 16
  %v1815 = vpop.permute.xlu0 %1814
  %1816 = vrot.lane.b32.xlu0 %v1694, 16
  %v1817 = vpop.permute.xlu0 %1816
  %1818 = vrot.lane.b32.xlu0 %v1695, 16
  %v1819 = vpop.permute.xlu0 %1818
  %1820 = vrot.lane.b32.xlu0 %v1696, 16
  %v1821 = vpop.permute.xlu0 %1820
  %1822 = vrot.lane.b32.xlu0 %v1697, 16
  %v1823 = vpop.permute.xlu0 %1822
  %1824 = vrot.lane.b32.xlu0 %v1698, 16
  %v1825 = vpop.permute.xlu0 %1824
  %1826 = vrot.lane.b32.xlu0 %v1699, 16
  %v1827 = vpop.permute.xlu0 %1826
  %1828 = vrot.lane.b32.xlu0 %v1700, 16
  %v1829 = vpop.permute.xlu0 %1828
  %1830 = vrot.lane.b32.xlu0 %v1701, 16
  %v1831 = vpop.permute.xlu0 %1830
  %1832 = vrot.lane.b32.xlu0 %v1702, 16
  %v1833 = vpop.permute.xlu0 %1832
  %1834 = vrot.lane.b32.xlu0 %v1703, 16
  %v1835 = vpop.permute.xlu0 %1834
  %vm1880 = vcmask 162944
  %1881 = vst.msk [vmem:[#allocation3] sm:$0xff] %vm1880, %v1749
  %1882 = vst.msk [vmem:[#allocation3 + $0x8] sm:$0xff] %vm1880, %v1751
  %1883 = vst.msk [vmem:[#allocation3 + $0x10] sm:$0xff] %vm1880, %v1753
  %1884 = vst.msk [vmem:[#allocation3 + $0x18] sm:$0xff] %vm1880, %v1755
  %1885 = vst.msk [vmem:[#allocation3 + $0x20] sm:$0xff] %vm1880, %v1757
  %1886 = vst.msk [vmem:[#allocation3 + $0x28] sm:$0xff] %vm1880, %v1759
  %1887 = vst.msk [vmem:[#allocation3 + $0x30] sm:$0xff] %vm1880, %v1761
  %1888 = vst.msk [vmem:[#allocation3 + $0x38] sm:$0xff] %vm1880, %v1763
  %1889 = vst.msk [vmem:[#allocation3 + $0x40] sm:$0xff] %vm1880, %v1765
  %1890 = vst.msk [vmem:[#allocation3 + $0x48] sm:$0xff] %vm1880, %v1767
  %1891 = vst.msk [vmem:[#allocation3 + $0x50] sm:$0xff] %vm1880, %v1769
  %1892 = vst.msk [vmem:[#allocation3 + $0x58] sm:$0xff] %vm1880, %v1771
  %1893 = vst.msk [vmem:[#allocation3 + $0x60] sm:$0xff] %vm1880, %v1773
  %1894 = vst.msk [vmem:[#allocation3 + $0x68] sm:$0xff] %vm1880, %v1775
  %1895 = vst.msk [vmem:[#allocation3 + $0x70] sm:$0xff] %vm1880, %v1777
  %1896 = vst.msk [vmem:[#allocation3 + $0x78] sm:$0xff] %vm1880, %v1779
  %1897 = vst.msk [vmem:[#allocation3 + $0x80] sm:$0xff] %vm1880, %v1781
  %1898 = vst.msk [vmem:[#allocation3 + $0x88] sm:$0xff] %vm1880, %v1783
  %1899 = vst.msk [vmem:[#allocation3 + $0x90] sm:$0xff] %vm1880, %v1785
  %1900 = vst.msk [vmem:[#allocation3 + $0x98] sm:$0xff] %vm1880, %v1787
  %1901 = vst.msk [vmem:[#allocation3 + $0xa0] sm:$0xff] %vm1880, %v1789
  %1902 = vst.msk [vmem:[#allocation3 + $0xa8] sm:$0xff] %vm1880, %v1791
  %1903 = vst.msk [vmem:[#allocation3 + $0xb0] sm:$0xff] %vm1880, %v1793
  %1904 = vst.msk [vmem:[#allocation3 + $0xb8] sm:$0xff] %vm1880, %v1795
  %1905 = vst.msk [vmem:[#allocation3 + $0xc0] sm:$0xff] %vm1880, %v1797
  %1906 = vst.msk [vmem:[#allocation3 + $0xc8] sm:$0xff] %vm1880, %v1799
  %1907 = vst.msk [vmem:[#allocation3 + $0xd0] sm:$0xff] %vm1880, %v1801
  %1908 = vst.msk [vmem:[#allocation3 + $0xd8] sm:$0xff] %vm1880, %v1803
  %1909 = vst.msk [vmem:[#allocation3 + $0xe0] sm:$0xff] %vm1880, %v1805
  %1910 = vst.msk [vmem:[#allocation3 + $0xe8] sm:$0xff] %vm1880, %v1807
  %1911 = vst.msk [vmem:[#allocation3 + $0xf0] sm:$0xff] %vm1880, %v1809
  %1912 = vst.msk [vmem:[#allocation3 + $0xf8] sm:$0xff] %vm1880, %v1811
  %1913 = vst.msk [vmem:[#allocation3 + $0x100] sm:$0xff] %vm1880, %v1813
  %1914 = vst.msk [vmem:[#allocation3 + $0x108] sm:$0xff] %vm1880, %v1815
  %1915 = vst.msk [vmem:[#allocation3 + $0x110] sm:$0xff] %vm1880, %v1817
  %1916 = vst.msk [vmem:[#allocation3 + $0x118] sm:$0xff] %vm1880, %v1819
  %1917 = vst.msk [vmem:[#allocation3 + $0x120] sm:$0xff] %vm1880, %v1821
  %1918 = vst.msk [vmem:[#allocation3 + $0x128] sm:$0xff] %vm1880, %v1823
  %1919 = vst.msk [vmem:[#allocation3 + $0x130] sm:$0xff] %vm1880, %v1825
  %1920 = vst.msk [vmem:[#allocation3 + $0x138] sm:$0xff] %vm1880, %v1827
  %1921 = vst.msk [vmem:[#allocation3 + $0x140] sm:$0xff] %vm1880, %v1829
  %1922 = vst.msk [vmem:[#allocation3 + $0x148] sm:$0xff] %vm1880, %v1831
  %1923 = vst.msk [vmem:[#allocation3 + $0x150] sm:$0xff] %vm1880, %v1833
  %1924 = vst.msk [vmem:[#allocation3 + $0x158] sm:$0xff] %vm1880, %v1835
  %v1925 = vld [vmem:[#allocation2 + $0x14] sm:$0xff]
  %v1926 = vld [vmem:[#allocation2 + $0x1c] sm:$0xff]
  %v1927 = vld [vmem:[#allocation2 + $0x24] sm:$0xff]
  %v1928 = vld [vmem:[#allocation2 + $0x2c] sm:$0xff]
  %v1929 = vld [vmem:[#allocation2 + $0x34] sm:$0xff]
  %v1930 = vld [vmem:[#allocation2 + $0x3c] sm:$0xff]
  %v1931 = vld [vmem:[#allocation2 + $0x44] sm:$0xff]
  %v1932 = vld [vmem:[#allocation2 + $0x4c] sm:$0xff]
  %v1933 = vld [vmem:[#allocation2 + $0x54] sm:$0xff]
  %v1934 = vld [vmem:[#allocation2 + $0x5c] sm:$0xff]
  %v1935 = vld [vmem:[#allocation2 + $0x64] sm:$0xff]
  %v1936 = vld [vmem:[#allocation2 + $0x6c] sm:$0xff]
  %v1937 = vld [vmem:[#allocation2 + $0x74] sm:$0xff]
  %v1938 = vld [vmem:[#allocation2 + $0x7c] sm:$0xff]
  %v1939 = vld [vmem:[#allocation2 + $0x84] sm:$0xff]
  %v1940 = vld [vmem:[#allocation2 + $0x8c] sm:$0xff]
  %v1941 = vld [vmem:[#allocation2 + $0x94] sm:$0xff]
  %v1942 = vld [vmem:[#allocation2 + $0x9c] sm:$0xff]
  %v1943 = vld [vmem:[#allocation2 + $0xa4] sm:$0xff]
  %v1944 = vld [vmem:[#allocation2 + $0xac] sm:$0xff]
  %v1945 = vld [vmem:[#allocation2 + $0xb4] sm:$0xff]
  %v1946 = vld [vmem:[#allocation2 + $0xbc] sm:$0xff]
  %v1947 = vld [vmem:[#allocation2 + $0xc4] sm:$0xff]
  %v1948 = vld [vmem:[#allocation2 + $0xcc] sm:$0xff]
  %v1949 = vld [vmem:[#allocation2 + $0xd4] sm:$0xff]
  %v1950 = vld [vmem:[#allocation2 + $0xdc] sm:$0xff]
  %v1951 = vld [vmem:[#allocation2 + $0xe4] sm:$0xff]
  %v1952 = vld [vmem:[#allocation2 + $0xec] sm:$0xff]
  %v1953 = vld [vmem:[#allocation2 + $0xf4] sm:$0xff]
  %v1954 = vld [vmem:[#allocation2 + $0xfc] sm:$0xff]
  %v1955 = vld [vmem:[#allocation2 + $0x104] sm:$0xff]
  %v1956 = vld [vmem:[#allocation2 + $0x10c] sm:$0xff]
  %v1957 = vld [vmem:[#allocation2 + $0x114] sm:$0xff]
  %v1958 = vld [vmem:[#allocation2 + $0x11c] sm:$0xff]
  %v1959 = vld [vmem:[#allocation2 + $0x124] sm:$0xff]
  %v1960 = vld [vmem:[#allocation2 + $0x12c] sm:$0xff]
  %v1961 = vld [vmem:[#allocation2 + $0x134] sm:$0xff]
  %v1962 = vld [vmem:[#allocation2 + $0x13c] sm:$0xff]
  %v1963 = vld [vmem:[#allocation2 + $0x144] sm:$0xff]
  %v1964 = vld [vmem:[#allocation2 + $0x14c] sm:$0xff]
  %v1965 = vld [vmem:[#allocation2 + $0x154] sm:$0xff]
  %v1966 = vld [vmem:[#allocation2 + $0x15c] sm:$0xff]
  %v1967 = vld [vmem:[#allocation2 + $0x164] sm:$0xff]
  %v1968 = vld [vmem:[#allocation2 + $0x16c] sm:$0xff]
  %v1969 = vld [vmem:[#allocation2 + $0x174] sm:$0xff]
  %v1970 = vld [vmem:[#allocation2 + $0x17c] sm:$0xff]
  %v1971 = vld [vmem:[#allocation2 + $0x184] sm:$0xff]
  %v1972 = vld [vmem:[#allocation2 + $0x18c] sm:$0xff]
  %v1973 = vld [vmem:[#allocation2 + $0x194] sm:$0xff]
  %v1974 = vld [vmem:[#allocation2 + $0x19c] sm:$0xff]
  %v1975 = vld [vmem:[#allocation2 + $0x1a4] sm:$0xff]
  %v1976 = vld [vmem:[#allocation2 + $0x1ac] sm:$0xff]
  %v1977 = vld [vmem:[#allocation2 + $0x1b4] sm:$0xff]
  %v1978 = vld [vmem:[#allocation2 + $0x1bc] sm:$0xff]
  %v1979 = vld [vmem:[#allocation2 + $0x1c4] sm:$0xff]
  %v1980 = vld [vmem:[#allocation2 + $0x1cc] sm:$0xff]
  %v1981 = vld [vmem:[#allocation2 + $0x1d4] sm:$0xff]
  %v1982 = vld [vmem:[#allocation2 + $0x1dc] sm:$0xff]
  %v1983 = vld [vmem:[#allocation2 + $0x1e4] sm:$0xff]
  %v1984 = vld [vmem:[#allocation2 + $0x1ec] sm:$0xff]
  %v1985 = vld [vmem:[#allocation2 + $0x1f4] sm:$0xff]
  %v1986 = vld [vmem:[#allocation2 + $0x1fc] sm:$0xff]
  %v1987 = vld [vmem:[#allocation2 + $0x204] sm:$0xff]
  %v1988 = vld [vmem:[#allocation2 + $0x20c] sm:$0xff]
  %v1989 = vld [vmem:[#allocation2 + $0x214] sm:$0xff]
  %v1990 = vld [vmem:[#allocation2 + $0x21c] sm:$0xff]
  %v1991 = vld [vmem:[#allocation2 + $0x224] sm:$0xff]
  %v1992 = vld [vmem:[#allocation2 + $0x22c] sm:$0xff]
  %v1993 = vld [vmem:[#allocation2 + $0x234] sm:$0xff]
  %v1994 = vld [vmem:[#allocation2 + $0x23c] sm:$0xff]
  %v1995 = vld [vmem:[#allocation2 + $0x244] sm:$0xff]
  %v1996 = vld [vmem:[#allocation2 + $0x24c] sm:$0xff]
  %v1997 = vld [vmem:[#allocation2 + $0x254] sm:$0xff]
  %v1998 = vld [vmem:[#allocation2 + $0x25c] sm:$0xff]
  %v1999 = vld [vmem:[#allocation2 + $0x264] sm:$0xff]
  %v2000 = vld [vmem:[#allocation2 + $0x26c] sm:$0xff]
  %v2001 = vld [vmem:[#allocation2 + $0x274] sm:$0xff]
  %v2002 = vld [vmem:[#allocation2 + $0x27c] sm:$0xff]
  %v2003 = vld [vmem:[#allocation2 + $0x284] sm:$0xff]
  %v2004 = vld [vmem:[#allocation2 + $0x28c] sm:$0xff]
  %v2005 = vld [vmem:[#allocation2 + $0x294] sm:$0xff]
  %v2006 = vld [vmem:[#allocation2 + $0x29c] sm:$0xff]
  %v2007 = vld [vmem:[#allocation2 + $0x2a4] sm:$0xff]
  %v2008 = vld [vmem:[#allocation2 + $0x2ac] sm:$0xff]
  %v2009 = vld [vmem:[#allocation2 + $0x2b4] sm:$0xff]
  %v2010 = vld [vmem:[#allocation2 + $0x2bc] sm:$0xff]
  %v2011 = vld [vmem:[#allocation2 + $0x2c4] sm:$0xff]
  %v2012 = vld [vmem:[#allocation2 + $0x2cc] sm:$0xff]
  %v2013 = vpack.c.bf16 %v1926, %v1925
  %v2014 = vpack.c.bf16 %v1928, %v1927
  %v2015 = vpack.c.bf16 %v1930, %v1929
  %v2016 = vpack.c.bf16 %v1932, %v1931
  %v2017 = vpack.c.bf16 %v1934, %v1933
  %v2018 = vpack.c.bf16 %v1936, %v1935
  %v2019 = vpack.c.bf16 %v1938, %v1937
  %v2020 = vpack.c.bf16 %v1940, %v1939
  %v2021 = vpack.c.bf16 %v1942, %v1941
  %v2022 = vpack.c.bf16 %v1944, %v1943
  %v2023 = vpack.c.bf16 %v1946, %v1945
  %v2024 = vpack.c.bf16 %v1948, %v1947
  %v2025 = vpack.c.bf16 %v1950, %v1949
  %v2026 = vpack.c.bf16 %v1952, %v1951
  %v2027 = vpack.c.bf16 %v1954, %v1953
  %v2028 = vpack.c.bf16 %v1956, %v1955
  %v2029 = vpack.c.bf16 %v1958, %v1957
  %v2030 = vpack.c.bf16 %v1960, %v1959
  %v2031 = vpack.c.bf16 %v1962, %v1961
  %v2032 = vpack.c.bf16 %v1964, %v1963
  %v2033 = vpack.c.bf16 %v1966, %v1965
  %v2034 = vpack.c.bf16 %v1968, %v1967
  %v2035 = vpack.c.bf16 %v1970, %v1969
  %v2036 = vpack.c.bf16 %v1972, %v1971
  %v2037 = vpack.c.bf16 %v1974, %v1973
  %v2038 = vpack.c.bf16 %v1976, %v1975
  %v2039 = vpack.c.bf16 %v1978, %v1977
  %v2040 = vpack.c.bf16 %v1980, %v1979
  %v2041 = vpack.c.bf16 %v1982, %v1981
  %v2042 = vpack.c.bf16 %v1984, %v1983
  %v2043 = vpack.c.bf16 %v1986, %v1985
  %v2044 = vpack.c.bf16 %v1988, %v1987
  %v2045 = vpack.c.bf16 %v1990, %v1989
  %v2046 = vpack.c.bf16 %v1992, %v1991
  %v2047 = vpack.c.bf16 %v1994, %v1993
  %v2048 = vpack.c.bf16 %v1996, %v1995
  %v2049 = vpack.c.bf16 %v1998, %v1997
  %v2050 = vpack.c.bf16 %v2000, %v1999
  %v2051 = vpack.c.bf16 %v2002, %v2001
  %v2052 = vpack.c.bf16 %v2004, %v2003
  %v2053 = vpack.c.bf16 %v2006, %v2005
  %v2054 = vpack.c.bf16 %v2008, %v2007
  %v2055 = vpack.c.bf16 %v2010, %v2009
  %v2056 = vpack.c.bf16 %v2012, %v2011
  %2101 = vrot.lane.b32.xlu0 %v2013, 20
  %v2102 = vpop.permute.xlu0 %2101
  %2103 = vrot.lane.b32.xlu0 %v2014, 20
  %v2104 = vpop.permute.xlu0 %2103
  %2105 = vrot.lane.b32.xlu0 %v2015, 20
  %v2106 = vpop.permute.xlu0 %2105
  %2107 = vrot.lane.b32.xlu0 %v2016, 20
  %v2108 = vpop.permute.xlu0 %2107
  %2109 = vrot.lane.b32.xlu0 %v2017, 20
  %v2110 = vpop.permute.xlu0 %2109
  %2111 = vrot.lane.b32.xlu0 %v2018, 20
  %v2112 = vpop.permute.xlu0 %2111
  %2113 = vrot.lane.b32.xlu0 %v2019, 20
  %v2114 = vpop.permute.xlu0 %2113
  %2115 = vrot.lane.b32.xlu0 %v2020, 20
  %v2116 = vpop.permute.xlu0 %2115
  %2117 = vrot.lane.b32.xlu0 %v2021, 20
  %v2118 = vpop.permute.xlu0 %2117
  %2119 = vrot.lane.b32.xlu0 %v2022, 20
  %v2120 = vpop.permute.xlu0 %2119
  %2121 = vrot.lane.b32.xlu0 %v2023, 20
  %v2122 = vpop.permute.xlu0 %2121
  %2123 = vrot.lane.b32.xlu0 %v2024, 20
  %v2124 = vpop.permute.xlu0 %2123
  %2125 = vrot.lane.b32.xlu0 %v2025, 20
  %v2126 = vpop.permute.xlu0 %2125
  %2127 = vrot.lane.b32.xlu0 %v2026, 20
  %v2128 = vpop.permute.xlu0 %2127
  %2129 = vrot.lane.b32.xlu0 %v2027, 20
  %v2130 = vpop.permute.xlu0 %2129
  %2131 = vrot.lane.b32.xlu0 %v2028, 20
  %v2132 = vpop.permute.xlu0 %2131
  %2133 = vrot.lane.b32.xlu0 %v2029, 20
  %v2134 = vpop.permute.xlu0 %2133
  %2135 = vrot.lane.b32.xlu0 %v2030, 20
  %v2136 = vpop.permute.xlu0 %2135
  %2137 = vrot.lane.b32.xlu0 %v2031, 20
  %v2138 = vpop.permute.xlu0 %2137
  %2139 = vrot.lane.b32.xlu0 %v2032, 20
  %v2140 = vpop.permute.xlu0 %2139
  %2141 = vrot.lane.b32.xlu0 %v2033, 20
  %v2142 = vpop.permute.xlu0 %2141
  %2143 = vrot.lane.b32.xlu0 %v2034, 20
  %v2144 = vpop.permute.xlu0 %2143
  %2145 = vrot.lane.b32.xlu0 %v2035, 20
  %v2146 = vpop.permute.xlu0 %2145
  %2147 = vrot.lane.b32.xlu0 %v2036, 20
  %v2148 = vpop.permute.xlu0 %2147
  %2149 = vrot.lane.b32.xlu0 %v2037, 20
  %v2150 = vpop.permute.xlu0 %2149
  %2151 = vrot.lane.b32.xlu0 %v2038, 20
  %v2152 = vpop.permute.xlu0 %2151
  %2153 = vrot.lane.b32.xlu0 %v2039, 20
  %v2154 = vpop.permute.xlu0 %2153
  %2155 = vrot.lane.b32.xlu0 %v2040, 20
  %v2156 = vpop.permute.xlu0 %2155
  %2157 = vrot.lane.b32.xlu0 %v2041, 20
  %v2158 = vpop.permute.xlu0 %2157
  %2159 = vrot.lane.b32.xlu0 %v2042, 20
  %v2160 = vpop.permute.xlu0 %2159
  %2161 = vrot.lane.b32.xlu0 %v2043, 20
  %v2162 = vpop.permute.xlu0 %2161
  %2163 = vrot.lane.b32.xlu0 %v2044, 20
  %v2164 = vpop.permute.xlu0 %2163
  %2165 = vrot.lane.b32.xlu0 %v2045, 20
  %v2166 = vpop.permute.xlu0 %2165
  %2167 = vrot.lane.b32.xlu0 %v2046, 20
  %v2168 = vpop.permute.xlu0 %2167
  %2169 = vrot.lane.b32.xlu0 %v2047, 20
  %v2170 = vpop.permute.xlu0 %2169
  %2171 = vrot.lane.b32.xlu0 %v2048, 20
  %v2172 = vpop.permute.xlu0 %2171
  %2173 = vrot.lane.b32.xlu0 %v2049, 20
  %v2174 = vpop.permute.xlu0 %2173
  %2175 = vrot.lane.b32.xlu0 %v2050, 20
  %v2176 = vpop.permute.xlu0 %2175
  %2177 = vrot.lane.b32.xlu0 %v2051, 20
  %v2178 = vpop.permute.xlu0 %2177
  %2179 = vrot.lane.b32.xlu0 %v2052, 20
  %v2180 = vpop.permute.xlu0 %2179
  %2181 = vrot.lane.b32.xlu0 %v2053, 20
  %v2182 = vpop.permute.xlu0 %2181
  %2183 = vrot.lane.b32.xlu0 %v2054, 20
  %v2184 = vpop.permute.xlu0 %2183
  %2185 = vrot.lane.b32.xlu0 %v2055, 20
  %v2186 = vpop.permute.xlu0 %2185
  %2187 = vrot.lane.b32.xlu0 %v2056, 20
  %v2188 = vpop.permute.xlu0 %2187
  %vm2233 = vcmask 195744
  %2234 = vst.msk [vmem:[#allocation3] sm:$0xff] %vm2233, %v2102
  %2235 = vst.msk [vmem:[#allocation3 + $0x8] sm:$0xff] %vm2233, %v2104
  %2236 = vst.msk [vmem:[#allocation3 + $0x10] sm:$0xff] %vm2233, %v2106
  %2237 = vst.msk [vmem:[#allocation3 + $0x18] sm:$0xff] %vm2233, %v2108
  %2238 = vst.msk [vmem:[#allocation3 + $0x20] sm:$0xff] %vm2233, %v2110
  %2239 = vst.msk [vmem:[#allocation3 + $0x28] sm:$0xff] %vm2233, %v2112
  %2240 = vst.msk [vmem:[#allocation3 + $0x30] sm:$0xff] %vm2233, %v2114
  %2241 = vst.msk [vmem:[#allocation3 + $0x38] sm:$0xff] %vm2233, %v2116
  %2242 = vst.msk [vmem:[#allocation3 + $0x40] sm:$0xff] %vm2233, %v2118
  %2243 = vst.msk [vmem:[#allocation3 + $0x48] sm:$0xff] %vm2233, %v2120
  %2244 = vst.msk [vmem:[#allocation3 + $0x50] sm:$0xff] %vm2233, %v2122
  %2245 = vst.msk [vmem:[#allocation3 + $0x58] sm:$0xff] %vm2233, %v2124
  %2246 = vst.msk [vmem:[#allocation3 + $0x60] sm:$0xff] %vm2233, %v2126
  %2247 = vst.msk [vmem:[#allocation3 + $0x68] sm:$0xff] %vm2233, %v2128
  %2248 = vst.msk [vmem:[#allocation3 + $0x70] sm:$0xff] %vm2233, %v2130
  %2249 = vst.msk [vmem:[#allocation3 + $0x78] sm:$0xff] %vm2233, %v2132
  %2250 = vst.msk [vmem:[#allocation3 + $0x80] sm:$0xff] %vm2233, %v2134
  %2251 = vst.msk [vmem:[#allocation3 + $0x88] sm:$0xff] %vm2233, %v2136
  %2252 = vst.msk [vmem:[#allocation3 + $0x90] sm:$0xff] %vm2233, %v2138
  %2253 = vst.msk [vmem:[#allocation3 + $0x98] sm:$0xff] %vm2233, %v2140
  %2254 = vst.msk [vmem:[#allocation3 + $0xa0] sm:$0xff] %vm2233, %v2142
  %2255 = vst.msk [vmem:[#allocation3 + $0xa8] sm:$0xff] %vm2233, %v2144
  %2256 = vst.msk [vmem:[#allocation3 + $0xb0] sm:$0xff] %vm2233, %v2146
  %2257 = vst.msk [vmem:[#allocation3 + $0xb8] sm:$0xff] %vm2233, %v2148
  %2258 = vst.msk [vmem:[#allocation3 + $0xc0] sm:$0xff] %vm2233, %v2150
  %2259 = vst.msk [vmem:[#allocation3 + $0xc8] sm:$0xff] %vm2233, %v2152
  %2260 = vst.msk [vmem:[#allocation3 + $0xd0] sm:$0xff] %vm2233, %v2154
  %2261 = vst.msk [vmem:[#allocation3 + $0xd8] sm:$0xff] %vm2233, %v2156
  %2262 = vst.msk [vmem:[#allocation3 + $0xe0] sm:$0xff] %vm2233, %v2158
  %2263 = vst.msk [vmem:[#allocation3 + $0xe8] sm:$0xff] %vm2233, %v2160
  %2264 = vst.msk [vmem:[#allocation3 + $0xf0] sm:$0xff] %vm2233, %v2162
  %2265 = vst.msk [vmem:[#allocation3 + $0xf8] sm:$0xff] %vm2233, %v2164
  %2266 = vst.msk [vmem:[#allocation3 + $0x100] sm:$0xff] %vm2233, %v2166
  %2267 = vst.msk [vmem:[#allocation3 + $0x108] sm:$0xff] %vm2233, %v2168
  %2268 = vst.msk [vmem:[#allocation3 + $0x110] sm:$0xff] %vm2233, %v2170
  %2269 = vst.msk [vmem:[#allocation3 + $0x118] sm:$0xff] %vm2233, %v2172
  %2270 = vst.msk [vmem:[#allocation3 + $0x120] sm:$0xff] %vm2233, %v2174
  %2271 = vst.msk [vmem:[#allocation3 + $0x128] sm:$0xff] %vm2233, %v2176
  %2272 = vst.msk [vmem:[#allocation3 + $0x130] sm:$0xff] %vm2233, %v2178
  %2273 = vst.msk [vmem:[#allocation3 + $0x138] sm:$0xff] %vm2233, %v2180
  %2274 = vst.msk [vmem:[#allocation3 + $0x140] sm:$0xff] %vm2233, %v2182
  %2275 = vst.msk [vmem:[#allocation3 + $0x148] sm:$0xff] %vm2233, %v2184
  %2276 = vst.msk [vmem:[#allocation3 + $0x150] sm:$0xff] %vm2233, %v2186
  %2277 = vst.msk [vmem:[#allocation3 + $0x158] sm:$0xff] %vm2233, %v2188
  %v2278 = vld [vmem:[#allocation2 + $0x24] sm:$0xff]
  %v2279 = vld [vmem:[#allocation2 + $0x2c] sm:$0xff]
  %v2280 = vld [vmem:[#allocation2 + $0x34] sm:$0xff]
  %v2281 = vld [vmem:[#allocation2 + $0x3c] sm:$0xff]
  %v2282 = vld [vmem:[#allocation2 + $0x44] sm:$0xff]
  %v2283 = vld [vmem:[#allocation2 + $0x4c] sm:$0xff]
  %v2284 = vld [vmem:[#allocation2 + $0x54] sm:$0xff]
  %v2285 = vld [vmem:[#allocation2 + $0x5c] sm:$0xff]
  %v2286 = vld [vmem:[#allocation2 + $0x64] sm:$0xff]
  %v2287 = vld [vmem:[#allocation2 + $0x6c] sm:$0xff]
  %v2288 = vld [vmem:[#allocation2 + $0x74] sm:$0xff]
  %v2289 = vld [vmem:[#allocation2 + $0x7c] sm:$0xff]
  %v2290 = vld [vmem:[#allocation2 + $0x84] sm:$0xff]
  %v2291 = vld [vmem:[#allocation2 + $0x8c] sm:$0xff]
  %v2292 = vld [vmem:[#allocation2 + $0x94] sm:$0xff]
  %v2293 = vld [vmem:[#allocation2 + $0x9c] sm:$0xff]
  %v2294 = vld [vmem:[#allocation2 + $0xa4] sm:$0xff]
  %v2295 = vld [vmem:[#allocation2 + $0xac] sm:$0xff]
  %v2296 = vld [vmem:[#allocation2 + $0xb4] sm:$0xff]
  %v2297 = vld [vmem:[#allocation2 + $0xbc] sm:$0xff]
  %v2298 = vld [vmem:[#allocation2 + $0xc4] sm:$0xff]
  %v2299 = vld [vmem:[#allocation2 + $0xcc] sm:$0xff]
  %v2300 = vld [vmem:[#allocation2 + $0xd4] sm:$0xff]
  %v2301 = vld [vmem:[#allocation2 + $0xdc] sm:$0xff]
  %v2302 = vld [vmem:[#allocation2 + $0xe4] sm:$0xff]
  %v2303 = vld [vmem:[#allocation2 + $0xec] sm:$0xff]
  %v2304 = vld [vmem:[#allocation2 + $0xf4] sm:$0xff]
  %v2305 = vld [vmem:[#allocation2 + $0xfc] sm:$0xff]
  %v2306 = vld [vmem:[#allocation2 + $0x104] sm:$0xff]
  %v2307 = vld [vmem:[#allocation2 + $0x10c] sm:$0xff]
  %v2308 = vld [vmem:[#allocation2 + $0x114] sm:$0xff]
  %v2309 = vld [vmem:[#allocation2 + $0x11c] sm:$0xff]
  %v2310 = vld [vmem:[#allocation2 + $0x124] sm:$0xff]
  %v2311 = vld [vmem:[#allocation2 + $0x12c] sm:$0xff]
  %v2312 = vld [vmem:[#allocation2 + $0x134] sm:$0xff]
  %v2313 = vld [vmem:[#allocation2 + $0x13c] sm:$0xff]
  %v2314 = vld [vmem:[#allocation2 + $0x144] sm:$0xff]
  %v2315 = vld [vmem:[#allocation2 + $0x14c] sm:$0xff]
  %v2316 = vld [vmem:[#allocation2 + $0x154] sm:$0xff]
  %v2317 = vld [vmem:[#allocation2 + $0x15c] sm:$0xff]
  %v2318 = vld [vmem:[#allocation2 + $0x164] sm:$0xff]
  %v2319 = vld [vmem:[#allocation2 + $0x16c] sm:$0xff]
  %v2320 = vld [vmem:[#allocation2 + $0x174] sm:$0xff]
  %v2321 = vld [vmem:[#allocation2 + $0x17c] sm:$0xff]
  %v2322 = vld [vmem:[#allocation2 + $0x184] sm:$0xff]
  %v2323 = vld [vmem:[#allocation2 + $0x18c] sm:$0xff]
  %v2324 = vld [vmem:[#allocation2 + $0x194] sm:$0xff]
  %v2325 = vld [vmem:[#allocation2 + $0x19c] sm:$0xff]
  %v2326 = vld [vmem:[#allocation2 + $0x1a4] sm:$0xff]
  %v2327 = vld [vmem:[#allocation2 + $0x1ac] sm:$0xff]
  %v2328 = vld [vmem:[#allocation2 + $0x1b4] sm:$0xff]
  %v2329 = vld [vmem:[#allocation2 + $0x1bc] sm:$0xff]
  %v2330 = vld [vmem:[#allocation2 + $0x1c4] sm:$0xff]
  %v2331 = vld [vmem:[#allocation2 + $0x1cc] sm:$0xff]
  %v2332 = vld [vmem:[#allocation2 + $0x1d4] sm:$0xff]
  %v2333 = vld [vmem:[#allocation2 + $0x1dc] sm:$0xff]
  %v2334 = vld [vmem:[#allocation2 + $0x1e4] sm:$0xff]
  %v2335 = vld [vmem:[#allocation2 + $0x1ec] sm:$0xff]
  %v2336 = vld [vmem:[#allocation2 + $0x1f4] sm:$0xff]
  %v2337 = vld [vmem:[#allocation2 + $0x1fc] sm:$0xff]
  %v2338 = vld [vmem:[#allocation2 + $0x204] sm:$0xff]
  %v2339 = vld [vmem:[#allocation2 + $0x20c] sm:$0xff]
  %v2340 = vld [vmem:[#allocation2 + $0x214] sm:$0xff]
  %v2341 = vld [vmem:[#allocation2 + $0x21c] sm:$0xff]
  %v2342 = vld [vmem:[#allocation2 + $0x224] sm:$0xff]
  %v2343 = vld [vmem:[#allocation2 + $0x22c] sm:$0xff]
  %v2344 = vld [vmem:[#allocation2 + $0x234] sm:$0xff]
  %v2345 = vld [vmem:[#allocation2 + $0x23c] sm:$0xff]
  %v2346 = vld [vmem:[#allocation2 + $0x244] sm:$0xff]
  %v2347 = vld [vmem:[#allocation2 + $0x24c] sm:$0xff]
  %v2348 = vld [vmem:[#allocation2 + $0x254] sm:$0xff]
  %v2349 = vld [vmem:[#allocation2 + $0x25c] sm:$0xff]
  %v2350 = vld [vmem:[#allocation2 + $0x264] sm:$0xff]
  %v2351 = vld [vmem:[#allocation2 + $0x26c] sm:$0xff]
  %v2352 = vld [vmem:[#allocation2 + $0x274] sm:$0xff]
  %v2353 = vld [vmem:[#allocation2 + $0x27c] sm:$0xff]
  %v2354 = vld [vmem:[#allocation2 + $0x284] sm:$0xff]
  %v2355 = vld [vmem:[#allocation2 + $0x28c] sm:$0xff]
  %v2356 = vld [vmem:[#allocation2 + $0x294] sm:$0xff]
  %v2357 = vld [vmem:[#allocation2 + $0x29c] sm:$0xff]
  %v2358 = vld [vmem:[#allocation2 + $0x2a4] sm:$0xff]
  %v2359 = vld [vmem:[#allocation2 + $0x2ac] sm:$0xff]
  %v2360 = vld [vmem:[#allocation2 + $0x2b4] sm:$0xff]
  %v2361 = vld [vmem:[#allocation2 + $0x2bc] sm:$0xff]
  %v2362 = vld [vmem:[#allocation2 + $0x2c4] sm:$0xff]
  %v2363 = vld [vmem:[#allocation2 + $0x2cc] sm:$0xff]
  %v2364 = vld [vmem:[#allocation2 + $0x2d4] sm:$0xff]
  %v2365 = vld [vmem:[#allocation2 + $0x2dc] sm:$0xff]
  %v2366 = vpack.c.bf16 %v2279, %v2278
  %v2367 = vpack.c.bf16 %v2281, %v2280
  %v2368 = vpack.c.bf16 %v2283, %v2282
  %v2369 = vpack.c.bf16 %v2285, %v2284
  %v2370 = vpack.c.bf16 %v2287, %v2286
  %v2371 = vpack.c.bf16 %v2289, %v2288
  %v2372 = vpack.c.bf16 %v2291, %v2290
  %v2373 = vpack.c.bf16 %v2293, %v2292
  %v2374 = vpack.c.bf16 %v2295, %v2294
  %v2375 = vpack.c.bf16 %v2297, %v2296
  %v2376 = vpack.c.bf16 %v2299, %v2298
  %v2377 = vpack.c.bf16 %v2301, %v2300
  %v2378 = vpack.c.bf16 %v2303, %v2302
  %v2379 = vpack.c.bf16 %v2305, %v2304
  %v2380 = vpack.c.bf16 %v2307, %v2306
  %v2381 = vpack.c.bf16 %v2309, %v2308
  %v2382 = vpack.c.bf16 %v2311, %v2310
  %v2383 = vpack.c.bf16 %v2313, %v2312
  %v2384 = vpack.c.bf16 %v2315, %v2314
  %v2385 = vpack.c.bf16 %v2317, %v2316
  %v2386 = vpack.c.bf16 %v2319, %v2318
  %v2387 = vpack.c.bf16 %v2321, %v2320
  %v2388 = vpack.c.bf16 %v2323, %v2322
  %v2389 = vpack.c.bf16 %v2325, %v2324
  %v2390 = vpack.c.bf16 %v2327, %v2326
  %v2391 = vpack.c.bf16 %v2329, %v2328
  %v2392 = vpack.c.bf16 %v2331, %v2330
  %v2393 = vpack.c.bf16 %v2333, %v2332
  %v2394 = vpack.c.bf16 %v2335, %v2334
  %v2395 = vpack.c.bf16 %v2337, %v2336
  %v2396 = vpack.c.bf16 %v2339, %v2338
  %v2397 = vpack.c.bf16 %v2341, %v2340
  %v2398 = vpack.c.bf16 %v2343, %v2342
  %v2399 = vpack.c.bf16 %v2345, %v2344
  %v2400 = vpack.c.bf16 %v2347, %v2346
  %v2401 = vpack.c.bf16 %v2349, %v2348
  %v2402 = vpack.c.bf16 %v2351, %v2350
  %v2403 = vpack.c.bf16 %v2353, %v2352
  %v2404 = vpack.c.bf16 %v2355, %v2354
  %v2405 = vpack.c.bf16 %v2357, %v2356
  %v2406 = vpack.c.bf16 %v2359, %v2358
  %v2407 = vpack.c.bf16 %v2361, %v2360
  %v2408 = vpack.c.bf16 %v2363, %v2362
  %v2409 = vpack.c.bf16 %v2365, %v2364
  %2454 = vrot.lane.b32.xlu0 %v2366, 24
  %v2455 = vpop.permute.xlu0 %2454
  %2456 = vrot.lane.b32.xlu0 %v2367, 24
  %v2457 = vpop.permute.xlu0 %2456
  %2458 = vrot.lane.b32.xlu0 %v2368, 24
  %v2459 = vpop.permute.xlu0 %2458
  %2460 = vrot.lane.b32.xlu0 %v2369, 24
  %v2461 = vpop.permute.xlu0 %2460
  %2462 = vrot.lane.b32.xlu0 %v2370, 24
  %v2463 = vpop.permute.xlu0 %2462
  %2464 = vrot.lane.b32.xlu0 %v2371, 24
  %v2465 = vpop.permute.xlu0 %2464
  %2466 = vrot.lane.b32.xlu0 %v2372, 24
  %v2467 = vpop.permute.xlu0 %2466
  %2468 = vrot.lane.b32.xlu0 %v2373, 24
  %v2469 = vpop.permute.xlu0 %2468
  %2470 = vrot.lane.b32.xlu0 %v2374, 24
  %v2471 = vpop.permute.xlu0 %2470
  %2472 = vrot.lane.b32.xlu0 %v2375, 24
  %v2473 = vpop.permute.xlu0 %2472
  %2474 = vrot.lane.b32.xlu0 %v2376, 24
  %v2475 = vpop.permute.xlu0 %2474
  %2476 = vrot.lane.b32.xlu0 %v2377, 24
  %v2477 = vpop.permute.xlu0 %2476
  %2478 = vrot.lane.b32.xlu0 %v2378, 24
  %v2479 = vpop.permute.xlu0 %2478
  %2480 = vrot.lane.b32.xlu0 %v2379, 24
  %v2481 = vpop.permute.xlu0 %2480
  %2482 = vrot.lane.b32.xlu0 %v2380, 24
  %v2483 = vpop.permute.xlu0 %2482
  %2484 = vrot.lane.b32.xlu0 %v2381, 24
  %v2485 = vpop.permute.xlu0 %2484
  %2486 = vrot.lane.b32.xlu0 %v2382, 24
  %v2487 = vpop.permute.xlu0 %2486
  %2488 = vrot.lane.b32.xlu0 %v2383, 24
  %v2489 = vpop.permute.xlu0 %2488
  %2490 = vrot.lane.b32.xlu0 %v2384, 24
  %v2491 = vpop.permute.xlu0 %2490
  %2492 = vrot.lane.b32.xlu0 %v2385, 24
  %v2493 = vpop.permute.xlu0 %2492
  %2494 = vrot.lane.b32.xlu0 %v2386, 24
  %v2495 = vpop.permute.xlu0 %2494
  %2496 = vrot.lane.b32.xlu0 %v2387, 24
  %v2497 = vpop.permute.xlu0 %2496
  %2498 = vrot.lane.b32.xlu0 %v2388, 24
  %v2499 = vpop.permute.xlu0 %2498
  %2500 = vrot.lane.b32.xlu0 %v2389, 24
  %v2501 = vpop.permute.xlu0 %2500
  %2502 = vrot.lane.b32.xlu0 %v2390, 24
  %v2503 = vpop.permute.xlu0 %2502
  %2504 = vrot.lane.b32.xlu0 %v2391, 24
  %v2505 = vpop.permute.xlu0 %2504
  %2506 = vrot.lane.b32.xlu0 %v2392, 24
  %v2507 = vpop.permute.xlu0 %2506
  %2508 = vrot.lane.b32.xlu0 %v2393, 24
  %v2509 = vpop.permute.xlu0 %2508
  %2510 = vrot.lane.b32.xlu0 %v2394, 24
  %v2511 = vpop.permute.xlu0 %2510
  %2512 = vrot.lane.b32.xlu0 %v2395, 24
  %v2513 = vpop.permute.xlu0 %2512
  %2514 = vrot.lane.b32.xlu0 %v2396, 24
  %v2515 = vpop.permute.xlu0 %2514
  %2516 = vrot.lane.b32.xlu0 %v2397, 24
  %v2517 = vpop.permute.xlu0 %2516
  %2518 = vrot.lane.b32.xlu0 %v2398, 24
  %v2519 = vpop.permute.xlu0 %2518
  %2520 = vrot.lane.b32.xlu0 %v2399, 24
  %v2521 = vpop.permute.xlu0 %2520
  %2522 = vrot.lane.b32.xlu0 %v2400, 24
  %v2523 = vpop.permute.xlu0 %2522
  %2524 = vrot.lane.b32.xlu0 %v2401, 24
  %v2525 = vpop.permute.xlu0 %2524
  %2526 = vrot.lane.b32.xlu0 %v2402, 24
  %v2527 = vpop.permute.xlu0 %2526
  %2528 = vrot.lane.b32.xlu0 %v2403, 24
  %v2529 = vpop.permute.xlu0 %2528
  %2530 = vrot.lane.b32.xlu0 %v2404, 24
  %v2531 = vpop.permute.xlu0 %2530
  %2532 = vrot.lane.b32.xlu0 %v2405, 24
  %v2533 = vpop.permute.xlu0 %2532
  %2534 = vrot.lane.b32.xlu0 %v2406, 24
  %v2535 = vpop.permute.xlu0 %2534
  %2536 = vrot.lane.b32.xlu0 %v2407, 24
  %v2537 = vpop.permute.xlu0 %2536
  %2538 = vrot.lane.b32.xlu0 %v2408, 24
  %v2539 = vpop.permute.xlu0 %2538
  %2540 = vrot.lane.b32.xlu0 %v2409, 24
  %v2541 = vpop.permute.xlu0 %2540
  %vm2586 = vcmask 228544
  %2587 = vst.msk [vmem:[#allocation3] sm:$0xff] %vm2586, %v2455
  %2588 = vst.msk [vmem:[#allocation3 + $0x8] sm:$0xff] %vm2586, %v2457
  %2589 = vst.msk [vmem:[#allocation3 + $0x10] sm:$0xff] %vm2586, %v2459
  %2590 = vst.msk [vmem:[#allocation3 + $0x18] sm:$0xff] %vm2586, %v2461
  %2591 = vst.msk [vmem:[#allocation3 + $0x20] sm:$0xff] %vm2586, %v2463
  %2592 = vst.msk [vmem:[#allocation3 + $0x28] sm:$0xff] %vm2586, %v2465
  %2593 = vst.msk [vmem:[#allocation3 + $0x30] sm:$0xff] %vm2586, %v2467
  %2594 = vst.msk [vmem:[#allocation3 + $0x38] sm:$0xff] %vm2586, %v2469
  %2595 = vst.msk [vmem:[#allocation3 + $0x40] sm:$0xff] %vm2586, %v2471
  %2596 = vst.msk [vmem:[#allocation3 + $0x48] sm:$0xff] %vm2586, %v2473
  %2597 = vst.msk [vmem:[#allocation3 + $0x50] sm:$0xff] %vm2586, %v2475
  %2598 = vst.msk [vmem:[#allocation3 + $0x58] sm:$0xff] %vm2586, %v2477
  %2599 = vst.msk [vmem:[#allocation3 + $0x60] sm:$0xff] %vm2586, %v2479
  %2600 = vst.msk [vmem:[#allocation3 + $0x68] sm:$0xff] %vm2586, %v2481
  %2601 = vst.msk [vmem:[#allocation3 + $0x70] sm:$0xff] %vm2586, %v2483
  %2602 = vst.msk [vmem:[#allocation3 + $0x78] sm:$0xff] %vm2586, %v2485
  %2603 = vst.msk [vmem:[#allocation3 + $0x80] sm:$0xff] %vm2586, %v2487
  %2604 = vst.msk [vmem:[#allocation3 + $0x88] sm:$0xff] %vm2586, %v2489
  %2605 = vst.msk [vmem:[#allocation3 + $0x90] sm:$0xff] %vm2586, %v2491
  %2606 = vst.msk [vmem:[#allocation3 + $0x98] sm:$0xff] %vm2586, %v2493
  %2607 = vst.msk [vmem:[#allocation3 + $0xa0] sm:$0xff] %vm2586, %v2495
  %2608 = vst.msk [vmem:[#allocation3 + $0xa8] sm:$0xff] %vm2586, %v2497
  %2609 = vst.msk [vmem:[#allocation3 + $0xb0] sm:$0xff] %vm2586, %v2499
  %2610 = vst.msk [vmem:[#allocation3 + $0xb8] sm:$0xff] %vm2586, %v2501
  %2611 = vst.msk [vmem:[#allocation3 + $0xc0] sm:$0xff] %vm2586, %v2503
  %2612 = vst.msk [vmem:[#allocation3 + $0xc8] sm:$0xff] %vm2586, %v2505
  %2613 = vst.msk [vmem:[#allocation3 + $0xd0] sm:$0xff] %vm2586, %v2507
  %2614 = vst.msk [vmem:[#allocation3 + $0xd8] sm:$0xff] %vm2586, %v2509
  %2615 = vst.msk [vmem:[#allocation3 + $0xe0] sm:$0xff] %vm2586, %v2511
  %2616 = vst.msk [vmem:[#allocation3 + $0xe8] sm:$0xff] %vm2586, %v2513
  %2617 = vst.msk [vmem:[#allocation3 + $0xf0] sm:$0xff] %vm2586, %v2515
  %2618 = vst.msk [vmem:[#allocation3 + $0xf8] sm:$0xff] %vm2586, %v2517
  %2619 = vst.msk [vmem:[#allocation3 + $0x100] sm:$0xff] %vm2586, %v2519
  %2620 = vst.msk [vmem:[#allocation3 + $0x108] sm:$0xff] %vm2586, %v2521
  %2621 = vst.msk [vmem:[#allocation3 + $0x110] sm:$0xff] %vm2586, %v2523
  %2622 = vst.msk [vmem:[#allocation3 + $0x118] sm:$0xff] %vm2586, %v2525
  %2623 = vst.msk [vmem:[#allocation3 + $0x120] sm:$0xff] %vm2586, %v2527
  %2624 = vst.msk [vmem:[#allocation3 + $0x128] sm:$0xff] %vm2586, %v2529
  %2625 = vst.msk [vmem:[#allocation3 + $0x130] sm:$0xff] %vm2586, %v2531
  %2626 = vst.msk [vmem:[#allocation3 + $0x138] sm:$0xff] %vm2586, %v2533
  %2627 = vst.msk [vmem:[#allocation3 + $0x140] sm:$0xff] %vm2586, %v2535
  %2628 = vst.msk [vmem:[#allocation3 + $0x148] sm:$0xff] %vm2586, %v2537
  %2629 = vst.msk [vmem:[#allocation3 + $0x150] sm:$0xff] %vm2586, %v2539
  %2630 = vst.msk [vmem:[#allocation3 + $0x158] sm:$0xff] %vm2586, %v2541
  %v2631 = vld [vmem:[#allocation2 + $0x25] sm:$0xff]
  %v2632 = vld [vmem:[#allocation2 + $0x2d] sm:$0xff]
  %v2633 = vld [vmem:[#allocation2 + $0x35] sm:$0xff]
  %v2634 = vld [vmem:[#allocation2 + $0x3d] sm:$0xff]
  %v2635 = vld [vmem:[#allocation2 + $0x45] sm:$0xff]
  %v2636 = vld [vmem:[#allocation2 + $0x4d] sm:$0xff]
  %v2637 = vld [vmem:[#allocation2 + $0x55] sm:$0xff]
  %v2638 = vld [vmem:[#allocation2 + $0x5d] sm:$0xff]
  %v2639 = vld [vmem:[#allocation2 + $0x65] sm:$0xff]
  %v2640 = vld [vmem:[#allocation2 + $0x6d] sm:$0xff]
  %v2641 = vld [vmem:[#allocation2 + $0x75] sm:$0xff]
  %v2642 = vld [vmem:[#allocation2 + $0x7d] sm:$0xff]
  %v2643 = vld [vmem:[#allocation2 + $0x85] sm:$0xff]
  %v2644 = vld [vmem:[#allocation2 + $0x8d] sm:$0xff]
  %v2645 = vld [vmem:[#allocation2 + $0x95] sm:$0xff]
  %v2646 = vld [vmem:[#allocation2 + $0x9d] sm:$0xff]
  %v2647 = vld [vmem:[#allocation2 + $0xa5] sm:$0xff]
  %v2648 = vld [vmem:[#allocation2 + $0xad] sm:$0xff]
  %v2649 = vld [vmem:[#allocation2 + $0xb5] sm:$0xff]
  %v2650 = vld [vmem:[#allocation2 + $0xbd] sm:$0xff]
  %v2651 = vld [vmem:[#allocation2 + $0xc5] sm:$0xff]
  %v2652 = vld [vmem:[#allocation2 + $0xcd] sm:$0xff]
  %v2653 = vld [vmem:[#allocation2 + $0xd5] sm:$0xff]
  %v2654 = vld [vmem:[#allocation2 + $0xdd] sm:$0xff]
  %v2655 = vld [vmem:[#allocation2 + $0xe5] sm:$0xff]
  %v2656 = vld [vmem:[#allocation2 + $0xed] sm:$0xff]
  %v2657 = vld [vmem:[#allocation2 + $0xf5] sm:$0xff]
  %v2658 = vld [vmem:[#allocation2 + $0xfd] sm:$0xff]
  %v2659 = vld [vmem:[#allocation2 + $0x105] sm:$0xff]
  %v2660 = vld [vmem:[#allocation2 + $0x10d] sm:$0xff]
  %v2661 = vld [vmem:[#allocation2 + $0x115] sm:$0xff]
  %v2662 = vld [vmem:[#allocation2 + $0x11d] sm:$0xff]
  %v2663 = vld [vmem:[#allocation2 + $0x125] sm:$0xff]
  %v2664 = vld [vmem:[#allocation2 + $0x12d] sm:$0xff]
  %v2665 = vld [vmem:[#allocation2 + $0x135] sm:$0xff]
  %v2666 = vld [vmem:[#allocation2 + $0x13d] sm:$0xff]
  %v2667 = vld [vmem:[#allocation2 + $0x145] sm:$0xff]
  %v2668 = vld [vmem:[#allocation2 + $0x14d] sm:$0xff]
  %v2669 = vld [vmem:[#allocation2 + $0x155] sm:$0xff]
  %v2670 = vld [vmem:[#allocation2 + $0x15d] sm:$0xff]
  %v2671 = vld [vmem:[#allocation2 + $0x165] sm:$0xff]
  %v2672 = vld [vmem:[#allocation2 + $0x16d] sm:$0xff]
  %v2673 = vld [vmem:[#allocation2 + $0x175] sm:$0xff]
  %v2674 = vld [vmem:[#allocation2 + $0x17d] sm:$0xff]
  %v2675 = vld [vmem:[#allocation2 + $0x185] sm:$0xff]
  %v2676 = vld [vmem:[#allocation2 + $0x18d] sm:$0xff]
  %v2677 = vld [vmem:[#allocation2 + $0x195] sm:$0xff]
  %v2678 = vld [vmem:[#allocation2 + $0x19d] sm:$0xff]
  %v2679 = vld [vmem:[#allocation2 + $0x1a5] sm:$0xff]
  %v2680 = vld [vmem:[#allocation2 + $0x1ad] sm:$0xff]
  %v2681 = vld [vmem:[#allocation2 + $0x1b5] sm:$0xff]
  %v2682 = vld [vmem:[#allocation2 + $0x1bd] sm:$0xff]
  %v2683 = vld [vmem:[#allocation2 + $0x1c5] sm:$0xff]
  %v2684 = vld [vmem:[#allocation2 + $0x1cd] sm:$0xff]
  %v2685 = vld [vmem:[#allocation2 + $0x1d5] sm:$0xff]
  %v2686 = vld [vmem:[#allocation2 + $0x1dd] sm:$0xff]
  %v2687 = vld [vmem:[#allocation2 + $0x1e5] sm:$0xff]
  %v2688 = vld [vmem:[#allocation2 + $0x1ed] sm:$0xff]
  %v2689 = vld [vmem:[#allocation2 + $0x1f5] sm:$0xff]
  %v2690 = vld [vmem:[#allocation2 + $0x1fd] sm:$0xff]
  %v2691 = vld [vmem:[#allocation2 + $0x205] sm:$0xff]
  %v2692 = vld [vmem:[#allocation2 + $0x20d] sm:$0xff]
  %v2693 = vld [vmem:[#allocation2 + $0x215] sm:$0xff]
  %v2694 = vld [vmem:[#allocation2 + $0x21d] sm:$0xff]
  %v2695 = vld [vmem:[#allocation2 + $0x225] sm:$0xff]
  %v2696 = vld [vmem:[#allocation2 + $0x22d] sm:$0xff]
  %v2697 = vld [vmem:[#allocation2 + $0x235] sm:$0xff]
  %v2698 = vld [vmem:[#allocation2 + $0x23d] sm:$0xff]
  %v2699 = vld [vmem:[#allocation2 + $0x245] sm:$0xff]
  %v2700 = vld [vmem:[#allocation2 + $0x24d] sm:$0xff]
  %v2701 = vld [vmem:[#allocation2 + $0x255] sm:$0xff]
  %v2702 = vld [vmem:[#allocation2 + $0x25d] sm:$0xff]
  %v2703 = vld [vmem:[#allocation2 + $0x265] sm:$0xff]
  %v2704 = vld [vmem:[#allocation2 + $0x26d] sm:$0xff]
  %v2705 = vld [vmem:[#allocation2 + $0x275] sm:$0xff]
  %v2706 = vld [vmem:[#allocation2 + $0x27d] sm:$0xff]
  %v2707 = vld [vmem:[#allocation2 + $0x285] sm:$0xff]
  %v2708 = vld [vmem:[#allocation2 + $0x28d] sm:$0xff]
  %v2709 = vld [vmem:[#allocation2 + $0x295] sm:$0xff]
  %v2710 = vld [vmem:[#allocation2 + $0x29d] sm:$0xff]
  %v2711 = vld [vmem:[#allocation2 + $0x2a5] sm:$0xff]
  %v2712 = vld [vmem:[#allocation2 + $0x2ad] sm:$0xff]
  %v2713 = vld [vmem:[#allocation2 + $0x2b5] sm:$0xff]
  %v2714 = vld [vmem:[#allocation2 + $0x2bd] sm:$0xff]
  %v2715 = vld [vmem:[#allocation2 + $0x2c5] sm:$0xff]
  %v2716 = vld [vmem:[#allocation2 + $0x2cd] sm:$0xff]
  %v2717 = vld [vmem:[#allocation2 + $0x2d5] sm:$0xff]
  %v2718 = vld [vmem:[#allocation2 + $0x2dd] sm:$0xff]
  %v2719 = vpack.c.bf16 %v2632, %v2631
  %v2720 = vpack.c.bf16 %v2634, %v2633
  %v2721 = vpack.c.bf16 %v2636, %v2635
  %v2722 = vpack.c.bf16 %v2638, %v2637
  %v2723 = vpack.c.bf16 %v2640, %v2639
  %v2724 = vpack.c.bf16 %v2642, %v2641
  %v2725 = vpack.c.bf16 %v2644, %v2643
  %v2726 = vpack.c.bf16 %v2646, %v2645
  %v2727 = vpack.c.bf16 %v2648, %v2647
  %v2728 = vpack.c.bf16 %v2650, %v2649
  %v2729 = vpack.c.bf16 %v2652, %v2651
  %v2730 = vpack.c.bf16 %v2654, %v2653
  %v2731 = vpack.c.bf16 %v2656, %v2655
  %v2732 = vpack.c.bf16 %v2658, %v2657
  %v2733 = vpack.c.bf16 %v2660, %v2659
  %v2734 = vpack.c.bf16 %v2662, %v2661
  %v2735 = vpack.c.bf16 %v2664, %v2663
  %v2736 = vpack.c.bf16 %v2666, %v2665
  %v2737 = vpack.c.bf16 %v2668, %v2667
  %v2738 = vpack.c.bf16 %v2670, %v2669
  %v2739 = vpack.c.bf16 %v2672, %v2671
  %v2740 = vpack.c.bf16 %v2674, %v2673
  %v2741 = vpack.c.bf16 %v2676, %v2675
  %v2742 = vpack.c.bf16 %v2678, %v2677
  %v2743 = vpack.c.bf16 %v2680, %v2679
  %v2744 = vpack.c.bf16 %v2682, %v2681
  %v2745 = vpack.c.bf16 %v2684, %v2683
  %v2746 = vpack.c.bf16 %v2686, %v2685
  %v2747 = vpack.c.bf16 %v2688, %v2687
  %v2748 = vpack.c.bf16 %v2690, %v2689
  %v2749 = vpack.c.bf16 %v2692, %v2691
  %v2750 = vpack.c.bf16 %v2694, %v2693
  %v2751 = vpack.c.bf16 %v2696, %v2695
  %v2752 = vpack.c.bf16 %v2698, %v2697
  %v2753 = vpack.c.bf16 %v2700, %v2699
  %v2754 = vpack.c.bf16 %v2702, %v2701
  %v2755 = vpack.c.bf16 %v2704, %v2703
  %v2756 = vpack.c.bf16 %v2706, %v2705
  %v2757 = vpack.c.bf16 %v2708, %v2707
  %v2758 = vpack.c.bf16 %v2710, %v2709
  %v2759 = vpack.c.bf16 %v2712, %v2711
  %v2760 = vpack.c.bf16 %v2714, %v2713
  %v2761 = vpack.c.bf16 %v2716, %v2715
  %v2762 = vpack.c.bf16 %v2718, %v2717
  %2807 = vrot.lane.b32.xlu0 %v2719, 28
  %v2808 = vpop.permute.xlu0 %2807
  %2809 = vrot.lane.b32.xlu0 %v2720, 28
  %v2810 = vpop.permute.xlu0 %2809
  %2811 = vrot.lane.b32.xlu0 %v2721, 28
  %v2812 = vpop.permute.xlu0 %2811
  %2813 = vrot.lane.b32.xlu0 %v2722, 28
  %v2814 = vpop.permute.xlu0 %2813
  %2815 = vrot.lane.b32.xlu0 %v2723, 28
  %v2816 = vpop.permute.xlu0 %2815
  %2817 = vrot.lane.b32.xlu0 %v2724, 28
  %v2818 = vpop.permute.xlu0 %2817
  %2819 = vrot.lane.b32.xlu0 %v2725, 28
  %v2820 = vpop.permute.xlu0 %2819
  %2821 = vrot.lane.b32.xlu0 %v2726, 28
  %v2822 = vpop.permute.xlu0 %2821
  %2823 = vrot.lane.b32.xlu0 %v2727, 28
  %v2824 = vpop.permute.xlu0 %2823
  %2825 = vrot.lane.b32.xlu0 %v2728, 28
  %v2826 = vpop.permute.xlu0 %2825
  %2827 = vrot.lane.b32.xlu0 %v2729, 28
  %v2828 = vpop.permute.xlu0 %2827
  %2829 = vrot.lane.b32.xlu0 %v2730, 28
  %v2830 = vpop.permute.xlu0 %2829
  %2831 = vrot.lane.b32.xlu0 %v2731, 28
  %v2832 = vpop.permute.xlu0 %2831
  %2833 = vrot.lane.b32.xlu0 %v2732, 28
  %v2834 = vpop.permute.xlu0 %2833
  %2835 = vrot.lane.b32.xlu0 %v2733, 28
  %v2836 = vpop.permute.xlu0 %2835
  %2837 = vrot.lane.b32.xlu0 %v2734, 28
  %v2838 = vpop.permute.xlu0 %2837
  %2839 = vrot.lane.b32.xlu0 %v2735, 28
  %v2840 = vpop.permute.xlu0 %2839
  %2841 = vrot.lane.b32.xlu0 %v2736, 28
  %v2842 = vpop.permute.xlu0 %2841
  %2843 = vrot.lane.b32.xlu0 %v2737, 28
  %v2844 = vpop.permute.xlu0 %2843
  %2845 = vrot.lane.b32.xlu0 %v2738, 28
  %v2846 = vpop.permute.xlu0 %2845
  %2847 = vrot.lane.b32.xlu0 %v2739, 28
  %v2848 = vpop.permute.xlu0 %2847
  %2849 = vrot.lane.b32.xlu0 %v2740, 28
  %v2850 = vpop.permute.xlu0 %2849
  %2851 = vrot.lane.b32.xlu0 %v2741, 28
  %v2852 = vpop.permute.xlu0 %2851
  %2853 = vrot.lane.b32.xlu0 %v2742, 28
  %v2854 = vpop.permute.xlu0 %2853
  %2855 = vrot.lane.b32.xlu0 %v2743, 28
  %v2856 = vpop.permute.xlu0 %2855
  %2857 = vrot.lane.b32.xlu0 %v2744, 28
  %v2858 = vpop.permute.xlu0 %2857
  %2859 = vrot.lane.b32.xlu0 %v2745, 28
  %v2860 = vpop.permute.xlu0 %2859
  %2861 = vrot.lane.b32.xlu0 %v2746, 28
  %v2862 = vpop.permute.xlu0 %2861
  %2863 = vrot.lane.b32.xlu0 %v2747, 28
  %v2864 = vpop.permute.xlu0 %2863
  %2865 = vrot.lane.b32.xlu0 %v2748, 28
  %v2866 = vpop.permute.xlu0 %2865
  %2867 = vrot.lane.b32.xlu0 %v2749, 28
  %v2868 = vpop.permute.xlu0 %2867
  %2869 = vrot.lane.b32.xlu0 %v2750, 28
  %v2870 = vpop.permute.xlu0 %2869
  %2871 = vrot.lane.b32.xlu0 %v2751, 28
  %v2872 = vpop.permute.xlu0 %2871
  %2873 = vrot.lane.b32.xlu0 %v2752, 28
  %v2874 = vpop.permute.xlu0 %2873
  %2875 = vrot.lane.b32.xlu0 %v2753, 28
  %v2876 = vpop.permute.xlu0 %2875
  %2877 = vrot.lane.b32.xlu0 %v2754, 28
  %v2878 = vpop.permute.xlu0 %2877
  %2879 = vrot.lane.b32.xlu0 %v2755, 28
  %v2880 = vpop.permute.xlu0 %2879
  %2881 = vrot.lane.b32.xlu0 %v2756, 28
  %v2882 = vpop.permute.xlu0 %2881
  %2883 = vrot.lane.b32.xlu0 %v2757, 28
  %v2884 = vpop.permute.xlu0 %2883
  %2885 = vrot.lane.b32.xlu0 %v2758, 28
  %v2886 = vpop.permute.xlu0 %2885
  %2887 = vrot.lane.b32.xlu0 %v2759, 28
  %v2888 = vpop.permute.xlu0 %2887
  %2889 = vrot.lane.b32.xlu0 %v2760, 28
  %v2890 = vpop.permute.xlu0 %2889
  %2891 = vrot.lane.b32.xlu0 %v2761, 28
  %v2892 = vpop.permute.xlu0 %2891
  %2893 = vrot.lane.b32.xlu0 %v2762, 28
  %v2894 = vpop.permute.xlu0 %2893
  %vm2939 = vcmask 261344
  %2940 = vst.msk [vmem:[#allocation3] sm:$0xff] %vm2939, %v2808
  %2941 = vst.msk [vmem:[#allocation3 + $0x8] sm:$0xff] %vm2939, %v2810
  %2942 = vst.msk [vmem:[#allocation3 + $0x10] sm:$0xff] %vm2939, %v2812
  %2943 = vst.msk [vmem:[#allocation3 + $0x18] sm:$0xff] %vm2939, %v2814
  %2944 = vst.msk [vmem:[#allocation3 + $0x20] sm:$0xff] %vm2939, %v2816
  %2945 = vst.msk [vmem:[#allocation3 + $0x28] sm:$0xff] %vm2939, %v2818
  %2946 = vst.msk [vmem:[#allocation3 + $0x30] sm:$0xff] %vm2939, %v2820
  %2947 = vst.msk [vmem:[#allocation3 + $0x38] sm:$0xff] %vm2939, %v2822
  %2948 = vst.msk [vmem:[#allocation3 + $0x40] sm:$0xff] %vm2939, %v2824
  %2949 = vst.msk [vmem:[#allocation3 + $0x48] sm:$0xff] %vm2939, %v2826
  %2950 = vst.msk [vmem:[#allocation3 + $0x50] sm:$0xff] %vm2939, %v2828
  %2951 = vst.msk [vmem:[#allocation3 + $0x58] sm:$0xff] %vm2939, %v2830
  %2952 = vst.msk [vmem:[#allocation3 + $0x60] sm:$0xff] %vm2939, %v2832
  %2953 = vst.msk [vmem:[#allocation3 + $0x68] sm:$0xff] %vm2939, %v2834
  %2954 = vst.msk [vmem:[#allocation3 + $0x70] sm:$0xff] %vm2939, %v2836
  %2955 = vst.msk [vmem:[#allocation3 + $0x78] sm:$0xff] %vm2939, %v2838
  %2956 = vst.msk [vmem:[#allocation3 + $0x80] sm:$0xff] %vm2939, %v2840
  %2957 = vst.msk [vmem:[#allocation3 + $0x88] sm:$0xff] %vm2939, %v2842
  %2958 = vst.msk [vmem:[#allocation3 + $0x90] sm:$0xff] %vm2939, %v2844
  %2959 = vst.msk [vmem:[#allocation3 + $0x98] sm:$0xff] %vm2939, %v2846
  %2960 = vst.msk [vmem:[#allocation3 + $0xa0] sm:$0xff] %vm2939, %v2848
  %2961 = vst.msk [vmem:[#allocation3 + $0xa8] sm:$0xff] %vm2939, %v2850
  %2962 = vst.msk [vmem:[#allocation3 + $0xb0] sm:$0xff] %vm2939, %v2852
  %2963 = vst.msk [vmem:[#allocation3 + $0xb8] sm:$0xff] %vm2939, %v2854
  %2964 = vst.msk [vmem:[#allocation3 + $0xc0] sm:$0xff] %vm2939, %v2856
  %2965 = vst.msk [vmem:[#allocation3 + $0xc8] sm:$0xff] %vm2939, %v2858
  %2966 = vst.msk [vmem:[#allocation3 + $0xd0] sm:$0xff] %vm2939, %v2860
  %2967 = vst.msk [vmem:[#allocation3 + $0xd8] sm:$0xff] %vm2939, %v2862
  %2968 = vst.msk [vmem:[#allocation3 + $0xe0] sm:$0xff] %vm2939, %v2864
  %2969 = vst.msk [vmem:[#allocation3 + $0xe8] sm:$0xff] %vm2939, %v2866
  %2970 = vst.msk [vmem:[#allocation3 + $0xf0] sm:$0xff] %vm2939, %v2868
  %2971 = vst.msk [vmem:[#allocation3 + $0xf8] sm:$0xff] %vm2939, %v2870
  %2972 = vst.msk [vmem:[#allocation3 + $0x100] sm:$0xff] %vm2939, %v2872
  %2973 = vst.msk [vmem:[#allocation3 + $0x108] sm:$0xff] %vm2939, %v2874
  %2974 = vst.msk [vmem:[#allocation3 + $0x110] sm:$0xff] %vm2939, %v2876
  %2975 = vst.msk [vmem:[#allocation3 + $0x118] sm:$0xff] %vm2939, %v2878
  %2976 = vst.msk [vmem:[#allocation3 + $0x120] sm:$0xff] %vm2939, %v2880
  %2977 = vst.msk [vmem:[#allocation3 + $0x128] sm:$0xff] %vm2939, %v2882
  %2978 = vst.msk [vmem:[#allocation3 + $0x130] sm:$0xff] %vm2939, %v2884
  %2979 = vst.msk [vmem:[#allocation3 + $0x138] sm:$0xff] %vm2939, %v2886
  %2980 = vst.msk [vmem:[#allocation3 + $0x140] sm:$0xff] %vm2939, %v2888
  %2981 = vst.msk [vmem:[#allocation3 + $0x148] sm:$0xff] %vm2939, %v2890
  %2982 = vst.msk [vmem:[#allocation3 + $0x150] sm:$0xff] %vm2939, %v2892
  %2983 = vst.msk [vmem:[#allocation3 + $0x158] sm:$0xff] %vm2939, %v2894
  %v2984 = vld [vmem:[#allocation2 + $0x26] sm:$0xff]
  %v2985 = vld [vmem:[#allocation2 + $0x2e] sm:$0xff]
  %v2986 = vld [vmem:[#allocation2 + $0x36] sm:$0xff]
  %v2987 = vld [vmem:[#allocation2 + $0x3e] sm:$0xff]
  %v2988 = vld [vmem:[#allocation2 + $0x46] sm:$0xff]
  %v2989 = vld [vmem:[#allocation2 + $0x4e] sm:$0xff]
  %v2990 = vld [vmem:[#allocation2 + $0x56] sm:$0xff]
  %v2991 = vld [vmem:[#allocation2 + $0x5e] sm:$0xff]
  %v2992 = vld [vmem:[#allocation2 + $0x66] sm:$0xff]
  %v2993 = vld [vmem:[#allocation2 + $0x6e] sm:$0xff]
  %v2994 = vld [vmem:[#allocation2 + $0x76] sm:$0xff]
  %v2995 = vld [vmem:[#allocation2 + $0x7e] sm:$0xff]
  %v2996 = vld [vmem:[#allocation2 + $0x86] sm:$0xff]
  %v2997 = vld [vmem:[#allocation2 + $0x8e] sm:$0xff]
  %v2998 = vld [vmem:[#allocation2 + $0x96] sm:$0xff]
  %v2999 = vld [vmem:[#allocation2 + $0x9e] sm:$0xff]
  %v3000 = vld [vmem:[#allocation2 + $0xa6] sm:$0xff]
  %v3001 = vld [vmem:[#allocation2 + $0xae] sm:$0xff]
  %v3002 = vld [vmem:[#allocation2 + $0xb6] sm:$0xff]
  %v3003 = vld [vmem:[#allocation2 + $0xbe] sm:$0xff]
  %v3004 = vld [vmem:[#allocation2 + $0xc6] sm:$0xff]
  %v3005 = vld [vmem:[#allocation2 + $0xce] sm:$0xff]
  %v3006 = vld [vmem:[#allocation2 + $0xd6] sm:$0xff]
  %v3007 = vld [vmem:[#allocation2 + $0xde] sm:$0xff]
  %v3008 = vld [vmem:[#allocation2 + $0xe6] sm:$0xff]
  %v3009 = vld [vmem:[#allocation2 + $0xee] sm:$0xff]
  %v3010 = vld [vmem:[#allocation2 + $0xf6] sm:$0xff]
  %v3011 = vld [vmem:[#allocation2 + $0xfe] sm:$0xff]
  %v3012 = vld [vmem:[#allocation2 + $0x106] sm:$0xff]
  %v3013 = vld [vmem:[#allocation2 + $0x10e] sm:$0xff]
  %v3014 = vld [vmem:[#allocation2 + $0x116] sm:$0xff]
  %v3015 = vld [vmem:[#allocation2 + $0x11e] sm:$0xff]
  %v3016 = vld [vmem:[#allocation2 + $0x126] sm:$0xff]
  %v3017 = vld [vmem:[#allocation2 + $0x12e] sm:$0xff]
  %v3018 = vld [vmem:[#allocation2 + $0x136] sm:$0xff]
  %v3019 = vld [vmem:[#allocation2 + $0x13e] sm:$0xff]
  %v3020 = vld [vmem:[#allocation2 + $0x146] sm:$0xff]
  %v3021 = vld [vmem:[#allocation2 + $0x14e] sm:$0xff]
  %v3022 = vld [vmem:[#allocation2 + $0x156] sm:$0xff]
  %v3023 = vld [vmem:[#allocation2 + $0x15e] sm:$0xff]
  %v3024 = vld [vmem:[#allocation2 + $0x166] sm:$0xff]
  %v3025 = vld [vmem:[#allocation2 + $0x16e] sm:$0xff]
  %v3026 = vld [vmem:[#allocation2 + $0x176] sm:$0xff]
  %v3027 = vld [vmem:[#allocation2 + $0x17e] sm:$0xff]
  %v3028 = vld [vmem:[#allocation2 + $0x186] sm:$0xff]
  %v3029 = vld [vmem:[#allocation2 + $0x18e] sm:$0xff]
  %v3030 = vld [vmem:[#allocation2 + $0x196] sm:$0xff]
  %v3031 = vld [vmem:[#allocation2 + $0x19e] sm:$0xff]
  %v3032 = vld [vmem:[#allocation2 + $0x1a6] sm:$0xff]
  %v3033 = vld [vmem:[#allocation2 + $0x1ae] sm:$0xff]
  %v3034 = vld [vmem:[#allocation2 + $0x1b6] sm:$0xff]
  %v3035 = vld [vmem:[#allocation2 + $0x1be] sm:$0xff]
  %v3036 = vld [vmem:[#allocation2 + $0x1c6] sm:$0xff]
  %v3037 = vld [vmem:[#allocation2 + $0x1ce] sm:$0xff]
  %v3038 = vld [vmem:[#allocation2 + $0x1d6] sm:$0xff]
  %v3039 = vld [vmem:[#allocation2 + $0x1de] sm:$0xff]
  %v3040 = vld [vmem:[#allocation2 + $0x1e6] sm:$0xff]
  %v3041 = vld [vmem:[#allocation2 + $0x1ee] sm:$0xff]
  %v3042 = vld [vmem:[#allocation2 + $0x1f6] sm:$0xff]
  %v3043 = vld [vmem:[#allocation2 + $0x1fe] sm:$0xff]
  %v3044 = vld [vmem:[#allocation2 + $0x206] sm:$0xff]
  %v3045 = vld [vmem:[#allocation2 + $0x20e] sm:$0xff]
  %v3046 = vld [vmem:[#allocation2 + $0x216] sm:$0xff]
  %v3047 = vld [vmem:[#allocation2 + $0x21e] sm:$0xff]
  %v3048 = vld [vmem:[#allocation2 + $0x226] sm:$0xff]
  %v3049 = vld [vmem:[#allocation2 + $0x22e] sm:$0xff]
  %v3050 = vld [vmem:[#allocation2 + $0x236] sm:$0xff]
  %v3051 = vld [vmem:[#allocation2 + $0x23e] sm:$0xff]
  %v3052 = vld [vmem:[#allocation2 + $0x246] sm:$0xff]
  %v3053 = vld [vmem:[#allocation2 + $0x24e] sm:$0xff]
  %v3054 = vld [vmem:[#allocation2 + $0x256] sm:$0xff]
  %v3055 = vld [vmem:[#allocation2 + $0x25e] sm:$0xff]
  %v3056 = vld [vmem:[#allocation2 + $0x266] sm:$0xff]
  %v3057 = vld [vmem:[#allocation2 + $0x26e] sm:$0xff]
  %v3058 = vld [vmem:[#allocation2 + $0x276] sm:$0xff]
  %v3059 = vld [vmem:[#allocation2 + $0x27e] sm:$0xff]
  %v3060 = vld [vmem:[#allocation2 + $0x286] sm:$0xff]
  %v3061 = vld [vmem:[#allocation2 + $0x28e] sm:$0xff]
  %v3062 = vld [vmem:[#allocation2 + $0x296] sm:$0xff]
  %v3063 = vld [vmem:[#allocation2 + $0x29e] sm:$0xff]
  %v3064 = vld [vmem:[#allocation2 + $0x2a6] sm:$0xff]
  %v3065 = vld [vmem:[#allocation2 + $0x2ae] sm:$0xff]
  %v3066 = vld [vmem:[#allocation2 + $0x2b6] sm:$0xff]
  %v3067 = vld [vmem:[#allocation2 + $0x2be] sm:$0xff]
  %v3068 = vld [vmem:[#allocation2 + $0x2c6] sm:$0xff]
  %v3069 = vld [vmem:[#allocation2 + $0x2ce] sm:$0xff]
  %v3070 = vld [vmem:[#allocation2 + $0x2d6] sm:$0xff]
  %v3071 = vld [vmem:[#allocation2 + $0x2de] sm:$0xff]
  %v3072 = vpack.c.bf16 %v2985, %v2984
  %v3073 = vpack.c.bf16 %v2987, %v2986
  %v3074 = vpack.c.bf16 %v2989, %v2988
  %v3075 = vpack.c.bf16 %v2991, %v2990
  %v3076 = vpack.c.bf16 %v2993, %v2992
  %v3077 = vpack.c.bf16 %v2995, %v2994
  %v3078 = vpack.c.bf16 %v2997, %v2996
  %v3079 = vpack.c.bf16 %v2999, %v2998
  %v3080 = vpack.c.bf16 %v3001, %v3000
  %v3081 = vpack.c.bf16 %v3003, %v3002
  %v3082 = vpack.c.bf16 %v3005, %v3004
  %v3083 = vpack.c.bf16 %v3007, %v3006
  %v3084 = vpack.c.bf16 %v3009, %v3008
  %v3085 = vpack.c.bf16 %v3011, %v3010
  %v3086 = vpack.c.bf16 %v3013, %v3012
  %v3087 = vpack.c.bf16 %v3015, %v3014
  %v3088 = vpack.c.bf16 %v3017, %v3016
  %v3089 = vpack.c.bf16 %v3019, %v3018
  %v3090 = vpack.c.bf16 %v3021, %v3020
  %v3091 = vpack.c.bf16 %v3023, %v3022
  %v3092 = vpack.c.bf16 %v3025, %v3024
  %v3093 = vpack.c.bf16 %v3027, %v3026
  %v3094 = vpack.c.bf16 %v3029, %v3028
  %v3095 = vpack.c.bf16 %v3031, %v3030
  %v3096 = vpack.c.bf16 %v3033, %v3032
  %v3097 = vpack.c.bf16 %v3035, %v3034
  %v3098 = vpack.c.bf16 %v3037, %v3036
  %v3099 = vpack.c.bf16 %v3039, %v3038
  %v3100 = vpack.c.bf16 %v3041, %v3040
  %v3101 = vpack.c.bf16 %v3043, %v3042
  %v3102 = vpack.c.bf16 %v3045, %v3044
  %v3103 = vpack.c.bf16 %v3047, %v3046
  %v3104 = vpack.c.bf16 %v3049, %v3048
  %v3105 = vpack.c.bf16 %v3051, %v3050
  %v3106 = vpack.c.bf16 %v3053, %v3052
  %v3107 = vpack.c.bf16 %v3055, %v3054
  %v3108 = vpack.c.bf16 %v3057, %v3056
  %v3109 = vpack.c.bf16 %v3059, %v3058
  %v3110 = vpack.c.bf16 %v3061, %v3060
  %v3111 = vpack.c.bf16 %v3063, %v3062
  %v3112 = vpack.c.bf16 %v3065, %v3064
  %v3113 = vpack.c.bf16 %v3067, %v3066
  %v3114 = vpack.c.bf16 %v3069, %v3068
  %v3115 = vpack.c.bf16 %v3071, %v3070
  %3160 = vrot.lane.b32.xlu0 %v3072, 32
  %v3161 = vpop.permute.xlu0 %3160
  %3162 = vrot.lane.b32.xlu0 %v3073, 32
  %v3163 = vpop.permute.xlu0 %3162
  %3164 = vrot.lane.b32.xlu0 %v3074, 32
  %v3165 = vpop.permute.xlu0 %3164
  %3166 = vrot.lane.b32.xlu0 %v3075, 32
  %v3167 = vpop.permute.xlu0 %3166
  %3168 = vrot.lane.b32.xlu0 %v3076, 32
  %v3169 = vpop.permute.xlu0 %3168
  %3170 = vrot.lane.b32.xlu0 %v3077, 32
  %v3171 = vpop.permute.xlu0 %3170
  %3172 = vrot.lane.b32.xlu0 %v3078, 32
  %v3173 = vpop.permute.xlu0 %3172
  %3174 = vrot.lane.b32.xlu0 %v3079, 32
  %v3175 = vpop.permute.xlu0 %3174
  %3176 = vrot.lane.b32.xlu0 %v3080, 32
  %v3177 = vpop.permute.xlu0 %3176
  %3178 = vrot.lane.b32.xlu0 %v3081, 32
  %v3179 = vpop.permute.xlu0 %3178
  %3180 = vrot.lane.b32.xlu0 %v3082, 32
  %v3181 = vpop.permute.xlu0 %3180
  %3182 = vrot.lane.b32.xlu0 %v3083, 32
  %v3183 = vpop.permute.xlu0 %3182
  %3184 = vrot.lane.b32.xlu0 %v3084, 32
  %v3185 = vpop.permute.xlu0 %3184
  %3186 = vrot.lane.b32.xlu0 %v3085, 32
  %v3187 = vpop.permute.xlu0 %3186
  %3188 = vrot.lane.b32.xlu0 %v3086, 32
  %v3189 = vpop.permute.xlu0 %3188
  %3190 = vrot.lane.b32.xlu0 %v3087, 32
  %v3191 = vpop.permute.xlu0 %3190
  %3192 = vrot.lane.b32.xlu0 %v3088, 32
  %v3193 = vpop.permute.xlu0 %3192
  %3194 = vrot.lane.b32.xlu0 %v3089, 32
  %v3195 = vpop.permute.xlu0 %3194
  %3196 = vrot.lane.b32.xlu0 %v3090, 32
  %v3197 = vpop.permute.xlu0 %3196
  %3198 = vrot.lane.b32.xlu0 %v3091, 32
  %v3199 = vpop.permute.xlu0 %3198
  %3200 = vrot.lane.b32.xlu0 %v3092, 32
  %v3201 = vpop.permute.xlu0 %3200
  %3202 = vrot.lane.b32.xlu0 %v3093, 32
  %v3203 = vpop.permute.xlu0 %3202
  %3204 = vrot.lane.b32.xlu0 %v3094, 32
  %v3205 = vpop.permute.xlu0 %3204
  %3206 = vrot.lane.b32.xlu0 %v3095, 32
  %v3207 = vpop.permute.xlu0 %3206
  %3208 = vrot.lane.b32.xlu0 %v3096, 32
  %v3209 = vpop.permute.xlu0 %3208
  %3210 = vrot.lane.b32.xlu0 %v3097, 32
  %v3211 = vpop.permute.xlu0 %3210
  %3212 = vrot.lane.b32.xlu0 %v3098, 32
  %v3213 = vpop.permute.xlu0 %3212
  %3214 = vrot.lane.b32.xlu0 %v3099, 32
  %v3215 = vpop.permute.xlu0 %3214
  %3216 = vrot.lane.b32.xlu0 %v3100, 32
  %v3217 = vpop.permute.xlu0 %3216
  %3218 = vrot.lane.b32.xlu0 %v3101, 32
  %v3219 = vpop.permute.xlu0 %3218
  %3220 = vrot.lane.b32.xlu0 %v3102, 32
  %v3221 = vpop.permute.xlu0 %3220
  %3222 = vrot.lane.b32.xlu0 %v3103, 32
  %v3223 = vpop.permute.xlu0 %3222
  %3224 = vrot.lane.b32.xlu0 %v3104, 32
  %v3225 = vpop.permute.xlu0 %3224
  %3226 = vrot.lane.b32.xlu0 %v3105, 32
  %v3227 = vpop.permute.xlu0 %3226
  %3228 = vrot.lane.b32.xlu0 %v3106, 32
  %v3229 = vpop.permute.xlu0 %3228
  %3230 = vrot.lane.b32.xlu0 %v3107, 32
  %v3231 = vpop.permute.xlu0 %3230
  %3232 = vrot.lane.b32.xlu0 %v3108, 32
  %v3233 = vpop.permute.xlu0 %3232
  %3234 = vrot.lane.b32.xlu0 %v3109, 32
  %v3235 = vpop.permute.xlu0 %3234
  %3236 = vrot.lane.b32.xlu0 %v3110, 32
  %v3237 = vpop.permute.xlu0 %3236
  %3238 = vrot.lane.b32.xlu0 %v3111, 32
  %v3239 = vpop.permute.xlu0 %3238
  %3240 = vrot.lane.b32.xlu0 %v3112, 32
  %v3241 = vpop.permute.xlu0 %3240
  %3242 = vrot.lane.b32.xlu0 %v3113, 32
  %v3243 = vpop.permute.xlu0 %3242
  %3244 = vrot.lane.b32.xlu0 %v3114, 32
  %v3245 = vpop.permute.xlu0 %3244
  %3246 = vrot.lane.b32.xlu0 %v3115, 32
  %v3247 = vpop.permute.xlu0 %3246
  %vm3292 = vcmask 294144
  %3293 = vst.msk [vmem:[#allocation3] sm:$0xff] %vm3292, %v3161
  %3294 = vst.msk [vmem:[#allocation3 + $0x8] sm:$0xff] %vm3292, %v3163
  %3295 = vst.msk [vmem:[#allocation3 + $0x10] sm:$0xff] %vm3292, %v3165
  %3296 = vst.msk [vmem:[#allocation3 + $0x18] sm:$0xff] %vm3292, %v3167
  %3297 = vst.msk [vmem:[#allocation3 + $0x20] sm:$0xff] %vm3292, %v3169
  %3298 = vst.msk [vmem:[#allocation3 + $0x28] sm:$0xff] %vm3292, %v3171
  %3299 = vst.msk [vmem:[#allocation3 + $0x30] sm:$0xff] %vm3292, %v3173
  %3300 = vst.msk [vmem:[#allocation3 + $0x38] sm:$0xff] %vm3292, %v3175
  %3301 = vst.msk [vmem:[#allocation3 + $0x40] sm:$0xff] %vm3292, %v3177
  %3302 = vst.msk [vmem:[#allocation3 + $0x48] sm:$0xff] %vm3292, %v3179
  %3303 = vst.msk [vmem:[#allocation3 + $0x50] sm:$0xff] %vm3292, %v3181
  %3304 = vst.msk [vmem:[#allocation3 + $0x58] sm:$0xff] %vm3292, %v3183
  %3305 = vst.msk [vmem:[#allocation3 + $0x60] sm:$0xff] %vm3292, %v3185
  %3306 = vst.msk [vmem:[#allocation3 + $0x68] sm:$0xff] %vm3292, %v3187
  %3307 = vst.msk [vmem:[#allocation3 + $0x70] sm:$0xff] %vm3292, %v3189
  %3308 = vst.msk [vmem:[#allocation3 + $0x78] sm:$0xff] %vm3292, %v3191
  %3309 = vst.msk [vmem:[#allocation3 + $0x80] sm:$0xff] %vm3292, %v3193
  %3310 = vst.msk [vmem:[#allocation3 + $0x88] sm:$0xff] %vm3292, %v3195
  %3311 = vst.msk [vmem:[#allocation3 + $0x90] sm:$0xff] %vm3292, %v3197
  %3312 = vst.msk [vmem:[#allocation3 + $0x98] sm:$0xff] %vm3292, %v3199
  %3313 = vst.msk [vmem:[#allocation3 + $0xa0] sm:$0xff] %vm3292, %v3201
  %3314 = vst.msk [vmem:[#allocation3 + $0xa8] sm:$0xff] %vm3292, %v3203
  %3315 = vst.msk [vmem:[#allocation3 + $0xb0] sm:$0xff] %vm3292, %v3205
  %3316 = vst.msk [vmem:[#allocation3 + $0xb8] sm:$0xff] %vm3292, %v3207
  %3317 = vst.msk [vmem:[#allocation3 + $0xc0] sm:$0xff] %vm3292, %v3209
  %3318 = vst.msk [vmem:[#allocation3 + $0xc8] sm:$0xff] %vm3292, %v3211
  %3319 = vst.msk [vmem:[#allocation3 + $0xd0] sm:$0xff] %vm3292, %v3213
  %3320 = vst.msk [vmem:[#allocation3 + $0xd8] sm:$0xff] %vm3292, %v3215
  %3321 = vst.msk [vmem:[#allocation3 + $0xe0] sm:$0xff] %vm3292, %v3217
  %3322 = vst.msk [vmem:[#allocation3 + $0xe8] sm:$0xff] %vm3292, %v3219
  %3323 = vst.msk [vmem:[#allocation3 + $0xf0] sm:$0xff] %vm3292, %v3221
  %3324 = vst.msk [vmem:[#allocation3 + $0xf8] sm:$0xff] %vm3292, %v3223
  %3325 = vst.msk [vmem:[#allocation3 + $0x100] sm:$0xff] %vm3292, %v3225
  %3326 = vst.msk [vmem:[#allocation3 + $0x108] sm:$0xff] %vm3292, %v3227
  %3327 = vst.msk [vmem:[#allocation3 + $0x110] sm:$0xff] %vm3292, %v3229
  %3328 = vst.msk [vmem:[#allocation3 + $0x118] sm:$0xff] %vm3292, %v3231
  %3329 = vst.msk [vmem:[#allocation3 + $0x120] sm:$0xff] %vm3292, %v3233
  %3330 = vst.msk [vmem:[#allocation3 + $0x128] sm:$0xff] %vm3292, %v3235
  %3331 = vst.msk [vmem:[#allocation3 + $0x130] sm:$0xff] %vm3292, %v3237
  %3332 = vst.msk [vmem:[#allocation3 + $0x138] sm:$0xff] %vm3292, %v3239
  %3333 = vst.msk [vmem:[#allocation3 + $0x140] sm:$0xff] %vm3292, %v3241
  %3334 = vst.msk [vmem:[#allocation3 + $0x148] sm:$0xff] %vm3292, %v3243
  %3335 = vst.msk [vmem:[#allocation3 + $0x150] sm:$0xff] %vm3292, %v3245
  %3336 = vst.msk [vmem:[#allocation3 + $0x158] sm:$0xff] %vm3292, %v3247
  %v3337 = vld [vmem:[#allocation3] sm:$0xff]
  %v3338 = vld [vmem:[#allocation3 + $0x8] sm:$0xff]
  %v3339 = vld [vmem:[#allocation3 + $0x10] sm:$0xff]
  %v3340 = vld [vmem:[#allocation3 + $0x18] sm:$0xff]
  %v3341 = vld [vmem:[#allocation3 + $0x20] sm:$0xff]
  %v3342 = vld [vmem:[#allocation3 + $0x28] sm:$0xff]
  %v3343 = vld [vmem:[#allocation3 + $0x30] sm:$0xff]
  %v3344 = vld [vmem:[#allocation3 + $0x38] sm:$0xff]
  %v3345 = vld [vmem:[#allocation3 + $0x40] sm:$0xff]
  %v3346 = vld [vmem:[#allocation3 + $0x48] sm:$0xff]
  %v3347 = vld [vmem:[#allocation3 + $0x50] sm:$0xff]
  %v3348 = vld [vmem:[#allocation3 + $0x58] sm:$0xff]
  %v3349 = vld [vmem:[#allocation3 + $0x60] sm:$0xff]
  %v3350 = vld [vmem:[#allocation3 + $0x68] sm:$0xff]
  %v3351 = vld [vmem:[#allocation3 + $0x70] sm:$0xff]
  %v3352 = vld [vmem:[#allocation3 + $0x78] sm:$0xff]
  %v3353 = vld [vmem:[#allocation3 + $0x80] sm:$0xff]
  %v3354 = vld [vmem:[#allocation3 + $0x88] sm:$0xff]
  %v3355 = vld [vmem:[#allocation3 + $0x90] sm:$0xff]
  %v3356 = vld [vmem:[#allocation3 + $0x98] sm:$0xff]
  %v3357 = vld [vmem:[#allocation3 + $0xa0] sm:$0xff]
  %v3358 = vld [vmem:[#allocation3 + $0xa8] sm:$0xff]
  %v3359 = vld [vmem:[#allocation3 + $0xb0] sm:$0xff]
  %v3360 = vld [vmem:[#allocation3 + $0xb8] sm:$0xff]
  %v3361 = vld [vmem:[#allocation3 + $0xc0] sm:$0xff]
  %v3362 = vld [vmem:[#allocation3 + $0xc8] sm:$0xff]
  %v3363 = vld [vmem:[#allocation3 + $0xd0] sm:$0xff]
  %v3364 = vld [vmem:[#allocation3 + $0xd8] sm:$0xff]
  %v3365 = vld [vmem:[#allocation3 + $0xe0] sm:$0xff]
  %v3366 = vld [vmem:[#allocation3 + $0xe8] sm:$0xff]
  %v3367 = vld [vmem:[#allocation3 + $0xf0] sm:$0xff]
  %v3368 = vld [vmem:[#allocation3 + $0xf8] sm:$0xff]
  %v3369 = vld [vmem:[#allocation3 + $0x100] sm:$0xff]
  %v3370 = vld [vmem:[#allocation3 + $0x108] sm:$0xff]
  %v3371 = vld [vmem:[#allocation3 + $0x110] sm:$0xff]
  %v3372 = vld [vmem:[#allocation3 + $0x118] sm:$0xff]
  %v3373 = vld [vmem:[#allocation3 + $0x120] sm:$0xff]
  %v3374 = vld [vmem:[#allocation3 + $0x128] sm:$0xff]
  %v3375 = vld [vmem:[#allocation3 + $0x130] sm:$0xff]
  %v3376 = vld [vmem:[#allocation3 + $0x138] sm:$0xff]
  %v3377 = vld [vmem:[#allocation3 + $0x140] sm:$0xff]
  %v3378 = vld [vmem:[#allocation3 + $0x148] sm:$0xff]
  %v3379 = vld [vmem:[#allocation3 + $0x150] sm:$0xff]
  %v3380 = vld [vmem:[#allocation3 + $0x158] sm:$0xff]
  %v3381 = vld [vmem:[%s2] sm:$0xf]
  %v3382 = vld [vmem:[%s2 + $0x4] sm:$0xf]
  %v3383 = vld [vmem:[%s2 + $0x8] sm:$0xf]
  %v3384 = vld [vmem:[%s2 + $0xc] sm:$0xf]
  %v3385 = vld [vmem:[%s2 + $0x10] sm:$0x3]
  %v3391 = vunpack.c.l.b16 %v3381
  %v3392 = vunpack.c.l.b16 %v3382
  %v3393 = vunpack.c.l.b16 %v3383
  %v3394 = vunpack.c.l.b16 %v3384
  %v3395 = vunpack.c.l.b16 %v3385
  %v3396 = vpack.c.b16 %v3392, %v3391
  %v3397 = vpack.c.b16 %v3394, %v3393
  %v3398 = vpack.c.b16 %v3395, %v3395
  %vm3401 = vcmask 293888
  %v3403 = vsel %vm3401, %v3337, 0
  %v3406 = vsel %vm3401, %v3338, 0
  %v3409 = vsel %vm3401, %v3339, 0
  %v3412 = vsel %vm3401, %v3340, 0
  %v3415 = vsel %vm3401, %v3341, 0
  %v3418 = vsel %vm3401, %v3342, 0
  %v3421 = vsel %vm3401, %v3343, 0
  %v3424 = vsel %vm3401, %v3344, 0
  %v3427 = vsel %vm3401, %v3345, 0
  %v3430 = vsel %vm3401, %v3346, 0
  %v3433 = vsel %vm3401, %v3347, 0
  %v3436 = vsel %vm3401, %v3348, 0
  %v3439 = vsel %vm3401, %v3349, 0
  %v3442 = vsel %vm3401, %v3350, 0
  %v3445 = vsel %vm3401, %v3351, 0
  %v3448 = vsel %vm3401, %v3352, 0
  %v3451 = vsel %vm3401, %v3353, 0
  %v3454 = vsel %vm3401, %v3354, 0
  %v3457 = vsel %vm3401, %v3355, 0
  %v3460 = vsel %vm3401, %v3356, 0
  %v3463 = vsel %vm3401, %v3357, 0
  %v3466 = vsel %vm3401, %v3358, 0
  %v3469 = vsel %vm3401, %v3359, 0
  %v3472 = vsel %vm3401, %v3360, 0
  %v3475 = vsel %vm3401, %v3361, 0
  %v3478 = vsel %vm3401, %v3362, 0
  %v3481 = vsel %vm3401, %v3363, 0
  %v3484 = vsel %vm3401, %v3364, 0
  %v3487 = vsel %vm3401, %v3365, 0
  %v3490 = vsel %vm3401, %v3366, 0
  %v3493 = vsel %vm3401, %v3367, 0
  %v3496 = vsel %vm3401, %v3368, 0
  %v3499 = vsel %vm3401, %v3369, 0
  %v3502 = vsel %vm3401, %v3370, 0
  %v3505 = vsel %vm3401, %v3371, 0
  %v3508 = vsel %vm3401, %v3372, 0
  %v3511 = vsel %vm3401, %v3373, 0
  %v3514 = vsel %vm3401, %v3374, 0
  %v3517 = vsel %vm3401, %v3375, 0
  %v3520 = vsel %vm3401, %v3376, 0
  %v3523 = vsel %vm3401, %v3377, 0
  %v3526 = vsel %vm3401, %v3378, 0
  %v3529 = vsel %vm3401, %v3379, 0
  %v3532 = vsel %vm3401, %v3380, 0
  %vm3534 = vcmask 1041408
  %v3536 = vsel %vm3534, %v3398, 0
  %3538 = vmatprep.subr.bf16.mxu0 0
  %3539 = vmatpush1.bf16.msra.mxu0 %v3396
  %3540 = vmatprep.subr.bf16.mxu0 0
  %3541 = vmatpush1.bf16.msra.mxu0 %v3397
  %3542 = vmatprep.subr.bf16.mxu0 0
  %3543 = vmatpush1.bf16.msra.mxu0 %v3536
  %3544 = vmatprep.subr.bf16.mxu0 0
  %3545 = vmatpush1.bf16.msra.mxu0 0
  %3546 = vmatprep.subr.bf16.mxu0 0
  %3547 = vmatpush1.bf16.msra.mxu0 0
  %3548 = vmatprep.subr.bf16.mxu0 0
  %3549 = vmatpush1.bf16.msra.mxu0 0
  %3550 = vmatprep.subr.bf16.mxu0 0
  %3551 = vmatpush1.bf16.msra.mxu0 0
  %3552 = vmatprep.subr.bf16.mxu0 0
  %3553 = vmatpush1.bf16.msra.mxu0 0
  %3554 = vmatprep.subr.bf16.mxu0 0
  %3555 = vmatpush1.bf16.msra.mxu0 0
  %3556 = vmatprep.subr.bf16.mxu0 0
  %3557 = vmatpush1.bf16.msra.mxu0 0
  %3558 = vmatprep.subr.bf16.mxu0 0
  %3559 = vmatpush1.bf16.msra.mxu0 0
  %3560 = vmatprep.subr.bf16.mxu0 0
  %3561 = vmatpush1.bf16.msra.mxu0 0
  %3562 = vmatprep.subr.bf16.mxu0 0
  %3563 = vmatpush1.bf16.msra.mxu0 0
  %3564 = vmatprep.subr.bf16.mxu0 0
  %3565 = vmatpush1.bf16.msra.mxu0 0
  %3566 = vmatprep.subr.bf16.mxu0 0
  %3567 = vmatpush1.bf16.msra.mxu0 0
  %3568 = vmatprep.subr.bf16.mxu0 0
  %3569 = vmatpush1.bf16.msra.mxu0 0
  %3570 = vmatprep.mubr.bf16.mxu0 0
  %3571 = vmatmul.mubr.bf16.gmra.mrb[0].mxu0 %v3403
  %v3572 = vpop.f32.mrb[0].mxu0
  %v3573 = vadd.f32 0.0, %v3572
  %v3574 = vpop.f32.mrb[0].mxu0
  %v3575 = vpop.f32.mrb[0].mxu0
  %v3576 = vadd.f32 0.0, %v3575
  %v3577 = vpop.f32.mrb[0].mxu0
  %3578 = vmatprep.mubr.bf16.mxu0 0
  %3579 = vmatmul.mubr.bf16.gmra.mrb[0].mxu0 %v3406
  %v3580 = vpop.f32.mrb[0].mxu0
  %v3581 = vadd.f32 0.0, %v3580
  %v3582 = vpop.f32.mrb[0].mxu0
  %v3583 = vpop.f32.mrb[0].mxu0
  %v3584 = vadd.f32 0.0, %v3583
  %v3585 = vpop.f32.mrb[0].mxu0
  %3586 = vmatprep.mubr.bf16.mxu0 0
  %3587 = vmatmul.mubr.bf16.gmra.mrb[0].mxu0 %v3409
  %v3588 = vpop.f32.mrb[0].mxu0
  %v3589 = vadd.f32 0.0, %v3588
  %v3590 = vpop.f32.mrb[0].mxu0
  %v3591 = vpop.f32.mrb[0].mxu0
  %v3592 = vadd.f32 0.0, %v3591
  %v3593 = vpop.f32.mrb[0].mxu0
  %3594 = vmatprep.mubr.bf16.mxu0 0
  %3595 = vmatmul.mubr.bf16.gmra.mrb[0].mxu0 %v3412
  %v3596 = vpop.f32.mrb[0].mxu0
  %v3597 = vadd.f32 0.0, %v3596
  %v3598 = vpop.f32.mrb[0].mxu0
  %v3599 = vpop.f32.mrb[0].mxu0
  %v3600 = vadd.f32 0.0, %v3599
  %v3601 = vpop.f32.mrb[0].mxu0
  %3602 = vmatprep.mubr.bf16.mxu0 0
  %3603 = vmatmul.mubr.bf16.gmra.mrb[0].mxu0 %v3415
  %v3604 = vpop.f32.mrb[0].mxu0
  %v3605 = vadd.f32 0.0, %v3604
  %v3606 = vpop.f32.mrb[0].mxu0
  %v3607 = vpop.f32.mrb[0].mxu0
  %v3608 = vadd.f32 0.0, %v3607
  %v3609 = vpop.f32.mrb[0].mxu0
  %3610 = vmatprep.mubr.bf16.mxu0 0
  %3611 = vmatmul.mubr.bf16.gmra.mrb[0].mxu0 %v3418
  %v3612 = vpop.f32.mrb[0].mxu0
  %v3613 = vadd.f32 0.0, %v3612
  %v3614 = vpop.f32.mrb[0].mxu0
  %v3615 = vpop.f32.mrb[0].mxu0
  %v3616 = vadd.f32 0.0, %v3615
  %v3617 = vpop.f32.mrb[0].mxu0
  %3618 = vmatprep.mubr.bf16.mxu0 0
  %3619 = vmatmul.mubr.bf16.gmra.mrb[0].mxu0 %v3421
  %v3620 = vpop.f32.mrb[0].mxu0
  %v3621 = vadd.f32 0.0, %v3620
  %v3622 = vpop.f32.mrb[0].mxu0
  %v3623 = vpop.f32.mrb[0].mxu0
  %v3624 = vadd.f32 0.0, %v3623
  %v3625 = vpop.f32.mrb[0].mxu0
  %3626 = vmatprep.mubr.bf16.mxu0 0
  %3627 = vmatmul.mubr.bf16.gmra.mrb[0].mxu0 %v3424
  %v3628 = vpop.f32.mrb[0].mxu0
  %v3629 = vadd.f32 0.0, %v3628
  %v3630 = vpop.f32.mrb[0].mxu0
  %v3631 = vpop.f32.mrb[0].mxu0
  %v3632 = vadd.f32 0.0, %v3631
  %v3633 = vpop.f32.mrb[0].mxu0
  %3634 = vmatprep.mubr.bf16.mxu0 0
  %3635 = vmatmul.mubr.bf16.gmra.mrb[0].mxu0 %v3427
  %v3636 = vpop.f32.mrb[0].mxu0
  %v3637 = vadd.f32 0.0, %v3636
  %v3638 = vpop.f32.mrb[0].mxu0
  %v3639 = vpop.f32.mrb[0].mxu0
  %v3640 = vadd.f32 0.0, %v3639
  %v3641 = vpop.f32.mrb[0].mxu0
  %3642 = vmatprep.mubr.bf16.mxu0 0
  %3643 = vmatmul.mubr.bf16.gmra.mrb[0].mxu0 %v3430
  %v3644 = vpop.f32.mrb[0].mxu0
  %v3645 = vadd.f32 0.0, %v3644
  %v3646 = vpop.f32.mrb[0].mxu0
  %v3647 = vpop.f32.mrb[0].mxu0
  %v3648 = vadd.f32 0.0, %v3647
  %v3649 = vpop.f32.mrb[0].mxu0
  %3650 = vmatprep.mubr.bf16.mxu0 0
  %3651 = vmatmul.mubr.bf16.gmra.mrb[0].mxu0 %v3433
  %v3652 = vpop.f32.mrb[0].mxu0
  %v3653 = vadd.f32 0.0, %v3652
  %v3654 = vpop.f32.mrb[0].mxu0
  %v3655 = vpop.f32.mrb[0].mxu0
  %v3656 = vadd.f32 0.0, %v3655
  %v3657 = vpop.f32.mrb[0].mxu0
  %3658 = vmatprep.mubr.bf16.mxu0 0
  %3659 = vmatmul.mubr.bf16.gmra.mrb[0].mxu0 %v3436
  %v3660 = vpop.f32.mrb[0].mxu0
  %v3661 = vadd.f32 0.0, %v3660
  %v3662 = vpop.f32.mrb[0].mxu0
  %v3663 = vpop.f32.mrb[0].mxu0
  %v3664 = vadd.f32 0.0, %v3663
  %v3665 = vpop.f32.mrb[0].mxu0
  %3666 = vmatprep.mubr.bf16.mxu0 0
  %3667 = vmatmul.mubr.bf16.gmra.mrb[0].mxu0 %v3439
  %v3668 = vpop.f32.mrb[0].mxu0
  %v3669 = vadd.f32 0.0, %v3668
  %v3670 = vpop.f32.mrb[0].mxu0
  %v3671 = vpop.f32.mrb[0].mxu0
  %v3672 = vadd.f32 0.0, %v3671
  %v3673 = vpop.f32.mrb[0].mxu0
  %3674 = vmatprep.mubr.bf16.mxu0 0
  %3675 = vmatmul.mubr.bf16.gmra.mrb[0].mxu0 %v3442
  %v3676 = vpop.f32.mrb[0].mxu0
  %v3677 = vadd.f32 0.0, %v3676
  %v3678 = vpop.f32.mrb[0].mxu0
  %v3679 = vpop.f32.mrb[0].mxu0
  %v3680 = vadd.f32 0.0, %v3679
  %v3681 = vpop.f32.mrb[0].mxu0
  %3682 = vmatprep.mubr.bf16.mxu0 0
  %3683 = vmatmul.mubr.bf16.gmra.mrb[0].mxu0 %v3445
  %v3684 = vpop.f32.mrb[0].mxu0
  %v3685 = vadd.f32 0.0, %v3684
  %v3686 = vpop.f32.mrb[0].mxu0
  %v3687 = vpop.f32.mrb[0].mxu0
  %v3688 = vadd.f32 0.0, %v3687
  %v3689 = vpop.f32.mrb[0].mxu0
  %3690 = vmatprep.mubr.bf16.mxu0 0
  %3691 = vmatmul.mubr.bf16.gmra.mrb[0].mxu0 %v3448
  %v3692 = vpop.f32.mrb[0].mxu0
  %v3693 = vadd.f32 0.0, %v3692
  %v3694 = vpop.f32.mrb[0].mxu0
  %v3695 = vpop.f32.mrb[0].mxu0
  %v3696 = vadd.f32 0.0, %v3695
  %v3697 = vpop.f32.mrb[0].mxu0
  %3698 = vmatprep.mubr.bf16.mxu0 0
  %3699 = vmatmul.mubr.bf16.gmra.mrb[0].mxu0 %v3451
  %v3700 = vpop.f32.mrb[0].mxu0
  %v3701 = vadd.f32 0.0, %v3700
  %v3702 = vpop.f32.mrb[0].mxu0
  %v3703 = vpop.f32.mrb[0].mxu0
  %v3704 = vadd.f32 0.0, %v3703
  %v3705 = vpop.f32.mrb[0].mxu0
  %3706 = vmatprep.mubr.bf16.mxu0 0
  %3707 = vmatmul.mubr.bf16.gmra.mrb[0].mxu0 %v3454
  %v3708 = vpop.f32.mrb[0].mxu0
  %v3709 = vadd.f32 0.0, %v3708
  %v3710 = vpop.f32.mrb[0].mxu0
  %v3711 = vpop.f32.mrb[0].mxu0
  %v3712 = vadd.f32 0.0, %v3711
  %v3713 = vpop.f32.mrb[0].mxu0
  %3714 = vmatprep.mubr.bf16.mxu0 0
  %3715 = vmatmul.mubr.bf16.gmra.mrb[0].mxu0 %v3457
  %v3716 = vpop.f32.mrb[0].mxu0
  %v3717 = vadd.f32 0.0, %v3716
  %v3718 = vpop.f32.mrb[0].mxu0
  %v3719 = vpop.f32.mrb[0].mxu0
  %v3720 = vadd.f32 0.0, %v3719
  %v3721 = vpop.f32.mrb[0].mxu0
  %3722 = vmatprep.mubr.bf16.mxu0 0
  %3723 = vmatmul.mubr.bf16.gmra.mrb[0].mxu0 %v3460
  %v3724 = vpop.f32.mrb[0].mxu0
  %v3725 = vadd.f32 0.0, %v3724
  %v3726 = vpop.f32.mrb[0].mxu0
  %v3727 = vpop.f32.mrb[0].mxu0
  %v3728 = vadd.f32 0.0, %v3727
  %v3729 = vpop.f32.mrb[0].mxu0
  %3730 = vmatprep.mubr.bf16.mxu0 0
  %3731 = vmatmul.mubr.bf16.gmra.mrb[0].mxu0 %v3463
  %v3732 = vpop.f32.mrb[0].mxu0
  %v3733 = vadd.f32 0.0, %v3732
  %v3734 = vpop.f32.mrb[0].mxu0
  %v3735 = vpop.f32.mrb[0].mxu0
  %v3736 = vadd.f32 0.0, %v3735
  %v3737 = vpop.f32.mrb[0].mxu0
  %3738 = vmatprep.mubr.bf16.mxu0 0
  %3739 = vmatmul.mubr.bf16.gmra.mrb[0].mxu0 %v3466
  %v3740 = vpop.f32.mrb[0].mxu0
  %v3741 = vadd.f32 0.0, %v3740
  %v3742 = vpop.f32.mrb[0].mxu0
  %v3743 = vpop.f32.mrb[0].mxu0
  %v3744 = vadd.f32 0.0, %v3743
  %v3745 = vpop.f32.mrb[0].mxu0
  %3746 = vmatprep.mubr.bf16.mxu0 0
  %3747 = vmatmul.mubr.bf16.gmra.mrb[0].mxu0 %v3469
  %v3748 = vpop.f32.mrb[0].mxu0
  %v3749 = vadd.f32 0.0, %v3748
  %v3750 = vpop.f32.mrb[0].mxu0
  %v3751 = vpop.f32.mrb[0].mxu0
  %v3752 = vadd.f32 0.0, %v3751
  %v3753 = vpop.f32.mrb[0].mxu0
  %3754 = vmatprep.mubr.bf16.mxu0 0
  %3755 = vmatmul.mubr.bf16.gmra.mrb[0].mxu0 %v3472
  %v3756 = vpop.f32.mrb[0].mxu0
  %v3757 = vadd.f32 0.0, %v3756
  %v3758 = vpop.f32.mrb[0].mxu0
  %v3759 = vpop.f32.mrb[0].mxu0
  %v3760 = vadd.f32 0.0, %v3759
  %v3761 = vpop.f32.mrb[0].mxu0
  %3762 = vmatprep.mubr.bf16.mxu0 0
  %3763 = vmatmul.mubr.bf16.gmra.mrb[0].mxu0 %v3475
  %v3764 = vpop.f32.mrb[0].mxu0
  %v3765 = vadd.f32 0.0, %v3764
  %v3766 = vpop.f32.mrb[0].mxu0
  %v3767 = vpop.f32.mrb[0].mxu0
  %v3768 = vadd.f32 0.0, %v3767
  %v3769 = vpop.f32.mrb[0].mxu0
  %3770 = vmatprep.mubr.bf16.mxu0 0
  %3771 = vmatmul.mubr.bf16.gmra.mrb[0].mxu0 %v3478
  %v3772 = vpop.f32.mrb[0].mxu0
  %v3773 = vadd.f32 0.0, %v3772
  %v3774 = vpop.f32.mrb[0].mxu0
  %v3775 = vpop.f32.mrb[0].mxu0
  %v3776 = vadd.f32 0.0, %v3775
  %v3777 = vpop.f32.mrb[0].mxu0
  %3778 = vmatprep.mubr.bf16.mxu0 0
  %3779 = vmatmul.mubr.bf16.gmra.mrb[0].mxu0 %v3481
  %v3780 = vpop.f32.mrb[0].mxu0
  %v3781 = vadd.f32 0.0, %v3780
  %v3782 = vpop.f32.mrb[0].mxu0
  %v3783 = vpop.f32.mrb[0].mxu0
  %v3784 = vadd.f32 0.0, %v3783
  %v3785 = vpop.f32.mrb[0].mxu0
  %3786 = vmatprep.mubr.bf16.mxu0 0
  %3787 = vmatmul.mubr.bf16.gmra.mrb[0].mxu0 %v3484
  %v3788 = vpop.f32.mrb[0].mxu0
  %v3789 = vadd.f32 0.0, %v3788
  %v3790 = vpop.f32.mrb[0].mxu0
  %v3791 = vpop.f32.mrb[0].mxu0
  %v3792 = vadd.f32 0.0, %v3791
  %v3793 = vpop.f32.mrb[0].mxu0
  %3794 = vmatprep.mubr.bf16.mxu0 0
  %3795 = vmatmul.mubr.bf16.gmra.mrb[0].mxu0 %v3487
  %v3796 = vpop.f32.mrb[0].mxu0
  %v3797 = vadd.f32 0.0, %v3796
  %v3798 = vpop.f32.mrb[0].mxu0
  %v3799 = vpop.f32.mrb[0].mxu0
  %v3800 = vadd.f32 0.0, %v3799
  %v3801 = vpop.f32.mrb[0].mxu0
  %3802 = vmatprep.mubr.bf16.mxu0 0
  %3803 = vmatmul.mubr.bf16.gmra.mrb[0].mxu0 %v3490
  %v3804 = vpop.f32.mrb[0].mxu0
  %v3805 = vadd.f32 0.0, %v3804
  %v3806 = vpop.f32.mrb[0].mxu0
  %v3807 = vpop.f32.mrb[0].mxu0
  %v3808 = vadd.f32 0.0, %v3807
  %v3809 = vpop.f32.mrb[0].mxu0
  %3810 = vmatprep.mubr.bf16.mxu0 0
  %3811 = vmatmul.mubr.bf16.gmra.mrb[0].mxu0 %v3493
  %v3812 = vpop.f32.mrb[0].mxu0
  %v3813 = vadd.f32 0.0, %v3812
  %v3814 = vpop.f32.mrb[0].mxu0
  %v3815 = vpop.f32.mrb[0].mxu0
  %v3816 = vadd.f32 0.0, %v3815
  %v3817 = vpop.f32.mrb[0].mxu0
  %3818 = vmatprep.mubr.bf16.mxu0 0
  %3819 = vmatmul.mubr.bf16.gmra.mrb[0].mxu0 %v3496
  %v3820 = vpop.f32.mrb[0].mxu0
  %v3821 = vadd.f32 0.0, %v3820
  %v3822 = vpop.f32.mrb[0].mxu0
  %v3823 = vpop.f32.mrb[0].mxu0
  %v3824 = vadd.f32 0.0, %v3823
  %v3825 = vpop.f32.mrb[0].mxu0
  %3826 = vmatprep.mubr.bf16.mxu0 0
  %3827 = vmatmul.mubr.bf16.gmra.mrb[0].mxu0 %v3499
  %v3828 = vpop.f32.mrb[0].mxu0
  %v3829 = vadd.f32 0.0, %v3828
  %v3830 = vpop.f32.mrb[0].mxu0
  %v3831 = vpop.f32.mrb[0].mxu0
  %v3832 = vadd.f32 0.0, %v3831
  %v3833 = vpop.f32.mrb[0].mxu0
  %3834 = vmatprep.mubr.bf16.mxu0 0
  %3835 = vmatmul.mubr.bf16.gmra.mrb[0].mxu0 %v3502
  %v3836 = vpop.f32.mrb[0].mxu0
  %v3837 = vadd.f32 0.0, %v3836
  %v3838 = vpop.f32.mrb[0].mxu0
  %v3839 = vpop.f32.mrb[0].mxu0
  %v3840 = vadd.f32 0.0, %v3839
  %v3841 = vpop.f32.mrb[0].mxu0
  %3842 = vmatprep.mubr.bf16.mxu0 0
  %3843 = vmatmul.mubr.bf16.gmra.mrb[0].mxu0 %v3505
  %v3844 = vpop.f32.mrb[0].mxu0
  %v3845 = vadd.f32 0.0, %v3844
  %v3846 = vpop.f32.mrb[0].mxu0
  %v3847 = vpop.f32.mrb[0].mxu0
  %v3848 = vadd.f32 0.0, %v3847
  %v3849 = vpop.f32.mrb[0].mxu0
  %3850 = vmatprep.mubr.bf16.mxu0 0
  %3851 = vmatmul.mubr.bf16.gmra.mrb[0].mxu0 %v3508
  %v3852 = vpop.f32.mrb[0].mxu0
  %v3853 = vadd.f32 0.0, %v3852
  %v3854 = vpop.f32.mrb[0].mxu0
  %v3855 = vpop.f32.mrb[0].mxu0
  %v3856 = vadd.f32 0.0, %v3855
  %v3857 = vpop.f32.mrb[0].mxu0
  %3858 = vmatprep.mubr.bf16.mxu0 0
  %3859 = vmatmul.mubr.bf16.gmra.mrb[0].mxu0 %v3511
  %v3860 = vpop.f32.mrb[0].mxu0
  %v3861 = vadd.f32 0.0, %v3860
  %v3862 = vpop.f32.mrb[0].mxu0
  %v3863 = vpop.f32.mrb[0].mxu0
  %v3864 = vadd.f32 0.0, %v3863
  %v3865 = vpop.f32.mrb[0].mxu0
  %3866 = vmatprep.mubr.bf16.mxu0 0
  %3867 = vmatmul.mubr.bf16.gmra.mrb[0].mxu0 %v3514
  %v3868 = vpop.f32.mrb[0].mxu0
  %v3869 = vadd.f32 0.0, %v3868
  %v3870 = vpop.f32.mrb[0].mxu0
  %v3871 = vpop.f32.mrb[0].mxu0
  %v3872 = vadd.f32 0.0, %v3871
  %v3873 = vpop.f32.mrb[0].mxu0
  %3874 = vmatprep.mubr.bf16.mxu0 0
  %3875 = vmatmul.mubr.bf16.gmra.mrb[0].mxu0 %v3517
  %v3876 = vpop.f32.mrb[0].mxu0
  %v3877 = vadd.f32 0.0, %v3876
  %v3878 = vpop.f32.mrb[0].mxu0
  %v3879 = vpop.f32.mrb[0].mxu0
  %v3880 = vadd.f32 0.0, %v3879
  %v3881 = vpop.f32.mrb[0].mxu0
  %3882 = vmatprep.mubr.bf16.mxu0 0
  %3883 = vmatmul.mubr.bf16.gmra.mrb[0].mxu0 %v3520
  %v3884 = vpop.f32.mrb[0].mxu0
  %v3885 = vadd.f32 0.0, %v3884
  %v3886 = vpop.f32.mrb[0].mxu0
  %v3887 = vpop.f32.mrb[0].mxu0
  %v3888 = vadd.f32 0.0, %v3887
  %v3889 = vpop.f32.mrb[0].mxu0
  %3890 = vmatprep.mubr.bf16.mxu0 0
  %3891 = vmatmul.mubr.bf16.gmra.mrb[0].mxu0 %v3523
  %v3892 = vpop.f32.mrb[0].mxu0
  %v3893 = vadd.f32 0.0, %v3892
  %v3894 = vpop.f32.mrb[0].mxu0
  %v3895 = vpop.f32.mrb[0].mxu0
  %v3896 = vadd.f32 0.0, %v3895
  %v3897 = vpop.f32.mrb[0].mxu0
  %3898 = vmatprep.mubr.bf16.mxu0 0
  %3899 = vmatmul.mubr.bf16.gmra.mrb[0].mxu0 %v3526
  %v3900 = vpop.f32.mrb[0].mxu0
  %v3901 = vadd.f32 0.0, %v3900
  %v3902 = vpop.f32.mrb[0].mxu0
  %v3903 = vpop.f32.mrb[0].mxu0
  %v3904 = vadd.f32 0.0, %v3903
  %v3905 = vpop.f32.mrb[0].mxu0
  %3906 = vmatprep.mubr.bf16.mxu0 0
  %3907 = vmatmul.mubr.bf16.gmra.mrb[0].mxu0 %v3529
  %v3908 = vpop.f32.mrb[0].mxu0
  %v3909 = vadd.f32 0.0, %v3908
  %v3910 = vpop.f32.mrb[0].mxu0
  %v3911 = vpop.f32.mrb[0].mxu0
  %v3912 = vadd.f32 0.0, %v3911
  %v3913 = vpop.f32.mrb[0].mxu0
  %3914 = vmatprep.mubr.bf16.mxu0 0
  %3915 = vmatmul.mubr.bf16.gmra.mrb[0].mxu0 %v3532
  %v3916 = vpop.f32.mrb[0].mxu0
  %v3917 = vadd.f32 0.0, %v3916
  %v3918 = vpop.f32.mrb[0].mxu0
  %v3919 = vpop.f32.mrb[0].mxu0
  %v3920 = vadd.f32 0.0, %v3919
  %v3921 = vpop.f32.mrb[0].mxu0
  %3922 = vdwg.mxu0
  %v3923 = vld [vmem:[%s3] sm:$0x1]
  %v3925 = vlaneseq
  %v3926 = vshrl.u32 %v3925, 7
  %v3927 = vsub.s32 0, %v3926
  %v3928 = vrot.slane %v3923, %v3927
  %v3930 = vmul.f32 %v3573, %v3928
  %v3931 = vmul.f32 %v3576, %v3928
  %v3932 = vmul.f32 %v3581, %v3928
  %v3933 = vmul.f32 %v3584, %v3928
  %v3934 = vmul.f32 %v3589, %v3928
  %v3935 = vmul.f32 %v3592, %v3928
  %v3936 = vmul.f32 %v3597, %v3928
  %v3937 = vmul.f32 %v3600, %v3928
  %v3938 = vmul.f32 %v3605, %v3928
  %v3939 = vmul.f32 %v3608, %v3928
  %v3940 = vmul.f32 %v3613, %v3928
  %v3941 = vmul.f32 %v3616, %v3928
  %v3942 = vmul.f32 %v3621, %v3928
  %v3943 = vmul.f32 %v3624, %v3928
  %v3944 = vmul.f32 %v3629, %v3928
  %v3945 = vmul.f32 %v3632, %v3928
  %v3946 = vmul.f32 %v3637, %v3928
  %v3947 = vmul.f32 %v3640, %v3928
  %v3948 = vmul.f32 %v3645, %v3928
  %v3949 = vmul.f32 %v3648, %v3928
  %v3950 = vmul.f32 %v3653, %v3928
  %v3951 = vmul.f32 %v3656, %v3928
  %v3952 = vmul.f32 %v3661, %v3928
  %v3953 = vmul.f32 %v3664, %v3928
  %v3954 = vmul.f32 %v3669, %v3928
  %v3955 = vmul.f32 %v3672, %v3928
  %v3956 = vmul.f32 %v3677, %v3928
  %v3957 = vmul.f32 %v3680, %v3928
  %v3958 = vmul.f32 %v3685, %v3928
  %v3959 = vmul.f32 %v3688, %v3928
  %v3960 = vmul.f32 %v3693, %v3928
  %v3961 = vmul.f32 %v3696, %v3928
  %v3962 = vmul.f32 %v3701, %v3928
  %v3963 = vmul.f32 %v3704, %v3928
  %v3964 = vmul.f32 %v3709, %v3928
  %v3965 = vmul.f32 %v3712, %v3928
  %v3966 = vmul.f32 %v3717, %v3928
  %v3967 = vmul.f32 %v3720, %v3928
  %v3968 = vmul.f32 %v3725, %v3928
  %v3969 = vmul.f32 %v3728, %v3928
  %v3970 = vmul.f32 %v3733, %v3928
  %v3971 = vmul.f32 %v3736, %v3928
  %v3972 = vmul.f32 %v3741, %v3928
  %v3973 = vmul.f32 %v3744, %v3928
  %v3974 = vmul.f32 %v3749, %v3928
  %v3975 = vmul.f32 %v3752, %v3928
  %v3976 = vmul.f32 %v3757, %v3928
  %v3977 = vmul.f32 %v3760, %v3928
  %v3978 = vmul.f32 %v3765, %v3928
  %v3979 = vmul.f32 %v3768, %v3928
  %v3980 = vmul.f32 %v3773, %v3928
  %v3981 = vmul.f32 %v3776, %v3928
  %v3982 = vmul.f32 %v3781, %v3928
  %v3983 = vmul.f32 %v3784, %v3928
  %v3984 = vmul.f32 %v3789, %v3928
  %v3985 = vmul.f32 %v3792, %v3928
  %v3986 = vmul.f32 %v3797, %v3928
  %v3987 = vmul.f32 %v3800, %v3928
  %v3988 = vmul.f32 %v3805, %v3928
  %v3989 = vmul.f32 %v3808, %v3928
  %v3990 = vmul.f32 %v3813, %v3928
  %v3991 = vmul.f32 %v3816, %v3928
  %v3992 = vmul.f32 %v3821, %v3928
  %v3993 = vmul.f32 %v3824, %v3928
  %v3994 = vmul.f32 %v3829, %v3928
  %v3995 = vmul.f32 %v3832, %v3928
  %v3996 = vmul.f32 %v3837, %v3928
  %v3997 = vmul.f32 %v3840, %v3928
  %v3998 = vmul.f32 %v3845, %v3928
  %v3999 = vmul.f32 %v3848, %v3928
  %v4000 = vmul.f32 %v3853, %v3928
  %v4001 = vmul.f32 %v3856, %v3928
  %v4002 = vmul.f32 %v3861, %v3928
  %v4003 = vmul.f32 %v3864, %v3928
  %v4004 = vmul.f32 %v3869, %v3928
  %v4005 = vmul.f32 %v3872, %v3928
  %v4006 = vmul.f32 %v3877, %v3928
  %v4007 = vmul.f32 %v3880, %v3928
  %v4008 = vmul.f32 %v3885, %v3928
  %v4009 = vmul.f32 %v3888, %v3928
  %v4010 = vmul.f32 %v3893, %v3928
  %v4011 = vmul.f32 %v3896, %v3928
  %v4012 = vmul.f32 %v3901, %v3928
  %v4013 = vmul.f32 %v3904, %v3928
  %v4014 = vmul.f32 %v3909, %v3928
  %v4015 = vmul.f32 %v3912, %v3928
  %v4016 = vmul.f32 %v3917, %v3928
  %v4017 = vmul.f32 %v3920, %v3928
  %v4018 = vld [vmem:[%s4] sm:$0x1]
  %v4020 = vlaneseq
  %v4021 = vshrl.u32 %v4020, 7
  %v4022 = vsub.s32 0, %v4021
  %v4023 = vrot.slane %v4018, %v4022
  %v4025 = vadd.f32 %v3930, %v4023
  %v4026 = vadd.f32 %v3931, %v4023
  %v4027 = vadd.f32 %v3932, %v4023
  %v4028 = vadd.f32 %v3933, %v4023
  %v4029 = vadd.f32 %v3934, %v4023
  %v4030 = vadd.f32 %v3935, %v4023
  %v4031 = vadd.f32 %v3936, %v4023
  %v4032 = vadd.f32 %v3937, %v4023
  %v4033 = vadd.f32 %v3938, %v4023
  %v4034 = vadd.f32 %v3939, %v4023
  %v4035 = vadd.f32 %v3940, %v4023
  %v4036 = vadd.f32 %v3941, %v4023
  %v4037 = vadd.f32 %v3942, %v4023
  %v4038 = vadd.f32 %v3943, %v4023
  %v4039 = vadd.f32 %v3944, %v4023
  %v4040 = vadd.f32 %v3945, %v4023
  %v4041 = vadd.f32 %v3946, %v4023
  %v4042 = vadd.f32 %v3947, %v4023
  %v4043 = vadd.f32 %v3948, %v4023
  %v4044 = vadd.f32 %v3949, %v4023
  %v4045 = vadd.f32 %v3950, %v4023
  %v4046 = vadd.f32 %v3951, %v4023
  %v4047 = vadd.f32 %v3952, %v4023
  %v4048 = vadd.f32 %v3953, %v4023
  %v4049 = vadd.f32 %v3954, %v4023
  %v4050 = vadd.f32 %v3955, %v4023
  %v4051 = vadd.f32 %v3956, %v4023
  %v4052 = vadd.f32 %v3957, %v4023
  %v4053 = vadd.f32 %v3958, %v4023
  %v4054 = vadd.f32 %v3959, %v4023
  %v4055 = vadd.f32 %v3960, %v4023
  %v4056 = vadd.f32 %v3961, %v4023
  %v4057 = vadd.f32 %v3962, %v4023
  %v4058 = vadd.f32 %v3963, %v4023
  %v4059 = vadd.f32 %v3964, %v4023
  %v4060 = vadd.f32 %v3965, %v4023
  %v4061 = vadd.f32 %v3966, %v4023
  %v4062 = vadd.f32 %v3967, %v4023
  %v4063 = vadd.f32 %v3968, %v4023
  %v4064 = vadd.f32 %v3969, %v4023
  %v4065 = vadd.f32 %v3970, %v4023
  %v4066 = vadd.f32 %v3971, %v4023
  %v4067 = vadd.f32 %v3972, %v4023
  %v4068 = vadd.f32 %v3973, %v4023
  %v4069 = vadd.f32 %v3974, %v4023
  %v4070 = vadd.f32 %v3975, %v4023
  %v4071 = vadd.f32 %v3976, %v4023
  %v4072 = vadd.f32 %v3977, %v4023
  %v4073 = vadd.f32 %v3978, %v4023
  %v4074 = vadd.f32 %v3979, %v4023
  %v4075 = vadd.f32 %v3980, %v4023
  %v4076 = vadd.f32 %v3981, %v4023
  %v4077 = vadd.f32 %v3982, %v4023
  %v4078 = vadd.f32 %v3983, %v4023
  %v4079 = vadd.f32 %v3984, %v4023
  %v4080 = vadd.f32 %v3985, %v4023
  %v4081 = vadd.f32 %v3986, %v4023
  %v4082 = vadd.f32 %v3987, %v4023
  %v4083 = vadd.f32 %v3988, %v4023
  %v4084 = vadd.f32 %v3989, %v4023
  %v4085 = vadd.f32 %v3990, %v4023
  %v4086 = vadd.f32 %v3991, %v4023
  %v4087 = vadd.f32 %v3992, %v4023
  %v4088 = vadd.f32 %v3993, %v4023
  %v4089 = vadd.f32 %v3994, %v4023
  %v4090 = vadd.f32 %v3995, %v4023
  %v4091 = vadd.f32 %v3996, %v4023
  %v4092 = vadd.f32 %v3997, %v4023
  %v4093 = vadd.f32 %v3998, %v4023
  %v4094 = vadd.f32 %v3999, %v4023
  %v4095 = vadd.f32 %v4000, %v4023
  %v4096 = vadd.f32 %v4001, %v4023
  %v4097 = vadd.f32 %v4002, %v4023
  %v4098 = vadd.f32 %v4003, %v4023
  %v4099 = vadd.f32 %v4004, %v4023
  %v4100 = vadd.f32 %v4005, %v4023
  %v4101 = vadd.f32 %v4006, %v4023
  %v4102 = vadd.f32 %v4007, %v4023
  %v4103 = vadd.f32 %v4008, %v4023
  %v4104 = vadd.f32 %v4009, %v4023
  %v4105 = vadd.f32 %v4010, %v4023
  %v4106 = vadd.f32 %v4011, %v4023
  %v4107 = vadd.f32 %v4012, %v4023
  %v4108 = vadd.f32 %v4013, %v4023
  %v4109 = vadd.f32 %v4014, %v4023
  %v4110 = vadd.f32 %v4015, %v4023
  %v4111 = vadd.f32 %v4016, %v4023
  %v4112 = vadd.f32 %v4017, %v4023
  %4113 = vst [vmem:[%s5] sm:$0xff] %v4025
  %4114 = vst [vmem:[%s5 + $0x8] sm:$0xff] %v4026
  %4115 = vst [vmem:[%s5 + $0x10] sm:$0xff] %v4027
  %4116 = vst [vmem:[%s5 + $0x18] sm:$0xff] %v4028
  %4117 = vst [vmem:[%s5 + $0x20] sm:$0xff] %v4029
  %4118 = vst [vmem:[%s5 + $0x28] sm:$0xff] %v4030
  %4119 = vst [vmem:[%s5 + $0x30] sm:$0xff] %v4031
  %4120 = vst [vmem:[%s5 + $0x38] sm:$0xff] %v4032
  %4121 = vst [vmem:[%s5 + $0x40] sm:$0xff] %v4033
  %4122 = vst [vmem:[%s5 + $0x48] sm:$0xff] %v4034
  %4123 = vst [vmem:[%s5 + $0x50] sm:$0xff] %v4035
  %4124 = vst [vmem:[%s5 + $0x58] sm:$0xff] %v4036
  %4125 = vst [vmem:[%s5 + $0x60] sm:$0xff] %v4037
  %4126 = vst [vmem:[%s5 + $0x68] sm:$0xff] %v4038
  %4127 = vst [vmem:[%s5 + $0x70] sm:$0xff] %v4039
  %4128 = vst [vmem:[%s5 + $0x78] sm:$0xff] %v4040
  %4129 = vst [vmem:[%s5 + $0x80] sm:$0xff] %v4041
  %4130 = vst [vmem:[%s5 + $0x88] sm:$0xff] %v4042
  %4131 = vst [vmem:[%s5 + $0x90] sm:$0xff] %v4043
  %4132 = vst [vmem:[%s5 + $0x98] sm:$0xff] %v4044
  %4133 = vst [vmem:[%s5 + $0xa0] sm:$0xff] %v4045
  %4134 = vst [vmem:[%s5 + $0xa8] sm:$0xff] %v4046
  %4135 = vst [vmem:[%s5 + $0xb0] sm:$0xff] %v4047
  %4136 = vst [vmem:[%s5 + $0xb8] sm:$0xff] %v4048
  %4137 = vst [vmem:[%s5 + $0xc0] sm:$0xff] %v4049
  %4138 = vst [vmem:[%s5 + $0xc8] sm:$0xff] %v4050
  %4139 = vst [vmem:[%s5 + $0xd0] sm:$0xff] %v4051
  %4140 = vst [vmem:[%s5 + $0xd8] sm:$0xff] %v4052
  %4141 = vst [vmem:[%s5 + $0xe0] sm:$0xff] %v4053
  %4142 = vst [vmem:[%s5 + $0xe8] sm:$0xff] %v4054
  %4143 = vst [vmem:[%s5 + $0xf0] sm:$0xff] %v4055
  %4144 = vst [vmem:[%s5 + $0xf8] sm:$0xff] %v4056
  %4145 = vst [vmem:[%s5 + $0x100] sm:$0xff] %v4057
  %4146 = vst [vmem:[%s5 + $0x108] sm:$0xff] %v4058
  %4147 = vst [vmem:[%s5 + $0x110] sm:$0xff] %v4059
  %4148 = vst [vmem:[%s5 + $0x118] sm:$0xff] %v4060
  %4149 = vst [vmem:[%s5 + $0x120] sm:$0xff] %v4061
  %4150 = vst [vmem:[%s5 + $0x128] sm:$0xff] %v4062
  %4151 = vst [vmem:[%s5 + $0x130] sm:$0xff] %v4063
  %4152 = vst [vmem:[%s5 + $0x138] sm:$0xff] %v4064
  %4153 = vst [vmem:[%s5 + $0x140] sm:$0xff] %v4065
  %4154 = vst [vmem:[%s5 + $0x148] sm:$0xff] %v4066
  %4155 = vst [vmem:[%s5 + $0x150] sm:$0xff] %v4067
  %4156 = vst [vmem:[%s5 + $0x158] sm:$0xff] %v4068
  %4157 = vst [vmem:[%s5 + $0x160] sm:$0xff] %v4069
  %4158 = vst [vmem:[%s5 + $0x168] sm:$0xff] %v4070
  %4159 = vst [vmem:[%s5 + $0x170] sm:$0xff] %v4071
  %4160 = vst [vmem:[%s5 + $0x178] sm:$0xff] %v4072
  %4161 = vst [vmem:[%s5 + $0x180] sm:$0xff] %v4073
  %4162 = vst [vmem:[%s5 + $0x188] sm:$0xff] %v4074
  %4163 = vst [vmem:[%s5 + $0x190] sm:$0xff] %v4075
  %4164 = vst [vmem:[%s5 + $0x198] sm:$0xff] %v4076
  %4165 = vst [vmem:[%s5 + $0x1a0] sm:$0xff] %v4077
  %4166 = vst [vmem:[%s5 + $0x1a8] sm:$0xff] %v4078
  %4167 = vst [vmem:[%s5 + $0x1b0] sm:$0xff] %v4079
  %4168 = vst [vmem:[%s5 + $0x1b8] sm:$0xff] %v4080
  %4169 = vst [vmem:[%s5 + $0x1c0] sm:$0xff] %v4081
  %4170 = vst [vmem:[%s5 + $0x1c8] sm:$0xff] %v4082
  %4171 = vst [vmem:[%s5 + $0x1d0] sm:$0xff] %v4083
  %4172 = vst [vmem:[%s5 + $0x1d8] sm:$0xff] %v4084
  %4173 = vst [vmem:[%s5 + $0x1e0] sm:$0xff] %v4085
  %4174 = vst [vmem:[%s5 + $0x1e8] sm:$0xff] %v4086
  %4175 = vst [vmem:[%s5 + $0x1f0] sm:$0xff] %v4087
  %4176 = vst [vmem:[%s5 + $0x1f8] sm:$0xff] %v4088
  %4177 = vst [vmem:[%s5 + $0x200] sm:$0xff] %v4089
  %4178 = vst [vmem:[%s5 + $0x208] sm:$0xff] %v4090
  %4179 = vst [vmem:[%s5 + $0x210] sm:$0xff] %v4091
  %4180 = vst [vmem:[%s5 + $0x218] sm:$0xff] %v4092
  %4181 = vst [vmem:[%s5 + $0x220] sm:$0xff] %v4093
  %4182 = vst [vmem:[%s5 + $0x228] sm:$0xff] %v4094
  %4183 = vst [vmem:[%s5 + $0x230] sm:$0xff] %v4095
  %4184 = vst [vmem:[%s5 + $0x238] sm:$0xff] %v4096
  %4185 = vst [vmem:[%s5 + $0x240] sm:$0xff] %v4097
  %4186 = vst [vmem:[%s5 + $0x248] sm:$0xff] %v4098
  %4187 = vst [vmem:[%s5 + $0x250] sm:$0xff] %v4099
  %4188 = vst [vmem:[%s5 + $0x258] sm:$0xff] %v4100
  %4189 = vst [vmem:[%s5 + $0x260] sm:$0xff] %v4101
  %4190 = vst [vmem:[%s5 + $0x268] sm:$0xff] %v4102
  %4191 = vst [vmem:[%s5 + $0x270] sm:$0xff] %v4103
  %4192 = vst [vmem:[%s5 + $0x278] sm:$0xff] %v4104
  %4193 = vst [vmem:[%s5 + $0x280] sm:$0xff] %v4105
  %4194 = vst [vmem:[%s5 + $0x288] sm:$0xff] %v4106
  %4195 = vst [vmem:[%s5 + $0x290] sm:$0xff] %v4107
  %4196 = vst [vmem:[%s5 + $0x298] sm:$0xff] %v4108
  %4197 = vst [vmem:[%s5 + $0x2a0] sm:$0xff] %v4109
  %4198 = vst [vmem:[%s5 + $0x2a8] sm:$0xff] %v4110
  %4199 = vst [vmem:[%s5 + $0x2b0] sm:$0xff] %v4111
  %4200 = vst [vmem:[%s5 + $0x2b8] sm:$0xff] %v4112
  // Predicated region
  $region22: #{conv2d_batchnorm_3x3.3} parent=0 // pred_check
    _
  $region23: #{conv2d_batchnorm_3x3.3} parent=0 // pred_check_branch
    %4202 = sbr.rel (0) target = $region25
  $region24: #{conv2d_batchnorm_3x3.3} parent=0 // pred_region
    _
  $region25: #{conv2d_batchnorm_3x3.3} parent=0 // pred_fallthru
    _
  // Predicated region
  $region26: #{conv2d_batchnorm_3x3.3} parent=0 // pred_check
    _
  $region27: #{conv2d_batchnorm_3x3.3} parent=0 // pred_check_branch
    %4204 = sbr.rel (0) target = $region29
  $region28: #{conv2d_batchnorm_3x3.3} parent=0 // pred_region
    _
  $region29: #{conv2d_batchnorm_3x3.3} parent=0 // pred_fallthru
    _

// kernel: conv2d_batchnorm_3x3.2
$region0: #{conv2d_batchnorm_3x3.2}
  #allocation0 [shape = 'u32[]', space=smem, size = 0x4, offset = 0x4, fixed_abs, tag = 'smem constant byte address 0x4 - core index']
  #allocation1 [shape = 'u32[144,128]{1,0:T(1,128)}', space=vmem, size = 0x12000, scoped, tag = 'internal scratch']
  #allocation2 [shape = 'f32[768,4]{1,0:T(8,128)}', space=vmem, size = 0x60000, scoped, tag = 'scratch operand']
  #allocation3 [shape = 'bf16[704,36]{1,0:T(16,128)(2,1)}', space=vmem, size = 0x2c000, scoped, tag = 'scratch operand']
  %s0 = inlined_call_operand.vmem [shape: bf16[1408,5], index: 0, kind: input, shape index: {}, may-alias: {0,1}]
  %s1 = inlined_call_operand.vmem [shape: bf16[1408,5], index: 1, kind: input, shape index: {}, may-alias: {0,1}]
  %s2 = inlined_call_operand.vmem [shape: bf16[36,128], index: 2, kind: input, shape index: {}]
  %s3 = inlined_call_operand.vmem [shape: f32[8,128], index: 3, kind: output, shape index: {}]
  %s4 = sld [smem:[#allocation0]]
  $region26: #{conv2d_batchnorm_3x3.2} parent=0
    _
  %s6 = ssub.s32 1, %s4
  %s7 = scalar_select 0, %s6, %s4
  // Predicated region
  $region2: #{conv2d_batchnorm_3x3.2} parent=0 // pred_check
    _
  $region3: #{conv2d_batchnorm_3x3.2} parent=0 // pred_check_branch
    %9 = sbr.rel (0) target = $region5
  $region4: #{conv2d_batchnorm_3x3.2} parent=0 // pred_region
    _
  $region5: #{conv2d_batchnorm_3x3.2} parent=0 // pred_fallthru
    _
  // Predicated region
  $region6: #{conv2d_batchnorm_3x3.2} parent=0 // pred_check
    _
  $region7: #{conv2d_batchnorm_3x3.2} parent=0 // pred_check_branch
    %11 = sbr.rel (0) target = $region9
  $region8: #{conv2d_batchnorm_3x3.2} parent=0 // pred_region
    %s12 = sadd.s32 0, 1
    %s13 = smul.u32 %s12, 11
    %s14 = smul.u32 8, %s13
    %p15 = scmp.lt.s32.totalorder %s14, 175
    %s16 = scalar_select %p15, %s14, 175
    %s17 = smul.addr %s16, 4
    %s18 = scalar_lea.vmem %s1, %s17
    %s19 = sadd.s32 0, 1
    %s20 = smul.u32 %s19, 11
    %s21 = smul.u32 8, %s20
  $region9: #{conv2d_batchnorm_3x3.2} parent=0 // pred_fallthru
    _
  // Predicated region
  $region10: #{conv2d_batchnorm_3x3.2} parent=0 // pred_check
    _
  $region11: #{conv2d_batchnorm_3x3.2} parent=0 // pred_check_branch
    %23 = sbr.rel (0) target = $region13
  $region12: #{conv2d_batchnorm_3x3.2} parent=0 // pred_region
    _
  $region13: #{conv2d_batchnorm_3x3.2} parent=0 // pred_fallthru
    _
  %s24 = sadd.s32 0, 1
  %s25 = smul.u32 %s24, 11
  %s26 = smul.u32 8, %s25
  %p27 = scmp.lt.s32.totalorder %s26, 175
  %s28 = scalar_select %p27, %s26, 175
  %s29 = smul.addr %s28, 4
  %s30 = scalar_lea.vmem %s1, %s29
  %s31 = sadd.s32 0, 1
  %s32 = smul.u32 %s31, 11
  %s33 = smul.u32 8, %s32
  %p34 = scmp.lt.s32.totalorder %s33, 175
  %s35 = scalar_select %p34, %s33, 175
  %s36 = smul.addr %s35, 4
  %s37 = scalar_lea.vmem %s1, %s36
  %s38 = sadd.s32 0, 1
  %s39 = smul.u32 %s38, 11
  %s40 = smul.u32 8, %s39
  %v42 = vld [vmem:[%s0] sm:$0xf]
  %v43 = vld [vmem:[%s0 + $0x4] sm:$0xf]
  %v44 = vld [vmem:[%s0 + $0x8] sm:$0xf]
  %v45 = vld [vmem:[%s0 + $0xc] sm:$0xf]
  %v46 = vld [vmem:[%s0 + $0x10] sm:$0xf]
  %v47 = vld [vmem:[%s0 + $0x14] sm:$0xf]
  %v48 = vld [vmem:[%s0 + $0x18] sm:$0xf]
  %v49 = vld [vmem:[%s0 + $0x1c] sm:$0xf]
  %v50 = vld [vmem:[%s0 + $0x20] sm:$0xf]
  %v51 = vld [vmem:[%s0 + $0x24] sm:$0xf]
  %v52 = vld [vmem:[%s0 + $0x28] sm:$0xf]
  %v53 = vld [vmem:[%s0 + $0x2c] sm:$0xf]
  %v54 = vld [vmem:[%s0 + $0x30] sm:$0xf]
  %v55 = vld [vmem:[%s0 + $0x34] sm:$0xf]
  %v56 = vld [vmem:[%s0 + $0x38] sm:$0xf]
  %v57 = vld [vmem:[%s0 + $0x3c] sm:$0xf]
  %v58 = vld [vmem:[%s0 + $0x40] sm:$0xf]
  %v59 = vld [vmem:[%s0 + $0x44] sm:$0xf]
  %v60 = vld [vmem:[%s0 + $0x48] sm:$0xf]
  %v61 = vld [vmem:[%s0 + $0x4c] sm:$0xf]
  %v62 = vld [vmem:[%s0 + $0x50] sm:$0xf]
  %v63 = vld [vmem:[%s0 + $0x54] sm:$0xf]
  %v64 = vld [vmem:[%s0 + $0x58] sm:$0xf]
  %v65 = vld [vmem:[%s0 + $0x5c] sm:$0xf]
  %v66 = vld [vmem:[%s0 + $0x60] sm:$0xf]
  %v67 = vld [vmem:[%s0 + $0x64] sm:$0xf]
  %v68 = vld [vmem:[%s0 + $0x68] sm:$0xf]
  %v69 = vld [vmem:[%s0 + $0x6c] sm:$0xf]
  %v70 = vld [vmem:[%s0 + $0x70] sm:$0xf]
  %v71 = vld [vmem:[%s0 + $0x74] sm:$0xf]
  %v72 = vld [vmem:[%s0 + $0x78] sm:$0xf]
  %v73 = vld [vmem:[%s0 + $0x7c] sm:$0xf]
  %v74 = vld [vmem:[%s0 + $0x80] sm:$0xf]
  %v75 = vld [vmem:[%s0 + $0x84] sm:$0xf]
  %v76 = vld [vmem:[%s0 + $0x88] sm:$0xf]
  %v77 = vld [vmem:[%s0 + $0x8c] sm:$0xf]
  %v78 = vld [vmem:[%s0 + $0x90] sm:$0xf]
  %v79 = vld [vmem:[%s0 + $0x94] sm:$0xf]
  %v80 = vld [vmem:[%s0 + $0x98] sm:$0xf]
  %v81 = vld [vmem:[%s0 + $0x9c] sm:$0xf]
  %v82 = vld [vmem:[%s0 + $0xa0] sm:$0xf]
  %v83 = vld [vmem:[%s0 + $0xa4] sm:$0xf]
  %v84 = vld [vmem:[%s0 + $0xa8] sm:$0xf]
  %v85 = vld [vmem:[%s0 + $0xac] sm:$0xf]
  %v86 = vld [vmem:[%s0 + $0xb0] sm:$0xf]
  %v87 = vld [vmem:[%s0 + $0xb4] sm:$0xf]
  %v88 = vld [vmem:[%s0 + $0xb8] sm:$0xf]
  %v89 = vld [vmem:[%s0 + $0xbc] sm:$0xf]
  %v90 = vld [vmem:[%s0 + $0xc0] sm:$0xf]
  %v91 = vld [vmem:[%s0 + $0xc4] sm:$0xf]
  %v92 = vld [vmem:[%s0 + $0xc8] sm:$0xf]
  %v93 = vld [vmem:[%s0 + $0xcc] sm:$0xf]
  %v94 = vld [vmem:[%s0 + $0xd0] sm:$0xf]
  %v95 = vld [vmem:[%s0 + $0xd4] sm:$0xf]
  %v96 = vld [vmem:[%s0 + $0xd8] sm:$0xf]
  %v97 = vld [vmem:[%s0 + $0xdc] sm:$0xf]
  %v98 = vld [vmem:[%s0 + $0xe0] sm:$0xf]
  %v99 = vld [vmem:[%s0 + $0xe4] sm:$0xf]
  %v100 = vld [vmem:[%s0 + $0xe8] sm:$0xf]
  %v101 = vld [vmem:[%s0 + $0xec] sm:$0xf]
  %v102 = vld [vmem:[%s0 + $0xf0] sm:$0xf]
  %v103 = vld [vmem:[%s0 + $0xf4] sm:$0xf]
  %v104 = vld [vmem:[%s0 + $0xf8] sm:$0xf]
  %v105 = vld [vmem:[%s0 + $0xfc] sm:$0xf]
  %v106 = vld [vmem:[%s0 + $0x100] sm:$0xf]
  %v107 = vld [vmem:[%s0 + $0x104] sm:$0xf]
  %v108 = vld [vmem:[%s0 + $0x108] sm:$0xf]
  %v109 = vld [vmem:[%s0 + $0x10c] sm:$0xf]
  %v110 = vld [vmem:[%s0 + $0x110] sm:$0xf]
  %v111 = vld [vmem:[%s0 + $0x114] sm:$0xf]
  %v112 = vld [vmem:[%s0 + $0x118] sm:$0xf]
  %v113 = vld [vmem:[%s0 + $0x11c] sm:$0xf]
  %v114 = vld [vmem:[%s0 + $0x120] sm:$0xf]
  %v115 = vld [vmem:[%s0 + $0x124] sm:$0xf]
  %v116 = vld [vmem:[%s0 + $0x128] sm:$0xf]
  %v117 = vld [vmem:[%s0 + $0x12c] sm:$0xf]
  %v118 = vld [vmem:[%s0 + $0x130] sm:$0xf]
  %v119 = vld [vmem:[%s0 + $0x134] sm:$0xf]
  %v120 = vld [vmem:[%s0 + $0x138] sm:$0xf]
  %v121 = vld [vmem:[%s0 + $0x13c] sm:$0xf]
  %v122 = vld [vmem:[%s0 + $0x140] sm:$0xf]
  %v123 = vld [vmem:[%s0 + $0x144] sm:$0xf]
  %v124 = vld [vmem:[%s0 + $0x148] sm:$0xf]
  %v125 = vld [vmem:[%s0 + $0x14c] sm:$0xf]
  %v126 = vld [vmem:[%s0 + $0x150] sm:$0xf]
  %v127 = vld [vmem:[%s0 + $0x154] sm:$0xf]
  %v128 = vld [vmem:[%s0 + $0x158] sm:$0xf]
  %v129 = vld [vmem:[%s0 + $0x15c] sm:$0xf]
  %v130 = vunpack.c.l.bf16 %v42
  %v131 = vunpack.c.l.bf16 %v43
  %v132 = vunpack.c.l.bf16 %v44
  %v133 = vunpack.c.l.bf16 %v45
  %v134 = vunpack.c.l.bf16 %v46
  %v135 = vunpack.c.l.bf16 %v47
  %v136 = vunpack.c.l.bf16 %v48
  %v137 = vunpack.c.l.bf16 %v49
  %v138 = vunpack.c.l.bf16 %v50
  %v139 = vunpack.c.l.bf16 %v51
  %v140 = vunpack.c.l.bf16 %v52
  %v141 = vunpack.c.l.bf16 %v53
  %v142 = vunpack.c.l.bf16 %v54
  %v143 = vunpack.c.l.bf16 %v55
  %v144 = vunpack.c.l.bf16 %v56
  %v145 = vunpack.c.l.bf16 %v57
  %v146 = vunpack.c.l.bf16 %v58
  %v147 = vunpack.c.l.bf16 %v59
  %v148 = vunpack.c.l.bf16 %v60
  %v149 = vunpack.c.l.bf16 %v61
  %v150 = vunpack.c.l.bf16 %v62
  %v151 = vunpack.c.l.bf16 %v63
  %v152 = vunpack.c.l.bf16 %v64
  %v153 = vunpack.c.l.bf16 %v65
  %v154 = vunpack.c.l.bf16 %v66
  %v155 = vunpack.c.l.bf16 %v67
  %v156 = vunpack.c.l.bf16 %v68
  %v157 = vunpack.c.l.bf16 %v69
  %v158 = vunpack.c.l.bf16 %v70
  %v159 = vunpack.c.l.bf16 %v71
  %v160 = vunpack.c.l.bf16 %v72
  %v161 = vunpack.c.l.bf16 %v73
  %v162 = vunpack.c.l.bf16 %v74
  %v163 = vunpack.c.l.bf16 %v75
  %v164 = vunpack.c.l.bf16 %v76
  %v165 = vunpack.c.l.bf16 %v77
  %v166 = vunpack.c.l.bf16 %v78
  %v167 = vunpack.c.l.bf16 %v79
  %v168 = vunpack.c.l.bf16 %v80
  %v169 = vunpack.c.l.bf16 %v81
  %v170 = vunpack.c.l.bf16 %v82
  %v171 = vunpack.c.l.bf16 %v83
  %v172 = vunpack.c.l.bf16 %v84
  %v173 = vunpack.c.l.bf16 %v85
  %v174 = vunpack.c.l.bf16 %v86
  %v175 = vunpack.c.l.bf16 %v87
  %v176 = vunpack.c.l.bf16 %v88
  %v177 = vunpack.c.l.bf16 %v89
  %v178 = vunpack.c.l.bf16 %v90
  %v179 = vunpack.c.l.bf16 %v91
  %v180 = vunpack.c.l.bf16 %v92
  %v181 = vunpack.c.l.bf16 %v93
  %v182 = vunpack.c.l.bf16 %v94
  %v183 = vunpack.c.l.bf16 %v95
  %v184 = vunpack.c.l.bf16 %v96
  %v185 = vunpack.c.l.bf16 %v97
  %v186 = vunpack.c.l.bf16 %v98
  %v187 = vunpack.c.l.bf16 %v99
  %v188 = vunpack.c.l.bf16 %v100
  %v189 = vunpack.c.l.bf16 %v101
  %v190 = vunpack.c.l.bf16 %v102
  %v191 = vunpack.c.l.bf16 %v103
  %v192 = vunpack.c.l.bf16 %v104
  %v193 = vunpack.c.l.bf16 %v105
  %v194 = vunpack.c.l.bf16 %v106
  %v195 = vunpack.c.l.bf16 %v107
  %v196 = vunpack.c.l.bf16 %v108
  %v197 = vunpack.c.l.bf16 %v109
  %v198 = vunpack.c.l.bf16 %v110
  %v199 = vunpack.c.l.bf16 %v111
  %v200 = vunpack.c.l.bf16 %v112
  %v201 = vunpack.c.l.bf16 %v113
  %v202 = vunpack.c.l.bf16 %v114
  %v203 = vunpack.c.l.bf16 %v115
  %v204 = vunpack.c.l.bf16 %v116
  %v205 = vunpack.c.l.bf16 %v117
  %v206 = vunpack.c.l.bf16 %v118
  %v207 = vunpack.c.l.bf16 %v119
  %v208 = vunpack.c.l.bf16 %v120
  %v209 = vunpack.c.l.bf16 %v121
  %v210 = vunpack.c.l.bf16 %v122
  %v211 = vunpack.c.l.bf16 %v123
  %v212 = vunpack.c.l.bf16 %v124
  %v213 = vunpack.c.l.bf16 %v125
  %v214 = vunpack.c.l.bf16 %v126
  %v215 = vunpack.c.l.bf16 %v127
  %v216 = vunpack.c.l.bf16 %v128
  %v217 = vunpack.c.l.bf16 %v129
  %vm218 = vcmask 31744
  %219 = vst.msk [vmem:[#allocation2] sm:$0xff] %vm218, %v130
  %220 = vst.msk [vmem:[#allocation2 + $0x8] sm:$0xff] %vm218, %v131
  %221 = vst.msk [vmem:[#allocation2 + $0x10] sm:$0xff] %vm218, %v132
  %222 = vst.msk [vmem:[#allocation2 + $0x18] sm:$0xff] %vm218, %v133
  %223 = vst.msk [vmem:[#allocation2 + $0x20] sm:$0xff] %vm218, %v134
  %224 = vst.msk [vmem:[#allocation2 + $0x28] sm:$0xff] %vm218, %v135
  %225 = vst.msk [vmem:[#allocation2 + $0x30] sm:$0xff] %vm218, %v136
  %226 = vst.msk [vmem:[#allocation2 + $0x38] sm:$0xff] %vm218, %v137
  %227 = vst.msk [vmem:[#allocation2 + $0x40] sm:$0xff] %vm218, %v138
  %228 = vst.msk [vmem:[#allocation2 + $0x48] sm:$0xff] %vm218, %v139
  %229 = vst.msk [vmem:[#allocation2 + $0x50] sm:$0xff] %vm218, %v140
  %230 = vst.msk [vmem:[#allocation2 + $0x58] sm:$0xff] %vm218, %v141
  %231 = vst.msk [vmem:[#allocation2 + $0x60] sm:$0xff] %vm218, %v142
  %232 = vst.msk [vmem:[#allocation2 + $0x68] sm:$0xff] %vm218, %v143
  %233 = vst.msk [vmem:[#allocation2 + $0x70] sm:$0xff] %vm218, %v144
  %234 = vst.msk [vmem:[#allocation2 + $0x78] sm:$0xff] %vm218, %v145
  %235 = vst.msk [vmem:[#allocation2 + $0x80] sm:$0xff] %vm218, %v146
  %236 = vst.msk [vmem:[#allocation2 + $0x88] sm:$0xff] %vm218, %v147
  %237 = vst.msk [vmem:[#allocation2 + $0x90] sm:$0xff] %vm218, %v148
  %238 = vst.msk [vmem:[#allocation2 + $0x98] sm:$0xff] %vm218, %v149
  %239 = vst.msk [vmem:[#allocation2 + $0xa0] sm:$0xff] %vm218, %v150
  %240 = vst.msk [vmem:[#allocation2 + $0xa8] sm:$0xff] %vm218, %v151
  %241 = vst.msk [vmem:[#allocation2 + $0xb0] sm:$0xff] %vm218, %v152
  %242 = vst.msk [vmem:[#allocation2 + $0xb8] sm:$0xff] %vm218, %v153
  %243 = vst.msk [vmem:[#allocation2 + $0xc0] sm:$0xff] %vm218, %v154
  %244 = vst.msk [vmem:[#allocation2 + $0xc8] sm:$0xff] %vm218, %v155
  %245 = vst.msk [vmem:[#allocation2 + $0xd0] sm:$0xff] %vm218, %v156
  %246 = vst.msk [vmem:[#allocation2 + $0xd8] sm:$0xff] %vm218, %v157
  %247 = vst.msk [vmem:[#allocation2 + $0xe0] sm:$0xff] %vm218, %v158
  %248 = vst.msk [vmem:[#allocation2 + $0xe8] sm:$0xff] %vm218, %v159
  %249 = vst.msk [vmem:[#allocation2 + $0xf0] sm:$0xff] %vm218, %v160
  %250 = vst.msk [vmem:[#allocation2 + $0xf8] sm:$0xff] %vm218, %v161
  %251 = vst.msk [vmem:[#allocation2 + $0x100] sm:$0xff] %vm218, %v162
  %252 = vst.msk [vmem:[#allocation2 + $0x108] sm:$0xff] %vm218, %v163
  %253 = vst.msk [vmem:[#allocation2 + $0x110] sm:$0xff] %vm218, %v164
  %254 = vst.msk [vmem:[#allocation2 + $0x118] sm:$0xff] %vm218, %v165
  %255 = vst.msk [vmem:[#allocation2 + $0x120] sm:$0xff] %vm218, %v166
  %256 = vst.msk [vmem:[#allocation2 + $0x128] sm:$0xff] %vm218, %v167
  %257 = vst.msk [vmem:[#allocation2 + $0x130] sm:$0xff] %vm218, %v168
  %258 = vst.msk [vmem:[#allocation2 + $0x138] sm:$0xff] %vm218, %v169
  %259 = vst.msk [vmem:[#allocation2 + $0x140] sm:$0xff] %vm218, %v170
  %260 = vst.msk [vmem:[#allocation2 + $0x148] sm:$0xff] %vm218, %v171
  %261 = vst.msk [vmem:[#allocation2 + $0x150] sm:$0xff] %vm218, %v172
  %262 = vst.msk [vmem:[#allocation2 + $0x158] sm:$0xff] %vm218, %v173
  %263 = vst.msk [vmem:[#allocation2 + $0x160] sm:$0xff] %vm218, %v174
  %264 = vst.msk [vmem:[#allocation2 + $0x168] sm:$0xff] %vm218, %v175
  %265 = vst.msk [vmem:[#allocation2 + $0x170] sm:$0xff] %vm218, %v176
  %266 = vst.msk [vmem:[#allocation2 + $0x178] sm:$0xff] %vm218, %v177
  %267 = vst.msk [vmem:[#allocation2 + $0x180] sm:$0xff] %vm218, %v178
  %268 = vst.msk [vmem:[#allocation2 + $0x188] sm:$0xff] %vm218, %v179
  %269 = vst.msk [vmem:[#allocation2 + $0x190] sm:$0xff] %vm218, %v180
  %270 = vst.msk [vmem:[#allocation2 + $0x198] sm:$0xff] %vm218, %v181
  %271 = vst.msk [vmem:[#allocation2 + $0x1a0] sm:$0xff] %vm218, %v182
  %272 = vst.msk [vmem:[#allocation2 + $0x1a8] sm:$0xff] %vm218, %v183
  %273 = vst.msk [vmem:[#allocation2 + $0x1b0] sm:$0xff] %vm218, %v184
  %274 = vst.msk [vmem:[#allocation2 + $0x1b8] sm:$0xff] %vm218, %v185
  %275 = vst.msk [vmem:[#allocation2 + $0x1c0] sm:$0xff] %vm218, %v186
  %276 = vst.msk [vmem:[#allocation2 + $0x1c8] sm:$0xff] %vm218, %v187
  %277 = vst.msk [vmem:[#allocation2 + $0x1d0] sm:$0xff] %vm218, %v188
  %278 = vst.msk [vmem:[#allocation2 + $0x1d8] sm:$0xff] %vm218, %v189
  %279 = vst.msk [vmem:[#allocation2 + $0x1e0] sm:$0xff] %vm218, %v190
  %280 = vst.msk [vmem:[#allocation2 + $0x1e8] sm:$0xff] %vm218, %v191
  %281 = vst.msk [vmem:[#allocation2 + $0x1f0] sm:$0xff] %vm218, %v192
  %282 = vst.msk [vmem:[#allocation2 + $0x1f8] sm:$0xff] %vm218, %v193
  %283 = vst.msk [vmem:[#allocation2 + $0x200] sm:$0xff] %vm218, %v194
  %284 = vst.msk [vmem:[#allocation2 + $0x208] sm:$0xff] %vm218, %v195
  %285 = vst.msk [vmem:[#allocation2 + $0x210] sm:$0xff] %vm218, %v196
  %286 = vst.msk [vmem:[#allocation2 + $0x218] sm:$0xff] %vm218, %v197
  %287 = vst.msk [vmem:[#allocation2 + $0x220] sm:$0xff] %vm218, %v198
  %288 = vst.msk [vmem:[#allocation2 + $0x228] sm:$0xff] %vm218, %v199
  %289 = vst.msk [vmem:[#allocation2 + $0x230] sm:$0xff] %vm218, %v200
  %290 = vst.msk [vmem:[#allocation2 + $0x238] sm:$0xff] %vm218, %v201
  %291 = vst.msk [vmem:[#allocation2 + $0x240] sm:$0xff] %vm218, %v202
  %292 = vst.msk [vmem:[#allocation2 + $0x248] sm:$0xff] %vm218, %v203
  %293 = vst.msk [vmem:[#allocation2 + $0x250] sm:$0xff] %vm218, %v204
  %294 = vst.msk [vmem:[#allocation2 + $0x258] sm:$0xff] %vm218, %v205
  %295 = vst.msk [vmem:[#allocation2 + $0x260] sm:$0xff] %vm218, %v206
  %296 = vst.msk [vmem:[#allocation2 + $0x268] sm:$0xff] %vm218, %v207
  %297 = vst.msk [vmem:[#allocation2 + $0x270] sm:$0xff] %vm218, %v208
  %298 = vst.msk [vmem:[#allocation2 + $0x278] sm:$0xff] %vm218, %v209
  %299 = vst.msk [vmem:[#allocation2 + $0x280] sm:$0xff] %vm218, %v210
  %300 = vst.msk [vmem:[#allocation2 + $0x288] sm:$0xff] %vm218, %v211
  %301 = vst.msk [vmem:[#allocation2 + $0x290] sm:$0xff] %vm218, %v212
  %302 = vst.msk [vmem:[#allocation2 + $0x298] sm:$0xff] %vm218, %v213
  %303 = vst.msk [vmem:[#allocation2 + $0x2a0] sm:$0xff] %vm218, %v214
  %304 = vst.msk [vmem:[#allocation2 + $0x2a8] sm:$0xff] %vm218, %v215
  %305 = vst.msk [vmem:[#allocation2 + $0x2b0] sm:$0xff] %vm218, %v216
  %306 = vst.msk [vmem:[#allocation2 + $0x2b8] sm:$0xff] %vm218, %v217
  %v307 = vld [vmem:[%s37] sm:$0xf]
  %v308 = vld [vmem:[%s37 + $0x4] sm:$0xf]
  %v309 = vld [vmem:[%s37 + $0x8] sm:$0xf]
  %v310 = vld [vmem:[%s37 + $0xc] sm:$0xf]
  %v311 = vld [vmem:[%s37 + $0x10] sm:$0xf]
  %v312 = vld [vmem:[%s37 + $0x14] sm:$0xf]
  %v313 = vld [vmem:[%s37 + $0x18] sm:$0xf]
  %v314 = vld [vmem:[%s37 + $0x1c] sm:$0xf]
  %v315 = vunpack.c.l.bf16 %v307
  %v316 = vunpack.c.l.bf16 %v308
  %v317 = vunpack.c.l.bf16 %v309
  %v318 = vunpack.c.l.bf16 %v310
  %v319 = vunpack.c.l.bf16 %v311
  %v320 = vunpack.c.l.bf16 %v312
  %v321 = vunpack.c.l.bf16 %v313
  %v322 = vunpack.c.l.bf16 %v314
  %323 = vst.msk [vmem:[#allocation2 + $0x2c0] sm:$0xff] %vm218, %v315
  %324 = vst.msk [vmem:[#allocation2 + $0x2c8] sm:$0xff] %vm218, %v316
  %325 = vst.msk [vmem:[#allocation2 + $0x2d0] sm:$0xff] %vm218, %v317
  %326 = vst.msk [vmem:[#allocation2 + $0x2d8] sm:$0xff] %vm218, %v318
  %327 = vst.msk [vmem:[#allocation2 + $0x2e0] sm:$0xff] %vm218, %v319
  %328 = vst.msk [vmem:[#allocation2 + $0x2e8] sm:$0xff] %vm218, %v320
  %329 = vst.msk [vmem:[#allocation2 + $0x2f0] sm:$0xff] %vm218, %v321
  %330 = vst.msk [vmem:[#allocation2 + $0x2f8] sm:$0xff] %vm218, %v322
  %v331 = vld [vmem:[#allocation2] sm:$0xff]
  %v332 = vld [vmem:[#allocation2 + $0x8] sm:$0xff]
  %v333 = vld [vmem:[#allocation2 + $0x10] sm:$0xff]
  %v334 = vld [vmem:[#allocation2 + $0x18] sm:$0xff]
  %v335 = vld [vmem:[#allocation2 + $0x20] sm:$0xff]
  %v336 = vld [vmem:[#allocation2 + $0x28] sm:$0xff]
  %v337 = vld [vmem:[#allocation2 + $0x30] sm:$0xff]
  %v338 = vld [vmem:[#allocation2 + $0x38] sm:$0xff]
  %v339 = vld [vmem:[#allocation2 + $0x40] sm:$0xff]
  %v340 = vld [vmem:[#allocation2 + $0x48] sm:$0xff]
  %v341 = vld [vmem:[#allocation2 + $0x50] sm:$0xff]
  %v342 = vld [vmem:[#allocation2 + $0x58] sm:$0xff]
  %v343 = vld [vmem:[#allocation2 + $0x60] sm:$0xff]
  %v344 = vld [vmem:[#allocation2 + $0x68] sm:$0xff]
  %v345 = vld [vmem:[#allocation2 + $0x70] sm:$0xff]
  %v346 = vld [vmem:[#allocation2 + $0x78] sm:$0xff]
  %v347 = vld [vmem:[#allocation2 + $0x80] sm:$0xff]
  %v348 = vld [vmem:[#allocation2 + $0x88] sm:$0xff]
  %v349 = vld [vmem:[#allocation2 + $0x90] sm:$0xff]
  %v350 = vld [vmem:[#allocation2 + $0x98] sm:$0xff]
  %v351 = vld [vmem:[#allocation2 + $0xa0] sm:$0xff]
  %v352 = vld [vmem:[#allocation2 + $0xa8] sm:$0xff]
  %v353 = vld [vmem:[#allocation2 + $0xb0] sm:$0xff]
  %v354 = vld [vmem:[#allocation2 + $0xb8] sm:$0xff]
  %v355 = vld [vmem:[#allocation2 + $0xc0] sm:$0xff]
  %v356 = vld [vmem:[#allocation2 + $0xc8] sm:$0xff]
  %v357 = vld [vmem:[#allocation2 + $0xd0] sm:$0xff]
  %v358 = vld [vmem:[#allocation2 + $0xd8] sm:$0xff]
  %v359 = vld [vmem:[#allocation2 + $0xe0] sm:$0xff]
  %v360 = vld [vmem:[#allocation2 + $0xe8] sm:$0xff]
  %v361 = vld [vmem:[#allocation2 + $0xf0] sm:$0xff]
  %v362 = vld [vmem:[#allocation2 + $0xf8] sm:$0xff]
  %v363 = vld [vmem:[#allocation2 + $0x100] sm:$0xff]
  %v364 = vld [vmem:[#allocation2 + $0x108] sm:$0xff]
  %v365 = vld [vmem:[#allocation2 + $0x110] sm:$0xff]
  %v366 = vld [vmem:[#allocation2 + $0x118] sm:$0xff]
  %v367 = vld [vmem:[#allocation2 + $0x120] sm:$0xff]
  %v368 = vld [vmem:[#allocation2 + $0x128] sm:$0xff]
  %v369 = vld [vmem:[#allocation2 + $0x130] sm:$0xff]
  %v370 = vld [vmem:[#allocation2 + $0x138] sm:$0xff]
  %v371 = vld [vmem:[#allocation2 + $0x140] sm:$0xff]
  %v372 = vld [vmem:[#allocation2 + $0x148] sm:$0xff]
  %v373 = vld [vmem:[#allocation2 + $0x150] sm:$0xff]
  %v374 = vld [vmem:[#allocation2 + $0x158] sm:$0xff]
  %v375 = vld [vmem:[#allocation2 + $0x160] sm:$0xff]
  %v376 = vld [vmem:[#allocation2 + $0x168] sm:$0xff]
  %v377 = vld [vmem:[#allocation2 + $0x170] sm:$0xff]
  %v378 = vld [vmem:[#allocation2 + $0x178] sm:$0xff]
  %v379 = vld [vmem:[#allocation2 + $0x180] sm:$0xff]
  %v380 = vld [vmem:[#allocation2 + $0x188] sm:$0xff]
  %v381 = vld [vmem:[#allocation2 + $0x190] sm:$0xff]
  %v382 = vld [vmem:[#allocation2 + $0x198] sm:$0xff]
  %v383 = vld [vmem:[#allocation2 + $0x1a0] sm:$0xff]
  %v384 = vld [vmem:[#allocation2 + $0x1a8] sm:$0xff]
  %v385 = vld [vmem:[#allocation2 + $0x1b0] sm:$0xff]
  %v386 = vld [vmem:[#allocation2 + $0x1b8] sm:$0xff]
  %v387 = vld [vmem:[#allocation2 + $0x1c0] sm:$0xff]
  %v388 = vld [vmem:[#allocation2 + $0x1c8] sm:$0xff]
  %v389 = vld [vmem:[#allocation2 + $0x1d0] sm:$0xff]
  %v390 = vld [vmem:[#allocation2 + $0x1d8] sm:$0xff]
  %v391 = vld [vmem:[#allocation2 + $0x1e0] sm:$0xff]
  %v392 = vld [vmem:[#allocation2 + $0x1e8] sm:$0xff]
  %v393 = vld [vmem:[#allocation2 + $0x1f0] sm:$0xff]
  %v394 = vld [vmem:[#allocation2 + $0x1f8] sm:$0xff]
  %v395 = vld [vmem:[#allocation2 + $0x200] sm:$0xff]
  %v396 = vld [vmem:[#allocation2 + $0x208] sm:$0xff]
  %v397 = vld [vmem:[#allocation2 + $0x210] sm:$0xff]
  %v398 = vld [vmem:[#allocation2 + $0x218] sm:$0xff]
  %v399 = vld [vmem:[#allocation2 + $0x220] sm:$0xff]
  %v400 = vld [vmem:[#allocation2 + $0x228] sm:$0xff]
  %v401 = vld [vmem:[#allocation2 + $0x230] sm:$0xff]
  %v402 = vld [vmem:[#allocation2 + $0x238] sm:$0xff]
  %v403 = vld [vmem:[#allocation2 + $0x240] sm:$0xff]
  %v404 = vld [vmem:[#allocation2 + $0x248] sm:$0xff]
  %v405 = vld [vmem:[#allocation2 + $0x250] sm:$0xff]
  %v406 = vld [vmem:[#allocation2 + $0x258] sm:$0xff]
  %v407 = vld [vmem:[#allocation2 + $0x260] sm:$0xff]
  %v408 = vld [vmem:[#allocation2 + $0x268] sm:$0xff]
  %v409 = vld [vmem:[#allocation2 + $0x270] sm:$0xff]
  %v410 = vld [vmem:[#allocation2 + $0x278] sm:$0xff]
  %v411 = vld [vmem:[#allocation2 + $0x280] sm:$0xff]
  %v412 = vld [vmem:[#allocation2 + $0x288] sm:$0xff]
  %v413 = vld [vmem:[#allocation2 + $0x290] sm:$0xff]
  %v414 = vld [vmem:[#allocation2 + $0x298] sm:$0xff]
  %v415 = vld [vmem:[#allocation2 + $0x2a0] sm:$0xff]
  %v416 = vld [vmem:[#allocation2 + $0x2a8] sm:$0xff]
  %v417 = vld [vmem:[#allocation2 + $0x2b0] sm:$0xff]
  %v418 = vld [vmem:[#allocation2 + $0x2b8] sm:$0xff]
  %v419 = vpack.c.bf16 %v332, %v331
  %v420 = vpack.c.bf16 %v334, %v333
  %v421 = vpack.c.bf16 %v336, %v335
  %v422 = vpack.c.bf16 %v338, %v337
  %v423 = vpack.c.bf16 %v340, %v339
  %v424 = vpack.c.bf16 %v342, %v341
  %v425 = vpack.c.bf16 %v344, %v343
  %v426 = vpack.c.bf16 %v346, %v345
  %v427 = vpack.c.bf16 %v348, %v347
  %v428 = vpack.c.bf16 %v350, %v349
  %v429 = vpack.c.bf16 %v352, %v351
  %v430 = vpack.c.bf16 %v354, %v353
  %v431 = vpack.c.bf16 %v356, %v355
  %v432 = vpack.c.bf16 %v358, %v357
  %v433 = vpack.c.bf16 %v360, %v359
  %v434 = vpack.c.bf16 %v362, %v361
  %v435 = vpack.c.bf16 %v364, %v363
  %v436 = vpack.c.bf16 %v366, %v365
  %v437 = vpack.c.bf16 %v368, %v367
  %v438 = vpack.c.bf16 %v370, %v369
  %v439 = vpack.c.bf16 %v372, %v371
  %v440 = vpack.c.bf16 %v374, %v373
  %v441 = vpack.c.bf16 %v376, %v375
  %v442 = vpack.c.bf16 %v378, %v377
  %v443 = vpack.c.bf16 %v380, %v379
  %v444 = vpack.c.bf16 %v382, %v381
  %v445 = vpack.c.bf16 %v384, %v383
  %v446 = vpack.c.bf16 %v386, %v385
  %v447 = vpack.c.bf16 %v388, %v387
  %v448 = vpack.c.bf16 %v390, %v389
  %v449 = vpack.c.bf16 %v392, %v391
  %v450 = vpack.c.bf16 %v394, %v393
  %v451 = vpack.c.bf16 %v396, %v395
  %v452 = vpack.c.bf16 %v398, %v397
  %v453 = vpack.c.bf16 %v400, %v399
  %v454 = vpack.c.bf16 %v402, %v401
  %v455 = vpack.c.bf16 %v404, %v403
  %v456 = vpack.c.bf16 %v406, %v405
  %v457 = vpack.c.bf16 %v408, %v407
  %v458 = vpack.c.bf16 %v410, %v409
  %v459 = vpack.c.bf16 %v412, %v411
  %v460 = vpack.c.bf16 %v414, %v413
  %v461 = vpack.c.bf16 %v416, %v415
  %v462 = vpack.c.bf16 %v418, %v417
  %463 = vst.msk [vmem:[#allocation3] sm:$0xff] %vm218, %v419
  %464 = vst.msk [vmem:[#allocation3 + $0x8] sm:$0xff] %vm218, %v420
  %465 = vst.msk [vmem:[#allocation3 + $0x10] sm:$0xff] %vm218, %v421
  %466 = vst.msk [vmem:[#allocation3 + $0x18] sm:$0xff] %vm218, %v422
  %467 = vst.msk [vmem:[#allocation3 + $0x20] sm:$0xff] %vm218, %v423
  %468 = vst.msk [vmem:[#allocation3 + $0x28] sm:$0xff] %vm218, %v424
  %469 = vst.msk [vmem:[#allocation3 + $0x30] sm:$0xff] %vm218, %v425
  %470 = vst.msk [vmem:[#allocation3 + $0x38] sm:$0xff] %vm218, %v426
  %471 = vst.msk [vmem:[#allocation3 + $0x40] sm:$0xff] %vm218, %v427
  %472 = vst.msk [vmem:[#allocation3 + $0x48] sm:$0xff] %vm218, %v428
  %473 = vst.msk [vmem:[#allocation3 + $0x50] sm:$0xff] %vm218, %v429
  %474 = vst.msk [vmem:[#allocation3 + $0x58] sm:$0xff] %vm218, %v430
  %475 = vst.msk [vmem:[#allocation3 + $0x60] sm:$0xff] %vm218, %v431
  %476 = vst.msk [vmem:[#allocation3 + $0x68] sm:$0xff] %vm218, %v432
  %477 = vst.msk [vmem:[#allocation3 + $0x70] sm:$0xff] %vm218, %v433
  %478 = vst.msk [vmem:[#allocation3 + $0x78] sm:$0xff] %vm218, %v434
  %479 = vst.msk [vmem:[#allocation3 + $0x80] sm:$0xff] %vm218, %v435
  %480 = vst.msk [vmem:[#allocation3 + $0x88] sm:$0xff] %vm218, %v436
  %481 = vst.msk [vmem:[#allocation3 + $0x90] sm:$0xff] %vm218, %v437
  %482 = vst.msk [vmem:[#allocation3 + $0x98] sm:$0xff] %vm218, %v438
  %483 = vst.msk [vmem:[#allocation3 + $0xa0] sm:$0xff] %vm218, %v439
  %484 = vst.msk [vmem:[#allocation3 + $0xa8] sm:$0xff] %vm218, %v440
  %485 = vst.msk [vmem:[#allocation3 + $0xb0] sm:$0xff] %vm218, %v441
  %486 = vst.msk [vmem:[#allocation3 + $0xb8] sm:$0xff] %vm218, %v442
  %487 = vst.msk [vmem:[#allocation3 + $0xc0] sm:$0xff] %vm218, %v443
  %488 = vst.msk [vmem:[#allocation3 + $0xc8] sm:$0xff] %vm218, %v444
  %489 = vst.msk [vmem:[#allocation3 + $0xd0] sm:$0xff] %vm218, %v445
  %490 = vst.msk [vmem:[#allocation3 + $0xd8] sm:$0xff] %vm218, %v446
  %491 = vst.msk [vmem:[#allocation3 + $0xe0] sm:$0xff] %vm218, %v447
  %492 = vst.msk [vmem:[#allocation3 + $0xe8] sm:$0xff] %vm218, %v448
  %493 = vst.msk [vmem:[#allocation3 + $0xf0] sm:$0xff] %vm218, %v449
  %494 = vst.msk [vmem:[#allocation3 + $0xf8] sm:$0xff] %vm218, %v450
  %495 = vst.msk [vmem:[#allocation3 + $0x100] sm:$0xff] %vm218, %v451
  %496 = vst.msk [vmem:[#allocation3 + $0x108] sm:$0xff] %vm218, %v452
  %497 = vst.msk [vmem:[#allocation3 + $0x110] sm:$0xff] %vm218, %v453
  %498 = vst.msk [vmem:[#allocation3 + $0x118] sm:$0xff] %vm218, %v454
  %499 = vst.msk [vmem:[#allocation3 + $0x120] sm:$0xff] %vm218, %v455
  %500 = vst.msk [vmem:[#allocation3 + $0x128] sm:$0xff] %vm218, %v456
  %501 = vst.msk [vmem:[#allocation3 + $0x130] sm:$0xff] %vm218, %v457
  %502 = vst.msk [vmem:[#allocation3 + $0x138] sm:$0xff] %vm218, %v458
  %503 = vst.msk [vmem:[#allocation3 + $0x140] sm:$0xff] %vm218, %v459
  %504 = vst.msk [vmem:[#allocation3 + $0x148] sm:$0xff] %vm218, %v460
  %505 = vst.msk [vmem:[#allocation3 + $0x150] sm:$0xff] %vm218, %v461
  %506 = vst.msk [vmem:[#allocation3 + $0x158] sm:$0xff] %vm218, %v462
  %v507 = vld [vmem:[#allocation2 + $0x1] sm:$0xff]
  %v508 = vld [vmem:[#allocation2 + $0x9] sm:$0xff]
  %v509 = vld [vmem:[#allocation2 + $0x11] sm:$0xff]
  %v510 = vld [vmem:[#allocation2 + $0x19] sm:$0xff]
  %v511 = vld [vmem:[#allocation2 + $0x21] sm:$0xff]
  %v512 = vld [vmem:[#allocation2 + $0x29] sm:$0xff]
  %v513 = vld [vmem:[#allocation2 + $0x31] sm:$0xff]
  %v514 = vld [vmem:[#allocation2 + $0x39] sm:$0xff]
  %v515 = vld [vmem:[#allocation2 + $0x41] sm:$0xff]
  %v516 = vld [vmem:[#allocation2 + $0x49] sm:$0xff]
  %v517 = vld [vmem:[#allocation2 + $0x51] sm:$0xff]
  %v518 = vld [vmem:[#allocation2 + $0x59] sm:$0xff]
  %v519 = vld [vmem:[#allocation2 + $0x61] sm:$0xff]
  %v520 = vld [vmem:[#allocation2 + $0x69] sm:$0xff]
  %v521 = vld [vmem:[#allocation2 + $0x71] sm:$0xff]
  %v522 = vld [vmem:[#allocation2 + $0x79] sm:$0xff]
  %v523 = vld [vmem:[#allocation2 + $0x81] sm:$0xff]
  %v524 = vld [vmem:[#allocation2 + $0x89] sm:$0xff]
  %v525 = vld [vmem:[#allocation2 + $0x91] sm:$0xff]
  %v526 = vld [vmem:[#allocation2 + $0x99] sm:$0xff]
  %v527 = vld [vmem:[#allocation2 + $0xa1] sm:$0xff]
  %v528 = vld [vmem:[#allocation2 + $0xa9] sm:$0xff]
  %v529 = vld [vmem:[#allocation2 + $0xb1] sm:$0xff]
  %v530 = vld [vmem:[#allocation2 + $0xb9] sm:$0xff]
  %v531 = vld [vmem:[#allocation2 + $0xc1] sm:$0xff]
  %v532 = vld [vmem:[#allocation2 + $0xc9] sm:$0xff]
  %v533 = vld [vmem:[#allocation2 + $0xd1] sm:$0xff]
  %v534 = vld [vmem:[#allocation2 + $0xd9] sm:$0xff]
  %v535 = vld [vmem:[#allocation2 + $0xe1] sm:$0xff]
  %v536 = vld [vmem:[#allocation2 + $0xe9] sm:$0xff]
  %v537 = vld [vmem:[#allocation2 + $0xf1] sm:$0xff]
  %v538 = vld [vmem:[#allocation2 + $0xf9] sm:$0xff]
  %v539 = vld [vmem:[#allocation2 + $0x101] sm:$0xff]
  %v540 = vld [vmem:[#allocation2 + $0x109] sm:$0xff]
  %v541 = vld [vmem:[#allocation2 + $0x111] sm:$0xff]
  %v542 = vld [vmem:[#allocation2 + $0x119] sm:$0xff]
  %v543 = vld [vmem:[#allocation2 + $0x121] sm:$0xff]
  %v544 = vld [vmem:[#allocation2 + $0x129] sm:$0xff]
  %v545 = vld [vmem:[#allocation2 + $0x131] sm:$0xff]
  %v546 = vld [vmem:[#allocation2 + $0x139] sm:$0xff]
  %v547 = vld [vmem:[#allocation2 + $0x141] sm:$0xff]
  %v548 = vld [vmem:[#allocation2 + $0x149] sm:$0xff]
  %v549 = vld [vmem:[#allocation2 + $0x151] sm:$0xff]
  %v550 = vld [vmem:[#allocation2 + $0x159] sm:$0xff]
  %v551 = vld [vmem:[#allocation2 + $0x161] sm:$0xff]
  %v552 = vld [vmem:[#allocation2 + $0x169] sm:$0xff]
  %v553 = vld [vmem:[#allocation2 + $0x171] sm:$0xff]
  %v554 = vld [vmem:[#allocation2 + $0x179] sm:$0xff]
  %v555 = vld [vmem:[#allocation2 + $0x181] sm:$0xff]
  %v556 = vld [vmem:[#allocation2 + $0x189] sm:$0xff]
  %v557 = vld [vmem:[#allocation2 + $0x191] sm:$0xff]
  %v558 = vld [vmem:[#allocation2 + $0x199] sm:$0xff]
  %v559 = vld [vmem:[#allocation2 + $0x1a1] sm:$0xff]
  %v560 = vld [vmem:[#allocation2 + $0x1a9] sm:$0xff]
  %v561 = vld [vmem:[#allocation2 + $0x1b1] sm:$0xff]
  %v562 = vld [vmem:[#allocation2 + $0x1b9] sm:$0xff]
  %v563 = vld [vmem:[#allocation2 + $0x1c1] sm:$0xff]
  %v564 = vld [vmem:[#allocation2 + $0x1c9] sm:$0xff]
  %v565 = vld [vmem:[#allocation2 + $0x1d1] sm:$0xff]
  %v566 = vld [vmem:[#allocation2 + $0x1d9] sm:$0xff]
  %v567 = vld [vmem:[#allocation2 + $0x1e1] sm:$0xff]
  %v568 = vld [vmem:[#allocation2 + $0x1e9] sm:$0xff]
  %v569 = vld [vmem:[#allocation2 + $0x1f1] sm:$0xff]
  %v570 = vld [vmem:[#allocation2 + $0x1f9] sm:$0xff]
  %v571 = vld [vmem:[#allocation2 + $0x201] sm:$0xff]
  %v572 = vld [vmem:[#allocation2 + $0x209] sm:$0xff]
  %v573 = vld [vmem:[#allocation2 + $0x211] sm:$0xff]
  %v574 = vld [vmem:[#allocation2 + $0x219] sm:$0xff]
  %v575 = vld [vmem:[#allocation2 + $0x221] sm:$0xff]
  %v576 = vld [vmem:[#allocation2 + $0x229] sm:$0xff]
  %v577 = vld [vmem:[#allocation2 + $0x231] sm:$0xff]
  %v578 = vld [vmem:[#allocation2 + $0x239] sm:$0xff]
  %v579 = vld [vmem:[#allocation2 + $0x241] sm:$0xff]
  %v580 = vld [vmem:[#allocation2 + $0x249] sm:$0xff]
  %v581 = vld [vmem:[#allocation2 + $0x251] sm:$0xff]
  %v582 = vld [vmem:[#allocation2 + $0x259] sm:$0xff]
  %v583 = vld [vmem:[#allocation2 + $0x261] sm:$0xff]
  %v584 = vld [vmem:[#allocation2 + $0x269] sm:$0xff]
  %v585 = vld [vmem:[#allocation2 + $0x271] sm:$0xff]
  %v586 = vld [vmem:[#allocation2 + $0x279] sm:$0xff]
  %v587 = vld [vmem:[#allocation2 + $0x281] sm:$0xff]
  %v588 = vld [vmem:[#allocation2 + $0x289] sm:$0xff]
  %v589 = vld [vmem:[#allocation2 + $0x291] sm:$0xff]
  %v590 = vld [vmem:[#allocation2 + $0x299] sm:$0xff]
  %v591 = vld [vmem:[#allocation2 + $0x2a1] sm:$0xff]
  %v592 = vld [vmem:[#allocation2 + $0x2a9] sm:$0xff]
  %v593 = vld [vmem:[#allocation2 + $0x2b1] sm:$0xff]
  %v594 = vld [vmem:[#allocation2 + $0x2b9] sm:$0xff]
  %v595 = vpack.c.bf16 %v508, %v507
  %v596 = vpack.c.bf16 %v510, %v509
  %v597 = vpack.c.bf16 %v512, %v511
  %v598 = vpack.c.bf16 %v514, %v513
  %v599 = vpack.c.bf16 %v516, %v515
  %v600 = vpack.c.bf16 %v518, %v517
  %v601 = vpack.c.bf16 %v520, %v519
  %v602 = vpack.c.bf16 %v522, %v521
  %v603 = vpack.c.bf16 %v524, %v523
  %v604 = vpack.c.bf16 %v526, %v525
  %v605 = vpack.c.bf16 %v528, %v527
  %v606 = vpack.c.bf16 %v530, %v529
  %v607 = vpack.c.bf16 %v532, %v531
  %v608 = vpack.c.bf16 %v534, %v533
  %v609 = vpack.c.bf16 %v536, %v535
  %v610 = vpack.c.bf16 %v538, %v537
  %v611 = vpack.c.bf16 %v540, %v539
  %v612 = vpack.c.bf16 %v542, %v541
  %v613 = vpack.c.bf16 %v544, %v543
  %v614 = vpack.c.bf16 %v546, %v545
  %v615 = vpack.c.bf16 %v548, %v547
  %v616 = vpack.c.bf16 %v550, %v549
  %v617 = vpack.c.bf16 %v552, %v551
  %v618 = vpack.c.bf16 %v554, %v553
  %v619 = vpack.c.bf16 %v556, %v555
  %v620 = vpack.c.bf16 %v558, %v557
  %v621 = vpack.c.bf16 %v560, %v559
  %v622 = vpack.c.bf16 %v562, %v561
  %v623 = vpack.c.bf16 %v564, %v563
  %v624 = vpack.c.bf16 %v566, %v565
  %v625 = vpack.c.bf16 %v568, %v567
  %v626 = vpack.c.bf16 %v570, %v569
  %v627 = vpack.c.bf16 %v572, %v571
  %v628 = vpack.c.bf16 %v574, %v573
  %v629 = vpack.c.bf16 %v576, %v575
  %v630 = vpack.c.bf16 %v578, %v577
  %v631 = vpack.c.bf16 %v580, %v579
  %v632 = vpack.c.bf16 %v582, %v581
  %v633 = vpack.c.bf16 %v584, %v583
  %v634 = vpack.c.bf16 %v586, %v585
  %v635 = vpack.c.bf16 %v588, %v587
  %v636 = vpack.c.bf16 %v590, %v589
  %v637 = vpack.c.bf16 %v592, %v591
  %v638 = vpack.c.bf16 %v594, %v593
  %683 = vrot.lane.b32.xlu0 %v595, 4
  %v684 = vpop.permute.xlu0 %683
  %685 = vrot.lane.b32.xlu0 %v596, 4
  %v686 = vpop.permute.xlu0 %685
  %687 = vrot.lane.b32.xlu0 %v597, 4
  %v688 = vpop.permute.xlu0 %687
  %689 = vrot.lane.b32.xlu0 %v598, 4
  %v690 = vpop.permute.xlu0 %689
  %691 = vrot.lane.b32.xlu0 %v599, 4
  %v692 = vpop.permute.xlu0 %691
  %693 = vrot.lane.b32.xlu0 %v600, 4
  %v694 = vpop.permute.xlu0 %693
  %695 = vrot.lane.b32.xlu0 %v601, 4
  %v696 = vpop.permute.xlu0 %695
  %697 = vrot.lane.b32.xlu0 %v602, 4
  %v698 = vpop.permute.xlu0 %697
  %699 = vrot.lane.b32.xlu0 %v603, 4
  %v700 = vpop.permute.xlu0 %699
  %701 = vrot.lane.b32.xlu0 %v604, 4
  %v702 = vpop.permute.xlu0 %701
  %703 = vrot.lane.b32.xlu0 %v605, 4
  %v704 = vpop.permute.xlu0 %703
  %705 = vrot.lane.b32.xlu0 %v606, 4
  %v706 = vpop.permute.xlu0 %705
  %707 = vrot.lane.b32.xlu0 %v607, 4
  %v708 = vpop.permute.xlu0 %707
  %709 = vrot.lane.b32.xlu0 %v608, 4
  %v710 = vpop.permute.xlu0 %709
  %711 = vrot.lane.b32.xlu0 %v609, 4
  %v712 = vpop.permute.xlu0 %711
  %713 = vrot.lane.b32.xlu0 %v610, 4
  %v714 = vpop.permute.xlu0 %713
  %715 = vrot.lane.b32.xlu0 %v611, 4
  %v716 = vpop.permute.xlu0 %715
  %717 = vrot.lane.b32.xlu0 %v612, 4
  %v718 = vpop.permute.xlu0 %717
  %719 = vrot.lane.b32.xlu0 %v613, 4
  %v720 = vpop.permute.xlu0 %719
  %721 = vrot.lane.b32.xlu0 %v614, 4
  %v722 = vpop.permute.xlu0 %721
  %723 = vrot.lane.b32.xlu0 %v615, 4
  %v724 = vpop.permute.xlu0 %723
  %725 = vrot.lane.b32.xlu0 %v616, 4
  %v726 = vpop.permute.xlu0 %725
  %727 = vrot.lane.b32.xlu0 %v617, 4
  %v728 = vpop.permute.xlu0 %727
  %729 = vrot.lane.b32.xlu0 %v618, 4
  %v730 = vpop.permute.xlu0 %729
  %731 = vrot.lane.b32.xlu0 %v619, 4
  %v732 = vpop.permute.xlu0 %731
  %733 = vrot.lane.b32.xlu0 %v620, 4
  %v734 = vpop.permute.xlu0 %733
  %735 = vrot.lane.b32.xlu0 %v621, 4
  %v736 = vpop.permute.xlu0 %735
  %737 = vrot.lane.b32.xlu0 %v622, 4
  %v738 = vpop.permute.xlu0 %737
  %739 = vrot.lane.b32.xlu0 %v623, 4
  %v740 = vpop.permute.xlu0 %739
  %741 = vrot.lane.b32.xlu0 %v624, 4
  %v742 = vpop.permute.xlu0 %741
  %743 = vrot.lane.b32.xlu0 %v625, 4
  %v744 = vpop.permute.xlu0 %743
  %745 = vrot.lane.b32.xlu0 %v626, 4
  %v746 = vpop.permute.xlu0 %745
  %747 = vrot.lane.b32.xlu0 %v627, 4
  %v748 = vpop.permute.xlu0 %747
  %749 = vrot.lane.b32.xlu0 %v628, 4
  %v750 = vpop.permute.xlu0 %749
  %751 = vrot.lane.b32.xlu0 %v629, 4
  %v752 = vpop.permute.xlu0 %751
  %753 = vrot.lane.b32.xlu0 %v630, 4
  %v754 = vpop.permute.xlu0 %753
  %755 = vrot.lane.b32.xlu0 %v631, 4
  %v756 = vpop.permute.xlu0 %755
  %757 = vrot.lane.b32.xlu0 %v632, 4
  %v758 = vpop.permute.xlu0 %757
  %759 = vrot.lane.b32.xlu0 %v633, 4
  %v760 = vpop.permute.xlu0 %759
  %761 = vrot.lane.b32.xlu0 %v634, 4
  %v762 = vpop.permute.xlu0 %761
  %763 = vrot.lane.b32.xlu0 %v635, 4
  %v764 = vpop.permute.xlu0 %763
  %765 = vrot.lane.b32.xlu0 %v636, 4
  %v766 = vpop.permute.xlu0 %765
  %767 = vrot.lane.b32.xlu0 %v637, 4
  %v768 = vpop.permute.xlu0 %767
  %769 = vrot.lane.b32.xlu0 %v638, 4
  %v770 = vpop.permute.xlu0 %769
  %vm815 = vcmask 64544
  %816 = vst.msk [vmem:[#allocation3] sm:$0xff] %vm815, %v684
  %817 = vst.msk [vmem:[#allocation3 + $0x8] sm:$0xff] %vm815, %v686
  %818 = vst.msk [vmem:[#allocation3 + $0x10] sm:$0xff] %vm815, %v688
  %819 = vst.msk [vmem:[#allocation3 + $0x18] sm:$0xff] %vm815, %v690
  %820 = vst.msk [vmem:[#allocation3 + $0x20] sm:$0xff] %vm815, %v692
  %821 = vst.msk [vmem:[#allocation3 + $0x28] sm:$0xff] %vm815, %v694
  %822 = vst.msk [vmem:[#allocation3 + $0x30] sm:$0xff] %vm815, %v696
  %823 = vst.msk [vmem:[#allocation3 + $0x38] sm:$0xff] %vm815, %v698
  %824 = vst.msk [vmem:[#allocation3 + $0x40] sm:$0xff] %vm815, %v700
  %825 = vst.msk [vmem:[#allocation3 + $0x48] sm:$0xff] %vm815, %v702
  %826 = vst.msk [vmem:[#allocation3 + $0x50] sm:$0xff] %vm815, %v704
  %827 = vst.msk [vmem:[#allocation3 + $0x58] sm:$0xff] %vm815, %v706
  %828 = vst.msk [vmem:[#allocation3 + $0x60] sm:$0xff] %vm815, %v708
  %829 = vst.msk [vmem:[#allocation3 + $0x68] sm:$0xff] %vm815, %v710
  %830 = vst.msk [vmem:[#allocation3 + $0x70] sm:$0xff] %vm815, %v712
  %831 = vst.msk [vmem:[#allocation3 + $0x78] sm:$0xff] %vm815, %v714
  %832 = vst.msk [vmem:[#allocation3 + $0x80] sm:$0xff] %vm815, %v716
  %833 = vst.msk [vmem:[#allocation3 + $0x88] sm:$0xff] %vm815, %v718
  %834 = vst.msk [vmem:[#allocation3 + $0x90] sm:$0xff] %vm815, %v720
  %835 = vst.msk [vmem:[#allocation3 + $0x98] sm:$0xff] %vm815, %v722
  %836 = vst.msk [vmem:[#allocation3 + $0xa0] sm:$0xff] %vm815, %v724
  %837 = vst.msk [vmem:[#allocation3 + $0xa8] sm:$0xff] %vm815, %v726
  %838 = vst.msk [vmem:[#allocation3 + $0xb0] sm:$0xff] %vm815, %v728
  %839 = vst.msk [vmem:[#allocation3 + $0xb8] sm:$0xff] %vm815, %v730
  %840 = vst.msk [vmem:[#allocation3 + $0xc0] sm:$0xff] %vm815, %v732
  %841 = vst.msk [vmem:[#allocation3 + $0xc8] sm:$0xff] %vm815, %v734
  %842 = vst.msk [vmem:[#allocation3 + $0xd0] sm:$0xff] %vm815, %v736
  %843 = vst.msk [vmem:[#allocation3 + $0xd8] sm:$0xff] %vm815, %v738
  %844 = vst.msk [vmem:[#allocation3 + $0xe0] sm:$0xff] %vm815, %v740
  %845 = vst.msk [vmem:[#allocation3 + $0xe8] sm:$0xff] %vm815, %v742
  %846 = vst.msk [vmem:[#allocation3 + $0xf0] sm:$0xff] %vm815, %v744
  %847 = vst.msk [vmem:[#allocation3 + $0xf8] sm:$0xff] %vm815, %v746
  %848 = vst.msk [vmem:[#allocation3 + $0x100] sm:$0xff] %vm815, %v748
  %849 = vst.msk [vmem:[#allocation3 + $0x108] sm:$0xff] %vm815, %v750
  %850 = vst.msk [vmem:[#allocation3 + $0x110] sm:$0xff] %vm815, %v752
  %851 = vst.msk [vmem:[#allocation3 + $0x118] sm:$0xff] %vm815, %v754
  %852 = vst.msk [vmem:[#allocation3 + $0x120] sm:$0xff] %vm815, %v756
  %853 = vst.msk [vmem:[#allocation3 + $0x128] sm:$0xff] %vm815, %v758
  %854 = vst.msk [vmem:[#allocation3 + $0x130] sm:$0xff] %vm815, %v760
  %855 = vst.msk [vmem:[#allocation3 + $0x138] sm:$0xff] %vm815, %v762
  %856 = vst.msk [vmem:[#allocation3 + $0x140] sm:$0xff] %vm815, %v764
  %857 = vst.msk [vmem:[#allocation3 + $0x148] sm:$0xff] %vm815, %v766
  %858 = vst.msk [vmem:[#allocation3 + $0x150] sm:$0xff] %vm815, %v768
  %859 = vst.msk [vmem:[#allocation3 + $0x158] sm:$0xff] %vm815, %v770
  %v860 = vld [vmem:[#allocation2 + $0x2] sm:$0xff]
  %v861 = vld [vmem:[#allocation2 + $0xa] sm:$0xff]
  %v862 = vld [vmem:[#allocation2 + $0x12] sm:$0xff]
  %v863 = vld [vmem:[#allocation2 + $0x1a] sm:$0xff]
  %v864 = vld [vmem:[#allocation2 + $0x22] sm:$0xff]
  %v865 = vld [vmem:[#allocation2 + $0x2a] sm:$0xff]
  %v866 = vld [vmem:[#allocation2 + $0x32] sm:$0xff]
  %v867 = vld [vmem:[#allocation2 + $0x3a] sm:$0xff]
  %v868 = vld [vmem:[#allocation2 + $0x42] sm:$0xff]
  %v869 = vld [vmem:[#allocation2 + $0x4a] sm:$0xff]
  %v870 = vld [vmem:[#allocation2 + $0x52] sm:$0xff]
  %v871 = vld [vmem:[#allocation2 + $0x5a] sm:$0xff]
  %v872 = vld [vmem:[#allocation2 + $0x62] sm:$0xff]
  %v873 = vld [vmem:[#allocation2 + $0x6a] sm:$0xff]
  %v874 = vld [vmem:[#allocation2 + $0x72] sm:$0xff]
  %v875 = vld [vmem:[#allocation2 + $0x7a] sm:$0xff]
  %v876 = vld [vmem:[#allocation2 + $0x82] sm:$0xff]
  %v877 = vld [vmem:[#allocation2 + $0x8a] sm:$0xff]
  %v878 = vld [vmem:[#allocation2 + $0x92] sm:$0xff]
  %v879 = vld [vmem:[#allocation2 + $0x9a] sm:$0xff]
  %v880 = vld [vmem:[#allocation2 + $0xa2] sm:$0xff]
  %v881 = vld [vmem:[#allocation2 + $0xaa] sm:$0xff]
  %v882 = vld [vmem:[#allocation2 + $0xb2] sm:$0xff]
  %v883 = vld [vmem:[#allocation2 + $0xba] sm:$0xff]
  %v884 = vld [vmem:[#allocation2 + $0xc2] sm:$0xff]
  %v885 = vld [vmem:[#allocation2 + $0xca] sm:$0xff]
  %v886 = vld [vmem:[#allocation2 + $0xd2] sm:$0xff]
  %v887 = vld [vmem:[#allocation2 + $0xda] sm:$0xff]
  %v888 = vld [vmem:[#allocation2 + $0xe2] sm:$0xff]
  %v889 = vld [vmem:[#allocation2 + $0xea] sm:$0xff]
  %v890 = vld [vmem:[#allocation2 + $0xf2] sm:$0xff]
  %v891 = vld [vmem:[#allocation2 + $0xfa] sm:$0xff]
  %v892 = vld [vmem:[#allocation2 + $0x102] sm:$0xff]
  %v893 = vld [vmem:[#allocation2 + $0x10a] sm:$0xff]
  %v894 = vld [vmem:[#allocation2 + $0x112] sm:$0xff]
  %v895 = vld [vmem:[#allocation2 + $0x11a] sm:$0xff]
  %v896 = vld [vmem:[#allocation2 + $0x122] sm:$0xff]
  %v897 = vld [vmem:[#allocation2 + $0x12a] sm:$0xff]
  %v898 = vld [vmem:[#allocation2 + $0x132] sm:$0xff]
  %v899 = vld [vmem:[#allocation2 + $0x13a] sm:$0xff]
  %v900 = vld [vmem:[#allocation2 + $0x142] sm:$0xff]
  %v901 = vld [vmem:[#allocation2 + $0x14a] sm:$0xff]
  %v902 = vld [vmem:[#allocation2 + $0x152] sm:$0xff]
  %v903 = vld [vmem:[#allocation2 + $0x15a] sm:$0xff]
  %v904 = vld [vmem:[#allocation2 + $0x162] sm:$0xff]
  %v905 = vld [vmem:[#allocation2 + $0x16a] sm:$0xff]
  %v906 = vld [vmem:[#allocation2 + $0x172] sm:$0xff]
  %v907 = vld [vmem:[#allocation2 + $0x17a] sm:$0xff]
  %v908 = vld [vmem:[#allocation2 + $0x182] sm:$0xff]
  %v909 = vld [vmem:[#allocation2 + $0x18a] sm:$0xff]
  %v910 = vld [vmem:[#allocation2 + $0x192] sm:$0xff]
  %v911 = vld [vmem:[#allocation2 + $0x19a] sm:$0xff]
  %v912 = vld [vmem:[#allocation2 + $0x1a2] sm:$0xff]
  %v913 = vld [vmem:[#allocation2 + $0x1aa] sm:$0xff]
  %v914 = vld [vmem:[#allocation2 + $0x1b2] sm:$0xff]
  %v915 = vld [vmem:[#allocation2 + $0x1ba] sm:$0xff]
  %v916 = vld [vmem:[#allocation2 + $0x1c2] sm:$0xff]
  %v917 = vld [vmem:[#allocation2 + $0x1ca] sm:$0xff]
  %v918 = vld [vmem:[#allocation2 + $0x1d2] sm:$0xff]
  %v919 = vld [vmem:[#allocation2 + $0x1da] sm:$0xff]
  %v920 = vld [vmem:[#allocation2 + $0x1e2] sm:$0xff]
  %v921 = vld [vmem:[#allocation2 + $0x1ea] sm:$0xff]
  %v922 = vld [vmem:[#allocation2 + $0x1f2] sm:$0xff]
  %v923 = vld [vmem:[#allocation2 + $0x1fa] sm:$0xff]
  %v924 = vld [vmem:[#allocation2 + $0x202] sm:$0xff]
  %v925 = vld [vmem:[#allocation2 + $0x20a] sm:$0xff]
  %v926 = vld [vmem:[#allocation2 + $0x212] sm:$0xff]
  %v927 = vld [vmem:[#allocation2 + $0x21a] sm:$0xff]
  %v928 = vld [vmem:[#allocation2 + $0x222] sm:$0xff]
  %v929 = vld [vmem:[#allocation2 + $0x22a] sm:$0xff]
  %v930 = vld [vmem:[#allocation2 + $0x232] sm:$0xff]
  %v931 = vld [vmem:[#allocation2 + $0x23a] sm:$0xff]
  %v932 = vld [vmem:[#allocation2 + $0x242] sm:$0xff]
  %v933 = vld [vmem:[#allocation2 + $0x24a] sm:$0xff]
  %v934 = vld [vmem:[#allocation2 + $0x252] sm:$0xff]
  %v935 = vld [vmem:[#allocation2 + $0x25a] sm:$0xff]
  %v936 = vld [vmem:[#allocation2 + $0x262] sm:$0xff]
  %v937 = vld [vmem:[#allocation2 + $0x26a] sm:$0xff]
  %v938 = vld [vmem:[#allocation2 + $0x272] sm:$0xff]
  %v939 = vld [vmem:[#allocation2 + $0x27a] sm:$0xff]
  %v940 = vld [vmem:[#allocation2 + $0x282] sm:$0xff]
  %v941 = vld [vmem:[#allocation2 + $0x28a] sm:$0xff]
  %v942 = vld [vmem:[#allocation2 + $0x292] sm:$0xff]
  %v943 = vld [vmem:[#allocation2 + $0x29a] sm:$0xff]
  %v944 = vld [vmem:[#allocation2 + $0x2a2] sm:$0xff]
  %v945 = vld [vmem:[#allocation2 + $0x2aa] sm:$0xff]
  %v946 = vld [vmem:[#allocation2 + $0x2b2] sm:$0xff]
  %v947 = vld [vmem:[#allocation2 + $0x2ba] sm:$0xff]
  %v948 = vpack.c.bf16 %v861, %v860
  %v949 = vpack.c.bf16 %v863, %v862
  %v950 = vpack.c.bf16 %v865, %v864
  %v951 = vpack.c.bf16 %v867, %v866
  %v952 = vpack.c.bf16 %v869, %v868
  %v953 = vpack.c.bf16 %v871, %v870
  %v954 = vpack.c.bf16 %v873, %v872
  %v955 = vpack.c.bf16 %v875, %v874
  %v956 = vpack.c.bf16 %v877, %v876
  %v957 = vpack.c.bf16 %v879, %v878
  %v958 = vpack.c.bf16 %v881, %v880
  %v959 = vpack.c.bf16 %v883, %v882
  %v960 = vpack.c.bf16 %v885, %v884
  %v961 = vpack.c.bf16 %v887, %v886
  %v962 = vpack.c.bf16 %v889, %v888
  %v963 = vpack.c.bf16 %v891, %v890
  %v964 = vpack.c.bf16 %v893, %v892
  %v965 = vpack.c.bf16 %v895, %v894
  %v966 = vpack.c.bf16 %v897, %v896
  %v967 = vpack.c.bf16 %v899, %v898
  %v968 = vpack.c.bf16 %v901, %v900
  %v969 = vpack.c.bf16 %v903, %v902
  %v970 = vpack.c.bf16 %v905, %v904
  %v971 = vpack.c.bf16 %v907, %v906
  %v972 = vpack.c.bf16 %v909, %v908
  %v973 = vpack.c.bf16 %v911, %v910
  %v974 = vpack.c.bf16 %v913, %v912
  %v975 = vpack.c.bf16 %v915, %v914
  %v976 = vpack.c.bf16 %v917, %v916
  %v977 = vpack.c.bf16 %v919, %v918
  %v978 = vpack.c.bf16 %v921, %v920
  %v979 = vpack.c.bf16 %v923, %v922
  %v980 = vpack.c.bf16 %v925, %v924
  %v981 = vpack.c.bf16 %v927, %v926
  %v982 = vpack.c.bf16 %v929, %v928
  %v983 = vpack.c.bf16 %v931, %v930
  %v984 = vpack.c.bf16 %v933, %v932
  %v985 = vpack.c.bf16 %v935, %v934
  %v986 = vpack.c.bf16 %v937, %v936
  %v987 = vpack.c.bf16 %v939, %v938
  %v988 = vpack.c.bf16 %v941, %v940
  %v989 = vpack.c.bf16 %v943, %v942
  %v990 = vpack.c.bf16 %v945, %v944
  %v991 = vpack.c.bf16 %v947, %v946
  %1036 = vrot.lane.b32.xlu0 %v948, 8
  %v1037 = vpop.permute.xlu0 %1036
  %1038 = vrot.lane.b32.xlu0 %v949, 8
  %v1039 = vpop.permute.xlu0 %1038
  %1040 = vrot.lane.b32.xlu0 %v950, 8
  %v1041 = vpop.permute.xlu0 %1040
  %1042 = vrot.lane.b32.xlu0 %v951, 8
  %v1043 = vpop.permute.xlu0 %1042
  %1044 = vrot.lane.b32.xlu0 %v952, 8
  %v1045 = vpop.permute.xlu0 %1044
  %1046 = vrot.lane.b32.xlu0 %v953, 8
  %v1047 = vpop.permute.xlu0 %1046
  %1048 = vrot.lane.b32.xlu0 %v954, 8
  %v1049 = vpop.permute.xlu0 %1048
  %1050 = vrot.lane.b32.xlu0 %v955, 8
  %v1051 = vpop.permute.xlu0 %1050
  %1052 = vrot.lane.b32.xlu0 %v956, 8
  %v1053 = vpop.permute.xlu0 %1052
  %1054 = vrot.lane.b32.xlu0 %v957, 8
  %v1055 = vpop.permute.xlu0 %1054
  %1056 = vrot.lane.b32.xlu0 %v958, 8
  %v1057 = vpop.permute.xlu0 %1056
  %1058 = vrot.lane.b32.xlu0 %v959, 8
  %v1059 = vpop.permute.xlu0 %1058
  %1060 = vrot.lane.b32.xlu0 %v960, 8
  %v1061 = vpop.permute.xlu0 %1060
  %1062 = vrot.lane.b32.xlu0 %v961, 8
  %v1063 = vpop.permute.xlu0 %1062
  %1064 = vrot.lane.b32.xlu0 %v962, 8
  %v1065 = vpop.permute.xlu0 %1064
  %1066 = vrot.lane.b32.xlu0 %v963, 8
  %v1067 = vpop.permute.xlu0 %1066
  %1068 = vrot.lane.b32.xlu0 %v964, 8
  %v1069 = vpop.permute.xlu0 %1068
  %1070 = vrot.lane.b32.xlu0 %v965, 8
  %v1071 = vpop.permute.xlu0 %1070
  %1072 = vrot.lane.b32.xlu0 %v966, 8
  %v1073 = vpop.permute.xlu0 %1072
  %1074 = vrot.lane.b32.xlu0 %v967, 8
  %v1075 = vpop.permute.xlu0 %1074
  %1076 = vrot.lane.b32.xlu0 %v968, 8
  %v1077 = vpop.permute.xlu0 %1076
  %1078 = vrot.lane.b32.xlu0 %v969, 8
  %v1079 = vpop.permute.xlu0 %1078
  %1080 = vrot.lane.b32.xlu0 %v970, 8
  %v1081 = vpop.permute.xlu0 %1080
  %1082 = vrot.lane.b32.xlu0 %v971, 8
  %v1083 = vpop.permute.xlu0 %1082
  %1084 = vrot.lane.b32.xlu0 %v972, 8
  %v1085 = vpop.permute.xlu0 %1084
  %1086 = vrot.lane.b32.xlu0 %v973, 8
  %v1087 = vpop.permute.xlu0 %1086
  %1088 = vrot.lane.b32.xlu0 %v974, 8
  %v1089 = vpop.permute.xlu0 %1088
  %1090 = vrot.lane.b32.xlu0 %v975, 8
  %v1091 = vpop.permute.xlu0 %1090
  %1092 = vrot.lane.b32.xlu0 %v976, 8
  %v1093 = vpop.permute.xlu0 %1092
  %1094 = vrot.lane.b32.xlu0 %v977, 8
  %v1095 = vpop.permute.xlu0 %1094
  %1096 = vrot.lane.b32.xlu0 %v978, 8
  %v1097 = vpop.permute.xlu0 %1096
  %1098 = vrot.lane.b32.xlu0 %v979, 8
  %v1099 = vpop.permute.xlu0 %1098
  %1100 = vrot.lane.b32.xlu0 %v980, 8
  %v1101 = vpop.permute.xlu0 %1100
  %1102 = vrot.lane.b32.xlu0 %v981, 8
  %v1103 = vpop.permute.xlu0 %1102
  %1104 = vrot.lane.b32.xlu0 %v982, 8
  %v1105 = vpop.permute.xlu0 %1104
  %1106 = vrot.lane.b32.xlu0 %v983, 8
  %v1107 = vpop.permute.xlu0 %1106
  %1108 = vrot.lane.b32.xlu0 %v984, 8
  %v1109 = vpop.permute.xlu0 %1108
  %1110 = vrot.lane.b32.xlu0 %v985, 8
  %v1111 = vpop.permute.xlu0 %1110
  %1112 = vrot.lane.b32.xlu0 %v986, 8
  %v1113 = vpop.permute.xlu0 %1112
  %1114 = vrot.lane.b32.xlu0 %v987, 8
  %v1115 = vpop.permute.xlu0 %1114
  %1116 = vrot.lane.b32.xlu0 %v988, 8
  %v1117 = vpop.permute.xlu0 %1116
  %1118 = vrot.lane.b32.xlu0 %v989, 8
  %v1119 = vpop.permute.xlu0 %1118
  %1120 = vrot.lane.b32.xlu0 %v990, 8
  %v1121 = vpop.permute.xlu0 %1120
  %1122 = vrot.lane.b32.xlu0 %v991, 8
  %v1123 = vpop.permute.xlu0 %1122
  %vm1168 = vcmask 97344
  %1169 = vst.msk [vmem:[#allocation3] sm:$0xff] %vm1168, %v1037
  %1170 = vst.msk [vmem:[#allocation3 + $0x8] sm:$0xff] %vm1168, %v1039
  %1171 = vst.msk [vmem:[#allocation3 + $0x10] sm:$0xff] %vm1168, %v1041
  %1172 = vst.msk [vmem:[#allocation3 + $0x18] sm:$0xff] %vm1168, %v1043
  %1173 = vst.msk [vmem:[#allocation3 + $0x20] sm:$0xff] %vm1168, %v1045
  %1174 = vst.msk [vmem:[#allocation3 + $0x28] sm:$0xff] %vm1168, %v1047
  %1175 = vst.msk [vmem:[#allocation3 + $0x30] sm:$0xff] %vm1168, %v1049
  %1176 = vst.msk [vmem:[#allocation3 + $0x38] sm:$0xff] %vm1168, %v1051
  %1177 = vst.msk [vmem:[#allocation3 + $0x40] sm:$0xff] %vm1168, %v1053
  %1178 = vst.msk [vmem:[#allocation3 + $0x48] sm:$0xff] %vm1168, %v1055
  %1179 = vst.msk [vmem:[#allocation3 + $0x50] sm:$0xff] %vm1168, %v1057
  %1180 = vst.msk [vmem:[#allocation3 + $0x58] sm:$0xff] %vm1168, %v1059
  %1181 = vst.msk [vmem:[#allocation3 + $0x60] sm:$0xff] %vm1168, %v1061
  %1182 = vst.msk [vmem:[#allocation3 + $0x68] sm:$0xff] %vm1168, %v1063
  %1183 = vst.msk [vmem:[#allocation3 + $0x70] sm:$0xff] %vm1168, %v1065
  %1184 = vst.msk [vmem:[#allocation3 + $0x78] sm:$0xff] %vm1168, %v1067
  %1185 = vst.msk [vmem:[#allocation3 + $0x80] sm:$0xff] %vm1168, %v1069
  %1186 = vst.msk [vmem:[#allocation3 + $0x88] sm:$0xff] %vm1168, %v1071
  %1187 = vst.msk [vmem:[#allocation3 + $0x90] sm:$0xff] %vm1168, %v1073
  %1188 = vst.msk [vmem:[#allocation3 + $0x98] sm:$0xff] %vm1168, %v1075
  %1189 = vst.msk [vmem:[#allocation3 + $0xa0] sm:$0xff] %vm1168, %v1077
  %1190 = vst.msk [vmem:[#allocation3 + $0xa8] sm:$0xff] %vm1168, %v1079
  %1191 = vst.msk [vmem:[#allocation3 + $0xb0] sm:$0xff] %vm1168, %v1081
  %1192 = vst.msk [vmem:[#allocation3 + $0xb8] sm:$0xff] %vm1168, %v1083
  %1193 = vst.msk [vmem:[#allocation3 + $0xc0] sm:$0xff] %vm1168, %v1085
  %1194 = vst.msk [vmem:[#allocation3 + $0xc8] sm:$0xff] %vm1168, %v1087
  %1195 = vst.msk [vmem:[#allocation3 + $0xd0] sm:$0xff] %vm1168, %v1089
  %1196 = vst.msk [vmem:[#allocation3 + $0xd8] sm:$0xff] %vm1168, %v1091
  %1197 = vst.msk [vmem:[#allocation3 + $0xe0] sm:$0xff] %vm1168, %v1093
  %1198 = vst.msk [vmem:[#allocation3 + $0xe8] sm:$0xff] %vm1168, %v1095
  %1199 = vst.msk [vmem:[#allocation3 + $0xf0] sm:$0xff] %vm1168, %v1097
  %1200 = vst.msk [vmem:[#allocation3 + $0xf8] sm:$0xff] %vm1168, %v1099
  %1201 = vst.msk [vmem:[#allocation3 + $0x100] sm:$0xff] %vm1168, %v1101
  %1202 = vst.msk [vmem:[#allocation3 + $0x108] sm:$0xff] %vm1168, %v1103
  %1203 = vst.msk [vmem:[#allocation3 + $0x110] sm:$0xff] %vm1168, %v1105
  %1204 = vst.msk [vmem:[#allocation3 + $0x118] sm:$0xff] %vm1168, %v1107
  %1205 = vst.msk [vmem:[#allocation3 + $0x120] sm:$0xff] %vm1168, %v1109
  %1206 = vst.msk [vmem:[#allocation3 + $0x128] sm:$0xff] %vm1168, %v1111
  %1207 = vst.msk [vmem:[#allocation3 + $0x130] sm:$0xff] %vm1168, %v1113
  %1208 = vst.msk [vmem:[#allocation3 + $0x138] sm:$0xff] %vm1168, %v1115
  %1209 = vst.msk [vmem:[#allocation3 + $0x140] sm:$0xff] %vm1168, %v1117
  %1210 = vst.msk [vmem:[#allocation3 + $0x148] sm:$0xff] %vm1168, %v1119
  %1211 = vst.msk [vmem:[#allocation3 + $0x150] sm:$0xff] %vm1168, %v1121
  %1212 = vst.msk [vmem:[#allocation3 + $0x158] sm:$0xff] %vm1168, %v1123
  %v1213 = vld [vmem:[#allocation2 + $0x12] sm:$0xff]
  %v1214 = vld [vmem:[#allocation2 + $0x1a] sm:$0xff]
  %v1215 = vld [vmem:[#allocation2 + $0x22] sm:$0xff]
  %v1216 = vld [vmem:[#allocation2 + $0x2a] sm:$0xff]
  %v1217 = vld [vmem:[#allocation2 + $0x32] sm:$0xff]
  %v1218 = vld [vmem:[#allocation2 + $0x3a] sm:$0xff]
  %v1219 = vld [vmem:[#allocation2 + $0x42] sm:$0xff]
  %v1220 = vld [vmem:[#allocation2 + $0x4a] sm:$0xff]
  %v1221 = vld [vmem:[#allocation2 + $0x52] sm:$0xff]
  %v1222 = vld [vmem:[#allocation2 + $0x5a] sm:$0xff]
  %v1223 = vld [vmem:[#allocation2 + $0x62] sm:$0xff]
  %v1224 = vld [vmem:[#allocation2 + $0x6a] sm:$0xff]
  %v1225 = vld [vmem:[#allocation2 + $0x72] sm:$0xff]
  %v1226 = vld [vmem:[#allocation2 + $0x7a] sm:$0xff]
  %v1227 = vld [vmem:[#allocation2 + $0x82] sm:$0xff]
  %v1228 = vld [vmem:[#allocation2 + $0x8a] sm:$0xff]
  %v1229 = vld [vmem:[#allocation2 + $0x92] sm:$0xff]
  %v1230 = vld [vmem:[#allocation2 + $0x9a] sm:$0xff]
  %v1231 = vld [vmem:[#allocation2 + $0xa2] sm:$0xff]
  %v1232 = vld [vmem:[#allocation2 + $0xaa] sm:$0xff]
  %v1233 = vld [vmem:[#allocation2 + $0xb2] sm:$0xff]
  %v1234 = vld [vmem:[#allocation2 + $0xba] sm:$0xff]
  %v1235 = vld [vmem:[#allocation2 + $0xc2] sm:$0xff]
  %v1236 = vld [vmem:[#allocation2 + $0xca] sm:$0xff]
  %v1237 = vld [vmem:[#allocation2 + $0xd2] sm:$0xff]
  %v1238 = vld [vmem:[#allocation2 + $0xda] sm:$0xff]
  %v1239 = vld [vmem:[#allocation2 + $0xe2] sm:$0xff]
  %v1240 = vld [vmem:[#allocation2 + $0xea] sm:$0xff]
  %v1241 = vld [vmem:[#allocation2 + $0xf2] sm:$0xff]
  %v1242 = vld [vmem:[#allocation2 + $0xfa] sm:$0xff]
  %v1243 = vld [vmem:[#allocation2 + $0x102] sm:$0xff]
  %v1244 = vld [vmem:[#allocation2 + $0x10a] sm:$0xff]
  %v1245 = vld [vmem:[#allocation2 + $0x112] sm:$0xff]
  %v1246 = vld [vmem:[#allocation2 + $0x11a] sm:$0xff]
  %v1247 = vld [vmem:[#allocation2 + $0x122] sm:$0xff]
  %v1248 = vld [vmem:[#allocation2 + $0x12a] sm:$0xff]
  %v1249 = vld [vmem:[#allocation2 + $0x132] sm:$0xff]
  %v1250 = vld [vmem:[#allocation2 + $0x13a] sm:$0xff]
  %v1251 = vld [vmem:[#allocation2 + $0x142] sm:$0xff]
  %v1252 = vld [vmem:[#allocation2 + $0x14a] sm:$0xff]
  %v1253 = vld [vmem:[#allocation2 + $0x152] sm:$0xff]
  %v1254 = vld [vmem:[#allocation2 + $0x15a] sm:$0xff]
  %v1255 = vld [vmem:[#allocation2 + $0x162] sm:$0xff]
  %v1256 = vld [vmem:[#allocation2 + $0x16a] sm:$0xff]
  %v1257 = vld [vmem:[#allocation2 + $0x172] sm:$0xff]
  %v1258 = vld [vmem:[#allocation2 + $0x17a] sm:$0xff]
  %v1259 = vld [vmem:[#allocation2 + $0x182] sm:$0xff]
  %v1260 = vld [vmem:[#allocation2 + $0x18a] sm:$0xff]
  %v1261 = vld [vmem:[#allocation2 + $0x192] sm:$0xff]
  %v1262 = vld [vmem:[#allocation2 + $0x19a] sm:$0xff]
  %v1263 = vld [vmem:[#allocation2 + $0x1a2] sm:$0xff]
  %v1264 = vld [vmem:[#allocation2 + $0x1aa] sm:$0xff]
  %v1265 = vld [vmem:[#allocation2 + $0x1b2] sm:$0xff]
  %v1266 = vld [vmem:[#allocation2 + $0x1ba] sm:$0xff]
  %v1267 = vld [vmem:[#allocation2 + $0x1c2] sm:$0xff]
  %v1268 = vld [vmem:[#allocation2 + $0x1ca] sm:$0xff]
  %v1269 = vld [vmem:[#allocation2 + $0x1d2] sm:$0xff]
  %v1270 = vld [vmem:[#allocation2 + $0x1da] sm:$0xff]
  %v1271 = vld [vmem:[#allocation2 + $0x1e2] sm:$0xff]
  %v1272 = vld [vmem:[#allocation2 + $0x1ea] sm:$0xff]
  %v1273 = vld [vmem:[#allocation2 + $0x1f2] sm:$0xff]
  %v1274 = vld [vmem:[#allocation2 + $0x1fa] sm:$0xff]
  %v1275 = vld [vmem:[#allocation2 + $0x202] sm:$0xff]
  %v1276 = vld [vmem:[#allocation2 + $0x20a] sm:$0xff]
  %v1277 = vld [vmem:[#allocation2 + $0x212] sm:$0xff]
  %v1278 = vld [vmem:[#allocation2 + $0x21a] sm:$0xff]
  %v1279 = vld [vmem:[#allocation2 + $0x222] sm:$0xff]
  %v1280 = vld [vmem:[#allocation2 + $0x22a] sm:$0xff]
  %v1281 = vld [vmem:[#allocation2 + $0x232] sm:$0xff]
  %v1282 = vld [vmem:[#allocation2 + $0x23a] sm:$0xff]
  %v1283 = vld [vmem:[#allocation2 + $0x242] sm:$0xff]
  %v1284 = vld [vmem:[#allocation2 + $0x24a] sm:$0xff]
  %v1285 = vld [vmem:[#allocation2 + $0x252] sm:$0xff]
  %v1286 = vld [vmem:[#allocation2 + $0x25a] sm:$0xff]
  %v1287 = vld [vmem:[#allocation2 + $0x262] sm:$0xff]
  %v1288 = vld [vmem:[#allocation2 + $0x26a] sm:$0xff]
  %v1289 = vld [vmem:[#allocation2 + $0x272] sm:$0xff]
  %v1290 = vld [vmem:[#allocation2 + $0x27a] sm:$0xff]
  %v1291 = vld [vmem:[#allocation2 + $0x282] sm:$0xff]
  %v1292 = vld [vmem:[#allocation2 + $0x28a] sm:$0xff]
  %v1293 = vld [vmem:[#allocation2 + $0x292] sm:$0xff]
  %v1294 = vld [vmem:[#allocation2 + $0x29a] sm:$0xff]
  %v1295 = vld [vmem:[#allocation2 + $0x2a2] sm:$0xff]
  %v1296 = vld [vmem:[#allocation2 + $0x2aa] sm:$0xff]
  %v1297 = vld [vmem:[#allocation2 + $0x2b2] sm:$0xff]
  %v1298 = vld [vmem:[#allocation2 + $0x2ba] sm:$0xff]
  %v1299 = vld [vmem:[#allocation2 + $0x2c2] sm:$0xff]
  %v1300 = vld [vmem:[#allocation2 + $0x2ca] sm:$0xff]
  %v1301 = vpack.c.bf16 %v1214, %v1213
  %v1302 = vpack.c.bf16 %v1216, %v1215
  %v1303 = vpack.c.bf16 %v1218, %v1217
  %v1304 = vpack.c.bf16 %v1220, %v1219
  %v1305 = vpack.c.bf16 %v1222, %v1221
  %v1306 = vpack.c.bf16 %v1224, %v1223
  %v1307 = vpack.c.bf16 %v1226, %v1225
  %v1308 = vpack.c.bf16 %v1228, %v1227
  %v1309 = vpack.c.bf16 %v1230, %v1229
  %v1310 = vpack.c.bf16 %v1232, %v1231
  %v1311 = vpack.c.bf16 %v1234, %v1233
  %v1312 = vpack.c.bf16 %v1236, %v1235
  %v1313 = vpack.c.bf16 %v1238, %v1237
  %v1314 = vpack.c.bf16 %v1240, %v1239
  %v1315 = vpack.c.bf16 %v1242, %v1241
  %v1316 = vpack.c.bf16 %v1244, %v1243
  %v1317 = vpack.c.bf16 %v1246, %v1245
  %v1318 = vpack.c.bf16 %v1248, %v1247
  %v1319 = vpack.c.bf16 %v1250, %v1249
  %v1320 = vpack.c.bf16 %v1252, %v1251
  %v1321 = vpack.c.bf16 %v1254, %v1253
  %v1322 = vpack.c.bf16 %v1256, %v1255
  %v1323 = vpack.c.bf16 %v1258, %v1257
  %v1324 = vpack.c.bf16 %v1260, %v1259
  %v1325 = vpack.c.bf16 %v1262, %v1261
  %v1326 = vpack.c.bf16 %v1264, %v1263
  %v1327 = vpack.c.bf16 %v1266, %v1265
  %v1328 = vpack.c.bf16 %v1268, %v1267
  %v1329 = vpack.c.bf16 %v1270, %v1269
  %v1330 = vpack.c.bf16 %v1272, %v1271
  %v1331 = vpack.c.bf16 %v1274, %v1273
  %v1332 = vpack.c.bf16 %v1276, %v1275
  %v1333 = vpack.c.bf16 %v1278, %v1277
  %v1334 = vpack.c.bf16 %v1280, %v1279
  %v1335 = vpack.c.bf16 %v1282, %v1281
  %v1336 = vpack.c.bf16 %v1284, %v1283
  %v1337 = vpack.c.bf16 %v1286, %v1285
  %v1338 = vpack.c.bf16 %v1288, %v1287
  %v1339 = vpack.c.bf16 %v1290, %v1289
  %v1340 = vpack.c.bf16 %v1292, %v1291
  %v1341 = vpack.c.bf16 %v1294, %v1293
  %v1342 = vpack.c.bf16 %v1296, %v1295
  %v1343 = vpack.c.bf16 %v1298, %v1297
  %v1344 = vpack.c.bf16 %v1300, %v1299
  %1389 = vrot.lane.b32.xlu0 %v1301, 12
  %v1390 = vpop.permute.xlu0 %1389
  %1391 = vrot.lane.b32.xlu0 %v1302, 12
  %v1392 = vpop.permute.xlu0 %1391
  %1393 = vrot.lane.b32.xlu0 %v1303, 12
  %v1394 = vpop.permute.xlu0 %1393
  %1395 = vrot.lane.b32.xlu0 %v1304, 12
  %v1396 = vpop.permute.xlu0 %1395
  %1397 = vrot.lane.b32.xlu0 %v1305, 12
  %v1398 = vpop.permute.xlu0 %1397
  %1399 = vrot.lane.b32.xlu0 %v1306, 12
  %v1400 = vpop.permute.xlu0 %1399
  %1401 = vrot.lane.b32.xlu0 %v1307, 12
  %v1402 = vpop.permute.xlu0 %1401
  %1403 = vrot.lane.b32.xlu0 %v1308, 12
  %v1404 = vpop.permute.xlu0 %1403
  %1405 = vrot.lane.b32.xlu0 %v1309, 12
  %v1406 = vpop.permute.xlu0 %1405
  %1407 = vrot.lane.b32.xlu0 %v1310, 12
  %v1408 = vpop.permute.xlu0 %1407
  %1409 = vrot.lane.b32.xlu0 %v1311, 12
  %v1410 = vpop.permute.xlu0 %1409
  %1411 = vrot.lane.b32.xlu0 %v1312, 12
  %v1412 = vpop.permute.xlu0 %1411
  %1413 = vrot.lane.b32.xlu0 %v1313, 12
  %v1414 = vpop.permute.xlu0 %1413
  %1415 = vrot.lane.b32.xlu0 %v1314, 12
  %v1416 = vpop.permute.xlu0 %1415
  %1417 = vrot.lane.b32.xlu0 %v1315, 12
  %v1418 = vpop.permute.xlu0 %1417
  %1419 = vrot.lane.b32.xlu0 %v1316, 12
  %v1420 = vpop.permute.xlu0 %1419
  %1421 = vrot.lane.b32.xlu0 %v1317, 12
  %v1422 = vpop.permute.xlu0 %1421
  %1423 = vrot.lane.b32.xlu0 %v1318, 12
  %v1424 = vpop.permute.xlu0 %1423
  %1425 = vrot.lane.b32.xlu0 %v1319, 12
  %v1426 = vpop.permute.xlu0 %1425
  %1427 = vrot.lane.b32.xlu0 %v1320, 12
  %v1428 = vpop.permute.xlu0 %1427
  %1429 = vrot.lane.b32.xlu0 %v1321, 12
  %v1430 = vpop.permute.xlu0 %1429
  %1431 = vrot.lane.b32.xlu0 %v1322, 12
  %v1432 = vpop.permute.xlu0 %1431
  %1433 = vrot.lane.b32.xlu0 %v1323, 12
  %v1434 = vpop.permute.xlu0 %1433
  %1435 = vrot.lane.b32.xlu0 %v1324, 12
  %v1436 = vpop.permute.xlu0 %1435
  %1437 = vrot.lane.b32.xlu0 %v1325, 12
  %v1438 = vpop.permute.xlu0 %1437
  %1439 = vrot.lane.b32.xlu0 %v1326, 12
  %v1440 = vpop.permute.xlu0 %1439
  %1441 = vrot.lane.b32.xlu0 %v1327, 12
  %v1442 = vpop.permute.xlu0 %1441
  %1443 = vrot.lane.b32.xlu0 %v1328, 12
  %v1444 = vpop.permute.xlu0 %1443
  %1445 = vrot.lane.b32.xlu0 %v1329, 12
  %v1446 = vpop.permute.xlu0 %1445
  %1447 = vrot.lane.b32.xlu0 %v1330, 12
  %v1448 = vpop.permute.xlu0 %1447
  %1449 = vrot.lane.b32.xlu0 %v1331, 12
  %v1450 = vpop.permute.xlu0 %1449
  %1451 = vrot.lane.b32.xlu0 %v1332, 12
  %v1452 = vpop.permute.xlu0 %1451
  %1453 = vrot.lane.b32.xlu0 %v1333, 12
  %v1454 = vpop.permute.xlu0 %1453
  %1455 = vrot.lane.b32.xlu0 %v1334, 12
  %v1456 = vpop.permute.xlu0 %1455
  %1457 = vrot.lane.b32.xlu0 %v1335, 12
  %v1458 = vpop.permute.xlu0 %1457
  %1459 = vrot.lane.b32.xlu0 %v1336, 12
  %v1460 = vpop.permute.xlu0 %1459
  %1461 = vrot.lane.b32.xlu0 %v1337, 12
  %v1462 = vpop.permute.xlu0 %1461
  %1463 = vrot.lane.b32.xlu0 %v1338, 12
  %v1464 = vpop.permute.xlu0 %1463
  %1465 = vrot.lane.b32.xlu0 %v1339, 12
  %v1466 = vpop.permute.xlu0 %1465
  %1467 = vrot.lane.b32.xlu0 %v1340, 12
  %v1468 = vpop.permute.xlu0 %1467
  %1469 = vrot.lane.b32.xlu0 %v1341, 12
  %v1470 = vpop.permute.xlu0 %1469
  %1471 = vrot.lane.b32.xlu0 %v1342, 12
  %v1472 = vpop.permute.xlu0 %1471
  %1473 = vrot.lane.b32.xlu0 %v1343, 12
  %v1474 = vpop.permute.xlu0 %1473
  %1475 = vrot.lane.b32.xlu0 %v1344, 12
  %v1476 = vpop.permute.xlu0 %1475
  %vm1521 = vcmask 130144
  %1522 = vst.msk [vmem:[#allocation3] sm:$0xff] %vm1521, %v1390
  %1523 = vst.msk [vmem:[#allocation3 + $0x8] sm:$0xff] %vm1521, %v1392
  %1524 = vst.msk [vmem:[#allocation3 + $0x10] sm:$0xff] %vm1521, %v1394
  %1525 = vst.msk [vmem:[#allocation3 + $0x18] sm:$0xff] %vm1521, %v1396
  %1526 = vst.msk [vmem:[#allocation3 + $0x20] sm:$0xff] %vm1521, %v1398
  %1527 = vst.msk [vmem:[#allocation3 + $0x28] sm:$0xff] %vm1521, %v1400
  %1528 = vst.msk [vmem:[#allocation3 + $0x30] sm:$0xff] %vm1521, %v1402
  %1529 = vst.msk [vmem:[#allocation3 + $0x38] sm:$0xff] %vm1521, %v1404
  %1530 = vst.msk [vmem:[#allocation3 + $0x40] sm:$0xff] %vm1521, %v1406
  %1531 = vst.msk [vmem:[#allocation3 + $0x48] sm:$0xff] %vm1521, %v1408
  %1532 = vst.msk [vmem:[#allocation3 + $0x50] sm:$0xff] %vm1521, %v1410
  %1533 = vst.msk [vmem:[#allocation3 + $0x58] sm:$0xff] %vm1521, %v1412
  %1534 = vst.msk [vmem:[#allocation3 + $0x60] sm:$0xff] %vm1521, %v1414
  %1535 = vst.msk [vmem:[#allocation3 + $0x68] sm:$0xff] %vm1521, %v1416
  %1536 = vst.msk [vmem:[#allocation3 + $0x70] sm:$0xff] %vm1521, %v1418
  %1537 = vst.msk [vmem:[#allocation3 + $0x78] sm:$0xff] %vm1521, %v1420
  %1538 = vst.msk [vmem:[#allocation3 + $0x80] sm:$0xff] %vm1521, %v1422
  %1539 = vst.msk [vmem:[#allocation3 + $0x88] sm:$0xff] %vm1521, %v1424
  %1540 = vst.msk [vmem:[#allocation3 + $0x90] sm:$0xff] %vm1521, %v1426
  %1541 = vst.msk [vmem:[#allocation3 + $0x98] sm:$0xff] %vm1521, %v1428
  %1542 = vst.msk [vmem:[#allocation3 + $0xa0] sm:$0xff] %vm1521, %v1430
  %1543 = vst.msk [vmem:[#allocation3 + $0xa8] sm:$0xff] %vm1521, %v1432
  %1544 = vst.msk [vmem:[#allocation3 + $0xb0] sm:$0xff] %vm1521, %v1434
  %1545 = vst.msk [vmem:[#allocation3 + $0xb8] sm:$0xff] %vm1521, %v1436
  %1546 = vst.msk [vmem:[#allocation3 + $0xc0] sm:$0xff] %vm1521, %v1438
  %1547 = vst.msk [vmem:[#allocation3 + $0xc8] sm:$0xff] %vm1521, %v1440
  %1548 = vst.msk [vmem:[#allocation3 + $0xd0] sm:$0xff] %vm1521, %v1442
  %1549 = vst.msk [vmem:[#allocation3 + $0xd8] sm:$0xff] %vm1521, %v1444
  %1550 = vst.msk [vmem:[#allocation3 + $0xe0] sm:$0xff] %vm1521, %v1446
  %1551 = vst.msk [vmem:[#allocation3 + $0xe8] sm:$0xff] %vm1521, %v1448
  %1552 = vst.msk [vmem:[#allocation3 + $0xf0] sm:$0xff] %vm1521, %v1450
  %1553 = vst.msk [vmem:[#allocation3 + $0xf8] sm:$0xff] %vm1521, %v1452
  %1554 = vst.msk [vmem:[#allocation3 + $0x100] sm:$0xff] %vm1521, %v1454
  %1555 = vst.msk [vmem:[#allocation3 + $0x108] sm:$0xff] %vm1521, %v1456
  %1556 = vst.msk [vmem:[#allocation3 + $0x110] sm:$0xff] %vm1521, %v1458
  %1557 = vst.msk [vmem:[#allocation3 + $0x118] sm:$0xff] %vm1521, %v1460
  %1558 = vst.msk [vmem:[#allocation3 + $0x120] sm:$0xff] %vm1521, %v1462
  %1559 = vst.msk [vmem:[#allocation3 + $0x128] sm:$0xff] %vm1521, %v1464
  %1560 = vst.msk [vmem:[#allocation3 + $0x130] sm:$0xff] %vm1521, %v1466
  %1561 = vst.msk [vmem:[#allocation3 + $0x138] sm:$0xff] %vm1521, %v1468
  %1562 = vst.msk [vmem:[#allocation3 + $0x140] sm:$0xff] %vm1521, %v1470
  %1563 = vst.msk [vmem:[#allocation3 + $0x148] sm:$0xff] %vm1521, %v1472
  %1564 = vst.msk [vmem:[#allocation3 + $0x150] sm:$0xff] %vm1521, %v1474
  %1565 = vst.msk [vmem:[#allocation3 + $0x158] sm:$0xff] %vm1521, %v1476
  %v1566 = vld [vmem:[#allocation2 + $0x13] sm:$0xff]
  %v1567 = vld [vmem:[#allocation2 + $0x1b] sm:$0xff]
  %v1568 = vld [vmem:[#allocation2 + $0x23] sm:$0xff]
  %v1569 = vld [vmem:[#allocation2 + $0x2b] sm:$0xff]
  %v1570 = vld [vmem:[#allocation2 + $0x33] sm:$0xff]
  %v1571 = vld [vmem:[#allocation2 + $0x3b] sm:$0xff]
  %v1572 = vld [vmem:[#allocation2 + $0x43] sm:$0xff]
  %v1573 = vld [vmem:[#allocation2 + $0x4b] sm:$0xff]
  %v1574 = vld [vmem:[#allocation2 + $0x53] sm:$0xff]
  %v1575 = vld [vmem:[#allocation2 + $0x5b] sm:$0xff]
  %v1576 = vld [vmem:[#allocation2 + $0x63] sm:$0xff]
  %v1577 = vld [vmem:[#allocation2 + $0x6b] sm:$0xff]
  %v1578 = vld [vmem:[#allocation2 + $0x73] sm:$0xff]
  %v1579 = vld [vmem:[#allocation2 + $0x7b] sm:$0xff]
  %v1580 = vld [vmem:[#allocation2 + $0x83] sm:$0xff]
  %v1581 = vld [vmem:[#allocation2 + $0x8b] sm:$0xff]
  %v1582 = vld [vmem:[#allocation2 + $0x93] sm:$0xff]
  %v1583 = vld [vmem:[#allocation2 + $0x9b] sm:$0xff]
  %v1584 = vld [vmem:[#allocation2 + $0xa3] sm:$0xff]
  %v1585 = vld [vmem:[#allocation2 + $0xab] sm:$0xff]
  %v1586 = vld [vmem:[#allocation2 + $0xb3] sm:$0xff]
  %v1587 = vld [vmem:[#allocation2 + $0xbb] sm:$0xff]
  %v1588 = vld [vmem:[#allocation2 + $0xc3] sm:$0xff]
  %v1589 = vld [vmem:[#allocation2 + $0xcb] sm:$0xff]
  %v1590 = vld [vmem:[#allocation2 + $0xd3] sm:$0xff]
  %v1591 = vld [vmem:[#allocation2 + $0xdb] sm:$0xff]
  %v1592 = vld [vmem:[#allocation2 + $0xe3] sm:$0xff]
  %v1593 = vld [vmem:[#allocation2 + $0xeb] sm:$0xff]
  %v1594 = vld [vmem:[#allocation2 + $0xf3] sm:$0xff]
  %v1595 = vld [vmem:[#allocation2 + $0xfb] sm:$0xff]
  %v1596 = vld [vmem:[#allocation2 + $0x103] sm:$0xff]
  %v1597 = vld [vmem:[#allocation2 + $0x10b] sm:$0xff]
  %v1598 = vld [vmem:[#allocation2 + $0x113] sm:$0xff]
  %v1599 = vld [vmem:[#allocation2 + $0x11b] sm:$0xff]
  %v1600 = vld [vmem:[#allocation2 + $0x123] sm:$0xff]
  %v1601 = vld [vmem:[#allocation2 + $0x12b] sm:$0xff]
  %v1602 = vld [vmem:[#allocation2 + $0x133] sm:$0xff]
  %v1603 = vld [vmem:[#allocation2 + $0x13b] sm:$0xff]
  %v1604 = vld [vmem:[#allocation2 + $0x143] sm:$0xff]
  %v1605 = vld [vmem:[#allocation2 + $0x14b] sm:$0xff]
  %v1606 = vld [vmem:[#allocation2 + $0x153] sm:$0xff]
  %v1607 = vld [vmem:[#allocation2 + $0x15b] sm:$0xff]
  %v1608 = vld [vmem:[#allocation2 + $0x163] sm:$0xff]
  %v1609 = vld [vmem:[#allocation2 + $0x16b] sm:$0xff]
  %v1610 = vld [vmem:[#allocation2 + $0x173] sm:$0xff]
  %v1611 = vld [vmem:[#allocation2 + $0x17b] sm:$0xff]
  %v1612 = vld [vmem:[#allocation2 + $0x183] sm:$0xff]
  %v1613 = vld [vmem:[#allocation2 + $0x18b] sm:$0xff]
  %v1614 = vld [vmem:[#allocation2 + $0x193] sm:$0xff]
  %v1615 = vld [vmem:[#allocation2 + $0x19b] sm:$0xff]
  %v1616 = vld [vmem:[#allocation2 + $0x1a3] sm:$0xff]
  %v1617 = vld [vmem:[#allocation2 + $0x1ab] sm:$0xff]
  %v1618 = vld [vmem:[#allocation2 + $0x1b3] sm:$0xff]
  %v1619 = vld [vmem:[#allocation2 + $0x1bb] sm:$0xff]
  %v1620 = vld [vmem:[#allocation2 + $0x1c3] sm:$0xff]
  %v1621 = vld [vmem:[#allocation2 + $0x1cb] sm:$0xff]
  %v1622 = vld [vmem:[#allocation2 + $0x1d3] sm:$0xff]
  %v1623 = vld [vmem:[#allocation2 + $0x1db] sm:$0xff]
  %v1624 = vld [vmem:[#allocation2 + $0x1e3] sm:$0xff]
  %v1625 = vld [vmem:[#allocation2 + $0x1eb] sm:$0xff]
  %v1626 = vld [vmem:[#allocation2 + $0x1f3] sm:$0xff]
  %v1627 = vld [vmem:[#allocation2 + $0x1fb] sm:$0xff]
  %v1628 = vld [vmem:[#allocation2 + $0x203] sm:$0xff]
  %v1629 = vld [vmem:[#allocation2 + $0x20b] sm:$0xff]
  %v1630 = vld [vmem:[#allocation2 + $0x213] sm:$0xff]
  %v1631 = vld [vmem:[#allocation2 + $0x21b] sm:$0xff]
  %v1632 = vld [vmem:[#allocation2 + $0x223] sm:$0xff]
  %v1633 = vld [vmem:[#allocation2 + $0x22b] sm:$0xff]
  %v1634 = vld [vmem:[#allocation2 + $0x233] sm:$0xff]
  %v1635 = vld [vmem:[#allocation2 + $0x23b] sm:$0xff]
  %v1636 = vld [vmem:[#allocation2 + $0x243] sm:$0xff]
  %v1637 = vld [vmem:[#allocation2 + $0x24b] sm:$0xff]
  %v1638 = vld [vmem:[#allocation2 + $0x253] sm:$0xff]
  %v1639 = vld [vmem:[#allocation2 + $0x25b] sm:$0xff]
  %v1640 = vld [vmem:[#allocation2 + $0x263] sm:$0xff]
  %v1641 = vld [vmem:[#allocation2 + $0x26b] sm:$0xff]
  %v1642 = vld [vmem:[#allocation2 + $0x273] sm:$0xff]
  %v1643 = vld [vmem:[#allocation2 + $0x27b] sm:$0xff]
  %v1644 = vld [vmem:[#allocation2 + $0x283] sm:$0xff]
  %v1645 = vld [vmem:[#allocation2 + $0x28b] sm:$0xff]
  %v1646 = vld [vmem:[#allocation2 + $0x293] sm:$0xff]
  %v1647 = vld [vmem:[#allocation2 + $0x29b] sm:$0xff]
  %v1648 = vld [vmem:[#allocation2 + $0x2a3] sm:$0xff]
  %v1649 = vld [vmem:[#allocation2 + $0x2ab] sm:$0xff]
  %v1650 = vld [vmem:[#allocation2 + $0x2b3] sm:$0xff]
  %v1651 = vld [vmem:[#allocation2 + $0x2bb] sm:$0xff]
  %v1652 = vld [vmem:[#allocation2 + $0x2c3] sm:$0xff]
  %v1653 = vld [vmem:[#allocation2 + $0x2cb] sm:$0xff]
  %v1654 = vpack.c.bf16 %v1567, %v1566
  %v1655 = vpack.c.bf16 %v1569, %v1568
  %v1656 = vpack.c.bf16 %v1571, %v1570
  %v1657 = vpack.c.bf16 %v1573, %v1572
  %v1658 = vpack.c.bf16 %v1575, %v1574
  %v1659 = vpack.c.bf16 %v1577, %v1576
  %v1660 = vpack.c.bf16 %v1579, %v1578
  %v1661 = vpack.c.bf16 %v1581, %v1580
  %v1662 = vpack.c.bf16 %v1583, %v1582
  %v1663 = vpack.c.bf16 %v1585, %v1584
  %v1664 = vpack.c.bf16 %v1587, %v1586
  %v1665 = vpack.c.bf16 %v1589, %v1588
  %v1666 = vpack.c.bf16 %v1591, %v1590
  %v1667 = vpack.c.bf16 %v1593, %v1592
  %v1668 = vpack.c.bf16 %v1595, %v1594
  %v1669 = vpack.c.bf16 %v1597, %v1596
  %v1670 = vpack.c.bf16 %v1599, %v1598
  %v1671 = vpack.c.bf16 %v1601, %v1600
  %v1672 = vpack.c.bf16 %v1603, %v1602
  %v1673 = vpack.c.bf16 %v1605, %v1604
  %v1674 = vpack.c.bf16 %v1607, %v1606
  %v1675 = vpack.c.bf16 %v1609, %v1608
  %v1676 = vpack.c.bf16 %v1611, %v1610
  %v1677 = vpack.c.bf16 %v1613, %v1612
  %v1678 = vpack.c.bf16 %v1615, %v1614
  %v1679 = vpack.c.bf16 %v1617, %v1616
  %v1680 = vpack.c.bf16 %v1619, %v1618
  %v1681 = vpack.c.bf16 %v1621, %v1620
  %v1682 = vpack.c.bf16 %v1623, %v1622
  %v1683 = vpack.c.bf16 %v1625, %v1624
  %v1684 = vpack.c.bf16 %v1627, %v1626
  %v1685 = vpack.c.bf16 %v1629, %v1628
  %v1686 = vpack.c.bf16 %v1631, %v1630
  %v1687 = vpack.c.bf16 %v1633, %v1632
  %v1688 = vpack.c.bf16 %v1635, %v1634
  %v1689 = vpack.c.bf16 %v1637, %v1636
  %v1690 = vpack.c.bf16 %v1639, %v1638
  %v1691 = vpack.c.bf16 %v1641, %v1640
  %v1692 = vpack.c.bf16 %v1643, %v1642
  %v1693 = vpack.c.bf16 %v1645, %v1644
  %v1694 = vpack.c.bf16 %v1647, %v1646
  %v1695 = vpack.c.bf16 %v1649, %v1648
  %v1696 = vpack.c.bf16 %v1651, %v1650
  %v1697 = vpack.c.bf16 %v1653, %v1652
  %1742 = vrot.lane.b32.xlu0 %v1654, 16
  %v1743 = vpop.permute.xlu0 %1742
  %1744 = vrot.lane.b32.xlu0 %v1655, 16
  %v1745 = vpop.permute.xlu0 %1744
  %1746 = vrot.lane.b32.xlu0 %v1656, 16
  %v1747 = vpop.permute.xlu0 %1746
  %1748 = vrot.lane.b32.xlu0 %v1657, 16
  %v1749 = vpop.permute.xlu0 %1748
  %1750 = vrot.lane.b32.xlu0 %v1658, 16
  %v1751 = vpop.permute.xlu0 %1750
  %1752 = vrot.lane.b32.xlu0 %v1659, 16
  %v1753 = vpop.permute.xlu0 %1752
  %1754 = vrot.lane.b32.xlu0 %v1660, 16
  %v1755 = vpop.permute.xlu0 %1754
  %1756 = vrot.lane.b32.xlu0 %v1661, 16
  %v1757 = vpop.permute.xlu0 %1756
  %1758 = vrot.lane.b32.xlu0 %v1662, 16
  %v1759 = vpop.permute.xlu0 %1758
  %1760 = vrot.lane.b32.xlu0 %v1663, 16
  %v1761 = vpop.permute.xlu0 %1760
  %1762 = vrot.lane.b32.xlu0 %v1664, 16
  %v1763 = vpop.permute.xlu0 %1762
  %1764 = vrot.lane.b32.xlu0 %v1665, 16
  %v1765 = vpop.permute.xlu0 %1764
  %1766 = vrot.lane.b32.xlu0 %v1666, 16
  %v1767 = vpop.permute.xlu0 %1766
  %1768 = vrot.lane.b32.xlu0 %v1667, 16
  %v1769 = vpop.permute.xlu0 %1768
  %1770 = vrot.lane.b32.xlu0 %v1668, 16
  %v1771 = vpop.permute.xlu0 %1770
  %1772 = vrot.lane.b32.xlu0 %v1669, 16
  %v1773 = vpop.permute.xlu0 %1772
  %1774 = vrot.lane.b32.xlu0 %v1670, 16
  %v1775 = vpop.permute.xlu0 %1774
  %1776 = vrot.lane.b32.xlu0 %v1671, 16
  %v1777 = vpop.permute.xlu0 %1776
  %1778 = vrot.lane.b32.xlu0 %v1672, 16
  %v1779 = vpop.permute.xlu0 %1778
  %1780 = vrot.lane.b32.xlu0 %v1673, 16
  %v1781 = vpop.permute.xlu0 %1780
  %1782 = vrot.lane.b32.xlu0 %v1674, 16
  %v1783 = vpop.permute.xlu0 %1782
  %1784 = vrot.lane.b32.xlu0 %v1675, 16
  %v1785 = vpop.permute.xlu0 %1784
  %1786 = vrot.lane.b32.xlu0 %v1676, 16
  %v1787 = vpop.permute.xlu0 %1786
  %1788 = vrot.lane.b32.xlu0 %v1677, 16
  %v1789 = vpop.permute.xlu0 %1788
  %1790 = vrot.lane.b32.xlu0 %v1678, 16
  %v1791 = vpop.permute.xlu0 %1790
  %1792 = vrot.lane.b32.xlu0 %v1679, 16
  %v1793 = vpop.permute.xlu0 %1792
  %1794 = vrot.lane.b32.xlu0 %v1680, 16
  %v1795 = vpop.permute.xlu0 %1794
  %1796 = vrot.lane.b32.xlu0 %v1681, 16
  %v1797 = vpop.permute.xlu0 %1796
  %1798 = vrot.lane.b32.xlu0 %v1682, 16
  %v1799 = vpop.permute.xlu0 %1798
  %1800 = vrot.lane.b32.xlu0 %v1683, 16
  %v1801 = vpop.permute.xlu0 %1800
  %1802 = vrot.lane.b32.xlu0 %v1684, 16
  %v1803 = vpop.permute.xlu0 %1802
  %1804 = vrot.lane.b32.xlu0 %v1685, 16
  %v1805 = vpop.permute.xlu0 %1804
  %1806 = vrot.lane.b32.xlu0 %v1686, 16
  %v1807 = vpop.permute.xlu0 %1806
  %1808 = vrot.lane.b32.xlu0 %v1687, 16
  %v1809 = vpop.permute.xlu0 %1808
  %1810 = vrot.lane.b32.xlu0 %v1688, 16
  %v1811 = vpop.permute.xlu0 %1810
  %1812 = vrot.lane.b32.xlu0 %v1689, 16
  %v1813 = vpop.permute.xlu0 %1812
  %1814 = vrot.lane.b32.xlu0 %v1690, 16
  %v1815 = vpop.permute.xlu0 %1814
  %1816 = vrot.lane.b32.xlu0 %v1691, 16
  %v1817 = vpop.permute.xlu0 %1816
  %1818 = vrot.lane.b32.xlu0 %v1692, 16
  %v1819 = vpop.permute.xlu0 %1818
  %1820 = vrot.lane.b32.xlu0 %v1693, 16
  %v1821 = vpop.permute.xlu0 %1820
  %1822 = vrot.lane.b32.xlu0 %v1694, 16
  %v1823 = vpop.permute.xlu0 %1822
  %1824 = vrot.lane.b32.xlu0 %v1695, 16
  %v1825 = vpop.permute.xlu0 %1824
  %1826 = vrot.lane.b32.xlu0 %v1696, 16
  %v1827 = vpop.permute.xlu0 %1826
  %1828 = vrot.lane.b32.xlu0 %v1697, 16
  %v1829 = vpop.permute.xlu0 %1828
  %vm1874 = vcmask 162944
  %1875 = vst.msk [vmem:[#allocation3] sm:$0xff] %vm1874, %v1743
  %1876 = vst.msk [vmem:[#allocation3 + $0x8] sm:$0xff] %vm1874, %v1745
  %1877 = vst.msk [vmem:[#allocation3 + $0x10] sm:$0xff] %vm1874, %v1747
  %1878 = vst.msk [vmem:[#allocation3 + $0x18] sm:$0xff] %vm1874, %v1749
  %1879 = vst.msk [vmem:[#allocation3 + $0x20] sm:$0xff] %vm1874, %v1751
  %1880 = vst.msk [vmem:[#allocation3 + $0x28] sm:$0xff] %vm1874, %v1753
  %1881 = vst.msk [vmem:[#allocation3 + $0x30] sm:$0xff] %vm1874, %v1755
  %1882 = vst.msk [vmem:[#allocation3 + $0x38] sm:$0xff] %vm1874, %v1757
  %1883 = vst.msk [vmem:[#allocation3 + $0x40] sm:$0xff] %vm1874, %v1759
  %1884 = vst.msk [vmem:[#allocation3 + $0x48] sm:$0xff] %vm1874, %v1761
  %1885 = vst.msk [vmem:[#allocation3 + $0x50] sm:$0xff] %vm1874, %v1763
  %1886 = vst.msk [vmem:[#allocation3 + $0x58] sm:$0xff] %vm1874, %v1765
  %1887 = vst.msk [vmem:[#allocation3 + $0x60] sm:$0xff] %vm1874, %v1767
  %1888 = vst.msk [vmem:[#allocation3 + $0x68] sm:$0xff] %vm1874, %v1769
  %1889 = vst.msk [vmem:[#allocation3 + $0x70] sm:$0xff] %vm1874, %v1771
  %1890 = vst.msk [vmem:[#allocation3 + $0x78] sm:$0xff] %vm1874, %v1773
  %1891 = vst.msk [vmem:[#allocation3 + $0x80] sm:$0xff] %vm1874, %v1775
  %1892 = vst.msk [vmem:[#allocation3 + $0x88] sm:$0xff] %vm1874, %v1777
  %1893 = vst.msk [vmem:[#allocation3 + $0x90] sm:$0xff] %vm1874, %v1779
  %1894 = vst.msk [vmem:[#allocation3 + $0x98] sm:$0xff] %vm1874, %v1781
  %1895 = vst.msk [vmem:[#allocation3 + $0xa0] sm:$0xff] %vm1874, %v1783
  %1896 = vst.msk [vmem:[#allocation3 + $0xa8] sm:$0xff] %vm1874, %v1785
  %1897 = vst.msk [vmem:[#allocation3 + $0xb0] sm:$0xff] %vm1874, %v1787
  %1898 = vst.msk [vmem:[#allocation3 + $0xb8] sm:$0xff] %vm1874, %v1789
  %1899 = vst.msk [vmem:[#allocation3 + $0xc0] sm:$0xff] %vm1874, %v1791
  %1900 = vst.msk [vmem:[#allocation3 + $0xc8] sm:$0xff] %vm1874, %v1793
  %1901 = vst.msk [vmem:[#allocation3 + $0xd0] sm:$0xff] %vm1874, %v1795
  %1902 = vst.msk [vmem:[#allocation3 + $0xd8] sm:$0xff] %vm1874, %v1797
  %1903 = vst.msk [vmem:[#allocation3 + $0xe0] sm:$0xff] %vm1874, %v1799
  %1904 = vst.msk [vmem:[#allocation3 + $0xe8] sm:$0xff] %vm1874, %v1801
  %1905 = vst.msk [vmem:[#allocation3 + $0xf0] sm:$0xff] %vm1874, %v1803
  %1906 = vst.msk [vmem:[#allocation3 + $0xf8] sm:$0xff] %vm1874, %v1805
  %1907 = vst.msk [vmem:[#allocation3 + $0x100] sm:$0xff] %vm1874, %v1807
  %1908 = vst.msk [vmem:[#allocation3 + $0x108] sm:$0xff] %vm1874, %v1809
  %1909 = vst.msk [vmem:[#allocation3 + $0x110] sm:$0xff] %vm1874, %v1811
  %1910 = vst.msk [vmem:[#allocation3 + $0x118] sm:$0xff] %vm1874, %v1813
  %1911 = vst.msk [vmem:[#allocation3 + $0x120] sm:$0xff] %vm1874, %v1815
  %1912 = vst.msk [vmem:[#allocation3 + $0x128] sm:$0xff] %vm1874, %v1817
  %1913 = vst.msk [vmem:[#allocation3 + $0x130] sm:$0xff] %vm1874, %v1819
  %1914 = vst.msk [vmem:[#allocation3 + $0x138] sm:$0xff] %vm1874, %v1821
  %1915 = vst.msk [vmem:[#allocation3 + $0x140] sm:$0xff] %vm1874, %v1823
  %1916 = vst.msk [vmem:[#allocation3 + $0x148] sm:$0xff] %vm1874, %v1825
  %1917 = vst.msk [vmem:[#allocation3 + $0x150] sm:$0xff] %vm1874, %v1827
  %1918 = vst.msk [vmem:[#allocation3 + $0x158] sm:$0xff] %vm1874, %v1829
  %v1919 = vld [vmem:[#allocation2 + $0x14] sm:$0xff]
  %v1920 = vld [vmem:[#allocation2 + $0x1c] sm:$0xff]
  %v1921 = vld [vmem:[#allocation2 + $0x24] sm:$0xff]
  %v1922 = vld [vmem:[#allocation2 + $0x2c] sm:$0xff]
  %v1923 = vld [vmem:[#allocation2 + $0x34] sm:$0xff]
  %v1924 = vld [vmem:[#allocation2 + $0x3c] sm:$0xff]
  %v1925 = vld [vmem:[#allocation2 + $0x44] sm:$0xff]
  %v1926 = vld [vmem:[#allocation2 + $0x4c] sm:$0xff]
  %v1927 = vld [vmem:[#allocation2 + $0x54] sm:$0xff]
  %v1928 = vld [vmem:[#allocation2 + $0x5c] sm:$0xff]
  %v1929 = vld [vmem:[#allocation2 + $0x64] sm:$0xff]
  %v1930 = vld [vmem:[#allocation2 + $0x6c] sm:$0xff]
  %v1931 = vld [vmem:[#allocation2 + $0x74] sm:$0xff]
  %v1932 = vld [vmem:[#allocation2 + $0x7c] sm:$0xff]
  %v1933 = vld [vmem:[#allocation2 + $0x84] sm:$0xff]
  %v1934 = vld [vmem:[#allocation2 + $0x8c] sm:$0xff]
  %v1935 = vld [vmem:[#allocation2 + $0x94] sm:$0xff]
  %v1936 = vld [vmem:[#allocation2 + $0x9c] sm:$0xff]
  %v1937 = vld [vmem:[#allocation2 + $0xa4] sm:$0xff]
  %v1938 = vld [vmem:[#allocation2 + $0xac] sm:$0xff]
  %v1939 = vld [vmem:[#allocation2 + $0xb4] sm:$0xff]
  %v1940 = vld [vmem:[#allocation2 + $0xbc] sm:$0xff]
  %v1941 = vld [vmem:[#allocation2 + $0xc4] sm:$0xff]
  %v1942 = vld [vmem:[#allocation2 + $0xcc] sm:$0xff]
  %v1943 = vld [vmem:[#allocation2 + $0xd4] sm:$0xff]
  %v1944 = vld [vmem:[#allocation2 + $0xdc] sm:$0xff]
  %v1945 = vld [vmem:[#allocation2 + $0xe4] sm:$0xff]
  %v1946 = vld [vmem:[#allocation2 + $0xec] sm:$0xff]
  %v1947 = vld [vmem:[#allocation2 + $0xf4] sm:$0xff]
  %v1948 = vld [vmem:[#allocation2 + $0xfc] sm:$0xff]
  %v1949 = vld [vmem:[#allocation2 + $0x104] sm:$0xff]
  %v1950 = vld [vmem:[#allocation2 + $0x10c] sm:$0xff]
  %v1951 = vld [vmem:[#allocation2 + $0x114] sm:$0xff]
  %v1952 = vld [vmem:[#allocation2 + $0x11c] sm:$0xff]
  %v1953 = vld [vmem:[#allocation2 + $0x124] sm:$0xff]
  %v1954 = vld [vmem:[#allocation2 + $0x12c] sm:$0xff]
  %v1955 = vld [vmem:[#allocation2 + $0x134] sm:$0xff]
  %v1956 = vld [vmem:[#allocation2 + $0x13c] sm:$0xff]
  %v1957 = vld [vmem:[#allocation2 + $0x144] sm:$0xff]
  %v1958 = vld [vmem:[#allocation2 + $0x14c] sm:$0xff]
  %v1959 = vld [vmem:[#allocation2 + $0x154] sm:$0xff]
  %v1960 = vld [vmem:[#allocation2 + $0x15c] sm:$0xff]
  %v1961 = vld [vmem:[#allocation2 + $0x164] sm:$0xff]
  %v1962 = vld [vmem:[#allocation2 + $0x16c] sm:$0xff]
  %v1963 = vld [vmem:[#allocation2 + $0x174] sm:$0xff]
  %v1964 = vld [vmem:[#allocation2 + $0x17c] sm:$0xff]
  %v1965 = vld [vmem:[#allocation2 + $0x184] sm:$0xff]
  %v1966 = vld [vmem:[#allocation2 + $0x18c] sm:$0xff]
  %v1967 = vld [vmem:[#allocation2 + $0x194] sm:$0xff]
  %v1968 = vld [vmem:[#allocation2 + $0x19c] sm:$0xff]
  %v1969 = vld [vmem:[#allocation2 + $0x1a4] sm:$0xff]
  %v1970 = vld [vmem:[#allocation2 + $0x1ac] sm:$0xff]
  %v1971 = vld [vmem:[#allocation2 + $0x1b4] sm:$0xff]
  %v1972 = vld [vmem:[#allocation2 + $0x1bc] sm:$0xff]
  %v1973 = vld [vmem:[#allocation2 + $0x1c4] sm:$0xff]
  %v1974 = vld [vmem:[#allocation2 + $0x1cc] sm:$0xff]
  %v1975 = vld [vmem:[#allocation2 + $0x1d4] sm:$0xff]
  %v1976 = vld [vmem:[#allocation2 + $0x1dc] sm:$0xff]
  %v1977 = vld [vmem:[#allocation2 + $0x1e4] sm:$0xff]
  %v1978 = vld [vmem:[#allocation2 + $0x1ec] sm:$0xff]
  %v1979 = vld [vmem:[#allocation2 + $0x1f4] sm:$0xff]
  %v1980 = vld [vmem:[#allocation2 + $0x1fc] sm:$0xff]
  %v1981 = vld [vmem:[#allocation2 + $0x204] sm:$0xff]
  %v1982 = vld [vmem:[#allocation2 + $0x20c] sm:$0xff]
  %v1983 = vld [vmem:[#allocation2 + $0x214] sm:$0xff]
  %v1984 = vld [vmem:[#allocation2 + $0x21c] sm:$0xff]
  %v1985 = vld [vmem:[#allocation2 + $0x224] sm:$0xff]
  %v1986 = vld [vmem:[#allocation2 + $0x22c] sm:$0xff]
  %v1987 = vld [vmem:[#allocation2 + $0x234] sm:$0xff]
  %v1988 = vld [vmem:[#allocation2 + $0x23c] sm:$0xff]
  %v1989 = vld [vmem:[#allocation2 + $0x244] sm:$0xff]
  %v1990 = vld [vmem:[#allocation2 + $0x24c] sm:$0xff]
  %v1991 = vld [vmem:[#allocation2 + $0x254] sm:$0xff]
  %v1992 = vld [vmem:[#allocation2 + $0x25c] sm:$0xff]
  %v1993 = vld [vmem:[#allocation2 + $0x264] sm:$0xff]
  %v1994 = vld [vmem:[#allocation2 + $0x26c] sm:$0xff]
  %v1995 = vld [vmem:[#allocation2 + $0x274] sm:$0xff]
  %v1996 = vld [vmem:[#allocation2 + $0x27c] sm:$0xff]
  %v1997 = vld [vmem:[#allocation2 + $0x284] sm:$0xff]
  %v1998 = vld [vmem:[#allocation2 + $0x28c] sm:$0xff]
  %v1999 = vld [vmem:[#allocation2 + $0x294] sm:$0xff]
  %v2000 = vld [vmem:[#allocation2 + $0x29c] sm:$0xff]
  %v2001 = vld [vmem:[#allocation2 + $0x2a4] sm:$0xff]
  %v2002 = vld [vmem:[#allocation2 + $0x2ac] sm:$0xff]
  %v2003 = vld [vmem:[#allocation2 + $0x2b4] sm:$0xff]
  %v2004 = vld [vmem:[#allocation2 + $0x2bc] sm:$0xff]
  %v2005 = vld [vmem:[#allocation2 + $0x2c4] sm:$0xff]
  %v2006 = vld [vmem:[#allocation2 + $0x2cc] sm:$0xff]
  %v2007 = vpack.c.bf16 %v1920, %v1919
  %v2008 = vpack.c.bf16 %v1922, %v1921
  %v2009 = vpack.c.bf16 %v1924, %v1923
  %v2010 = vpack.c.bf16 %v1926, %v1925
  %v2011 = vpack.c.bf16 %v1928, %v1927
  %v2012 = vpack.c.bf16 %v1930, %v1929
  %v2013 = vpack.c.bf16 %v1932, %v1931
  %v2014 = vpack.c.bf16 %v1934, %v1933
  %v2015 = vpack.c.bf16 %v1936, %v1935
  %v2016 = vpack.c.bf16 %v1938, %v1937
  %v2017 = vpack.c.bf16 %v1940, %v1939
  %v2018 = vpack.c.bf16 %v1942, %v1941
  %v2019 = vpack.c.bf16 %v1944, %v1943
  %v2020 = vpack.c.bf16 %v1946, %v1945
  %v2021 = vpack.c.bf16 %v1948, %v1947
  %v2022 = vpack.c.bf16 %v1950, %v1949
  %v2023 = vpack.c.bf16 %v1952, %v1951
  %v2024 = vpack.c.bf16 %v1954, %v1953
  %v2025 = vpack.c.bf16 %v1956, %v1955
  %v2026 = vpack.c.bf16 %v1958, %v1957
  %v2027 = vpack.c.bf16 %v1960, %v1959
  %v2028 = vpack.c.bf16 %v1962, %v1961
  %v2029 = vpack.c.bf16 %v1964, %v1963
  %v2030 = vpack.c.bf16 %v1966, %v1965
  %v2031 = vpack.c.bf16 %v1968, %v1967
  %v2032 = vpack.c.bf16 %v1970, %v1969
  %v2033 = vpack.c.bf16 %v1972, %v1971
  %v2034 = vpack.c.bf16 %v1974, %v1973
  %v2035 = vpack.c.bf16 %v1976, %v1975
  %v2036 = vpack.c.bf16 %v1978, %v1977
  %v2037 = vpack.c.bf16 %v1980, %v1979
  %v2038 = vpack.c.bf16 %v1982, %v1981
  %v2039 = vpack.c.bf16 %v1984, %v1983
  %v2040 = vpack.c.bf16 %v1986, %v1985
  %v2041 = vpack.c.bf16 %v1988, %v1987
  %v2042 = vpack.c.bf16 %v1990, %v1989
  %v2043 = vpack.c.bf16 %v1992, %v1991
  %v2044 = vpack.c.bf16 %v1994, %v1993
  %v2045 = vpack.c.bf16 %v1996, %v1995
  %v2046 = vpack.c.bf16 %v1998, %v1997
  %v2047 = vpack.c.bf16 %v2000, %v1999
  %v2048 = vpack.c.bf16 %v2002, %v2001
  %v2049 = vpack.c.bf16 %v2004, %v2003
  %v2050 = vpack.c.bf16 %v2006, %v2005
  %2095 = vrot.lane.b32.xlu0 %v2007, 20
  %v2096 = vpop.permute.xlu0 %2095
  %2097 = vrot.lane.b32.xlu0 %v2008, 20
  %v2098 = vpop.permute.xlu0 %2097
  %2099 = vrot.lane.b32.xlu0 %v2009, 20
  %v2100 = vpop.permute.xlu0 %2099
  %2101 = vrot.lane.b32.xlu0 %v2010, 20
  %v2102 = vpop.permute.xlu0 %2101
  %2103 = vrot.lane.b32.xlu0 %v2011, 20
  %v2104 = vpop.permute.xlu0 %2103
  %2105 = vrot.lane.b32.xlu0 %v2012, 20
  %v2106 = vpop.permute.xlu0 %2105
  %2107 = vrot.lane.b32.xlu0 %v2013, 20
  %v2108 = vpop.permute.xlu0 %2107
  %2109 = vrot.lane.b32.xlu0 %v2014, 20
  %v2110 = vpop.permute.xlu0 %2109
  %2111 = vrot.lane.b32.xlu0 %v2015, 20
  %v2112 = vpop.permute.xlu0 %2111
  %2113 = vrot.lane.b32.xlu0 %v2016, 20
  %v2114 = vpop.permute.xlu0 %2113
  %2115 = vrot.lane.b32.xlu0 %v2017, 20
  %v2116 = vpop.permute.xlu0 %2115
  %2117 = vrot.lane.b32.xlu0 %v2018, 20
  %v2118 = vpop.permute.xlu0 %2117
  %2119 = vrot.lane.b32.xlu0 %v2019, 20
  %v2120 = vpop.permute.xlu0 %2119
  %2121 = vrot.lane.b32.xlu0 %v2020, 20
  %v2122 = vpop.permute.xlu0 %2121
  %2123 = vrot.lane.b32.xlu0 %v2021, 20
  %v2124 = vpop.permute.xlu0 %2123
  %2125 = vrot.lane.b32.xlu0 %v2022, 20
  %v2126 = vpop.permute.xlu0 %2125
  %2127 = vrot.lane.b32.xlu0 %v2023, 20
  %v2128 = vpop.permute.xlu0 %2127
  %2129 = vrot.lane.b32.xlu0 %v2024, 20
  %v2130 = vpop.permute.xlu0 %2129
  %2131 = vrot.lane.b32.xlu0 %v2025, 20
  %v2132 = vpop.permute.xlu0 %2131
  %2133 = vrot.lane.b32.xlu0 %v2026, 20
  %v2134 = vpop.permute.xlu0 %2133
  %2135 = vrot.lane.b32.xlu0 %v2027, 20
  %v2136 = vpop.permute.xlu0 %2135
  %2137 = vrot.lane.b32.xlu0 %v2028, 20
  %v2138 = vpop.permute.xlu0 %2137
  %2139 = vrot.lane.b32.xlu0 %v2029, 20
  %v2140 = vpop.permute.xlu0 %2139
  %2141 = vrot.lane.b32.xlu0 %v2030, 20
  %v2142 = vpop.permute.xlu0 %2141
  %2143 = vrot.lane.b32.xlu0 %v2031, 20
  %v2144 = vpop.permute.xlu0 %2143
  %2145 = vrot.lane.b32.xlu0 %v2032, 20
  %v2146 = vpop.permute.xlu0 %2145
  %2147 = vrot.lane.b32.xlu0 %v2033, 20
  %v2148 = vpop.permute.xlu0 %2147
  %2149 = vrot.lane.b32.xlu0 %v2034, 20
  %v2150 = vpop.permute.xlu0 %2149
  %2151 = vrot.lane.b32.xlu0 %v2035, 20
  %v2152 = vpop.permute.xlu0 %2151
  %2153 = vrot.lane.b32.xlu0 %v2036, 20
  %v2154 = vpop.permute.xlu0 %2153
  %2155 = vrot.lane.b32.xlu0 %v2037, 20
  %v2156 = vpop.permute.xlu0 %2155
  %2157 = vrot.lane.b32.xlu0 %v2038, 20
  %v2158 = vpop.permute.xlu0 %2157
  %2159 = vrot.lane.b32.xlu0 %v2039, 20
  %v2160 = vpop.permute.xlu0 %2159
  %2161 = vrot.lane.b32.xlu0 %v2040, 20
  %v2162 = vpop.permute.xlu0 %2161
  %2163 = vrot.lane.b32.xlu0 %v2041, 20
  %v2164 = vpop.permute.xlu0 %2163
  %2165 = vrot.lane.b32.xlu0 %v2042, 20
  %v2166 = vpop.permute.xlu0 %2165
  %2167 = vrot.lane.b32.xlu0 %v2043, 20
  %v2168 = vpop.permute.xlu0 %2167
  %2169 = vrot.lane.b32.xlu0 %v2044, 20
  %v2170 = vpop.permute.xlu0 %2169
  %2171 = vrot.lane.b32.xlu0 %v2045, 20
  %v2172 = vpop.permute.xlu0 %2171
  %2173 = vrot.lane.b32.xlu0 %v2046, 20
  %v2174 = vpop.permute.xlu0 %2173
  %2175 = vrot.lane.b32.xlu0 %v2047, 20
  %v2176 = vpop.permute.xlu0 %2175
  %2177 = vrot.lane.b32.xlu0 %v2048, 20
  %v2178 = vpop.permute.xlu0 %2177
  %2179 = vrot.lane.b32.xlu0 %v2049, 20
  %v2180 = vpop.permute.xlu0 %2179
  %2181 = vrot.lane.b32.xlu0 %v2050, 20
  %v2182 = vpop.permute.xlu0 %2181
  %vm2227 = vcmask 195744
  %2228 = vst.msk [vmem:[#allocation3] sm:$0xff] %vm2227, %v2096
  %2229 = vst.msk [vmem:[#allocation3 + $0x8] sm:$0xff] %vm2227, %v2098
  %2230 = vst.msk [vmem:[#allocation3 + $0x10] sm:$0xff] %vm2227, %v2100
  %2231 = vst.msk [vmem:[#allocation3 + $0x18] sm:$0xff] %vm2227, %v2102
  %2232 = vst.msk [vmem:[#allocation3 + $0x20] sm:$0xff] %vm2227, %v2104
  %2233 = vst.msk [vmem:[#allocation3 + $0x28] sm:$0xff] %vm2227, %v2106
  %2234 = vst.msk [vmem:[#allocation3 + $0x30] sm:$0xff] %vm2227, %v2108
  %2235 = vst.msk [vmem:[#allocation3 + $0x38] sm:$0xff] %vm2227, %v2110
  %2236 = vst.msk [vmem:[#allocation3 + $0x40] sm:$0xff] %vm2227, %v2112
  %2237 = vst.msk [vmem:[#allocation3 + $0x48] sm:$0xff] %vm2227, %v2114
  %2238 = vst.msk [vmem:[#allocation3 + $0x50] sm:$0xff] %vm2227, %v2116
  %2239 = vst.msk [vmem:[#allocation3 + $0x58] sm:$0xff] %vm2227, %v2118
  %2240 = vst.msk [vmem:[#allocation3 + $0x60] sm:$0xff] %vm2227, %v2120
  %2241 = vst.msk [vmem:[#allocation3 + $0x68] sm:$0xff] %vm2227, %v2122
  %2242 = vst.msk [vmem:[#allocation3 + $0x70] sm:$0xff] %vm2227, %v2124
  %2243 = vst.msk [vmem:[#allocation3 + $0x78] sm:$0xff] %vm2227, %v2126
  %2244 = vst.msk [vmem:[#allocation3 + $0x80] sm:$0xff] %vm2227, %v2128
  %2245 = vst.msk [vmem:[#allocation3 + $0x88] sm:$0xff] %vm2227, %v2130
  %2246 = vst.msk [vmem:[#allocation3 + $0x90] sm:$0xff] %vm2227, %v2132
  %2247 = vst.msk [vmem:[#allocation3 + $0x98] sm:$0xff] %vm2227, %v2134
  %2248 = vst.msk [vmem:[#allocation3 + $0xa0] sm:$0xff] %vm2227, %v2136
  %2249 = vst.msk [vmem:[#allocation3 + $0xa8] sm:$0xff] %vm2227, %v2138
  %2250 = vst.msk [vmem:[#allocation3 + $0xb0] sm:$0xff] %vm2227, %v2140
  %2251 = vst.msk [vmem:[#allocation3 + $0xb8] sm:$0xff] %vm2227, %v2142
  %2252 = vst.msk [vmem:[#allocation3 + $0xc0] sm:$0xff] %vm2227, %v2144
  %2253 = vst.msk [vmem:[#allocation3 + $0xc8] sm:$0xff] %vm2227, %v2146
  %2254 = vst.msk [vmem:[#allocation3 + $0xd0] sm:$0xff] %vm2227, %v2148
  %2255 = vst.msk [vmem:[#allocation3 + $0xd8] sm:$0xff] %vm2227, %v2150
  %2256 = vst.msk [vmem:[#allocation3 + $0xe0] sm:$0xff] %vm2227, %v2152
  %2257 = vst.msk [vmem:[#allocation3 + $0xe8] sm:$0xff] %vm2227, %v2154
  %2258 = vst.msk [vmem:[#allocation3 + $0xf0] sm:$0xff] %vm2227, %v2156
  %2259 = vst.msk [vmem:[#allocation3 + $0xf8] sm:$0xff] %vm2227, %v2158
  %2260 = vst.msk [vmem:[#allocation3 + $0x100] sm:$0xff] %vm2227, %v2160
  %2261 = vst.msk [vmem:[#allocation3 + $0x108] sm:$0xff] %vm2227, %v2162
  %2262 = vst.msk [vmem:[#allocation3 + $0x110] sm:$0xff] %vm2227, %v2164
  %2263 = vst.msk [vmem:[#allocation3 + $0x118] sm:$0xff] %vm2227, %v2166
  %2264 = vst.msk [vmem:[#allocation3 + $0x120] sm:$0xff] %vm2227, %v2168
  %2265 = vst.msk [vmem:[#allocation3 + $0x128] sm:$0xff] %vm2227, %v2170
  %2266 = vst.msk [vmem:[#allocation3 + $0x130] sm:$0xff] %vm2227, %v2172
  %2267 = vst.msk [vmem:[#allocation3 + $0x138] sm:$0xff] %vm2227, %v2174
  %2268 = vst.msk [vmem:[#allocation3 + $0x140] sm:$0xff] %vm2227, %v2176
  %2269 = vst.msk [vmem:[#allocation3 + $0x148] sm:$0xff] %vm2227, %v2178
  %2270 = vst.msk [vmem:[#allocation3 + $0x150] sm:$0xff] %vm2227, %v2180
  %2271 = vst.msk [vmem:[#allocation3 + $0x158] sm:$0xff] %vm2227, %v2182
  %v2272 = vld [vmem:[#allocation2 + $0x24] sm:$0xff]
  %v2273 = vld [vmem:[#allocation2 + $0x2c] sm:$0xff]
  %v2274 = vld [vmem:[#allocation2 + $0x34] sm:$0xff]
  %v2275 = vld [vmem:[#allocation2 + $0x3c] sm:$0xff]
  %v2276 = vld [vmem:[#allocation2 + $0x44] sm:$0xff]
  %v2277 = vld [vmem:[#allocation2 + $0x4c] sm:$0xff]
  %v2278 = vld [vmem:[#allocation2 + $0x54] sm:$0xff]
  %v2279 = vld [vmem:[#allocation2 + $0x5c] sm:$0xff]
  %v2280 = vld [vmem:[#allocation2 + $0x64] sm:$0xff]
  %v2281 = vld [vmem:[#allocation2 + $0x6c] sm:$0xff]
  %v2282 = vld [vmem:[#allocation2 + $0x74] sm:$0xff]
  %v2283 = vld [vmem:[#allocation2 + $0x7c] sm:$0xff]
  %v2284 = vld [vmem:[#allocation2 + $0x84] sm:$0xff]
  %v2285 = vld [vmem:[#allocation2 + $0x8c] sm:$0xff]
  %v2286 = vld [vmem:[#allocation2 + $0x94] sm:$0xff]
  %v2287 = vld [vmem:[#allocation2 + $0x9c] sm:$0xff]
  %v2288 = vld [vmem:[#allocation2 + $0xa4] sm:$0xff]
  %v2289 = vld [vmem:[#allocation2 + $0xac] sm:$0xff]
  %v2290 = vld [vmem:[#allocation2 + $0xb4] sm:$0xff]
  %v2291 = vld [vmem:[#allocation2 + $0xbc] sm:$0xff]
  %v2292 = vld [vmem:[#allocation2 + $0xc4] sm:$0xff]
  %v2293 = vld [vmem:[#allocation2 + $0xcc] sm:$0xff]
  %v2294 = vld [vmem:[#allocation2 + $0xd4] sm:$0xff]
  %v2295 = vld [vmem:[#allocation2 + $0xdc] sm:$0xff]
  %v2296 = vld [vmem:[#allocation2 + $0xe4] sm:$0xff]
  %v2297 = vld [vmem:[#allocation2 + $0xec] sm:$0xff]
  %v2298 = vld [vmem:[#allocation2 + $0xf4] sm:$0xff]
  %v2299 = vld [vmem:[#allocation2 + $0xfc] sm:$0xff]
  %v2300 = vld [vmem:[#allocation2 + $0x104] sm:$0xff]
  %v2301 = vld [vmem:[#allocation2 + $0x10c] sm:$0xff]
  %v2302 = vld [vmem:[#allocation2 + $0x114] sm:$0xff]
  %v2303 = vld [vmem:[#allocation2 + $0x11c] sm:$0xff]
  %v2304 = vld [vmem:[#allocation2 + $0x124] sm:$0xff]
  %v2305 = vld [vmem:[#allocation2 + $0x12c] sm:$0xff]
  %v2306 = vld [vmem:[#allocation2 + $0x134] sm:$0xff]
  %v2307 = vld [vmem:[#allocation2 + $0x13c] sm:$0xff]
  %v2308 = vld [vmem:[#allocation2 + $0x144] sm:$0xff]
  %v2309 = vld [vmem:[#allocation2 + $0x14c] sm:$0xff]
  %v2310 = vld [vmem:[#allocation2 + $0x154] sm:$0xff]
  %v2311 = vld [vmem:[#allocation2 + $0x15c] sm:$0xff]
  %v2312 = vld [vmem:[#allocation2 + $0x164] sm:$0xff]
  %v2313 = vld [vmem:[#allocation2 + $0x16c] sm:$0xff]
  %v2314 = vld [vmem:[#allocation2 + $0x174] sm:$0xff]
  %v2315 = vld [vmem:[#allocation2 + $0x17c] sm:$0xff]
  %v2316 = vld [vmem:[#allocation2 + $0x184] sm:$0xff]
  %v2317 = vld [vmem:[#allocation2 + $0x18c] sm:$0xff]
  %v2318 = vld [vmem:[#allocation2 + $0x194] sm:$0xff]
  %v2319 = vld [vmem:[#allocation2 + $0x19c] sm:$0xff]
  %v2320 = vld [vmem:[#allocation2 + $0x1a4] sm:$0xff]
  %v2321 = vld [vmem:[#allocation2 + $0x1ac] sm:$0xff]
  %v2322 = vld [vmem:[#allocation2 + $0x1b4] sm:$0xff]
  %v2323 = vld [vmem:[#allocation2 + $0x1bc] sm:$0xff]
  %v2324 = vld [vmem:[#allocation2 + $0x1c4] sm:$0xff]
  %v2325 = vld [vmem:[#allocation2 + $0x1cc] sm:$0xff]
  %v2326 = vld [vmem:[#allocation2 + $0x1d4] sm:$0xff]
  %v2327 = vld [vmem:[#allocation2 + $0x1dc] sm:$0xff]
  %v2328 = vld [vmem:[#allocation2 + $0x1e4] sm:$0xff]
  %v2329 = vld [vmem:[#allocation2 + $0x1ec] sm:$0xff]
  %v2330 = vld [vmem:[#allocation2 + $0x1f4] sm:$0xff]
  %v2331 = vld [vmem:[#allocation2 + $0x1fc] sm:$0xff]
  %v2332 = vld [vmem:[#allocation2 + $0x204] sm:$0xff]
  %v2333 = vld [vmem:[#allocation2 + $0x20c] sm:$0xff]
  %v2334 = vld [vmem:[#allocation2 + $0x214] sm:$0xff]
  %v2335 = vld [vmem:[#allocation2 + $0x21c] sm:$0xff]
  %v2336 = vld [vmem:[#allocation2 + $0x224] sm:$0xff]
  %v2337 = vld [vmem:[#allocation2 + $0x22c] sm:$0xff]
  %v2338 = vld [vmem:[#allocation2 + $0x234] sm:$0xff]
  %v2339 = vld [vmem:[#allocation2 + $0x23c] sm:$0xff]
  %v2340 = vld [vmem:[#allocation2 + $0x244] sm:$0xff]
  %v2341 = vld [vmem:[#allocation2 + $0x24c] sm:$0xff]
  %v2342 = vld [vmem:[#allocation2 + $0x254] sm:$0xff]
  %v2343 = vld [vmem:[#allocation2 + $0x25c] sm:$0xff]
  %v2344 = vld [vmem:[#allocation2 + $0x264] sm:$0xff]
  %v2345 = vld [vmem:[#allocation2 + $0x26c] sm:$0xff]
  %v2346 = vld [vmem:[#allocation2 + $0x274] sm:$0xff]
  %v2347 = vld [vmem:[#allocation2 + $0x27c] sm:$0xff]
  %v2348 = vld [vmem:[#allocation2 + $0x284] sm:$0xff]
  %v2349 = vld [vmem:[#allocation2 + $0x28c] sm:$0xff]
  %v2350 = vld [vmem:[#allocation2 + $0x294] sm:$0xff]
  %v2351 = vld [vmem:[#allocation2 + $0x29c] sm:$0xff]
  %v2352 = vld [vmem:[#allocation2 + $0x2a4] sm:$0xff]
  %v2353 = vld [vmem:[#allocation2 + $0x2ac] sm:$0xff]
  %v2354 = vld [vmem:[#allocation2 + $0x2b4] sm:$0xff]
  %v2355 = vld [vmem:[#allocation2 + $0x2bc] sm:$0xff]
  %v2356 = vld [vmem:[#allocation2 + $0x2c4] sm:$0xff]
  %v2357 = vld [vmem:[#allocation2 + $0x2cc] sm:$0xff]
  %v2358 = vld [vmem:[#allocation2 + $0x2d4] sm:$0xff]
  %v2359 = vld [vmem:[#allocation2 + $0x2dc] sm:$0xff]
  %v2360 = vpack.c.bf16 %v2273, %v2272
  %v2361 = vpack.c.bf16 %v2275, %v2274
  %v2362 = vpack.c.bf16 %v2277, %v2276
  %v2363 = vpack.c.bf16 %v2279, %v2278
  %v2364 = vpack.c.bf16 %v2281, %v2280
  %v2365 = vpack.c.bf16 %v2283, %v2282
  %v2366 = vpack.c.bf16 %v2285, %v2284
  %v2367 = vpack.c.bf16 %v2287, %v2286
  %v2368 = vpack.c.bf16 %v2289, %v2288
  %v2369 = vpack.c.bf16 %v2291, %v2290
  %v2370 = vpack.c.bf16 %v2293, %v2292
  %v2371 = vpack.c.bf16 %v2295, %v2294
  %v2372 = vpack.c.bf16 %v2297, %v2296
  %v2373 = vpack.c.bf16 %v2299, %v2298
  %v2374 = vpack.c.bf16 %v2301, %v2300
  %v2375 = vpack.c.bf16 %v2303, %v2302
  %v2376 = vpack.c.bf16 %v2305, %v2304
  %v2377 = vpack.c.bf16 %v2307, %v2306
  %v2378 = vpack.c.bf16 %v2309, %v2308
  %v2379 = vpack.c.bf16 %v2311, %v2310
  %v2380 = vpack.c.bf16 %v2313, %v2312
  %v2381 = vpack.c.bf16 %v2315, %v2314
  %v2382 = vpack.c.bf16 %v2317, %v2316
  %v2383 = vpack.c.bf16 %v2319, %v2318
  %v2384 = vpack.c.bf16 %v2321, %v2320
  %v2385 = vpack.c.bf16 %v2323, %v2322
  %v2386 = vpack.c.bf16 %v2325, %v2324
  %v2387 = vpack.c.bf16 %v2327, %v2326
  %v2388 = vpack.c.bf16 %v2329, %v2328
  %v2389 = vpack.c.bf16 %v2331, %v2330
  %v2390 = vpack.c.bf16 %v2333, %v2332
  %v2391 = vpack.c.bf16 %v2335, %v2334
  %v2392 = vpack.c.bf16 %v2337, %v2336
  %v2393 = vpack.c.bf16 %v2339, %v2338
  %v2394 = vpack.c.bf16 %v2341, %v2340
  %v2395 = vpack.c.bf16 %v2343, %v2342
  %v2396 = vpack.c.bf16 %v2345, %v2344
  %v2397 = vpack.c.bf16 %v2347, %v2346
  %v2398 = vpack.c.bf16 %v2349, %v2348
  %v2399 = vpack.c.bf16 %v2351, %v2350
  %v2400 = vpack.c.bf16 %v2353, %v2352
  %v2401 = vpack.c.bf16 %v2355, %v2354
  %v2402 = vpack.c.bf16 %v2357, %v2356
  %v2403 = vpack.c.bf16 %v2359, %v2358
  %2448 = vrot.lane.b32.xlu0 %v2360, 24
  %v2449 = vpop.permute.xlu0 %2448
  %2450 = vrot.lane.b32.xlu0 %v2361, 24
  %v2451 = vpop.permute.xlu0 %2450
  %2452 = vrot.lane.b32.xlu0 %v2362, 24
  %v2453 = vpop.permute.xlu0 %2452
  %2454 = vrot.lane.b32.xlu0 %v2363, 24
  %v2455 = vpop.permute.xlu0 %2454
  %2456 = vrot.lane.b32.xlu0 %v2364, 24
  %v2457 = vpop.permute.xlu0 %2456
  %2458 = vrot.lane.b32.xlu0 %v2365, 24
  %v2459 = vpop.permute.xlu0 %2458
  %2460 = vrot.lane.b32.xlu0 %v2366, 24
  %v2461 = vpop.permute.xlu0 %2460
  %2462 = vrot.lane.b32.xlu0 %v2367, 24
  %v2463 = vpop.permute.xlu0 %2462
  %2464 = vrot.lane.b32.xlu0 %v2368, 24
  %v2465 = vpop.permute.xlu0 %2464
  %2466 = vrot.lane.b32.xlu0 %v2369, 24
  %v2467 = vpop.permute.xlu0 %2466
  %2468 = vrot.lane.b32.xlu0 %v2370, 24
  %v2469 = vpop.permute.xlu0 %2468
  %2470 = vrot.lane.b32.xlu0 %v2371, 24
  %v2471 = vpop.permute.xlu0 %2470
  %2472 = vrot.lane.b32.xlu0 %v2372, 24
  %v2473 = vpop.permute.xlu0 %2472
  %2474 = vrot.lane.b32.xlu0 %v2373, 24
  %v2475 = vpop.permute.xlu0 %2474
  %2476 = vrot.lane.b32.xlu0 %v2374, 24
  %v2477 = vpop.permute.xlu0 %2476
  %2478 = vrot.lane.b32.xlu0 %v2375, 24
  %v2479 = vpop.permute.xlu0 %2478
  %2480 = vrot.lane.b32.xlu0 %v2376, 24
  %v2481 = vpop.permute.xlu0 %2480
  %2482 = vrot.lane.b32.xlu0 %v2377, 24
  %v2483 = vpop.permute.xlu0 %2482
  %2484 = vrot.lane.b32.xlu0 %v2378, 24
  %v2485 = vpop.permute.xlu0 %2484
  %2486 = vrot.lane.b32.xlu0 %v2379, 24
  %v2487 = vpop.permute.xlu0 %2486
  %2488 = vrot.lane.b32.xlu0 %v2380, 24
  %v2489 = vpop.permute.xlu0 %2488
  %2490 = vrot.lane.b32.xlu0 %v2381, 24
  %v2491 = vpop.permute.xlu0 %2490
  %2492 = vrot.lane.b32.xlu0 %v2382, 24
  %v2493 = vpop.permute.xlu0 %2492
  %2494 = vrot.lane.b32.xlu0 %v2383, 24
  %v2495 = vpop.permute.xlu0 %2494
  %2496 = vrot.lane.b32.xlu0 %v2384, 24
  %v2497 = vpop.permute.xlu0 %2496
  %2498 = vrot.lane.b32.xlu0 %v2385, 24
  %v2499 = vpop.permute.xlu0 %2498
  %2500 = vrot.lane.b32.xlu0 %v2386, 24
  %v2501 = vpop.permute.xlu0 %2500
  %2502 = vrot.lane.b32.xlu0 %v2387, 24
  %v2503 = vpop.permute.xlu0 %2502
  %2504 = vrot.lane.b32.xlu0 %v2388, 24
  %v2505 = vpop.permute.xlu0 %2504
  %2506 = vrot.lane.b32.xlu0 %v2389, 24
  %v2507 = vpop.permute.xlu0 %2506
  %2508 = vrot.lane.b32.xlu0 %v2390, 24
  %v2509 = vpop.permute.xlu0 %2508
  %2510 = vrot.lane.b32.xlu0 %v2391, 24
  %v2511 = vpop.permute.xlu0 %2510
  %2512 = vrot.lane.b32.xlu0 %v2392, 24
  %v2513 = vpop.permute.xlu0 %2512
  %2514 = vrot.lane.b32.xlu0 %v2393, 24
  %v2515 = vpop.permute.xlu0 %2514
  %2516 = vrot.lane.b32.xlu0 %v2394, 24
  %v2517 = vpop.permute.xlu0 %2516
  %2518 = vrot.lane.b32.xlu0 %v2395, 24
  %v2519 = vpop.permute.xlu0 %2518
  %2520 = vrot.lane.b32.xlu0 %v2396, 24
  %v2521 = vpop.permute.xlu0 %2520
  %2522 = vrot.lane.b32.xlu0 %v2397, 24
  %v2523 = vpop.permute.xlu0 %2522
  %2524 = vrot.lane.b32.xlu0 %v2398, 24
  %v2525 = vpop.permute.xlu0 %2524
  %2526 = vrot.lane.b32.xlu0 %v2399, 24
  %v2527 = vpop.permute.xlu0 %2526
  %2528 = vrot.lane.b32.xlu0 %v2400, 24
  %v2529 = vpop.permute.xlu0 %2528
  %2530 = vrot.lane.b32.xlu0 %v2401, 24
  %v2531 = vpop.permute.xlu0 %2530
  %2532 = vrot.lane.b32.xlu0 %v2402, 24
  %v2533 = vpop.permute.xlu0 %2532
  %2534 = vrot.lane.b32.xlu0 %v2403, 24
  %v2535 = vpop.permute.xlu0 %2534
  %vm2580 = vcmask 228544
  %2581 = vst.msk [vmem:[#allocation3] sm:$0xff] %vm2580, %v2449
  %2582 = vst.msk [vmem:[#allocation3 + $0x8] sm:$0xff] %vm2580, %v2451
  %2583 = vst.msk [vmem:[#allocation3 + $0x10] sm:$0xff] %vm2580, %v2453
  %2584 = vst.msk [vmem:[#allocation3 + $0x18] sm:$0xff] %vm2580, %v2455
  %2585 = vst.msk [vmem:[#allocation3 + $0x20] sm:$0xff] %vm2580, %v2457
  %2586 = vst.msk [vmem:[#allocation3 + $0x28] sm:$0xff] %vm2580, %v2459
  %2587 = vst.msk [vmem:[#allocation3 + $0x30] sm:$0xff] %vm2580, %v2461
  %2588 = vst.msk [vmem:[#allocation3 + $0x38] sm:$0xff] %vm2580, %v2463
  %2589 = vst.msk [vmem:[#allocation3 + $0x40] sm:$0xff] %vm2580, %v2465
  %2590 = vst.msk [vmem:[#allocation3 + $0x48] sm:$0xff] %vm2580, %v2467
  %2591 = vst.msk [vmem:[#allocation3 + $0x50] sm:$0xff] %vm2580, %v2469
  %2592 = vst.msk [vmem:[#allocation3 + $0x58] sm:$0xff] %vm2580, %v2471
  %2593 = vst.msk [vmem:[#allocation3 + $0x60] sm:$0xff] %vm2580, %v2473
  %2594 = vst.msk [vmem:[#allocation3 + $0x68] sm:$0xff] %vm2580, %v2475
  %2595 = vst.msk [vmem:[#allocation3 + $0x70] sm:$0xff] %vm2580, %v2477
  %2596 = vst.msk [vmem:[#allocation3 + $0x78] sm:$0xff] %vm2580, %v2479
  %2597 = vst.msk [vmem:[#allocation3 + $0x80] sm:$0xff] %vm2580, %v2481
  %2598 = vst.msk [vmem:[#allocation3 + $0x88] sm:$0xff] %vm2580, %v2483
  %2599 = vst.msk [vmem:[#allocation3 + $0x90] sm:$0xff] %vm2580, %v2485
  %2600 = vst.msk [vmem:[#allocation3 + $0x98] sm:$0xff] %vm2580, %v2487
  %2601 = vst.msk [vmem:[#allocation3 + $0xa0] sm:$0xff] %vm2580, %v2489
  %2602 = vst.msk [vmem:[#allocation3 + $0xa8] sm:$0xff] %vm2580, %v2491
  %2603 = vst.msk [vmem:[#allocation3 + $0xb0] sm:$0xff] %vm2580, %v2493
  %2604 = vst.msk [vmem:[#allocation3 + $0xb8] sm:$0xff] %vm2580, %v2495
  %2605 = vst.msk [vmem:[#allocation3 + $0xc0] sm:$0xff] %vm2580, %v2497
  %2606 = vst.msk [vmem:[#allocation3 + $0xc8] sm:$0xff] %vm2580, %v2499
  %2607 = vst.msk [vmem:[#allocation3 + $0xd0] sm:$0xff] %vm2580, %v2501
  %2608 = vst.msk [vmem:[#allocation3 + $0xd8] sm:$0xff] %vm2580, %v2503
  %2609 = vst.msk [vmem:[#allocation3 + $0xe0] sm:$0xff] %vm2580, %v2505
  %2610 = vst.msk [vmem:[#allocation3 + $0xe8] sm:$0xff] %vm2580, %v2507
  %2611 = vst.msk [vmem:[#allocation3 + $0xf0] sm:$0xff] %vm2580, %v2509
  %2612 = vst.msk [vmem:[#allocation3 + $0xf8] sm:$0xff] %vm2580, %v2511
  %2613 = vst.msk [vmem:[#allocation3 + $0x100] sm:$0xff] %vm2580, %v2513
  %2614 = vst.msk [vmem:[#allocation3 + $0x108] sm:$0xff] %vm2580, %v2515
  %2615 = vst.msk [vmem:[#allocation3 + $0x110] sm:$0xff] %vm2580, %v2517
  %2616 = vst.msk [vmem:[#allocation3 + $0x118] sm:$0xff] %vm2580, %v2519
  %2617 = vst.msk [vmem:[#allocation3 + $0x120] sm:$0xff] %vm2580, %v2521
  %2618 = vst.msk [vmem:[#allocation3 + $0x128] sm:$0xff] %vm2580, %v2523
  %2619 = vst.msk [vmem:[#allocation3 + $0x130] sm:$0xff] %vm2580, %v2525
  %2620 = vst.msk [vmem:[#allocation3 + $0x138] sm:$0xff] %vm2580, %v2527
  %2621 = vst.msk [vmem:[#allocation3 + $0x140] sm:$0xff] %vm2580, %v2529
  %2622 = vst.msk [vmem:[#allocation3 + $0x148] sm:$0xff] %vm2580, %v2531
  %2623 = vst.msk [vmem:[#allocation3 + $0x150] sm:$0xff] %vm2580, %v2533
  %2624 = vst.msk [vmem:[#allocation3 + $0x158] sm:$0xff] %vm2580, %v2535
  %v2625 = vld [vmem:[#allocation2 + $0x25] sm:$0xff]
  %v2626 = vld [vmem:[#allocation2 + $0x2d] sm:$0xff]
  %v2627 = vld [vmem:[#allocation2 + $0x35] sm:$0xff]
  %v2628 = vld [vmem:[#allocation2 + $0x3d] sm:$0xff]
  %v2629 = vld [vmem:[#allocation2 + $0x45] sm:$0xff]
  %v2630 = vld [vmem:[#allocation2 + $0x4d] sm:$0xff]
  %v2631 = vld [vmem:[#allocation2 + $0x55] sm:$0xff]
  %v2632 = vld [vmem:[#allocation2 + $0x5d] sm:$0xff]
  %v2633 = vld [vmem:[#allocation2 + $0x65] sm:$0xff]
  %v2634 = vld [vmem:[#allocation2 + $0x6d] sm:$0xff]
  %v2635 = vld [vmem:[#allocation2 + $0x75] sm:$0xff]
  %v2636 = vld [vmem:[#allocation2 + $0x7d] sm:$0xff]
  %v2637 = vld [vmem:[#allocation2 + $0x85] sm:$0xff]
  %v2638 = vld [vmem:[#allocation2 + $0x8d] sm:$0xff]
  %v2639 = vld [vmem:[#allocation2 + $0x95] sm:$0xff]
  %v2640 = vld [vmem:[#allocation2 + $0x9d] sm:$0xff]
  %v2641 = vld [vmem:[#allocation2 + $0xa5] sm:$0xff]
  %v2642 = vld [vmem:[#allocation2 + $0xad] sm:$0xff]
  %v2643 = vld [vmem:[#allocation2 + $0xb5] sm:$0xff]
  %v2644 = vld [vmem:[#allocation2 + $0xbd] sm:$0xff]
  %v2645 = vld [vmem:[#allocation2 + $0xc5] sm:$0xff]
  %v2646 = vld [vmem:[#allocation2 + $0xcd] sm:$0xff]
  %v2647 = vld [vmem:[#allocation2 + $0xd5] sm:$0xff]
  %v2648 = vld [vmem:[#allocation2 + $0xdd] sm:$0xff]
  %v2649 = vld [vmem:[#allocation2 + $0xe5] sm:$0xff]
  %v2650 = vld [vmem:[#allocation2 + $0xed] sm:$0xff]
  %v2651 = vld [vmem:[#allocation2 + $0xf5] sm:$0xff]
  %v2652 = vld [vmem:[#allocation2 + $0xfd] sm:$0xff]
  %v2653 = vld [vmem:[#allocation2 + $0x105] sm:$0xff]
  %v2654 = vld [vmem:[#allocation2 + $0x10d] sm:$0xff]
  %v2655 = vld [vmem:[#allocation2 + $0x115] sm:$0xff]
  %v2656 = vld [vmem:[#allocation2 + $0x11d] sm:$0xff]
  %v2657 = vld [vmem:[#allocation2 + $0x125] sm:$0xff]
  %v2658 = vld [vmem:[#allocation2 + $0x12d] sm:$0xff]
  %v2659 = vld [vmem:[#allocation2 + $0x135] sm:$0xff]
  %v2660 = vld [vmem:[#allocation2 + $0x13d] sm:$0xff]
  %v2661 = vld [vmem:[#allocation2 + $0x145] sm:$0xff]
  %v2662 = vld [vmem:[#allocation2 + $0x14d] sm:$0xff]
  %v2663 = vld [vmem:[#allocation2 + $0x155] sm:$0xff]
  %v2664 = vld [vmem:[#allocation2 + $0x15d] sm:$0xff]
  %v2665 = vld [vmem:[#allocation2 + $0x165] sm:$0xff]
  %v2666 = vld [vmem:[#allocation2 + $0x16d] sm:$0xff]
  %v2667 = vld [vmem:[#allocation2 + $0x175] sm:$0xff]
  %v2668 = vld [vmem:[#allocation2 + $0x17d] sm:$0xff]
  %v2669 = vld [vmem:[#allocation2 + $0x185] sm:$0xff]
  %v2670 = vld [vmem:[#allocation2 + $0x18d] sm:$0xff]
  %v2671 = vld [vmem:[#allocation2 + $0x195] sm:$0xff]
  %v2672 = vld [vmem:[#allocation2 + $0x19d] sm:$0xff]
  %v2673 = vld [vmem:[#allocation2 + $0x1a5] sm:$0xff]
  %v2674 = vld [vmem:[#allocation2 + $0x1ad] sm:$0xff]
  %v2675 = vld [vmem:[#allocation2 + $0x1b5] sm:$0xff]
  %v2676 = vld [vmem:[#allocation2 + $0x1bd] sm:$0xff]
  %v2677 = vld [vmem:[#allocation2 + $0x1c5] sm:$0xff]
  %v2678 = vld [vmem:[#allocation2 + $0x1cd] sm:$0xff]
  %v2679 = vld [vmem:[#allocation2 + $0x1d5] sm:$0xff]
  %v2680 = vld [vmem:[#allocation2 + $0x1dd] sm:$0xff]
  %v2681 = vld [vmem:[#allocation2 + $0x1e5] sm:$0xff]
  %v2682 = vld [vmem:[#allocation2 + $0x1ed] sm:$0xff]
  %v2683 = vld [vmem:[#allocation2 + $0x1f5] sm:$0xff]
  %v2684 = vld [vmem:[#allocation2 + $0x1fd] sm:$0xff]
  %v2685 = vld [vmem:[#allocation2 + $0x205] sm:$0xff]
  %v2686 = vld [vmem:[#allocation2 + $0x20d] sm:$0xff]
  %v2687 = vld [vmem:[#allocation2 + $0x215] sm:$0xff]
  %v2688 = vld [vmem:[#allocation2 + $0x21d] sm:$0xff]
  %v2689 = vld [vmem:[#allocation2 + $0x225] sm:$0xff]
  %v2690 = vld [vmem:[#allocation2 + $0x22d] sm:$0xff]
  %v2691 = vld [vmem:[#allocation2 + $0x235] sm:$0xff]
  %v2692 = vld [vmem:[#allocation2 + $0x23d] sm:$0xff]
  %v2693 = vld [vmem:[#allocation2 + $0x245] sm:$0xff]
  %v2694 = vld [vmem:[#allocation2 + $0x24d] sm:$0xff]
  %v2695 = vld [vmem:[#allocation2 + $0x255] sm:$0xff]
  %v2696 = vld [vmem:[#allocation2 + $0x25d] sm:$0xff]
  %v2697 = vld [vmem:[#allocation2 + $0x265] sm:$0xff]
  %v2698 = vld [vmem:[#allocation2 + $0x26d] sm:$0xff]
  %v2699 = vld [vmem:[#allocation2 + $0x275] sm:$0xff]
  %v2700 = vld [vmem:[#allocation2 + $0x27d] sm:$0xff]
  %v2701 = vld [vmem:[#allocation2 + $0x285] sm:$0xff]
  %v2702 = vld [vmem:[#allocation2 + $0x28d] sm:$0xff]
  %v2703 = vld [vmem:[#allocation2 + $0x295] sm:$0xff]
  %v2704 = vld [vmem:[#allocation2 + $0x29d] sm:$0xff]
  %v2705 = vld [vmem:[#allocation2 + $0x2a5] sm:$0xff]
  %v2706 = vld [vmem:[#allocation2 + $0x2ad] sm:$0xff]
  %v2707 = vld [vmem:[#allocation2 + $0x2b5] sm:$0xff]
  %v2708 = vld [vmem:[#allocation2 + $0x2bd] sm:$0xff]
  %v2709 = vld [vmem:[#allocation2 + $0x2c5] sm:$0xff]
  %v2710 = vld [vmem:[#allocation2 + $0x2cd] sm:$0xff]
  %v2711 = vld [vmem:[#allocation2 + $0x2d5] sm:$0xff]
  %v2712 = vld [vmem:[#allocation2 + $0x2dd] sm:$0xff]
  %v2713 = vpack.c.bf16 %v2626, %v2625
  %v2714 = vpack.c.bf16 %v2628, %v2627
  %v2715 = vpack.c.bf16 %v2630, %v2629
  %v2716 = vpack.c.bf16 %v2632, %v2631
  %v2717 = vpack.c.bf16 %v2634, %v2633
  %v2718 = vpack.c.bf16 %v2636, %v2635
  %v2719 = vpack.c.bf16 %v2638, %v2637
  %v2720 = vpack.c.bf16 %v2640, %v2639
  %v2721 = vpack.c.bf16 %v2642, %v2641
  %v2722 = vpack.c.bf16 %v2644, %v2643
  %v2723 = vpack.c.bf16 %v2646, %v2645
  %v2724 = vpack.c.bf16 %v2648, %v2647
  %v2725 = vpack.c.bf16 %v2650, %v2649
  %v2726 = vpack.c.bf16 %v2652, %v2651
  %v2727 = vpack.c.bf16 %v2654, %v2653
  %v2728 = vpack.c.bf16 %v2656, %v2655
  %v2729 = vpack.c.bf16 %v2658, %v2657
  %v2730 = vpack.c.bf16 %v2660, %v2659
  %v2731 = vpack.c.bf16 %v2662, %v2661
  %v2732 = vpack.c.bf16 %v2664, %v2663
  %v2733 = vpack.c.bf16 %v2666, %v2665
  %v2734 = vpack.c.bf16 %v2668, %v2667
  %v2735 = vpack.c.bf16 %v2670, %v2669
  %v2736 = vpack.c.bf16 %v2672, %v2671
  %v2737 = vpack.c.bf16 %v2674, %v2673
  %v2738 = vpack.c.bf16 %v2676, %v2675
  %v2739 = vpack.c.bf16 %v2678, %v2677
  %v2740 = vpack.c.bf16 %v2680, %v2679
  %v2741 = vpack.c.bf16 %v2682, %v2681
  %v2742 = vpack.c.bf16 %v2684, %v2683
  %v2743 = vpack.c.bf16 %v2686, %v2685
  %v2744 = vpack.c.bf16 %v2688, %v2687
  %v2745 = vpack.c.bf16 %v2690, %v2689
  %v2746 = vpack.c.bf16 %v2692, %v2691
  %v2747 = vpack.c.bf16 %v2694, %v2693
  %v2748 = vpack.c.bf16 %v2696, %v2695
  %v2749 = vpack.c.bf16 %v2698, %v2697
  %v2750 = vpack.c.bf16 %v2700, %v2699
  %v2751 = vpack.c.bf16 %v2702, %v2701
  %v2752 = vpack.c.bf16 %v2704, %v2703
  %v2753 = vpack.c.bf16 %v2706, %v2705
  %v2754 = vpack.c.bf16 %v2708, %v2707
  %v2755 = vpack.c.bf16 %v2710, %v2709
  %v2756 = vpack.c.bf16 %v2712, %v2711
  %2801 = vrot.lane.b32.xlu0 %v2713, 28
  %v2802 = vpop.permute.xlu0 %2801
  %2803 = vrot.lane.b32.xlu0 %v2714, 28
  %v2804 = vpop.permute.xlu0 %2803
  %2805 = vrot.lane.b32.xlu0 %v2715, 28
  %v2806 = vpop.permute.xlu0 %2805
  %2807 = vrot.lane.b32.xlu0 %v2716, 28
  %v2808 = vpop.permute.xlu0 %2807
  %2809 = vrot.lane.b32.xlu0 %v2717, 28
  %v2810 = vpop.permute.xlu0 %2809
  %2811 = vrot.lane.b32.xlu0 %v2718, 28
  %v2812 = vpop.permute.xlu0 %2811
  %2813 = vrot.lane.b32.xlu0 %v2719, 28
  %v2814 = vpop.permute.xlu0 %2813
  %2815 = vrot.lane.b32.xlu0 %v2720, 28
  %v2816 = vpop.permute.xlu0 %2815
  %2817 = vrot.lane.b32.xlu0 %v2721, 28
  %v2818 = vpop.permute.xlu0 %2817
  %2819 = vrot.lane.b32.xlu0 %v2722, 28
  %v2820 = vpop.permute.xlu0 %2819
  %2821 = vrot.lane.b32.xlu0 %v2723, 28
  %v2822 = vpop.permute.xlu0 %2821
  %2823 = vrot.lane.b32.xlu0 %v2724, 28
  %v2824 = vpop.permute.xlu0 %2823
  %2825 = vrot.lane.b32.xlu0 %v2725, 28
  %v2826 = vpop.permute.xlu0 %2825
  %2827 = vrot.lane.b32.xlu0 %v2726, 28
  %v2828 = vpop.permute.xlu0 %2827
  %2829 = vrot.lane.b32.xlu0 %v2727, 28
  %v2830 = vpop.permute.xlu0 %2829
  %2831 = vrot.lane.b32.xlu0 %v2728, 28
  %v2832 = vpop.permute.xlu0 %2831
  %2833 = vrot.lane.b32.xlu0 %v2729, 28
  %v2834 = vpop.permute.xlu0 %2833
  %2835 = vrot.lane.b32.xlu0 %v2730, 28
  %v2836 = vpop.permute.xlu0 %2835
  %2837 = vrot.lane.b32.xlu0 %v2731, 28
  %v2838 = vpop.permute.xlu0 %2837
  %2839 = vrot.lane.b32.xlu0 %v2732, 28
  %v2840 = vpop.permute.xlu0 %2839
  %2841 = vrot.lane.b32.xlu0 %v2733, 28
  %v2842 = vpop.permute.xlu0 %2841
  %2843 = vrot.lane.b32.xlu0 %v2734, 28
  %v2844 = vpop.permute.xlu0 %2843
  %2845 = vrot.lane.b32.xlu0 %v2735, 28
  %v2846 = vpop.permute.xlu0 %2845
  %2847 = vrot.lane.b32.xlu0 %v2736, 28
  %v2848 = vpop.permute.xlu0 %2847
  %2849 = vrot.lane.b32.xlu0 %v2737, 28
  %v2850 = vpop.permute.xlu0 %2849
  %2851 = vrot.lane.b32.xlu0 %v2738, 28
  %v2852 = vpop.permute.xlu0 %2851
  %2853 = vrot.lane.b32.xlu0 %v2739, 28
  %v2854 = vpop.permute.xlu0 %2853
  %2855 = vrot.lane.b32.xlu0 %v2740, 28
  %v2856 = vpop.permute.xlu0 %2855
  %2857 = vrot.lane.b32.xlu0 %v2741, 28
  %v2858 = vpop.permute.xlu0 %2857
  %2859 = vrot.lane.b32.xlu0 %v2742, 28
  %v2860 = vpop.permute.xlu0 %2859
  %2861 = vrot.lane.b32.xlu0 %v2743, 28
  %v2862 = vpop.permute.xlu0 %2861
  %2863 = vrot.lane.b32.xlu0 %v2744, 28
  %v2864 = vpop.permute.xlu0 %2863
  %2865 = vrot.lane.b32.xlu0 %v2745, 28
  %v2866 = vpop.permute.xlu0 %2865
  %2867 = vrot.lane.b32.xlu0 %v2746, 28
  %v2868 = vpop.permute.xlu0 %2867
  %2869 = vrot.lane.b32.xlu0 %v2747, 28
  %v2870 = vpop.permute.xlu0 %2869
  %2871 = vrot.lane.b32.xlu0 %v2748, 28
  %v2872 = vpop.permute.xlu0 %2871
  %2873 = vrot.lane.b32.xlu0 %v2749, 28
  %v2874 = vpop.permute.xlu0 %2873
  %2875 = vrot.lane.b32.xlu0 %v2750, 28
  %v2876 = vpop.permute.xlu0 %2875
  %2877 = vrot.lane.b32.xlu0 %v2751, 28
  %v2878 = vpop.permute.xlu0 %2877
  %2879 = vrot.lane.b32.xlu0 %v2752, 28
  %v2880 = vpop.permute.xlu0 %2879
  %2881 = vrot.lane.b32.xlu0 %v2753, 28
  %v2882 = vpop.permute.xlu0 %2881
  %2883 = vrot.lane.b32.xlu0 %v2754, 28
  %v2884 = vpop.permute.xlu0 %2883
  %2885 = vrot.lane.b32.xlu0 %v2755, 28
  %v2886 = vpop.permute.xlu0 %2885
  %2887 = vrot.lane.b32.xlu0 %v2756, 28
  %v2888 = vpop.permute.xlu0 %2887
  %vm2933 = vcmask 261344
  %2934 = vst.msk [vmem:[#allocation3] sm:$0xff] %vm2933, %v2802
  %2935 = vst.msk [vmem:[#allocation3 + $0x8] sm:$0xff] %vm2933, %v2804
  %2936 = vst.msk [vmem:[#allocation3 + $0x10] sm:$0xff] %vm2933, %v2806
  %2937 = vst.msk [vmem:[#allocation3 + $0x18] sm:$0xff] %vm2933, %v2808
  %2938 = vst.msk [vmem:[#allocation3 + $0x20] sm:$0xff] %vm2933, %v2810
  %2939 = vst.msk [vmem:[#allocation3 + $0x28] sm:$0xff] %vm2933, %v2812
  %2940 = vst.msk [vmem:[#allocation3 + $0x30] sm:$0xff] %vm2933, %v2814
  %2941 = vst.msk [vmem:[#allocation3 + $0x38] sm:$0xff] %vm2933, %v2816
  %2942 = vst.msk [vmem:[#allocation3 + $0x40] sm:$0xff] %vm2933, %v2818
  %2943 = vst.msk [vmem:[#allocation3 + $0x48] sm:$0xff] %vm2933, %v2820
  %2944 = vst.msk [vmem:[#allocation3 + $0x50] sm:$0xff] %vm2933, %v2822
  %2945 = vst.msk [vmem:[#allocation3 + $0x58] sm:$0xff] %vm2933, %v2824
  %2946 = vst.msk [vmem:[#allocation3 + $0x60] sm:$0xff] %vm2933, %v2826
  %2947 = vst.msk [vmem:[#allocation3 + $0x68] sm:$0xff] %vm2933, %v2828
  %2948 = vst.msk [vmem:[#allocation3 + $0x70] sm:$0xff] %vm2933, %v2830
  %2949 = vst.msk [vmem:[#allocation3 + $0x78] sm:$0xff] %vm2933, %v2832
  %2950 = vst.msk [vmem:[#allocation3 + $0x80] sm:$0xff] %vm2933, %v2834
  %2951 = vst.msk [vmem:[#allocation3 + $0x88] sm:$0xff] %vm2933, %v2836
  %2952 = vst.msk [vmem:[#allocation3 + $0x90] sm:$0xff] %vm2933, %v2838
  %2953 = vst.msk [vmem:[#allocation3 + $0x98] sm:$0xff] %vm2933, %v2840
  %2954 = vst.msk [vmem:[#allocation3 + $0xa0] sm:$0xff] %vm2933, %v2842
  %2955 = vst.msk [vmem:[#allocation3 + $0xa8] sm:$0xff] %vm2933, %v2844
  %2956 = vst.msk [vmem:[#allocation3 + $0xb0] sm:$0xff] %vm2933, %v2846
  %2957 = vst.msk [vmem:[#allocation3 + $0xb8] sm:$0xff] %vm2933, %v2848
  %2958 = vst.msk [vmem:[#allocation3 + $0xc0] sm:$0xff] %vm2933, %v2850
  %2959 = vst.msk [vmem:[#allocation3 + $0xc8] sm:$0xff] %vm2933, %v2852
  %2960 = vst.msk [vmem:[#allocation3 + $0xd0] sm:$0xff] %vm2933, %v2854
  %2961 = vst.msk [vmem:[#allocation3 + $0xd8] sm:$0xff] %vm2933, %v2856
  %2962 = vst.msk [vmem:[#allocation3 + $0xe0] sm:$0xff] %vm2933, %v2858
  %2963 = vst.msk [vmem:[#allocation3 + $0xe8] sm:$0xff] %vm2933, %v2860
  %2964 = vst.msk [vmem:[#allocation3 + $0xf0] sm:$0xff] %vm2933, %v2862
  %2965 = vst.msk [vmem:[#allocation3 + $0xf8] sm:$0xff] %vm2933, %v2864
  %2966 = vst.msk [vmem:[#allocation3 + $0x100] sm:$0xff] %vm2933, %v2866
  %2967 = vst.msk [vmem:[#allocation3 + $0x108] sm:$0xff] %vm2933, %v2868
  %2968 = vst.msk [vmem:[#allocation3 + $0x110] sm:$0xff] %vm2933, %v2870
  %2969 = vst.msk [vmem:[#allocation3 + $0x118] sm:$0xff] %vm2933, %v2872
  %2970 = vst.msk [vmem:[#allocation3 + $0x120] sm:$0xff] %vm2933, %v2874
  %2971 = vst.msk [vmem:[#allocation3 + $0x128] sm:$0xff] %vm2933, %v2876
  %2972 = vst.msk [vmem:[#allocation3 + $0x130] sm:$0xff] %vm2933, %v2878
  %2973 = vst.msk [vmem:[#allocation3 + $0x138] sm:$0xff] %vm2933, %v2880
  %2974 = vst.msk [vmem:[#allocation3 + $0x140] sm:$0xff] %vm2933, %v2882
  %2975 = vst.msk [vmem:[#allocation3 + $0x148] sm:$0xff] %vm2933, %v2884
  %2976 = vst.msk [vmem:[#allocation3 + $0x150] sm:$0xff] %vm2933, %v2886
  %2977 = vst.msk [vmem:[#allocation3 + $0x158] sm:$0xff] %vm2933, %v2888
  %v2978 = vld [vmem:[#allocation2 + $0x26] sm:$0xff]
  %v2979 = vld [vmem:[#allocation2 + $0x2e] sm:$0xff]
  %v2980 = vld [vmem:[#allocation2 + $0x36] sm:$0xff]
  %v2981 = vld [vmem:[#allocation2 + $0x3e] sm:$0xff]
  %v2982 = vld [vmem:[#allocation2 + $0x46] sm:$0xff]
  %v2983 = vld [vmem:[#allocation2 + $0x4e] sm:$0xff]
  %v2984 = vld [vmem:[#allocation2 + $0x56] sm:$0xff]
  %v2985 = vld [vmem:[#allocation2 + $0x5e] sm:$0xff]
  %v2986 = vld [vmem:[#allocation2 + $0x66] sm:$0xff]
  %v2987 = vld [vmem:[#allocation2 + $0x6e] sm:$0xff]
  %v2988 = vld [vmem:[#allocation2 + $0x76] sm:$0xff]
  %v2989 = vld [vmem:[#allocation2 + $0x7e] sm:$0xff]
  %v2990 = vld [vmem:[#allocation2 + $0x86] sm:$0xff]
  %v2991 = vld [vmem:[#allocation2 + $0x8e] sm:$0xff]
  %v2992 = vld [vmem:[#allocation2 + $0x96] sm:$0xff]
  %v2993 = vld [vmem:[#allocation2 + $0x9e] sm:$0xff]
  %v2994 = vld [vmem:[#allocation2 + $0xa6] sm:$0xff]
  %v2995 = vld [vmem:[#allocation2 + $0xae] sm:$0xff]
  %v2996 = vld [vmem:[#allocation2 + $0xb6] sm:$0xff]
  %v2997 = vld [vmem:[#allocation2 + $0xbe] sm:$0xff]
  %v2998 = vld [vmem:[#allocation2 + $0xc6] sm:$0xff]
  %v2999 = vld [vmem:[#allocation2 + $0xce] sm:$0xff]
  %v3000 = vld [vmem:[#allocation2 + $0xd6] sm:$0xff]
  %v3001 = vld [vmem:[#allocation2 + $0xde] sm:$0xff]
  %v3002 = vld [vmem:[#allocation2 + $0xe6] sm:$0xff]
  %v3003 = vld [vmem:[#allocation2 + $0xee] sm:$0xff]
  %v3004 = vld [vmem:[#allocation2 + $0xf6] sm:$0xff]
  %v3005 = vld [vmem:[#allocation2 + $0xfe] sm:$0xff]
  %v3006 = vld [vmem:[#allocation2 + $0x106] sm:$0xff]
  %v3007 = vld [vmem:[#allocation2 + $0x10e] sm:$0xff]
  %v3008 = vld [vmem:[#allocation2 + $0x116] sm:$0xff]
  %v3009 = vld [vmem:[#allocation2 + $0x11e] sm:$0xff]
  %v3010 = vld [vmem:[#allocation2 + $0x126] sm:$0xff]
  %v3011 = vld [vmem:[#allocation2 + $0x12e] sm:$0xff]
  %v3012 = vld [vmem:[#allocation2 + $0x136] sm:$0xff]
  %v3013 = vld [vmem:[#allocation2 + $0x13e] sm:$0xff]
  %v3014 = vld [vmem:[#allocation2 + $0x146] sm:$0xff]
  %v3015 = vld [vmem:[#allocation2 + $0x14e] sm:$0xff]
  %v3016 = vld [vmem:[#allocation2 + $0x156] sm:$0xff]
  %v3017 = vld [vmem:[#allocation2 + $0x15e] sm:$0xff]
  %v3018 = vld [vmem:[#allocation2 + $0x166] sm:$0xff]
  %v3019 = vld [vmem:[#allocation2 + $0x16e] sm:$0xff]
  %v3020 = vld [vmem:[#allocation2 + $0x176] sm:$0xff]
  %v3021 = vld [vmem:[#allocation2 + $0x17e] sm:$0xff]
  %v3022 = vld [vmem:[#allocation2 + $0x186] sm:$0xff]
  %v3023 = vld [vmem:[#allocation2 + $0x18e] sm:$0xff]
  %v3024 = vld [vmem:[#allocation2 + $0x196] sm:$0xff]
  %v3025 = vld [vmem:[#allocation2 + $0x19e] sm:$0xff]
  %v3026 = vld [vmem:[#allocation2 + $0x1a6] sm:$0xff]
  %v3027 = vld [vmem:[#allocation2 + $0x1ae] sm:$0xff]
  %v3028 = vld [vmem:[#allocation2 + $0x1b6] sm:$0xff]
  %v3029 = vld [vmem:[#allocation2 + $0x1be] sm:$0xff]
  %v3030 = vld [vmem:[#allocation2 + $0x1c6] sm:$0xff]
  %v3031 = vld [vmem:[#allocation2 + $0x1ce] sm:$0xff]
  %v3032 = vld [vmem:[#allocation2 + $0x1d6] sm:$0xff]
  %v3033 = vld [vmem:[#allocation2 + $0x1de] sm:$0xff]
  %v3034 = vld [vmem:[#allocation2 + $0x1e6] sm:$0xff]
  %v3035 = vld [vmem:[#allocation2 + $0x1ee] sm:$0xff]
  %v3036 = vld [vmem:[#allocation2 + $0x1f6] sm:$0xff]
  %v3037 = vld [vmem:[#allocation2 + $0x1fe] sm:$0xff]
  %v3038 = vld [vmem:[#allocation2 + $0x206] sm:$0xff]
  %v3039 = vld [vmem:[#allocation2 + $0x20e] sm:$0xff]
  %v3040 = vld [vmem:[#allocation2 + $0x216] sm:$0xff]
  %v3041 = vld [vmem:[#allocation2 + $0x21e] sm:$0xff]
  %v3042 = vld [vmem:[#allocation2 + $0x226] sm:$0xff]
  %v3043 = vld [vmem:[#allocation2 + $0x22e] sm:$0xff]
  %v3044 = vld [vmem:[#allocation2 + $0x236] sm:$0xff]
  %v3045 = vld [vmem:[#allocation2 + $0x23e] sm:$0xff]
  %v3046 = vld [vmem:[#allocation2 + $0x246] sm:$0xff]
  %v3047 = vld [vmem:[#allocation2 + $0x24e] sm:$0xff]
  %v3048 = vld [vmem:[#allocation2 + $0x256] sm:$0xff]
  %v3049 = vld [vmem:[#allocation2 + $0x25e] sm:$0xff]
  %v3050 = vld [vmem:[#allocation2 + $0x266] sm:$0xff]
  %v3051 = vld [vmem:[#allocation2 + $0x26e] sm:$0xff]
  %v3052 = vld [vmem:[#allocation2 + $0x276] sm:$0xff]
  %v3053 = vld [vmem:[#allocation2 + $0x27e] sm:$0xff]
  %v3054 = vld [vmem:[#allocation2 + $0x286] sm:$0xff]
  %v3055 = vld [vmem:[#allocation2 + $0x28e] sm:$0xff]
  %v3056 = vld [vmem:[#allocation2 + $0x296] sm:$0xff]
  %v3057 = vld [vmem:[#allocation2 + $0x29e] sm:$0xff]
  %v3058 = vld [vmem:[#allocation2 + $0x2a6] sm:$0xff]
  %v3059 = vld [vmem:[#allocation2 + $0x2ae] sm:$0xff]
  %v3060 = vld [vmem:[#allocation2 + $0x2b6] sm:$0xff]
  %v3061 = vld [vmem:[#allocation2 + $0x2be] sm:$0xff]
  %v3062 = vld [vmem:[#allocation2 + $0x2c6] sm:$0xff]
  %v3063 = vld [vmem:[#allocation2 + $0x2ce] sm:$0xff]
  %v3064 = vld [vmem:[#allocation2 + $0x2d6] sm:$0xff]
  %v3065 = vld [vmem:[#allocation2 + $0x2de] sm:$0xff]
  %v3066 = vpack.c.bf16 %v2979, %v2978
  %v3067 = vpack.c.bf16 %v2981, %v2980
  %v3068 = vpack.c.bf16 %v2983, %v2982
  %v3069 = vpack.c.bf16 %v2985, %v2984
  %v3070 = vpack.c.bf16 %v2987, %v2986
  %v3071 = vpack.c.bf16 %v2989, %v2988
  %v3072 = vpack.c.bf16 %v2991, %v2990
  %v3073 = vpack.c.bf16 %v2993, %v2992
  %v3074 = vpack.c.bf16 %v2995, %v2994
  %v3075 = vpack.c.bf16 %v2997, %v2996
  %v3076 = vpack.c.bf16 %v2999, %v2998
  %v3077 = vpack.c.bf16 %v3001, %v3000
  %v3078 = vpack.c.bf16 %v3003, %v3002
  %v3079 = vpack.c.bf16 %v3005, %v3004
  %v3080 = vpack.c.bf16 %v3007, %v3006
  %v3081 = vpack.c.bf16 %v3009, %v3008
  %v3082 = vpack.c.bf16 %v3011, %v3010
  %v3083 = vpack.c.bf16 %v3013, %v3012
  %v3084 = vpack.c.bf16 %v3015, %v3014
  %v3085 = vpack.c.bf16 %v3017, %v3016
  %v3086 = vpack.c.bf16 %v3019, %v3018
  %v3087 = vpack.c.bf16 %v3021, %v3020
  %v3088 = vpack.c.bf16 %v3023, %v3022
  %v3089 = vpack.c.bf16 %v3025, %v3024
  %v3090 = vpack.c.bf16 %v3027, %v3026
  %v3091 = vpack.c.bf16 %v3029, %v3028
  %v3092 = vpack.c.bf16 %v3031, %v3030
  %v3093 = vpack.c.bf16 %v3033, %v3032
  %v3094 = vpack.c.bf16 %v3035, %v3034
  %v3095 = vpack.c.bf16 %v3037, %v3036
  %v3096 = vpack.c.bf16 %v3039, %v3038
  %v3097 = vpack.c.bf16 %v3041, %v3040
  %v3098 = vpack.c.bf16 %v3043, %v3042
  %v3099 = vpack.c.bf16 %v3045, %v3044
  %v3100 = vpack.c.bf16 %v3047, %v3046
  %v3101 = vpack.c.bf16 %v3049, %v3048
  %v3102 = vpack.c.bf16 %v3051, %v3050
  %v3103 = vpack.c.bf16 %v3053, %v3052
  %v3104 = vpack.c.bf16 %v3055, %v3054
  %v3105 = vpack.c.bf16 %v3057, %v3056
  %v3106 = vpack.c.bf16 %v3059, %v3058
  %v3107 = vpack.c.bf16 %v3061, %v3060
  %v3108 = vpack.c.bf16 %v3063, %v3062
  %v3109 = vpack.c.bf16 %v3065, %v3064
  %3154 = vrot.lane.b32.xlu0 %v3066, 32
  %v3155 = vpop.permute.xlu0 %3154
  %3156 = vrot.lane.b32.xlu0 %v3067, 32
  %v3157 = vpop.permute.xlu0 %3156
  %3158 = vrot.lane.b32.xlu0 %v3068, 32
  %v3159 = vpop.permute.xlu0 %3158
  %3160 = vrot.lane.b32.xlu0 %v3069, 32
  %v3161 = vpop.permute.xlu0 %3160
  %3162 = vrot.lane.b32.xlu0 %v3070, 32
  %v3163 = vpop.permute.xlu0 %3162
  %3164 = vrot.lane.b32.xlu0 %v3071, 32
  %v3165 = vpop.permute.xlu0 %3164
  %3166 = vrot.lane.b32.xlu0 %v3072, 32
  %v3167 = vpop.permute.xlu0 %3166
  %3168 = vrot.lane.b32.xlu0 %v3073, 32
  %v3169 = vpop.permute.xlu0 %3168
  %3170 = vrot.lane.b32.xlu0 %v3074, 32
  %v3171 = vpop.permute.xlu0 %3170
  %3172 = vrot.lane.b32.xlu0 %v3075, 32
  %v3173 = vpop.permute.xlu0 %3172
  %3174 = vrot.lane.b32.xlu0 %v3076, 32
  %v3175 = vpop.permute.xlu0 %3174
  %3176 = vrot.lane.b32.xlu0 %v3077, 32
  %v3177 = vpop.permute.xlu0 %3176
  %3178 = vrot.lane.b32.xlu0 %v3078, 32
  %v3179 = vpop.permute.xlu0 %3178
  %3180 = vrot.lane.b32.xlu0 %v3079, 32
  %v3181 = vpop.permute.xlu0 %3180
  %3182 = vrot.lane.b32.xlu0 %v3080, 32
  %v3183 = vpop.permute.xlu0 %3182
  %3184 = vrot.lane.b32.xlu0 %v3081, 32
  %v3185 = vpop.permute.xlu0 %3184
  %3186 = vrot.lane.b32.xlu0 %v3082, 32
  %v3187 = vpop.permute.xlu0 %3186
  %3188 = vrot.lane.b32.xlu0 %v3083, 32
  %v3189 = vpop.permute.xlu0 %3188
  %3190 = vrot.lane.b32.xlu0 %v3084, 32
  %v3191 = vpop.permute.xlu0 %3190
  %3192 = vrot.lane.b32.xlu0 %v3085, 32
  %v3193 = vpop.permute.xlu0 %3192
  %3194 = vrot.lane.b32.xlu0 %v3086, 32
  %v3195 = vpop.permute.xlu0 %3194
  %3196 = vrot.lane.b32.xlu0 %v3087, 32
  %v3197 = vpop.permute.xlu0 %3196
  %3198 = vrot.lane.b32.xlu0 %v3088, 32
  %v3199 = vpop.permute.xlu0 %3198
  %3200 = vrot.lane.b32.xlu0 %v3089, 32
  %v3201 = vpop.permute.xlu0 %3200
  %3202 = vrot.lane.b32.xlu0 %v3090, 32
  %v3203 = vpop.permute.xlu0 %3202
  %3204 = vrot.lane.b32.xlu0 %v3091, 32
  %v3205 = vpop.permute.xlu0 %3204
  %3206 = vrot.lane.b32.xlu0 %v3092, 32
  %v3207 = vpop.permute.xlu0 %3206
  %3208 = vrot.lane.b32.xlu0 %v3093, 32
  %v3209 = vpop.permute.xlu0 %3208
  %3210 = vrot.lane.b32.xlu0 %v3094, 32
  %v3211 = vpop.permute.xlu0 %3210
  %3212 = vrot.lane.b32.xlu0 %v3095, 32
  %v3213 = vpop.permute.xlu0 %3212
  %3214 = vrot.lane.b32.xlu0 %v3096, 32
  %v3215 = vpop.permute.xlu0 %3214
  %3216 = vrot.lane.b32.xlu0 %v3097, 32
  %v3217 = vpop.permute.xlu0 %3216
  %3218 = vrot.lane.b32.xlu0 %v3098, 32
  %v3219 = vpop.permute.xlu0 %3218
  %3220 = vrot.lane.b32.xlu0 %v3099, 32
  %v3221 = vpop.permute.xlu0 %3220
  %3222 = vrot.lane.b32.xlu0 %v3100, 32
  %v3223 = vpop.permute.xlu0 %3222
  %3224 = vrot.lane.b32.xlu0 %v3101, 32
  %v3225 = vpop.permute.xlu0 %3224
  %3226 = vrot.lane.b32.xlu0 %v3102, 32
  %v3227 = vpop.permute.xlu0 %3226
  %3228 = vrot.lane.b32.xlu0 %v3103, 32
  %v3229 = vpop.permute.xlu0 %3228
  %3230 = vrot.lane.b32.xlu0 %v3104, 32
  %v3231 = vpop.permute.xlu0 %3230
  %3232 = vrot.lane.b32.xlu0 %v3105, 32
  %v3233 = vpop.permute.xlu0 %3232
  %3234 = vrot.lane.b32.xlu0 %v3106, 32
  %v3235 = vpop.permute.xlu0 %3234
  %3236 = vrot.lane.b32.xlu0 %v3107, 32
  %v3237 = vpop.permute.xlu0 %3236
  %3238 = vrot.lane.b32.xlu0 %v3108, 32
  %v3239 = vpop.permute.xlu0 %3238
  %3240 = vrot.lane.b32.xlu0 %v3109, 32
  %v3241 = vpop.permute.xlu0 %3240
  %vm3286 = vcmask 294144
  %3287 = vst.msk [vmem:[#allocation3] sm:$0xff] %vm3286, %v3155
  %3288 = vst.msk [vmem:[#allocation3 + $0x8] sm:$0xff] %vm3286, %v3157
  %3289 = vst.msk [vmem:[#allocation3 + $0x10] sm:$0xff] %vm3286, %v3159
  %3290 = vst.msk [vmem:[#allocation3 + $0x18] sm:$0xff] %vm3286, %v3161
  %3291 = vst.msk [vmem:[#allocation3 + $0x20] sm:$0xff] %vm3286, %v3163
  %3292 = vst.msk [vmem:[#allocation3 + $0x28] sm:$0xff] %vm3286, %v3165
  %3293 = vst.msk [vmem:[#allocation3 + $0x30] sm:$0xff] %vm3286, %v3167
  %3294 = vst.msk [vmem:[#allocation3 + $0x38] sm:$0xff] %vm3286, %v3169
  %3295 = vst.msk [vmem:[#allocation3 + $0x40] sm:$0xff] %vm3286, %v3171
  %3296 = vst.msk [vmem:[#allocation3 + $0x48] sm:$0xff] %vm3286, %v3173
  %3297 = vst.msk [vmem:[#allocation3 + $0x50] sm:$0xff] %vm3286, %v3175
  %3298 = vst.msk [vmem:[#allocation3 + $0x58] sm:$0xff] %vm3286, %v3177
  %3299 = vst.msk [vmem:[#allocation3 + $0x60] sm:$0xff] %vm3286, %v3179
  %3300 = vst.msk [vmem:[#allocation3 + $0x68] sm:$0xff] %vm3286, %v3181
  %3301 = vst.msk [vmem:[#allocation3 + $0x70] sm:$0xff] %vm3286, %v3183
  %3302 = vst.msk [vmem:[#allocation3 + $0x78] sm:$0xff] %vm3286, %v3185
  %3303 = vst.msk [vmem:[#allocation3 + $0x80] sm:$0xff] %vm3286, %v3187
  %3304 = vst.msk [vmem:[#allocation3 + $0x88] sm:$0xff] %vm3286, %v3189
  %3305 = vst.msk [vmem:[#allocation3 + $0x90] sm:$0xff] %vm3286, %v3191
  %3306 = vst.msk [vmem:[#allocation3 + $0x98] sm:$0xff] %vm3286, %v3193
  %3307 = vst.msk [vmem:[#allocation3 + $0xa0] sm:$0xff] %vm3286, %v3195
  %3308 = vst.msk [vmem:[#allocation3 + $0xa8] sm:$0xff] %vm3286, %v3197
  %3309 = vst.msk [vmem:[#allocation3 + $0xb0] sm:$0xff] %vm3286, %v3199
  %3310 = vst.msk [vmem:[#allocation3 + $0xb8] sm:$0xff] %vm3286, %v3201
  %3311 = vst.msk [vmem:[#allocation3 + $0xc0] sm:$0xff] %vm3286, %v3203
  %3312 = vst.msk [vmem:[#allocation3 + $0xc8] sm:$0xff] %vm3286, %v3205
  %3313 = vst.msk [vmem:[#allocation3 + $0xd0] sm:$0xff] %vm3286, %v3207
  %3314 = vst.msk [vmem:[#allocation3 + $0xd8] sm:$0xff] %vm3286, %v3209
  %3315 = vst.msk [vmem:[#allocation3 + $0xe0] sm:$0xff] %vm3286, %v3211
  %3316 = vst.msk [vmem:[#allocation3 + $0xe8] sm:$0xff] %vm3286, %v3213
  %3317 = vst.msk [vmem:[#allocation3 + $0xf0] sm:$0xff] %vm3286, %v3215
  %3318 = vst.msk [vmem:[#allocation3 + $0xf8] sm:$0xff] %vm3286, %v3217
  %3319 = vst.msk [vmem:[#allocation3 + $0x100] sm:$0xff] %vm3286, %v3219
  %3320 = vst.msk [vmem:[#allocation3 + $0x108] sm:$0xff] %vm3286, %v3221
  %3321 = vst.msk [vmem:[#allocation3 + $0x110] sm:$0xff] %vm3286, %v3223
  %3322 = vst.msk [vmem:[#allocation3 + $0x118] sm:$0xff] %vm3286, %v3225
  %3323 = vst.msk [vmem:[#allocation3 + $0x120] sm:$0xff] %vm3286, %v3227
  %3324 = vst.msk [vmem:[#allocation3 + $0x128] sm:$0xff] %vm3286, %v3229
  %3325 = vst.msk [vmem:[#allocation3 + $0x130] sm:$0xff] %vm3286, %v3231
  %3326 = vst.msk [vmem:[#allocation3 + $0x138] sm:$0xff] %vm3286, %v3233
  %3327 = vst.msk [vmem:[#allocation3 + $0x140] sm:$0xff] %vm3286, %v3235
  %3328 = vst.msk [vmem:[#allocation3 + $0x148] sm:$0xff] %vm3286, %v3237
  %3329 = vst.msk [vmem:[#allocation3 + $0x150] sm:$0xff] %vm3286, %v3239
  %3330 = vst.msk [vmem:[#allocation3 + $0x158] sm:$0xff] %vm3286, %v3241
  %v3331 = vld [vmem:[#allocation3] sm:$0xff]
  %v3332 = vld [vmem:[#allocation3 + $0x8] sm:$0xff]
  %v3333 = vld [vmem:[#allocation3 + $0x10] sm:$0xff]
  %v3334 = vld [vmem:[#allocation3 + $0x18] sm:$0xff]
  %v3335 = vld [vmem:[#allocation3 + $0x20] sm:$0xff]
  %v3336 = vld [vmem:[#allocation3 + $0x28] sm:$0xff]
  %v3337 = vld [vmem:[#allocation3 + $0x30] sm:$0xff]
  %v3338 = vld [vmem:[#allocation3 + $0x38] sm:$0xff]
  %v3339 = vld [vmem:[#allocation3 + $0x40] sm:$0xff]
  %v3340 = vld [vmem:[#allocation3 + $0x48] sm:$0xff]
  %v3341 = vld [vmem:[#allocation3 + $0x50] sm:$0xff]
  %v3342 = vld [vmem:[#allocation3 + $0x58] sm:$0xff]
  %v3343 = vld [vmem:[#allocation3 + $0x60] sm:$0xff]
  %v3344 = vld [vmem:[#allocation3 + $0x68] sm:$0xff]
  %v3345 = vld [vmem:[#allocation3 + $0x70] sm:$0xff]
  %v3346 = vld [vmem:[#allocation3 + $0x78] sm:$0xff]
  %v3347 = vld [vmem:[#allocation3 + $0x80] sm:$0xff]
  %v3348 = vld [vmem:[#allocation3 + $0x88] sm:$0xff]
  %v3349 = vld [vmem:[#allocation3 + $0x90] sm:$0xff]
  %v3350 = vld [vmem:[#allocation3 + $0x98] sm:$0xff]
  %v3351 = vld [vmem:[#allocation3 + $0xa0] sm:$0xff]
  %v3352 = vld [vmem:[#allocation3 + $0xa8] sm:$0xff]
  %v3353 = vld [vmem:[#allocation3 + $0xb0] sm:$0xff]
  %v3354 = vld [vmem:[#allocation3 + $0xb8] sm:$0xff]
  %v3355 = vld [vmem:[#allocation3 + $0xc0] sm:$0xff]
  %v3356 = vld [vmem:[#allocation3 + $0xc8] sm:$0xff]
  %v3357 = vld [vmem:[#allocation3 + $0xd0] sm:$0xff]
  %v3358 = vld [vmem:[#allocation3 + $0xd8] sm:$0xff]
  %v3359 = vld [vmem:[#allocation3 + $0xe0] sm:$0xff]
  %v3360 = vld [vmem:[#allocation3 + $0xe8] sm:$0xff]
  %v3361 = vld [vmem:[#allocation3 + $0xf0] sm:$0xff]
  %v3362 = vld [vmem:[#allocation3 + $0xf8] sm:$0xff]
  %v3363 = vld [vmem:[#allocation3 + $0x100] sm:$0xff]
  %v3364 = vld [vmem:[#allocation3 + $0x108] sm:$0xff]
  %v3365 = vld [vmem:[#allocation3 + $0x110] sm:$0xff]
  %v3366 = vld [vmem:[#allocation3 + $0x118] sm:$0xff]
  %v3367 = vld [vmem:[#allocation3 + $0x120] sm:$0xff]
  %v3368 = vld [vmem:[#allocation3 + $0x128] sm:$0xff]
  %v3369 = vld [vmem:[#allocation3 + $0x130] sm:$0xff]
  %v3370 = vld [vmem:[#allocation3 + $0x138] sm:$0xff]
  %v3371 = vld [vmem:[#allocation3 + $0x140] sm:$0xff]
  %v3372 = vld [vmem:[#allocation3 + $0x148] sm:$0xff]
  %v3373 = vld [vmem:[#allocation3 + $0x150] sm:$0xff]
  %v3374 = vld [vmem:[#allocation3 + $0x158] sm:$0xff]
  %v3375 = vld [vmem:[%s2] sm:$0xf]
  %v3376 = vld [vmem:[%s2 + $0x4] sm:$0xf]
  %v3377 = vld [vmem:[%s2 + $0x8] sm:$0xf]
  %v3378 = vld [vmem:[%s2 + $0xc] sm:$0xf]
  %v3379 = vld [vmem:[%s2 + $0x10] sm:$0x3]
  %v3385 = vunpack.c.l.b16 %v3375
  %v3386 = vunpack.c.l.b16 %v3376
  %v3387 = vunpack.c.l.b16 %v3377
  %v3388 = vunpack.c.l.b16 %v3378
  %v3389 = vunpack.c.l.b16 %v3379
  %v3390 = vpack.c.b16 %v3386, %v3385
  %v3391 = vpack.c.b16 %v3388, %v3387
  %v3392 = vpack.c.b16 %v3389, %v3389
  %vm3395 = vcmask 293888
  %v3397 = vsel %vm3395, %v3331, 0
  %v3400 = vsel %vm3395, %v3332, 0
  %v3403 = vsel %vm3395, %v3333, 0
  %v3406 = vsel %vm3395, %v3334, 0
  %v3409 = vsel %vm3395, %v3335, 0
  %v3412 = vsel %vm3395, %v3336, 0
  %v3415 = vsel %vm3395, %v3337, 0
  %v3418 = vsel %vm3395, %v3338, 0
  %v3421 = vsel %vm3395, %v3339, 0
  %v3424 = vsel %vm3395, %v3340, 0
  %v3427 = vsel %vm3395, %v3341, 0
  %v3430 = vsel %vm3395, %v3342, 0
  %v3433 = vsel %vm3395, %v3343, 0
  %v3436 = vsel %vm3395, %v3344, 0
  %v3439 = vsel %vm3395, %v3345, 0
  %v3442 = vsel %vm3395, %v3346, 0
  %v3445 = vsel %vm3395, %v3347, 0
  %v3448 = vsel %vm3395, %v3348, 0
  %v3451 = vsel %vm3395, %v3349, 0
  %v3454 = vsel %vm3395, %v3350, 0
  %v3457 = vsel %vm3395, %v3351, 0
  %v3460 = vsel %vm3395, %v3352, 0
  %v3463 = vsel %vm3395, %v3353, 0
  %v3466 = vsel %vm3395, %v3354, 0
  %v3469 = vsel %vm3395, %v3355, 0
  %v3472 = vsel %vm3395, %v3356, 0
  %v3475 = vsel %vm3395, %v3357, 0
  %v3478 = vsel %vm3395, %v3358, 0
  %v3481 = vsel %vm3395, %v3359, 0
  %v3484 = vsel %vm3395, %v3360, 0
  %v3487 = vsel %vm3395, %v3361, 0
  %v3490 = vsel %vm3395, %v3362, 0
  %v3493 = vsel %vm3395, %v3363, 0
  %v3496 = vsel %vm3395, %v3364, 0
  %v3499 = vsel %vm3395, %v3365, 0
  %v3502 = vsel %vm3395, %v3366, 0
  %v3505 = vsel %vm3395, %v3367, 0
  %v3508 = vsel %vm3395, %v3368, 0
  %v3511 = vsel %vm3395, %v3369, 0
  %v3514 = vsel %vm3395, %v3370, 0
  %v3517 = vsel %vm3395, %v3371, 0
  %v3520 = vsel %vm3395, %v3372, 0
  %v3523 = vsel %vm3395, %v3373, 0
  %v3526 = vsel %vm3395, %v3374, 0
  %vm3528 = vcmask 1041408
  %v3530 = vsel %vm3528, %v3392, 0
  %3532 = vmatprep.subr.bf16.mxu0 0
  %3533 = vmatpush1.bf16.msra.mxu0 %v3390
  %3534 = vmatprep.subr.bf16.mxu0 0
  %3535 = vmatpush1.bf16.msra.mxu0 %v3391
  %3536 = vmatprep.subr.bf16.mxu0 0
  %3537 = vmatpush1.bf16.msra.mxu0 %v3530
  %3538 = vmatprep.subr.bf16.mxu0 0
  %3539 = vmatpush1.bf16.msra.mxu0 0
  %3540 = vmatprep.subr.bf16.mxu0 0
  %3541 = vmatpush1.bf16.msra.mxu0 0
  %3542 = vmatprep.subr.bf16.mxu0 0
  %3543 = vmatpush1.bf16.msra.mxu0 0
  %3544 = vmatprep.subr.bf16.mxu0 0
  %3545 = vmatpush1.bf16.msra.mxu0 0
  %3546 = vmatprep.subr.bf16.mxu0 0
  %3547 = vmatpush1.bf16.msra.mxu0 0
  %3548 = vmatprep.subr.bf16.mxu0 0
  %3549 = vmatpush1.bf16.msra.mxu0 0
  %3550 = vmatprep.subr.bf16.mxu0 0
  %3551 = vmatpush1.bf16.msra.mxu0 0
  %3552 = vmatprep.subr.bf16.mxu0 0
  %3553 = vmatpush1.bf16.msra.mxu0 0
  %3554 = vmatprep.subr.bf16.mxu0 0
  %3555 = vmatpush1.bf16.msra.mxu0 0
  %3556 = vmatprep.subr.bf16.mxu0 0
  %3557 = vmatpush1.bf16.msra.mxu0 0
  %3558 = vmatprep.subr.bf16.mxu0 0
  %3559 = vmatpush1.bf16.msra.mxu0 0
  %3560 = vmatprep.subr.bf16.mxu0 0
  %3561 = vmatpush1.bf16.msra.mxu0 0
  %3562 = vmatprep.subr.bf16.mxu0 0
  %3563 = vmatpush1.bf16.msra.mxu0 0
  %3564 = vmatprep.mubr.bf16.mxu0 0
  %3565 = vmatmul.mubr.bf16.gmra.mrb[0].mxu0 %v3397
  %v3566 = vpop.f32.mrb[0].mxu0
  %v3567 = vadd.f32 0.0, %v3566
  %v3568 = vpop.f32.mrb[0].mxu0
  %v3569 = vpop.f32.mrb[0].mxu0
  %v3570 = vadd.f32 0.0, %v3569
  %v3571 = vpop.f32.mrb[0].mxu0
  %3572 = vmatprep.mubr.bf16.mxu0 0
  %3573 = vmatmul.mubr.bf16.gmra.mrb[0].mxu0 %v3400
  %v3574 = vpop.f32.mrb[0].mxu0
  %v3575 = vadd.f32 0.0, %v3574
  %v3576 = vpop.f32.mrb[0].mxu0
  %v3577 = vpop.f32.mrb[0].mxu0
  %v3578 = vadd.f32 0.0, %v3577
  %v3579 = vpop.f32.mrb[0].mxu0
  %3580 = vmatprep.mubr.bf16.mxu0 0
  %3581 = vmatmul.mubr.bf16.gmra.mrb[0].mxu0 %v3403
  %v3582 = vpop.f32.mrb[0].mxu0
  %v3583 = vadd.f32 0.0, %v3582
  %v3584 = vpop.f32.mrb[0].mxu0
  %v3585 = vpop.f32.mrb[0].mxu0
  %v3586 = vadd.f32 0.0, %v3585
  %v3587 = vpop.f32.mrb[0].mxu0
  %3588 = vmatprep.mubr.bf16.mxu0 0
  %3589 = vmatmul.mubr.bf16.gmra.mrb[0].mxu0 %v3406
  %v3590 = vpop.f32.mrb[0].mxu0
  %v3591 = vadd.f32 0.0, %v3590
  %v3592 = vpop.f32.mrb[0].mxu0
  %v3593 = vpop.f32.mrb[0].mxu0
  %v3594 = vadd.f32 0.0, %v3593
  %v3595 = vpop.f32.mrb[0].mxu0
  %3596 = vmatprep.mubr.bf16.mxu0 0
  %3597 = vmatmul.mubr.bf16.gmra.mrb[0].mxu0 %v3409
  %v3598 = vpop.f32.mrb[0].mxu0
  %v3599 = vadd.f32 0.0, %v3598
  %v3600 = vpop.f32.mrb[0].mxu0
  %v3601 = vpop.f32.mrb[0].mxu0
  %v3602 = vadd.f32 0.0, %v3601
  %v3603 = vpop.f32.mrb[0].mxu0
  %3604 = vmatprep.mubr.bf16.mxu0 0
  %3605 = vmatmul.mubr.bf16.gmra.mrb[0].mxu0 %v3412
  %v3606 = vpop.f32.mrb[0].mxu0
  %v3607 = vadd.f32 0.0, %v3606
  %v3608 = vpop.f32.mrb[0].mxu0
  %v3609 = vpop.f32.mrb[0].mxu0
  %v3610 = vadd.f32 0.0, %v3609
  %v3611 = vpop.f32.mrb[0].mxu0
  %3612 = vmatprep.mubr.bf16.mxu0 0
  %3613 = vmatmul.mubr.bf16.gmra.mrb[0].mxu0 %v3415
  %v3614 = vpop.f32.mrb[0].mxu0
  %v3615 = vadd.f32 0.0, %v3614
  %v3616 = vpop.f32.mrb[0].mxu0
  %v3617 = vpop.f32.mrb[0].mxu0
  %v3618 = vadd.f32 0.0, %v3617
  %v3619 = vpop.f32.mrb[0].mxu0
  %3620 = vmatprep.mubr.bf16.mxu0 0
  %3621 = vmatmul.mubr.bf16.gmra.mrb[0].mxu0 %v3418
  %v3622 = vpop.f32.mrb[0].mxu0
  %v3623 = vadd.f32 0.0, %v3622
  %v3624 = vpop.f32.mrb[0].mxu0
  %v3625 = vpop.f32.mrb[0].mxu0
  %v3626 = vadd.f32 0.0, %v3625
  %v3627 = vpop.f32.mrb[0].mxu0
  %3628 = vmatprep.mubr.bf16.mxu0 0
  %3629 = vmatmul.mubr.bf16.gmra.mrb[0].mxu0 %v3421
  %v3630 = vpop.f32.mrb[0].mxu0
  %v3631 = vadd.f32 0.0, %v3630
  %v3632 = vpop.f32.mrb[0].mxu0
  %v3633 = vpop.f32.mrb[0].mxu0
  %v3634 = vadd.f32 0.0, %v3633
  %v3635 = vpop.f32.mrb[0].mxu0
  %3636 = vmatprep.mubr.bf16.mxu0 0
  %3637 = vmatmul.mubr.bf16.gmra.mrb[0].mxu0 %v3424
  %v3638 = vpop.f32.mrb[0].mxu0
  %v3639 = vadd.f32 0.0, %v3638
  %v3640 = vpop.f32.mrb[0].mxu0
  %v3641 = vpop.f32.mrb[0].mxu0
  %v3642 = vadd.f32 0.0, %v3641
  %v3643 = vpop.f32.mrb[0].mxu0
  %3644 = vmatprep.mubr.bf16.mxu0 0
  %3645 = vmatmul.mubr.bf16.gmra.mrb[0].mxu0 %v3427
  %v3646 = vpop.f32.mrb[0].mxu0
  %v3647 = vadd.f32 0.0, %v3646
  %v3648 = vpop.f32.mrb[0].mxu0
  %v3649 = vpop.f32.mrb[0].mxu0
  %v3650 = vadd.f32 0.0, %v3649
  %v3651 = vpop.f32.mrb[0].mxu0
  %3652 = vmatprep.mubr.bf16.mxu0 0
  %3653 = vmatmul.mubr.bf16.gmra.mrb[0].mxu0 %v3430
  %v3654 = vpop.f32.mrb[0].mxu0
  %v3655 = vadd.f32 0.0, %v3654
  %v3656 = vpop.f32.mrb[0].mxu0
  %v3657 = vpop.f32.mrb[0].mxu0
  %v3658 = vadd.f32 0.0, %v3657
  %v3659 = vpop.f32.mrb[0].mxu0
  %3660 = vmatprep.mubr.bf16.mxu0 0
  %3661 = vmatmul.mubr.bf16.gmra.mrb[0].mxu0 %v3433
  %v3662 = vpop.f32.mrb[0].mxu0
  %v3663 = vadd.f32 0.0, %v3662
  %v3664 = vpop.f32.mrb[0].mxu0
  %v3665 = vpop.f32.mrb[0].mxu0
  %v3666 = vadd.f32 0.0, %v3665
  %v3667 = vpop.f32.mrb[0].mxu0
  %3668 = vmatprep.mubr.bf16.mxu0 0
  %3669 = vmatmul.mubr.bf16.gmra.mrb[0].mxu0 %v3436
  %v3670 = vpop.f32.mrb[0].mxu0
  %v3671 = vadd.f32 0.0, %v3670
  %v3672 = vpop.f32.mrb[0].mxu0
  %v3673 = vpop.f32.mrb[0].mxu0
  %v3674 = vadd.f32 0.0, %v3673
  %v3675 = vpop.f32.mrb[0].mxu0
  %3676 = vmatprep.mubr.bf16.mxu0 0
  %3677 = vmatmul.mubr.bf16.gmra.mrb[0].mxu0 %v3439
  %v3678 = vpop.f32.mrb[0].mxu0
  %v3679 = vadd.f32 0.0, %v3678
  %v3680 = vpop.f32.mrb[0].mxu0
  %v3681 = vpop.f32.mrb[0].mxu0
  %v3682 = vadd.f32 0.0, %v3681
  %v3683 = vpop.f32.mrb[0].mxu0
  %3684 = vmatprep.mubr.bf16.mxu0 0
  %3685 = vmatmul.mubr.bf16.gmra.mrb[0].mxu0 %v3442
  %v3686 = vpop.f32.mrb[0].mxu0
  %v3687 = vadd.f32 0.0, %v3686
  %v3688 = vpop.f32.mrb[0].mxu0
  %v3689 = vpop.f32.mrb[0].mxu0
  %v3690 = vadd.f32 0.0, %v3689
  %v3691 = vpop.f32.mrb[0].mxu0
  %3692 = vmatprep.mubr.bf16.mxu0 0
  %3693 = vmatmul.mubr.bf16.gmra.mrb[0].mxu0 %v3445
  %v3694 = vpop.f32.mrb[0].mxu0
  %v3695 = vadd.f32 0.0, %v3694
  %v3696 = vpop.f32.mrb[0].mxu0
  %v3697 = vpop.f32.mrb[0].mxu0
  %v3698 = vadd.f32 0.0, %v3697
  %v3699 = vpop.f32.mrb[0].mxu0
  %3700 = vmatprep.mubr.bf16.mxu0 0
  %3701 = vmatmul.mubr.bf16.gmra.mrb[0].mxu0 %v3448
  %v3702 = vpop.f32.mrb[0].mxu0
  %v3703 = vadd.f32 0.0, %v3702
  %v3704 = vpop.f32.mrb[0].mxu0
  %v3705 = vpop.f32.mrb[0].mxu0
  %v3706 = vadd.f32 0.0, %v3705
  %v3707 = vpop.f32.mrb[0].mxu0
  %3708 = vmatprep.mubr.bf16.mxu0 0
  %3709 = vmatmul.mubr.bf16.gmra.mrb[0].mxu0 %v3451
  %v3710 = vpop.f32.mrb[0].mxu0
  %v3711 = vadd.f32 0.0, %v3710
  %v3712 = vpop.f32.mrb[0].mxu0
  %v3713 = vpop.f32.mrb[0].mxu0
  %v3714 = vadd.f32 0.0, %v3713
  %v3715 = vpop.f32.mrb[0].mxu0
  %3716 = vmatprep.mubr.bf16.mxu0 0
  %3717 = vmatmul.mubr.bf16.gmra.mrb[0].mxu0 %v3454
  %v3718 = vpop.f32.mrb[0].mxu0
  %v3719 = vadd.f32 0.0, %v3718
  %v3720 = vpop.f32.mrb[0].mxu0
  %v3721 = vpop.f32.mrb[0].mxu0
  %v3722 = vadd.f32 0.0, %v3721
  %v3723 = vpop.f32.mrb[0].mxu0
  %3724 = vmatprep.mubr.bf16.mxu0 0
  %3725 = vmatmul.mubr.bf16.gmra.mrb[0].mxu0 %v3457
  %v3726 = vpop.f32.mrb[0].mxu0
  %v3727 = vadd.f32 0.0, %v3726
  %v3728 = vpop.f32.mrb[0].mxu0
  %v3729 = vpop.f32.mrb[0].mxu0
  %v3730 = vadd.f32 0.0, %v3729
  %v3731 = vpop.f32.mrb[0].mxu0
  %3732 = vmatprep.mubr.bf16.mxu0 0
  %3733 = vmatmul.mubr.bf16.gmra.mrb[0].mxu0 %v3460
  %v3734 = vpop.f32.mrb[0].mxu0
  %v3735 = vadd.f32 0.0, %v3734
  %v3736 = vpop.f32.mrb[0].mxu0
  %v3737 = vpop.f32.mrb[0].mxu0
  %v3738 = vadd.f32 0.0, %v3737
  %v3739 = vpop.f32.mrb[0].mxu0
  %3740 = vmatprep.mubr.bf16.mxu0 0
  %3741 = vmatmul.mubr.bf16.gmra.mrb[0].mxu0 %v3463
  %v3742 = vpop.f32.mrb[0].mxu0
  %v3743 = vadd.f32 0.0, %v3742
  %v3744 = vpop.f32.mrb[0].mxu0
  %v3745 = vpop.f32.mrb[0].mxu0
  %v3746 = vadd.f32 0.0, %v3745
  %v3747 = vpop.f32.mrb[0].mxu0
  %3748 = vmatprep.mubr.bf16.mxu0 0
  %3749 = vmatmul.mubr.bf16.gmra.mrb[0].mxu0 %v3466
  %v3750 = vpop.f32.mrb[0].mxu0
  %v3751 = vadd.f32 0.0, %v3750
  %v3752 = vpop.f32.mrb[0].mxu0
  %v3753 = vpop.f32.mrb[0].mxu0
  %v3754 = vadd.f32 0.0, %v3753
  %v3755 = vpop.f32.mrb[0].mxu0
  %3756 = vmatprep.mubr.bf16.mxu0 0
  %3757 = vmatmul.mubr.bf16.gmra.mrb[0].mxu0 %v3469
  %v3758 = vpop.f32.mrb[0].mxu0
  %v3759 = vadd.f32 0.0, %v3758
  %v3760 = vpop.f32.mrb[0].mxu0
  %v3761 = vpop.f32.mrb[0].mxu0
  %v3762 = vadd.f32 0.0, %v3761
  %v3763 = vpop.f32.mrb[0].mxu0
  %3764 = vmatprep.mubr.bf16.mxu0 0
  %3765 = vmatmul.mubr.bf16.gmra.mrb[0].mxu0 %v3472
  %v3766 = vpop.f32.mrb[0].mxu0
  %v3767 = vadd.f32 0.0, %v3766
  %v3768 = vpop.f32.mrb[0].mxu0
  %v3769 = vpop.f32.mrb[0].mxu0
  %v3770 = vadd.f32 0.0, %v3769
  %v3771 = vpop.f32.mrb[0].mxu0
  %3772 = vmatprep.mubr.bf16.mxu0 0
  %3773 = vmatmul.mubr.bf16.gmra.mrb[0].mxu0 %v3475
  %v3774 = vpop.f32.mrb[0].mxu0
  %v3775 = vadd.f32 0.0, %v3774
  %v3776 = vpop.f32.mrb[0].mxu0
  %v3777 = vpop.f32.mrb[0].mxu0
  %v3778 = vadd.f32 0.0, %v3777
  %v3779 = vpop.f32.mrb[0].mxu0
  %3780 = vmatprep.mubr.bf16.mxu0 0
  %3781 = vmatmul.mubr.bf16.gmra.mrb[0].mxu0 %v3478
  %v3782 = vpop.f32.mrb[0].mxu0
  %v3783 = vadd.f32 0.0, %v3782
  %v3784 = vpop.f32.mrb[0].mxu0
  %v3785 = vpop.f32.mrb[0].mxu0
  %v3786 = vadd.f32 0.0, %v3785
  %v3787 = vpop.f32.mrb[0].mxu0
  %3788 = vmatprep.mubr.bf16.mxu0 0
  %3789 = vmatmul.mubr.bf16.gmra.mrb[0].mxu0 %v3481
  %v3790 = vpop.f32.mrb[0].mxu0
  %v3791 = vadd.f32 0.0, %v3790
  %v3792 = vpop.f32.mrb[0].mxu0
  %v3793 = vpop.f32.mrb[0].mxu0
  %v3794 = vadd.f32 0.0, %v3793
  %v3795 = vpop.f32.mrb[0].mxu0
  %3796 = vmatprep.mubr.bf16.mxu0 0
  %3797 = vmatmul.mubr.bf16.gmra.mrb[0].mxu0 %v3484
  %v3798 = vpop.f32.mrb[0].mxu0
  %v3799 = vadd.f32 0.0, %v3798
  %v3800 = vpop.f32.mrb[0].mxu0
  %v3801 = vpop.f32.mrb[0].mxu0
  %v3802 = vadd.f32 0.0, %v3801
  %v3803 = vpop.f32.mrb[0].mxu0
  %3804 = vmatprep.mubr.bf16.mxu0 0
  %3805 = vmatmul.mubr.bf16.gmra.mrb[0].mxu0 %v3487
  %v3806 = vpop.f32.mrb[0].mxu0
  %v3807 = vadd.f32 0.0, %v3806
  %v3808 = vpop.f32.mrb[0].mxu0
  %v3809 = vpop.f32.mrb[0].mxu0
  %v3810 = vadd.f32 0.0, %v3809
  %v3811 = vpop.f32.mrb[0].mxu0
  %3812 = vmatprep.mubr.bf16.mxu0 0
  %3813 = vmatmul.mubr.bf16.gmra.mrb[0].mxu0 %v3490
  %v3814 = vpop.f32.mrb[0].mxu0
  %v3815 = vadd.f32 0.0, %v3814
  %v3816 = vpop.f32.mrb[0].mxu0
  %v3817 = vpop.f32.mrb[0].mxu0
  %v3818 = vadd.f32 0.0, %v3817
  %v3819 = vpop.f32.mrb[0].mxu0
  %3820 = vmatprep.mubr.bf16.mxu0 0
  %3821 = vmatmul.mubr.bf16.gmra.mrb[0].mxu0 %v3493
  %v3822 = vpop.f32.mrb[0].mxu0
  %v3823 = vadd.f32 0.0, %v3822
  %v3824 = vpop.f32.mrb[0].mxu0
  %v3825 = vpop.f32.mrb[0].mxu0
  %v3826 = vadd.f32 0.0, %v3825
  %v3827 = vpop.f32.mrb[0].mxu0
  %3828 = vmatprep.mubr.bf16.mxu0 0
  %3829 = vmatmul.mubr.bf16.gmra.mrb[0].mxu0 %v3496
  %v3830 = vpop.f32.mrb[0].mxu0
  %v3831 = vadd.f32 0.0, %v3830
  %v3832 = vpop.f32.mrb[0].mxu0
  %v3833 = vpop.f32.mrb[0].mxu0
  %v3834 = vadd.f32 0.0, %v3833
  %v3835 = vpop.f32.mrb[0].mxu0
  %3836 = vmatprep.mubr.bf16.mxu0 0
  %3837 = vmatmul.mubr.bf16.gmra.mrb[0].mxu0 %v3499
  %v3838 = vpop.f32.mrb[0].mxu0
  %v3839 = vadd.f32 0.0, %v3838
  %v3840 = vpop.f32.mrb[0].mxu0
  %v3841 = vpop.f32.mrb[0].mxu0
  %v3842 = vadd.f32 0.0, %v3841
  %v3843 = vpop.f32.mrb[0].mxu0
  %3844 = vmatprep.mubr.bf16.mxu0 0
  %3845 = vmatmul.mubr.bf16.gmra.mrb[0].mxu0 %v3502
  %v3846 = vpop.f32.mrb[0].mxu0
  %v3847 = vadd.f32 0.0, %v3846
  %v3848 = vpop.f32.mrb[0].mxu0
  %v3849 = vpop.f32.mrb[0].mxu0
  %v3850 = vadd.f32 0.0, %v3849
  %v3851 = vpop.f32.mrb[0].mxu0
  %3852 = vmatprep.mubr.bf16.mxu0 0
  %3853 = vmatmul.mubr.bf16.gmra.mrb[0].mxu0 %v3505
  %v3854 = vpop.f32.mrb[0].mxu0
  %v3855 = vadd.f32 0.0, %v3854
  %v3856 = vpop.f32.mrb[0].mxu0
  %v3857 = vpop.f32.mrb[0].mxu0
  %v3858 = vadd.f32 0.0, %v3857
  %v3859 = vpop.f32.mrb[0].mxu0
  %3860 = vmatprep.mubr.bf16.mxu0 0
  %3861 = vmatmul.mubr.bf16.gmra.mrb[0].mxu0 %v3508
  %v3862 = vpop.f32.mrb[0].mxu0
  %v3863 = vadd.f32 0.0, %v3862
  %v3864 = vpop.f32.mrb[0].mxu0
  %v3865 = vpop.f32.mrb[0].mxu0
  %v3866 = vadd.f32 0.0, %v3865
  %v3867 = vpop.f32.mrb[0].mxu0
  %3868 = vmatprep.mubr.bf16.mxu0 0
  %3869 = vmatmul.mubr.bf16.gmra.mrb[0].mxu0 %v3511
  %v3870 = vpop.f32.mrb[0].mxu0
  %v3871 = vadd.f32 0.0, %v3870
  %v3872 = vpop.f32.mrb[0].mxu0
  %v3873 = vpop.f32.mrb[0].mxu0
  %v3874 = vadd.f32 0.0, %v3873
  %v3875 = vpop.f32.mrb[0].mxu0
  %3876 = vmatprep.mubr.bf16.mxu0 0
  %3877 = vmatmul.mubr.bf16.gmra.mrb[0].mxu0 %v3514
  %v3878 = vpop.f32.mrb[0].mxu0
  %v3879 = vadd.f32 0.0, %v3878
  %v3880 = vpop.f32.mrb[0].mxu0
  %v3881 = vpop.f32.mrb[0].mxu0
  %v3882 = vadd.f32 0.0, %v3881
  %v3883 = vpop.f32.mrb[0].mxu0
  %3884 = vmatprep.mubr.bf16.mxu0 0
  %3885 = vmatmul.mubr.bf16.gmra.mrb[0].mxu0 %v3517
  %v3886 = vpop.f32.mrb[0].mxu0
  %v3887 = vadd.f32 0.0, %v3886
  %v3888 = vpop.f32.mrb[0].mxu0
  %v3889 = vpop.f32.mrb[0].mxu0
  %v3890 = vadd.f32 0.0, %v3889
  %v3891 = vpop.f32.mrb[0].mxu0
  %3892 = vmatprep.mubr.bf16.mxu0 0
  %3893 = vmatmul.mubr.bf16.gmra.mrb[0].mxu0 %v3520
  %v3894 = vpop.f32.mrb[0].mxu0
  %v3895 = vadd.f32 0.0, %v3894
  %v3896 = vpop.f32.mrb[0].mxu0
  %v3897 = vpop.f32.mrb[0].mxu0
  %v3898 = vadd.f32 0.0, %v3897
  %v3899 = vpop.f32.mrb[0].mxu0
  %3900 = vmatprep.mubr.bf16.mxu0 0
  %3901 = vmatmul.mubr.bf16.gmra.mrb[0].mxu0 %v3523
  %v3902 = vpop.f32.mrb[0].mxu0
  %v3903 = vadd.f32 0.0, %v3902
  %v3904 = vpop.f32.mrb[0].mxu0
  %v3905 = vpop.f32.mrb[0].mxu0
  %v3906 = vadd.f32 0.0, %v3905
  %v3907 = vpop.f32.mrb[0].mxu0
  %3908 = vmatprep.mubr.bf16.mxu0 0
  %3909 = vmatmul.mubr.bf16.gmra.mrb[0].mxu0 %v3526
  %v3910 = vpop.f32.mrb[0].mxu0
  %v3911 = vadd.f32 0.0, %v3910
  %v3912 = vpop.f32.mrb[0].mxu0
  %v3913 = vpop.f32.mrb[0].mxu0
  %v3914 = vadd.f32 0.0, %v3913
  %v3915 = vpop.f32.mrb[0].mxu0
  %3916 = vdwg.mxu0
  %v3917 = vld [vmem:[%s0] sm:$0xf]
  %v3918 = vld [vmem:[%s0 + $0x4] sm:$0xf]
  %v3919 = vld [vmem:[%s0 + $0x8] sm:$0xf]
  %v3920 = vld [vmem:[%s0 + $0xc] sm:$0xf]
  %v3921 = vld [vmem:[%s0 + $0x10] sm:$0xf]
  %v3922 = vld [vmem:[%s0 + $0x14] sm:$0xf]
  %v3923 = vld [vmem:[%s0 + $0x18] sm:$0xf]
  %v3924 = vld [vmem:[%s0 + $0x1c] sm:$0xf]
  %v3925 = vld [vmem:[%s0 + $0x20] sm:$0xf]
  %v3926 = vld [vmem:[%s0 + $0x24] sm:$0xf]
  %v3927 = vld [vmem:[%s0 + $0x28] sm:$0xf]
  %v3928 = vld [vmem:[%s0 + $0x2c] sm:$0xf]
  %v3929 = vld [vmem:[%s0 + $0x30] sm:$0xf]
  %v3930 = vld [vmem:[%s0 + $0x34] sm:$0xf]
  %v3931 = vld [vmem:[%s0 + $0x38] sm:$0xf]
  %v3932 = vld [vmem:[%s0 + $0x3c] sm:$0xf]
  %v3933 = vld [vmem:[%s0 + $0x40] sm:$0xf]
  %v3934 = vld [vmem:[%s0 + $0x44] sm:$0xf]
  %v3935 = vld [vmem:[%s0 + $0x48] sm:$0xf]
  %v3936 = vld [vmem:[%s0 + $0x4c] sm:$0xf]
  %v3937 = vld [vmem:[%s0 + $0x50] sm:$0xf]
  %v3938 = vld [vmem:[%s0 + $0x54] sm:$0xf]
  %v3939 = vld [vmem:[%s0 + $0x58] sm:$0xf]
  %v3940 = vld [vmem:[%s0 + $0x5c] sm:$0xf]
  %v3941 = vld [vmem:[%s0 + $0x60] sm:$0xf]
  %v3942 = vld [vmem:[%s0 + $0x64] sm:$0xf]
  %v3943 = vld [vmem:[%s0 + $0x68] sm:$0xf]
  %v3944 = vld [vmem:[%s0 + $0x6c] sm:$0xf]
  %v3945 = vld [vmem:[%s0 + $0x70] sm:$0xf]
  %v3946 = vld [vmem:[%s0 + $0x74] sm:$0xf]
  %v3947 = vld [vmem:[%s0 + $0x78] sm:$0xf]
  %v3948 = vld [vmem:[%s0 + $0x7c] sm:$0xf]
  %v3949 = vld [vmem:[%s0 + $0x80] sm:$0xf]
  %v3950 = vld [vmem:[%s0 + $0x84] sm:$0xf]
  %v3951 = vld [vmem:[%s0 + $0x88] sm:$0xf]
  %v3952 = vld [vmem:[%s0 + $0x8c] sm:$0xf]
  %v3953 = vld [vmem:[%s0 + $0x90] sm:$0xf]
  %v3954 = vld [vmem:[%s0 + $0x94] sm:$0xf]
  %v3955 = vld [vmem:[%s0 + $0x98] sm:$0xf]
  %v3956 = vld [vmem:[%s0 + $0x9c] sm:$0xf]
  %v3957 = vld [vmem:[%s0 + $0xa0] sm:$0xf]
  %v3958 = vld [vmem:[%s0 + $0xa4] sm:$0xf]
  %v3959 = vld [vmem:[%s0 + $0xa8] sm:$0xf]
  %v3960 = vld [vmem:[%s0 + $0xac] sm:$0xf]
  %v3961 = vld [vmem:[%s0 + $0xb0] sm:$0xf]
  %v3962 = vld [vmem:[%s0 + $0xb4] sm:$0xf]
  %v3963 = vld [vmem:[%s0 + $0xb8] sm:$0xf]
  %v3964 = vld [vmem:[%s0 + $0xbc] sm:$0xf]
  %v3965 = vld [vmem:[%s0 + $0xc0] sm:$0xf]
  %v3966 = vld [vmem:[%s0 + $0xc4] sm:$0xf]
  %v3967 = vld [vmem:[%s0 + $0xc8] sm:$0xf]
  %v3968 = vld [vmem:[%s0 + $0xcc] sm:$0xf]
  %v3969 = vld [vmem:[%s0 + $0xd0] sm:$0xf]
  %v3970 = vld [vmem:[%s0 + $0xd4] sm:$0xf]
  %v3971 = vld [vmem:[%s0 + $0xd8] sm:$0xf]
  %v3972 = vld [vmem:[%s0 + $0xdc] sm:$0xf]
  %v3973 = vld [vmem:[%s0 + $0xe0] sm:$0xf]
  %v3974 = vld [vmem:[%s0 + $0xe4] sm:$0xf]
  %v3975 = vld [vmem:[%s0 + $0xe8] sm:$0xf]
  %v3976 = vld [vmem:[%s0 + $0xec] sm:$0xf]
  %v3977 = vld [vmem:[%s0 + $0xf0] sm:$0xf]
  %v3978 = vld [vmem:[%s0 + $0xf4] sm:$0xf]
  %v3979 = vld [vmem:[%s0 + $0xf8] sm:$0xf]
  %v3980 = vld [vmem:[%s0 + $0xfc] sm:$0xf]
  %v3981 = vld [vmem:[%s0 + $0x100] sm:$0xf]
  %v3982 = vld [vmem:[%s0 + $0x104] sm:$0xf]
  %v3983 = vld [vmem:[%s0 + $0x108] sm:$0xf]
  %v3984 = vld [vmem:[%s0 + $0x10c] sm:$0xf]
  %v3985 = vld [vmem:[%s0 + $0x110] sm:$0xf]
  %v3986 = vld [vmem:[%s0 + $0x114] sm:$0xf]
  %v3987 = vld [vmem:[%s0 + $0x118] sm:$0xf]
  %v3988 = vld [vmem:[%s0 + $0x11c] sm:$0xf]
  %v3989 = vld [vmem:[%s0 + $0x120] sm:$0xf]
  %v3990 = vld [vmem:[%s0 + $0x124] sm:$0xf]
  %v3991 = vld [vmem:[%s0 + $0x128] sm:$0xf]
  %v3992 = vld [vmem:[%s0 + $0x12c] sm:$0xf]
  %v3993 = vld [vmem:[%s0 + $0x130] sm:$0xf]
  %v3994 = vld [vmem:[%s0 + $0x134] sm:$0xf]
  %v3995 = vld [vmem:[%s0 + $0x138] sm:$0xf]
  %v3996 = vld [vmem:[%s0 + $0x13c] sm:$0xf]
  %v3997 = vld [vmem:[%s0 + $0x140] sm:$0xf]
  %v3998 = vld [vmem:[%s0 + $0x144] sm:$0xf]
  %v3999 = vld [vmem:[%s0 + $0x148] sm:$0xf]
  %v4000 = vld [vmem:[%s0 + $0x14c] sm:$0xf]
  %v4001 = vld [vmem:[%s0 + $0x150] sm:$0xf]
  %v4002 = vld [vmem:[%s0 + $0x154] sm:$0xf]
  %v4003 = vld [vmem:[%s0 + $0x158] sm:$0xf]
  %v4004 = vld [vmem:[%s0 + $0x15c] sm:$0xf]
  %v4005 = vunpack.c.l.bf16 %v3917
  %v4006 = vunpack.c.l.bf16 %v3918
  %v4007 = vunpack.c.l.bf16 %v3919
  %v4008 = vunpack.c.l.bf16 %v3920
  %v4009 = vunpack.c.l.bf16 %v3921
  %v4010 = vunpack.c.l.bf16 %v3922
  %v4011 = vunpack.c.l.bf16 %v3923
  %v4012 = vunpack.c.l.bf16 %v3924
  %v4013 = vunpack.c.l.bf16 %v3925
  %v4014 = vunpack.c.l.bf16 %v3926
  %v4015 = vunpack.c.l.bf16 %v3927
  %v4016 = vunpack.c.l.bf16 %v3928
  %v4017 = vunpack.c.l.bf16 %v3929
  %v4018 = vunpack.c.l.bf16 %v3930
  %v4019 = vunpack.c.l.bf16 %v3931
  %v4020 = vunpack.c.l.bf16 %v3932
  %v4021 = vunpack.c.l.bf16 %v3933
  %v4022 = vunpack.c.l.bf16 %v3934
  %v4023 = vunpack.c.l.bf16 %v3935
  %v4024 = vunpack.c.l.bf16 %v3936
  %v4025 = vunpack.c.l.bf16 %v3937
  %v4026 = vunpack.c.l.bf16 %v3938
  %v4027 = vunpack.c.l.bf16 %v3939
  %v4028 = vunpack.c.l.bf16 %v3940
  %v4029 = vunpack.c.l.bf16 %v3941
  %v4030 = vunpack.c.l.bf16 %v3942
  %v4031 = vunpack.c.l.bf16 %v3943
  %v4032 = vunpack.c.l.bf16 %v3944
  %v4033 = vunpack.c.l.bf16 %v3945
  %v4034 = vunpack.c.l.bf16 %v3946
  %v4035 = vunpack.c.l.bf16 %v3947
  %v4036 = vunpack.c.l.bf16 %v3948
  %v4037 = vunpack.c.l.bf16 %v3949
  %v4038 = vunpack.c.l.bf16 %v3950
  %v4039 = vunpack.c.l.bf16 %v3951
  %v4040 = vunpack.c.l.bf16 %v3952
  %v4041 = vunpack.c.l.bf16 %v3953
  %v4042 = vunpack.c.l.bf16 %v3954
  %v4043 = vunpack.c.l.bf16 %v3955
  %v4044 = vunpack.c.l.bf16 %v3956
  %v4045 = vunpack.c.l.bf16 %v3957
  %v4046 = vunpack.c.l.bf16 %v3958
  %v4047 = vunpack.c.l.bf16 %v3959
  %v4048 = vunpack.c.l.bf16 %v3960
  %v4049 = vunpack.c.l.bf16 %v3961
  %v4050 = vunpack.c.l.bf16 %v3962
  %v4051 = vunpack.c.l.bf16 %v3963
  %v4052 = vunpack.c.l.bf16 %v3964
  %v4053 = vunpack.c.l.bf16 %v3965
  %v4054 = vunpack.c.l.bf16 %v3966
  %v4055 = vunpack.c.l.bf16 %v3967
  %v4056 = vunpack.c.l.bf16 %v3968
  %v4057 = vunpack.c.l.bf16 %v3969
  %v4058 = vunpack.c.l.bf16 %v3970
  %v4059 = vunpack.c.l.bf16 %v3971
  %v4060 = vunpack.c.l.bf16 %v3972
  %v4061 = vunpack.c.l.bf16 %v3973
  %v4062 = vunpack.c.l.bf16 %v3974
  %v4063 = vunpack.c.l.bf16 %v3975
  %v4064 = vunpack.c.l.bf16 %v3976
  %v4065 = vunpack.c.l.bf16 %v3977
  %v4066 = vunpack.c.l.bf16 %v3978
  %v4067 = vunpack.c.l.bf16 %v3979
  %v4068 = vunpack.c.l.bf16 %v3980
  %v4069 = vunpack.c.l.bf16 %v3981
  %v4070 = vunpack.c.l.bf16 %v3982
  %v4071 = vunpack.c.l.bf16 %v3983
  %v4072 = vunpack.c.l.bf16 %v3984
  %v4073 = vunpack.c.l.bf16 %v3985
  %v4074 = vunpack.c.l.bf16 %v3986
  %v4075 = vunpack.c.l.bf16 %v3987
  %v4076 = vunpack.c.l.bf16 %v3988
  %v4077 = vunpack.c.l.bf16 %v3989
  %v4078 = vunpack.c.l.bf16 %v3990
  %v4079 = vunpack.c.l.bf16 %v3991
  %v4080 = vunpack.c.l.bf16 %v3992
  %v4081 = vunpack.c.l.bf16 %v3993
  %v4082 = vunpack.c.l.bf16 %v3994
  %v4083 = vunpack.c.l.bf16 %v3995
  %v4084 = vunpack.c.l.bf16 %v3996
  %v4085 = vunpack.c.l.bf16 %v3997
  %v4086 = vunpack.c.l.bf16 %v3998
  %v4087 = vunpack.c.l.bf16 %v3999
  %v4088 = vunpack.c.l.bf16 %v4000
  %v4089 = vunpack.c.l.bf16 %v4001
  %v4090 = vunpack.c.l.bf16 %v4002
  %v4091 = vunpack.c.l.bf16 %v4003
  %v4092 = vunpack.c.l.bf16 %v4004
  %4094 = vset.pattern.permute.xlu0 4
  %4095 = vperm.xlu0 %4094, %v4005
  %v4096 = vpop.permute.xlu0 %4095
  %4099 = vset.pattern.permute.xlu0 4
  %4100 = vperm.xlu0 %4099, %v4006
  %v4101 = vpop.permute.xlu0 %4100
  %4104 = vset.pattern.permute.xlu0 4
  %4105 = vperm.xlu0 %4104, %v4007
  %v4106 = vpop.permute.xlu0 %4105
  %4109 = vset.pattern.permute.xlu0 4
  %4110 = vperm.xlu0 %4109, %v4008
  %v4111 = vpop.permute.xlu0 %4110
  %4114 = vset.pattern.permute.xlu0 4
  %4115 = vperm.xlu0 %4114, %v4009
  %v4116 = vpop.permute.xlu0 %4115
  %4119 = vset.pattern.permute.xlu0 4
  %4120 = vperm.xlu0 %4119, %v4010
  %v4121 = vpop.permute.xlu0 %4120
  %4124 = vset.pattern.permute.xlu0 4
  %4125 = vperm.xlu0 %4124, %v4011
  %v4126 = vpop.permute.xlu0 %4125
  %4129 = vset.pattern.permute.xlu0 4
  %4130 = vperm.xlu0 %4129, %v4012
  %v4131 = vpop.permute.xlu0 %4130
  %4134 = vset.pattern.permute.xlu0 4
  %4135 = vperm.xlu0 %4134, %v4013
  %v4136 = vpop.permute.xlu0 %4135
  %4139 = vset.pattern.permute.xlu0 4
  %4140 = vperm.xlu0 %4139, %v4014
  %v4141 = vpop.permute.xlu0 %4140
  %4144 = vset.pattern.permute.xlu0 4
  %4145 = vperm.xlu0 %4144, %v4015
  %v4146 = vpop.permute.xlu0 %4145
  %4149 = vset.pattern.permute.xlu0 4
  %4150 = vperm.xlu0 %4149, %v4016
  %v4151 = vpop.permute.xlu0 %4150
  %4154 = vset.pattern.permute.xlu0 4
  %4155 = vperm.xlu0 %4154, %v4017
  %v4156 = vpop.permute.xlu0 %4155
  %4159 = vset.pattern.permute.xlu0 4
  %4160 = vperm.xlu0 %4159, %v4018
  %v4161 = vpop.permute.xlu0 %4160
  %4164 = vset.pattern.permute.xlu0 4
  %4165 = vperm.xlu0 %4164, %v4019
  %v4166 = vpop.permute.xlu0 %4165
  %4169 = vset.pattern.permute.xlu0 4
  %4170 = vperm.xlu0 %4169, %v4020
  %v4171 = vpop.permute.xlu0 %4170
  %4174 = vset.pattern.permute.xlu0 4
  %4175 = vperm.xlu0 %4174, %v4021
  %v4176 = vpop.permute.xlu0 %4175
  %4179 = vset.pattern.permute.xlu0 4
  %4180 = vperm.xlu0 %4179, %v4022
  %v4181 = vpop.permute.xlu0 %4180
  %4184 = vset.pattern.permute.xlu0 4
  %4185 = vperm.xlu0 %4184, %v4023
  %v4186 = vpop.permute.xlu0 %4185
  %4189 = vset.pattern.permute.xlu0 4
  %4190 = vperm.xlu0 %4189, %v4024
  %v4191 = vpop.permute.xlu0 %4190
  %4194 = vset.pattern.permute.xlu0 4
  %4195 = vperm.xlu0 %4194, %v4025
  %v4196 = vpop.permute.xlu0 %4195
  %4199 = vset.pattern.permute.xlu0 4
  %4200 = vperm.xlu0 %4199, %v4026
  %v4201 = vpop.permute.xlu0 %4200
  %4204 = vset.pattern.permute.xlu0 4
  %4205 = vperm.xlu0 %4204, %v4027
  %v4206 = vpop.permute.xlu0 %4205
  %4209 = vset.pattern.permute.xlu0 4
  %4210 = vperm.xlu0 %4209, %v4028
  %v4211 = vpop.permute.xlu0 %4210
  %4214 = vset.pattern.permute.xlu0 4
  %4215 = vperm.xlu0 %4214, %v4029
  %v4216 = vpop.permute.xlu0 %4215
  %4219 = vset.pattern.permute.xlu0 4
  %4220 = vperm.xlu0 %4219, %v4030
  %v4221 = vpop.permute.xlu0 %4220
  %4224 = vset.pattern.permute.xlu0 4
  %4225 = vperm.xlu0 %4224, %v4031
  %v4226 = vpop.permute.xlu0 %4225
  %4229 = vset.pattern.permute.xlu0 4
  %4230 = vperm.xlu0 %4229, %v4032
  %v4231 = vpop.permute.xlu0 %4230
  %4234 = vset.pattern.permute.xlu0 4
  %4235 = vperm.xlu0 %4234, %v4033
  %v4236 = vpop.permute.xlu0 %4235
  %4239 = vset.pattern.permute.xlu0 4
  %4240 = vperm.xlu0 %4239, %v4034
  %v4241 = vpop.permute.xlu0 %4240
  %4244 = vset.pattern.permute.xlu0 4
  %4245 = vperm.xlu0 %4244, %v4035
  %v4246 = vpop.permute.xlu0 %4245
  %4249 = vset.pattern.permute.xlu0 4
  %4250 = vperm.xlu0 %4249, %v4036
  %v4251 = vpop.permute.xlu0 %4250
  %4254 = vset.pattern.permute.xlu0 4
  %4255 = vperm.xlu0 %4254, %v4037
  %v4256 = vpop.permute.xlu0 %4255
  %4259 = vset.pattern.permute.xlu0 4
  %4260 = vperm.xlu0 %4259, %v4038
  %v4261 = vpop.permute.xlu0 %4260
  %4264 = vset.pattern.permute.xlu0 4
  %4265 = vperm.xlu0 %4264, %v4039
  %v4266 = vpop.permute.xlu0 %4265
  %4269 = vset.pattern.permute.xlu0 4
  %4270 = vperm.xlu0 %4269, %v4040
  %v4271 = vpop.permute.xlu0 %4270
  %4274 = vset.pattern.permute.xlu0 4
  %4275 = vperm.xlu0 %4274, %v4041
  %v4276 = vpop.permute.xlu0 %4275
  %4279 = vset.pattern.permute.xlu0 4
  %4280 = vperm.xlu0 %4279, %v4042
  %v4281 = vpop.permute.xlu0 %4280
  %4284 = vset.pattern.permute.xlu0 4
  %4285 = vperm.xlu0 %4284, %v4043
  %v4286 = vpop.permute.xlu0 %4285
  %4289 = vset.pattern.permute.xlu0 4
  %4290 = vperm.xlu0 %4289, %v4044
  %v4291 = vpop.permute.xlu0 %4290
  %4294 = vset.pattern.permute.xlu0 4
  %4295 = vperm.xlu0 %4294, %v4045
  %v4296 = vpop.permute.xlu0 %4295
  %4299 = vset.pattern.permute.xlu0 4
  %4300 = vperm.xlu0 %4299, %v4046
  %v4301 = vpop.permute.xlu0 %4300
  %4304 = vset.pattern.permute.xlu0 4
  %4305 = vperm.xlu0 %4304, %v4047
  %v4306 = vpop.permute.xlu0 %4305
  %4309 = vset.pattern.permute.xlu0 4
  %4310 = vperm.xlu0 %4309, %v4048
  %v4311 = vpop.permute.xlu0 %4310
  %4314 = vset.pattern.permute.xlu0 4
  %4315 = vperm.xlu0 %4314, %v4049
  %v4316 = vpop.permute.xlu0 %4315
  %4319 = vset.pattern.permute.xlu0 4
  %4320 = vperm.xlu0 %4319, %v4050
  %v4321 = vpop.permute.xlu0 %4320
  %4324 = vset.pattern.permute.xlu0 4
  %4325 = vperm.xlu0 %4324, %v4051
  %v4326 = vpop.permute.xlu0 %4325
  %4329 = vset.pattern.permute.xlu0 4
  %4330 = vperm.xlu0 %4329, %v4052
  %v4331 = vpop.permute.xlu0 %4330
  %4334 = vset.pattern.permute.xlu0 4
  %4335 = vperm.xlu0 %4334, %v4053
  %v4336 = vpop.permute.xlu0 %4335
  %4339 = vset.pattern.permute.xlu0 4
  %4340 = vperm.xlu0 %4339, %v4054
  %v4341 = vpop.permute.xlu0 %4340
  %4344 = vset.pattern.permute.xlu0 4
  %4345 = vperm.xlu0 %4344, %v4055
  %v4346 = vpop.permute.xlu0 %4345
  %4349 = vset.pattern.permute.xlu0 4
  %4350 = vperm.xlu0 %4349, %v4056
  %v4351 = vpop.permute.xlu0 %4350
  %4354 = vset.pattern.permute.xlu0 4
  %4355 = vperm.xlu0 %4354, %v4057
  %v4356 = vpop.permute.xlu0 %4355
  %4359 = vset.pattern.permute.xlu0 4
  %4360 = vperm.xlu0 %4359, %v4058
  %v4361 = vpop.permute.xlu0 %4360
  %4364 = vset.pattern.permute.xlu0 4
  %4365 = vperm.xlu0 %4364, %v4059
  %v4366 = vpop.permute.xlu0 %4365
  %4369 = vset.pattern.permute.xlu0 4
  %4370 = vperm.xlu0 %4369, %v4060
  %v4371 = vpop.permute.xlu0 %4370
  %4374 = vset.pattern.permute.xlu0 4
  %4375 = vperm.xlu0 %4374, %v4061
  %v4376 = vpop.permute.xlu0 %4375
  %4379 = vset.pattern.permute.xlu0 4
  %4380 = vperm.xlu0 %4379, %v4062
  %v4381 = vpop.permute.xlu0 %4380
  %4384 = vset.pattern.permute.xlu0 4
  %4385 = vperm.xlu0 %4384, %v4063
  %v4386 = vpop.permute.xlu0 %4385
  %4389 = vset.pattern.permute.xlu0 4
  %4390 = vperm.xlu0 %4389, %v4064
  %v4391 = vpop.permute.xlu0 %4390
  %4394 = vset.pattern.permute.xlu0 4
  %4395 = vperm.xlu0 %4394, %v4065
  %v4396 = vpop.permute.xlu0 %4395
  %4399 = vset.pattern.permute.xlu0 4
  %4400 = vperm.xlu0 %4399, %v4066
  %v4401 = vpop.permute.xlu0 %4400
  %4404 = vset.pattern.permute.xlu0 4
  %4405 = vperm.xlu0 %4404, %v4067
  %v4406 = vpop.permute.xlu0 %4405
  %4409 = vset.pattern.permute.xlu0 4
  %4410 = vperm.xlu0 %4409, %v4068
  %v4411 = vpop.permute.xlu0 %4410
  %4414 = vset.pattern.permute.xlu0 4
  %4415 = vperm.xlu0 %4414, %v4069
  %v4416 = vpop.permute.xlu0 %4415
  %4419 = vset.pattern.permute.xlu0 4
  %4420 = vperm.xlu0 %4419, %v4070
  %v4421 = vpop.permute.xlu0 %4420
  %4424 = vset.pattern.permute.xlu0 4
  %4425 = vperm.xlu0 %4424, %v4071
  %v4426 = vpop.permute.xlu0 %4425
  %4429 = vset.pattern.permute.xlu0 4
  %4430 = vperm.xlu0 %4429, %v4072
  %v4431 = vpop.permute.xlu0 %4430
  %4434 = vset.pattern.permute.xlu0 4
  %4435 = vperm.xlu0 %4434, %v4073
  %v4436 = vpop.permute.xlu0 %4435
  %4439 = vset.pattern.permute.xlu0 4
  %4440 = vperm.xlu0 %4439, %v4074
  %v4441 = vpop.permute.xlu0 %4440
  %4444 = vset.pattern.permute.xlu0 4
  %4445 = vperm.xlu0 %4444, %v4075
  %v4446 = vpop.permute.xlu0 %4445
  %4449 = vset.pattern.permute.xlu0 4
  %4450 = vperm.xlu0 %4449, %v4076
  %v4451 = vpop.permute.xlu0 %4450
  %4454 = vset.pattern.permute.xlu0 4
  %4455 = vperm.xlu0 %4454, %v4077
  %v4456 = vpop.permute.xlu0 %4455
  %4459 = vset.pattern.permute.xlu0 4
  %4460 = vperm.xlu0 %4459, %v4078
  %v4461 = vpop.permute.xlu0 %4460
  %4464 = vset.pattern.permute.xlu0 4
  %4465 = vperm.xlu0 %4464, %v4079
  %v4466 = vpop.permute.xlu0 %4465
  %4469 = vset.pattern.permute.xlu0 4
  %4470 = vperm.xlu0 %4469, %v4080
  %v4471 = vpop.permute.xlu0 %4470
  %4474 = vset.pattern.permute.xlu0 4
  %4475 = vperm.xlu0 %4474, %v4081
  %v4476 = vpop.permute.xlu0 %4475
  %4479 = vset.pattern.permute.xlu0 4
  %4480 = vperm.xlu0 %4479, %v4082
  %v4481 = vpop.permute.xlu0 %4480
  %4484 = vset.pattern.permute.xlu0 4
  %4485 = vperm.xlu0 %4484, %v4083
  %v4486 = vpop.permute.xlu0 %4485
  %4489 = vset.pattern.permute.xlu0 4
  %4490 = vperm.xlu0 %4489, %v4084
  %v4491 = vpop.permute.xlu0 %4490
  %4494 = vset.pattern.permute.xlu0 4
  %4495 = vperm.xlu0 %4494, %v4085
  %v4496 = vpop.permute.xlu0 %4495
  %4499 = vset.pattern.permute.xlu0 4
  %4500 = vperm.xlu0 %4499, %v4086
  %v4501 = vpop.permute.xlu0 %4500
  %4504 = vset.pattern.permute.xlu0 4
  %4505 = vperm.xlu0 %4504, %v4087
  %v4506 = vpop.permute.xlu0 %4505
  %4509 = vset.pattern.permute.xlu0 4
  %4510 = vperm.xlu0 %4509, %v4088
  %v4511 = vpop.permute.xlu0 %4510
  %4514 = vset.pattern.permute.xlu0 4
  %4515 = vperm.xlu0 %4514, %v4089
  %v4516 = vpop.permute.xlu0 %4515
  %4519 = vset.pattern.permute.xlu0 4
  %4520 = vperm.xlu0 %4519, %v4090
  %v4521 = vpop.permute.xlu0 %4520
  %4524 = vset.pattern.permute.xlu0 4
  %4525 = vperm.xlu0 %4524, %v4091
  %v4526 = vpop.permute.xlu0 %4525
  %4529 = vset.pattern.permute.xlu0 4
  %4530 = vperm.xlu0 %4529, %v4092
  %v4531 = vpop.permute.xlu0 %4530
  %v4533 = vmul.f32 %v3567, %v4096
  %v4534 = vmul.f32 %v3570, %v4101
  %v4535 = vmul.f32 %v3575, %v4106
  %v4536 = vmul.f32 %v3578, %v4111
  %v4537 = vmul.f32 %v3583, %v4116
  %v4538 = vmul.f32 %v3586, %v4121
  %v4539 = vmul.f32 %v3591, %v4126
  %v4540 = vmul.f32 %v3594, %v4131
  %v4541 = vmul.f32 %v3599, %v4136
  %v4542 = vmul.f32 %v3602, %v4141
  %v4543 = vmul.f32 %v3607, %v4146
  %v4544 = vmul.f32 %v3610, %v4151
  %v4545 = vmul.f32 %v3615, %v4156
  %v4546 = vmul.f32 %v3618, %v4161
  %v4547 = vmul.f32 %v3623, %v4166
  %v4548 = vmul.f32 %v3626, %v4171
  %v4549 = vmul.f32 %v3631, %v4176
  %v4550 = vmul.f32 %v3634, %v4181
  %v4551 = vmul.f32 %v3639, %v4186
  %v4552 = vmul.f32 %v3642, %v4191
  %v4553 = vmul.f32 %v3647, %v4196
  %v4554 = vmul.f32 %v3650, %v4201
  %v4555 = vmul.f32 %v3655, %v4206
  %v4556 = vmul.f32 %v3658, %v4211
  %v4557 = vmul.f32 %v3663, %v4216
  %v4558 = vmul.f32 %v3666, %v4221
  %v4559 = vmul.f32 %v3671, %v4226
  %v4560 = vmul.f32 %v3674, %v4231
  %v4561 = vmul.f32 %v3679, %v4236
  %v4562 = vmul.f32 %v3682, %v4241
  %v4563 = vmul.f32 %v3687, %v4246
  %v4564 = vmul.f32 %v3690, %v4251
  %v4565 = vmul.f32 %v3695, %v4256
  %v4566 = vmul.f32 %v3698, %v4261
  %v4567 = vmul.f32 %v3703, %v4266
  %v4568 = vmul.f32 %v3706, %v4271
  %v4569 = vmul.f32 %v3711, %v4276
  %v4570 = vmul.f32 %v3714, %v4281
  %v4571 = vmul.f32 %v3719, %v4286
  %v4572 = vmul.f32 %v3722, %v4291
  %v4573 = vmul.f32 %v3727, %v4296
  %v4574 = vmul.f32 %v3730, %v4301
  %v4575 = vmul.f32 %v3735, %v4306
  %v4576 = vmul.f32 %v3738, %v4311
  %v4577 = vmul.f32 %v3743, %v4316
  %v4578 = vmul.f32 %v3746, %v4321
  %v4579 = vmul.f32 %v3751, %v4326
  %v4580 = vmul.f32 %v3754, %v4331
  %v4581 = vmul.f32 %v3759, %v4336
  %v4582 = vmul.f32 %v3762, %v4341
  %v4583 = vmul.f32 %v3767, %v4346
  %v4584 = vmul.f32 %v3770, %v4351
  %v4585 = vmul.f32 %v3775, %v4356
  %v4586 = vmul.f32 %v3778, %v4361
  %v4587 = vmul.f32 %v3783, %v4366
  %v4588 = vmul.f32 %v3786, %v4371
  %v4589 = vmul.f32 %v3791, %v4376
  %v4590 = vmul.f32 %v3794, %v4381
  %v4591 = vmul.f32 %v3799, %v4386
  %v4592 = vmul.f32 %v3802, %v4391
  %v4593 = vmul.f32 %v3807, %v4396
  %v4594 = vmul.f32 %v3810, %v4401
  %v4595 = vmul.f32 %v3815, %v4406
  %v4596 = vmul.f32 %v3818, %v4411
  %v4597 = vmul.f32 %v3823, %v4416
  %v4598 = vmul.f32 %v3826, %v4421
  %v4599 = vmul.f32 %v3831, %v4426
  %v4600 = vmul.f32 %v3834, %v4431
  %v4601 = vmul.f32 %v3839, %v4436
  %v4602 = vmul.f32 %v3842, %v4441
  %v4603 = vmul.f32 %v3847, %v4446
  %v4604 = vmul.f32 %v3850, %v4451
  %v4605 = vmul.f32 %v3855, %v4456
  %v4606 = vmul.f32 %v3858, %v4461
  %v4607 = vmul.f32 %v3863, %v4466
  %v4608 = vmul.f32 %v3866, %v4471
  %v4609 = vmul.f32 %v3871, %v4476
  %v4610 = vmul.f32 %v3874, %v4481
  %v4611 = vmul.f32 %v3879, %v4486
  %v4612 = vmul.f32 %v3882, %v4491
  %v4613 = vmul.f32 %v3887, %v4496
  %v4614 = vmul.f32 %v3890, %v4501
  %v4615 = vmul.f32 %v3895, %v4506
  %v4616 = vmul.f32 %v3898, %v4511
  %v4617 = vmul.f32 %v3903, %v4516
  %v4618 = vmul.f32 %v3906, %v4521
  %v4619 = vmul.f32 %v3911, %v4526
  %v4620 = vmul.f32 %v3914, %v4531
  %p4621 = scmp.eq.s32.totalorder 0, 0
  // Predicated region
  $region14: #{conv2d_batchnorm_3x3.2} parent=0 // pred_check
    %p4622 = pneg %p4621
  $region15: #{conv2d_batchnorm_3x3.2} parent=0 // pred_check_branch
    %4624 = sbr.rel (%p4622) target = $region17
  $region16: #{conv2d_batchnorm_3x3.2} parent=0 // pred_region
    %4625 = vst [vmem:[%s3] sm:$0xff] 0.0
  $region17: #{conv2d_batchnorm_3x3.2} parent=0 // pred_fallthru
    _
  %v4626 = vld [vmem:[%s3] sm:$0x1]
  %v4627 = vadd.f32 %v4533, %v4534
  %v4628 = vadd.f32 %v4627, %v4535
  %v4629 = vadd.f32 %v4628, %v4536
  %v4630 = vadd.f32 %v4629, %v4537
  %v4631 = vadd.f32 %v4630, %v4538
  %v4632 = vadd.f32 %v4631, %v4539
  %v4633 = vadd.f32 %v4632, %v4540
  %v4634 = vadd.f32 %v4633, %v4541
  %v4635 = vadd.f32 %v4634, %v4542
  %v4636 = vadd.f32 %v4635, %v4543
  %v4637 = vadd.f32 %v4636, %v4544
  %v4638 = vadd.f32 %v4637, %v4545
  %v4639 = vadd.f32 %v4638, %v4546
  %v4640 = vadd.f32 %v4639, %v4547
  %v4641 = vadd.f32 %v4640, %v4548
  %v4642 = vadd.f32 %v4641, %v4549
  %v4643 = vadd.f32 %v4642, %v4550
  %v4644 = vadd.f32 %v4643, %v4551
  %v4645 = vadd.f32 %v4644, %v4552
  %v4646 = vadd.f32 %v4645, %v4553
  %v4647 = vadd.f32 %v4646, %v4554
  %v4648 = vadd.f32 %v4647, %v4555
  %v4649 = vadd.f32 %v4648, %v4556
  %v4650 = vadd.f32 %v4649, %v4557
  %v4651 = vadd.f32 %v4650, %v4558
  %v4652 = vadd.f32 %v4651, %v4559
  %v4653 = vadd.f32 %v4652, %v4560
  %v4654 = vadd.f32 %v4653, %v4561
  %v4655 = vadd.f32 %v4654, %v4562
  %v4656 = vadd.f32 %v4655, %v4563
  %v4657 = vadd.f32 %v4656, %v4564
  %v4658 = vadd.f32 %v4657, %v4565
  %v4659 = vadd.f32 %v4658, %v4566
  %v4660 = vadd.f32 %v4659, %v4567
  %v4661 = vadd.f32 %v4660, %v4568
  %v4662 = vadd.f32 %v4661, %v4569
  %v4663 = vadd.f32 %v4662, %v4570
  %v4664 = vadd.f32 %v4663, %v4571
  %v4665 = vadd.f32 %v4664, %v4572
  %v4666 = vadd.f32 %v4665, %v4573
  %v4667 = vadd.f32 %v4666, %v4574
  %v4668 = vadd.f32 %v4667, %v4575
  %v4669 = vadd.f32 %v4668, %v4576
  %v4670 = vadd.f32 %v4669, %v4577
  %v4671 = vadd.f32 %v4670, %v4578
  %v4672 = vadd.f32 %v4671, %v4579
  %v4673 = vadd.f32 %v4672, %v4580
  %v4674 = vadd.f32 %v4673, %v4581
  %v4675 = vadd.f32 %v4674, %v4582
  %v4676 = vadd.f32 %v4675, %v4583
  %v4677 = vadd.f32 %v4676, %v4584
  %v4678 = vadd.f32 %v4677, %v4585
  %v4679 = vadd.f32 %v4678, %v4586
  %v4680 = vadd.f32 %v4679, %v4587
  %v4681 = vadd.f32 %v4680, %v4588
  %v4682 = vadd.f32 %v4681, %v4589
  %v4683 = vadd.f32 %v4682, %v4590
  %v4684 = vadd.f32 %v4683, %v4591
  %v4685 = vadd.f32 %v4684, %v4592
  %v4686 = vadd.f32 %v4685, %v4593
  %v4687 = vadd.f32 %v4686, %v4594
  %v4688 = vadd.f32 %v4687, %v4595
  %v4689 = vadd.f32 %v4688, %v4596
  %v4690 = vadd.f32 %v4689, %v4597
  %v4691 = vadd.f32 %v4690, %v4598
  %v4692 = vadd.f32 %v4691, %v4599
  %v4693 = vadd.f32 %v4692, %v4600
  %v4694 = vadd.f32 %v4693, %v4601
  %v4695 = vadd.f32 %v4694, %v4602
  %v4696 = vadd.f32 %v4695, %v4603
  %v4697 = vadd.f32 %v4696, %v4604
  %v4698 = vadd.f32 %v4697, %v4605
  %v4699 = vadd.f32 %v4698, %v4606
  %v4700 = vadd.f32 %v4699, %v4607
  %v4701 = vadd.f32 %v4700, %v4608
  %v4702 = vadd.f32 %v4701, %v4609
  %v4703 = vadd.f32 %v4702, %v4610
  %v4704 = vadd.f32 %v4703, %v4611
  %v4705 = vadd.f32 %v4704, %v4612
  %v4706 = vadd.f32 %v4705, %v4613
  %v4707 = vadd.f32 %v4706, %v4614
  %v4708 = vadd.f32 %v4707, %v4615
  %v4709 = vadd.f32 %v4708, %v4616
  %v4710 = vadd.f32 %v4709, %v4617
  %v4711 = vadd.f32 %v4710, %v4618
  %v4712 = vadd.f32 %v4711, %v4619
  %v4713 = vadd.f32 %v4712, %v4620
  %v4714 = vrot.slane %v4713, 4
  %v4715 = vadd.f32 %v4713, %v4714
  %v4716 = vrot.slane %v4715, 2
  %v4717 = vadd.f32 %v4715, %v4716
  %v4718 = vrot.slane %v4717, 1
  %v4719 = vadd.f32 %v4717, %v4718
  %v4720 = vadd.f32 %v4626, %v4719
  %4721 = vst [vmem:[%s3] sm:$0x1] %v4720
  %v4722 = vld [vmem:[%s3 + $0x1] sm:$0x1]
  %v4723 = vmul.f32 %v4533, %v3567
  %v4724 = vmul.f32 %v4534, %v3570
  %v4725 = vmul.f32 %v4535, %v3575
  %v4726 = vmul.f32 %v4536, %v3578
  %v4727 = vmul.f32 %v4537, %v3583
  %v4728 = vmul.f32 %v4538, %v3586
  %v4729 = vmul.f32 %v4539, %v3591
  %v4730 = vmul.f32 %v4540, %v3594
  %v4731 = vmul.f32 %v4541, %v3599
  %v4732 = vmul.f32 %v4542, %v3602
  %v4733 = vmul.f32 %v4543, %v3607
  %v4734 = vmul.f32 %v4544, %v3610
  %v4735 = vmul.f32 %v4545, %v3615
  %v4736 = vmul.f32 %v4546, %v3618
  %v4737 = vmul.f32 %v4547, %v3623
  %v4738 = vmul.f32 %v4548, %v3626
  %v4739 = vmul.f32 %v4549, %v3631
  %v4740 = vmul.f32 %v4550, %v3634
  %v4741 = vmul.f32 %v4551, %v3639
  %v4742 = vmul.f32 %v4552, %v3642
  %v4743 = vmul.f32 %v4553, %v3647
  %v4744 = vmul.f32 %v4554, %v3650
  %v4745 = vmul.f32 %v4555, %v3655
  %v4746 = vmul.f32 %v4556, %v3658
  %v4747 = vmul.f32 %v4557, %v3663
  %v4748 = vmul.f32 %v4558, %v3666
  %v4749 = vmul.f32 %v4559, %v3671
  %v4750 = vmul.f32 %v4560, %v3674
  %v4751 = vmul.f32 %v4561, %v3679
  %v4752 = vmul.f32 %v4562, %v3682
  %v4753 = vmul.f32 %v4563, %v3687
  %v4754 = vmul.f32 %v4564, %v3690
  %v4755 = vmul.f32 %v4565, %v3695
  %v4756 = vmul.f32 %v4566, %v3698
  %v4757 = vmul.f32 %v4567, %v3703
  %v4758 = vmul.f32 %v4568, %v3706
  %v4759 = vmul.f32 %v4569, %v3711
  %v4760 = vmul.f32 %v4570, %v3714
  %v4761 = vmul.f32 %v4571, %v3719
  %v4762 = vmul.f32 %v4572, %v3722
  %v4763 = vmul.f32 %v4573, %v3727
  %v4764 = vmul.f32 %v4574, %v3730
  %v4765 = vmul.f32 %v4575, %v3735
  %v4766 = vmul.f32 %v4576, %v3738
  %v4767 = vmul.f32 %v4577, %v3743
  %v4768 = vmul.f32 %v4578, %v3746
  %v4769 = vmul.f32 %v4579, %v3751
  %v4770 = vmul.f32 %v4580, %v3754
  %v4771 = vmul.f32 %v4581, %v3759
  %v4772 = vmul.f32 %v4582, %v3762
  %v4773 = vmul.f32 %v4583, %v3767
  %v4774 = vmul.f32 %v4584, %v3770
  %v4775 = vmul.f32 %v4585, %v3775
  %v4776 = vmul.f32 %v4586, %v3778
  %v4777 = vmul.f32 %v4587, %v3783
  %v4778 = vmul.f32 %v4588, %v3786
  %v4779 = vmul.f32 %v4589, %v3791
  %v4780 = vmul.f32 %v4590, %v3794
  %v4781 = vmul.f32 %v4591, %v3799
  %v4782 = vmul.f32 %v4592, %v3802
  %v4783 = vmul.f32 %v4593, %v3807
  %v4784 = vmul.f32 %v4594, %v3810
  %v4785 = vmul.f32 %v4595, %v3815
  %v4786 = vmul.f32 %v4596, %v3818
  %v4787 = vmul.f32 %v4597, %v3823
  %v4788 = vmul.f32 %v4598, %v3826
  %v4789 = vmul.f32 %v4599, %v3831
  %v4790 = vmul.f32 %v4600, %v3834
  %v4791 = vmul.f32 %v4601, %v3839
  %v4792 = vmul.f32 %v4602, %v3842
  %v4793 = vmul.f32 %v4603, %v3847
  %v4794 = vmul.f32 %v4604, %v3850
  %v4795 = vmul.f32 %v4605, %v3855
  %v4796 = vmul.f32 %v4606, %v3858
  %v4797 = vmul.f32 %v4607, %v3863
  %v4798 = vmul.f32 %v4608, %v3866
  %v4799 = vmul.f32 %v4609, %v3871
  %v4800 = vmul.f32 %v4610, %v3874
  %v4801 = vmul.f32 %v4611, %v3879
  %v4802 = vmul.f32 %v4612, %v3882
  %v4803 = vmul.f32 %v4613, %v3887
  %v4804 = vmul.f32 %v4614, %v3890
  %v4805 = vmul.f32 %v4615, %v3895
  %v4806 = vmul.f32 %v4616, %v3898
  %v4807 = vmul.f32 %v4617, %v3903
  %v4808 = vmul.f32 %v4618, %v3906
  %v4809 = vmul.f32 %v4619, %v3911
  %v4810 = vmul.f32 %v4620, %v3914
  %v4811 = vadd.f32 %v4723, %v4724
  %v4812 = vadd.f32 %v4811, %v4725
  %v4813 = vadd.f32 %v4812, %v4726
  %v4814 = vadd.f32 %v4813, %v4727
  %v4815 = vadd.f32 %v4814, %v4728
  %v4816 = vadd.f32 %v4815, %v4729
  %v4817 = vadd.f32 %v4816, %v4730
  %v4818 = vadd.f32 %v4817, %v4731
  %v4819 = vadd.f32 %v4818, %v4732
  %v4820 = vadd.f32 %v4819, %v4733
  %v4821 = vadd.f32 %v4820, %v4734
  %v4822 = vadd.f32 %v4821, %v4735
  %v4823 = vadd.f32 %v4822, %v4736
  %v4824 = vadd.f32 %v4823, %v4737
  %v4825 = vadd.f32 %v4824, %v4738
  %v4826 = vadd.f32 %v4825, %v4739
  %v4827 = vadd.f32 %v4826, %v4740
  %v4828 = vadd.f32 %v4827, %v4741
  %v4829 = vadd.f32 %v4828, %v4742
  %v4830 = vadd.f32 %v4829, %v4743
  %v4831 = vadd.f32 %v4830, %v4744
  %v4832 = vadd.f32 %v4831, %v4745
  %v4833 = vadd.f32 %v4832, %v4746
  %v4834 = vadd.f32 %v4833, %v4747
  %v4835 = vadd.f32 %v4834, %v4748
  %v4836 = vadd.f32 %v4835, %v4749
  %v4837 = vadd.f32 %v4836, %v4750
  %v4838 = vadd.f32 %v4837, %v4751
  %v4839 = vadd.f32 %v4838, %v4752
  %v4840 = vadd.f32 %v4839, %v4753
  %v4841 = vadd.f32 %v4840, %v4754
  %v4842 = vadd.f32 %v4841, %v4755
  %v4843 = vadd.f32 %v4842, %v4756
  %v4844 = vadd.f32 %v4843, %v4757
  %v4845 = vadd.f32 %v4844, %v4758
  %v4846 = vadd.f32 %v4845, %v4759
  %v4847 = vadd.f32 %v4846, %v4760
  %v4848 = vadd.f32 %v4847, %v4761
  %v4849 = vadd.f32 %v4848, %v4762
  %v4850 = vadd.f32 %v4849, %v4763
  %v4851 = vadd.f32 %v4850, %v4764
  %v4852 = vadd.f32 %v4851, %v4765
  %v4853 = vadd.f32 %v4852, %v4766
  %v4854 = vadd.f32 %v4853, %v4767
  %v4855 = vadd.f32 %v4854, %v4768
  %v4856 = vadd.f32 %v4855, %v4769
  %v4857 = vadd.f32 %v4856, %v4770
  %v4858 = vadd.f32 %v4857, %v4771
  %v4859 = vadd.f32 %v4858, %v4772
  %v4860 = vadd.f32 %v4859, %v4773
  %v4861 = vadd.f32 %v4860, %v4774
  %v4862 = vadd.f32 %v4861, %v4775
  %v4863 = vadd.f32 %v4862, %v4776
  %v4864 = vadd.f32 %v4863, %v4777
  %v4865 = vadd.f32 %v4864, %v4778
  %v4866 = vadd.f32 %v4865, %v4779
  %v4867 = vadd.f32 %v4866, %v4780
  %v4868 = vadd.f32 %v4867, %v4781
  %v4869 = vadd.f32 %v4868, %v4782
  %v4870 = vadd.f32 %v4869, %v4783
  %v4871 = vadd.f32 %v4870, %v4784
  %v4872 = vadd.f32 %v4871, %v4785
  %v4873 = vadd.f32 %v4872, %v4786
  %v4874 = vadd.f32 %v4873, %v4787
  %v4875 = vadd.f32 %v4874, %v4788
  %v4876 = vadd.f32 %v4875, %v4789
  %v4877 = vadd.f32 %v4876, %v4790
  %v4878 = vadd.f32 %v4877, %v4791
  %v4879 = vadd.f32 %v4878, %v4792
  %v4880 = vadd.f32 %v4879, %v4793
  %v4881 = vadd.f32 %v4880, %v4794
  %v4882 = vadd.f32 %v4881, %v4795
  %v4883 = vadd.f32 %v4882, %v4796
  %v4884 = vadd.f32 %v4883, %v4797
  %v4885 = vadd.f32 %v4884, %v4798
  %v4886 = vadd.f32 %v4885, %v4799
  %v4887 = vadd.f32 %v4886, %v4800
  %v4888 = vadd.f32 %v4887, %v4801
  %v4889 = vadd.f32 %v4888, %v4802
  %v4890 = vadd.f32 %v4889, %v4803
  %v4891 = vadd.f32 %v4890, %v4804
  %v4892 = vadd.f32 %v4891, %v4805
  %v4893 = vadd.f32 %v4892, %v4806
  %v4894 = vadd.f32 %v4893, %v4807
  %v4895 = vadd.f32 %v4894, %v4808
  %v4896 = vadd.f32 %v4895, %v4809
  %v4897 = vadd.f32 %v4896, %v4810
  %v4898 = vrot.slane %v4897, 4
  %v4899 = vadd.f32 %v4897, %v4898
  %v4900 = vrot.slane %v4899, 2
  %v4901 = vadd.f32 %v4899, %v4900
  %v4902 = vrot.slane %v4901, 1
  %v4903 = vadd.f32 %v4901, %v4902
  %v4904 = vadd.f32 %v4722, %v4903
  %4905 = vst [vmem:[%s3 + $0x1] sm:$0x1] %v4904
  // Predicated region
  $region18: #{conv2d_batchnorm_3x3.2} parent=0 // pred_check
    _
  $region19: #{conv2d_batchnorm_3x3.2} parent=0 // pred_check_branch
    %4907 = sbr.rel (0) target = $region21
  $region20: #{conv2d_batchnorm_3x3.2} parent=0 // pred_region
    _
  $region21: #{conv2d_batchnorm_3x3.2} parent=0 // pred_fallthru
    _
  // Predicated region
  $region22: #{conv2d_batchnorm_3x3.2} parent=0 // pred_check
    _
  $region23: #{conv2d_batchnorm_3x3.2} parent=0 // pred_check_branch
    %4909 = sbr.rel (0) target = $region25
  $region24: #{conv2d_batchnorm_3x3.2} parent=0 // pred_region
    _
  $region25: #{conv2d_batchnorm_3x3.2} parent=0 // pred_fallthru
    _

</llo_original>
